<compile_context>
chip_gen: v6e
topology: v6e:2x2x1
jax: 0.10.0
libtpu: 0.0.40
codegen_flags: <defaults>
</compile_context>

<pallas_src>
import functools

import jax
import jax.numpy as jnp
import numpy as np
from jax import lax
from jax.experimental import pallas as pl
from jax.experimental.pallas import tpu as pltpu


# ---------------------------------------------------------------------------
# Fused Pallas kernel: GRU layer 1 -> GRU layer 2 -> Linear head
# ---------------------------------------------------------------------------
def fused_gru_kernel(
    x_ref,                                   # (T*B, F)   time-major input, flattened
    wih1_ref, whh1_ref, bih1_ref, bhh1_ref,  # (3,F,H) (3,H,H) (3,1,H) (3,1,H)
    wih2_ref, whh2_ref, bih2_ref, bhh2_ref,  # (3,H,H) (3,H,H) (3,1,H) (3,1,H)
    fcw_ref, fcb_ref,                        # (1,H) (1,1)
    out_ref,                                 # (B, 1)
    gi1r_ref, gi1z_ref, gi1n_ref,            # scratch: (T*B, H) each
    *, seq_len, batch,
):
    hidden = whh1_ref.shape[1]
    x_all = x_ref[...]                       # (T*B, F)

    # Hoisted layer-1 input projection: one matmul per gate over ALL timesteps.
    gi1r_ref[...] = jnp.dot(x_all, wih1_ref[0], preferred_element_type=jnp.float32) + bih1_ref[0]
    gi1z_ref[...] = jnp.dot(x_all, wih1_ref[1], preferred_element_type=jnp.float32) + bih1_ref[1]
    gi1n_ref[...] = jnp.dot(x_all, wih1_ref[2], preferred_element_type=jnp.float32) + bih1_ref[2]

    def rec(h, w_ref, b_ref, g):
        # Per-gate projection: (B,H) @ (H,H) + (1,H). Gate index g is a static
        # leading-axis ref index (lane-aligned, no intra-vreg slicing).
        return jnp.dot(h, w_ref[g], preferred_element_type=jnp.float32) + b_ref[g]

    def step(t, carry):
        h1, h2 = carry
        row = t * batch                      # batch is a multiple of 8 -> aligned sublane slice

        # ---- layer 1 (input projection precomputed above) ----
        r1 = jax.nn.sigmoid(gi1r_ref[pl.ds(row, batch), :] + rec(h1, whh1_ref, bhh1_ref, 0))
        z1 = jax.nn.sigmoid(gi1z_ref[pl.ds(row, batch), :] + rec(h1, whh1_ref, bhh1_ref, 1))
        n1 = jnp.tanh(gi1n_ref[pl.ds(row, batch), :] + r1 * rec(h1, whh1_ref, bhh1_ref, 2))
        h1 = (1.0 - z1) * n1 + z1 * h1

        # ---- layer 2 (its input is h1_t, so it must stay in the loop) ----
        r2 = jax.nn.sigmoid(rec(h1, wih2_ref, bih2_ref, 0) + rec(h2, whh2_ref, bhh2_ref, 0))
        z2 = jax.nn.sigmoid(rec(h1, wih2_ref, bih2_ref, 1) + rec(h2, whh2_ref, bhh2_ref, 1))
        n2 = jnp.tanh(rec(h1, wih2_ref, bih2_ref, 2) + r2 * rec(h2, whh2_ref, bhh2_ref, 2))
        h2 = (1.0 - z2) * n2 + z2 * h2
        return (h1, h2)

    h0 = jnp.zeros((batch, hidden), jnp.float32)
    _, h2_last = lax.fori_loop(0, seq_len, step, (h0, h0), unroll=True)

    # FC head fused in as a VPU multiply + lane reduction (head only needs the
    # last timestep of the top layer; nothing else is ever written to HBM).
    out_ref[...] = jnp.sum(h2_last * fcw_ref[...], axis=-1, keepdims=True) + fcb_ref[...]


# ---------------------------------------------------------------------------
# Wrapper (mirrors GRUModel.forward)
# ---------------------------------------------------------------------------
@functools.partial(jax.jit, static_argnames=("d_feat",))
def gru_model_forward(x, params, d_feat):
    layers = params["layers"]
    assert len(layers) == 2, "fused kernel implements the default num_layers=2"
    (wih1, whh1, bih1, bhh1), (wih2, whh2, bih2, bhh2) = layers
    hidden = whh1.shape[1]

    batch = x.shape[0]
    x = x.reshape(batch, d_feat, -1)          # (B, F, T)
    seq_len = x.shape[-1]
    x = jnp.transpose(x, (2, 0, 1))           # (T, B, F)  time-major

    # Pad batch up to a sublane multiple (8); padded rows are discarded below.
    batch_p = -(-batch // 8) * 8
    if batch_p != batch:
        x = jnp.pad(x, ((0, 0), (0, batch_p - batch), (0, 0)))
    x2d = x.reshape(seq_len * batch_p, d_feat)

    kernel = functools.partial(fused_gru_kernel, seq_len=seq_len, batch=batch_p)
    vmem = pl.BlockSpec(memory_space=pltpu.MemorySpace.VMEM)

    y = pl.pallas_call(
        kernel,
        out_shape=jax.ShapeDtypeStruct((batch_p, 1), jnp.float32),
        in_specs=[vmem] * 11,
        out_specs=pl.BlockSpec(memory_space=pltpu.MemorySpace.VMEM),
        scratch_shapes=[
            pltpu.VMEM((seq_len * batch_p, hidden), jnp.float32) for _ in range(3)
        ],
    )(x2d, wih1, whh1, bih1, bhh1, wih2, whh2, bih2, bhh2,
      params["fc_w"], params["fc_b"])

    return y[:batch, 0]                       # == fc_out(out[:, -1, :]).squeeze()


# ---------------------------------------------------------------------------
# Deterministic parameter init (PyTorch-style uniform(-1/sqrt(H), 1/sqrt(H)))
# Gate order (r, z, n); weights re-stacked per gate for lane-aligned access.
# ---------------------------------------------------------------------------
def init_params(key, d_feat, hidden_size, num_layers):
    bound = 1.0 / np.sqrt(hidden_size)
    layers = []
    for layer in range(num_layers):
        in_sz = d_feat if layer == 0 else hidden_size
        key, k1, k2, k3, k4 = jax.random.split(key, 5)
        w_ih = jax.random.uniform(k1, (3 * hidden_size, in_sz), jnp.float32, -bound, bound)
        w_hh = jax.random.uniform(k2, (3 * hidden_size, hidden_size), jnp.float32, -bound, bound)
        b_ih = jax.random.uniform(k3, (3 * hidden_size,), jnp.float32, -bound, bound)
        b_hh = jax.random.uniform(k4, (3 * hidden_size,), jnp.float32, -bound, bound)
        layers.append((
            jnp.transpose(w_ih.reshape(3, hidden_size, in_sz), (0, 2, 1)),        # (3, in, H)
            jnp.transpose(w_hh.reshape(3, hidden_size, hidden_size), (0, 2, 1)),  # (3, H, H)
            b_ih.reshape(3, 1, hidden_size),                                      # (3, 1, H)
            b_hh.reshape(3, 1, hidden_size),                                      # (3, 1, H)
        ))
    key, k5, k6 = jax.random.split(key, 3)
    fc_w = jax.random.uniform(k5, (1, hidden_size), jnp.float32, -bound, bound)
    fc_b = jax.random.uniform(k6, (1,), jnp.float32, -bound, bound)
    return {"layers": layers, "fc_w": fc_w, "fc_b": fc_b.reshape(1, 1)}


# ---------------------------------------------------------------------------
# Pure-JAX reference (for correctness check)
# ---------------------------------------------------------------------------
def gru_model_reference(x, params, d_feat):
    batch = x.shape[0]
    h_seq = jnp.transpose(x.reshape(batch, d_feat, -1), (2, 0, 1))  # (T, B, F)

    for (wih, whh, bih, bhh) in params["layers"]:
        hidden = whh.shape[1]

        def step(h, x_t, wih=wih, whh=whh, bih=bih, bhh=bhh):
            r = jax.nn.sigmoid(x_t @ wih[0] + bih[0] + h @ whh[0] + bhh[0])
            z = jax.nn.sigmoid(x_t @ wih[1] + bih[1] + h @ whh[1] + bhh[1])
            n = jnp.tanh(x_t @ wih[2] + bih[2] + r * (h @ whh[2] + bhh[2]))
            h_new = (1.0 - z) * n + z * h
            return h_new, h_new

        h0 = jnp.zeros((batch, hidden), jnp.float32)
        _, h_seq = lax.scan(step, h0, h_seq)

    h_last = h_seq[-1]
    return jnp.sum(h_last * params["fc_w"], axis=-1) + params["fc_b"][0, 0]


# ---------------------------------------------------------------------------
if __name__ == "__main__":
    D_FEAT = 6
    HIDDEN = 64
    NUM_LAYERS = 2
    BATCH = 8
    SEQ = 8

    key = jax.random.PRNGKey(0)
    key, pkey, xkey = jax.random.split(key, 3)
    params = init_params(pkey, D_FEAT, HIDDEN, NUM_LAYERS)
    # Module input: (B, d_feat * T), reshaped inside forward.
    x = jax.random.normal(xkey, (BATCH, D_FEAT * SEQ), jnp.float32)

    out = gru_model_forward(x, params, D_FEAT)
    out = jax.block_until_ready(out)

    ref = gru_model_reference(x, params, D_FEAT)
    np.testing.assert_allclose(np.asarray(out), np.asarray(ref), rtol=1e-5, atol=1e-5)
    assert out.shape == (BATCH,)

    print("KERNEL_OK")
</pallas_src>

<mosaic_0001>
module attributes {stable_mosaic.version = 11 : i64} {
  func.func @fused_gru_kernel(%arg0: memref<64x6xf32, #tpu.memory_space<vmem>>, %arg1: memref<3x6x64xf32, #tpu.memory_space<vmem>>, %arg2: memref<3x64x64xf32, #tpu.memory_space<vmem>>, %arg3: memref<3x1x64xf32, #tpu.memory_space<vmem>>, %arg4: memref<3x1x64xf32, #tpu.memory_space<vmem>>, %arg5: memref<3x64x64xf32, #tpu.memory_space<vmem>>, %arg6: memref<3x64x64xf32, #tpu.memory_space<vmem>>, %arg7: memref<3x1x64xf32, #tpu.memory_space<vmem>>, %arg8: memref<3x1x64xf32, #tpu.memory_space<vmem>>, %arg9: memref<1x64xf32, #tpu.memory_space<vmem>>, %arg10: memref<1x1xf32, #tpu.memory_space<vmem>>, %arg11: memref<8x1xf32, #tpu.memory_space<vmem>>, %arg12: memref<64x64xf32, #tpu.memory_space<vmem>>, %arg13: memref<64x64xf32, #tpu.memory_space<vmem>>, %arg14: memref<64x64xf32, #tpu.memory_space<vmem>>) attributes {dimension_semantics = [], scalar_prefetch = 0 : i64, scratch_operands = 3 : i64, tpu.core_type = #tpu.core_type<tc>} {
    %c0 = arith.constant 0 : index
    %c0_0 = arith.constant 0 : index
    %0 = vector.load %arg0[%c0, %c0_0] : memref<64x6xf32, #tpu.memory_space<vmem>>, vector<64x6xf32>
    %c0_1 = arith.constant 0 : index
    %c0_2 = arith.constant 0 : index
    %c0_3 = arith.constant 0 : index
    %1 = vector.load %arg1[%c0_1, %c0_2, %c0_3] : memref<3x6x64xf32, #tpu.memory_space<vmem>>, vector<1x6x64xf32>
    %2 = vector.shape_cast %1 : vector<1x6x64xf32> to vector<6x64xf32>
    %cst = arith.constant dense<0.000000e+00> : vector<64x64xf32>
    %3 = tpu.matmul %0, %2, %cst {dimension_numbers = #tpu.dot_dimension_numbers<[1], [0], [0], [1], [0, 0, 1, 1], [], []>} : vector<64x6xf32>, vector<6x64xf32>, vector<64x64xf32> -> vector<64x64xf32>
    %c0_4 = arith.constant 0 : index
    %c0_5 = arith.constant 0 : index
    %c0_6 = arith.constant 0 : index
    %4 = vector.load %arg3[%c0_4, %c0_5, %c0_6] : memref<3x1x64xf32, #tpu.memory_space<vmem>>, vector<1x1x64xf32>
    %5 = vector.shape_cast %4 : vector<1x1x64xf32> to vector<1x64xf32>
    %6 = vector.broadcast %5 : vector<1x64xf32> to vector<64x64xf32>
    %7 = arith.addf %3, %6 : vector<64x64xf32>
    %c0_7 = arith.constant 0 : index
    %c0_8 = arith.constant 0 : index
    %8 = vector.load %arg12[%c0_7, %c0_8] : memref<64x64xf32, #tpu.memory_space<vmem>>, vector<64x64xf32>
    tpu.vector_store %arg12[%c0_7, %c0_8], %7 {strides = array<i32>} : memref<64x64xf32, #tpu.memory_space<vmem>>, vector<64x64xf32>,
    %c1 = arith.constant 1 : index
    %c0_9 = arith.constant 0 : index
    %c0_10 = arith.constant 0 : index
    %9 = vector.load %arg1[%c1, %c0_9, %c0_10] : memref<3x6x64xf32, #tpu.memory_space<vmem>>, vector<1x6x64xf32>
    %10 = vector.shape_cast %9 : vector<1x6x64xf32> to vector<6x64xf32>
    %cst_11 = arith.constant dense<0.000000e+00> : vector<64x64xf32>
    %11 = tpu.matmul %0, %10, %cst_11 {dimension_numbers = #tpu.dot_dimension_numbers<[1], [0], [0], [1], [0, 0, 1, 1], [], []>} : vector<64x6xf32>, vector<6x64xf32>, vector<64x64xf32> -> vector<64x64xf32>
    %c1_12 = arith.constant 1 : index
    %c0_13 = arith.constant 0 : index
    %c0_14 = arith.constant 0 : index
    %12 = vector.load %arg3[%c1_12, %c0_13, %c0_14] : memref<3x1x64xf32, #tpu.memory_space<vmem>>, vector<1x1x64xf32>
    %13 = vector.shape_cast %12 : vector<1x1x64xf32> to vector<1x64xf32>
    %14 = vector.broadcast %13 : vector<1x64xf32> to vector<64x64xf32>
    %15 = arith.addf %11, %14 : vector<64x64xf32>
    %c0_15 = arith.constant 0 : index
    %c0_16 = arith.constant 0 : index
    %16 = vector.load %arg13[%c0_15, %c0_16] : memref<64x64xf32, #tpu.memory_space<vmem>>, vector<64x64xf32>
    tpu.vector_store %arg13[%c0_15, %c0_16], %15 {strides = array<i32>} : memref<64x64xf32, #tpu.memory_space<vmem>>, vector<64x64xf32>,
    %c2 = arith.constant 2 : index
    %c0_17 = arith.constant 0 : index
    %c0_18 = arith.constant 0 : index
    %17 = vector.load %arg1[%c2, %c0_17, %c0_18] : memref<3x6x64xf32, #tpu.memory_space<vmem>>, vector<1x6x64xf32>
    %18 = vector.shape_cast %17 : vector<1x6x64xf32> to vector<6x64xf32>
    %cst_19 = arith.constant dense<0.000000e+00> : vector<64x64xf32>
    %19 = tpu.matmul %0, %18, %cst_19 {dimension_numbers = #tpu.dot_dimension_numbers<[1], [0], [0], [1], [0, 0, 1, 1], [], []>} : vector<64x6xf32>, vector<6x64xf32>, vector<64x64xf32> -> vector<64x64xf32>
    %c2_20 = arith.constant 2 : index
    %c0_21 = arith.constant 0 : index
    %c0_22 = arith.constant 0 : index
    %20 = vector.load %arg3[%c2_20, %c0_21, %c0_22] : memref<3x1x64xf32, #tpu.memory_space<vmem>>, vector<1x1x64xf32>
    %21 = vector.shape_cast %20 : vector<1x1x64xf32> to vector<1x64xf32>
    %22 = vector.broadcast %21 : vector<1x64xf32> to vector<64x64xf32>
    %23 = arith.addf %19, %22 : vector<64x64xf32>
    %c0_23 = arith.constant 0 : index
    %c0_24 = arith.constant 0 : index
    %24 = vector.load %arg14[%c0_23, %c0_24] : memref<64x64xf32, #tpu.memory_space<vmem>>, vector<64x64xf32>
    tpu.vector_store %arg14[%c0_23, %c0_24], %23 {strides = array<i32>} : memref<64x64xf32, #tpu.memory_space<vmem>>, vector<64x64xf32>,
    %cst_25 = arith.constant 0.000000e+00 : f32
    %25 = vector.broadcast %cst_25 : f32 to vector<8x64xf32>
    %c0_i32 = arith.constant 0 : i32
    %c8_i32 = arith.constant 8 : i32
    %26 = arith.muli %c0_i32, %c8_i32 : i32
    %27 = arith.index_cast %26 : i32 to index
    %c0_26 = arith.constant 0 : index
    %28 = vector.load %arg12[%27, %c0_26] : memref<64x64xf32, #tpu.memory_space<vmem>>, vector<8x64xf32>
    %c0_27 = arith.constant 0 : index
    %c0_28 = arith.constant 0 : index
    %c0_29 = arith.constant 0 : index
    %29 = vector.load %arg2[%c0_27, %c0_28, %c0_29] : memref<3x64x64xf32, #tpu.memory_space<vmem>>, vector<1x64x64xf32>
    %30 = vector.shape_cast %29 : vector<1x64x64xf32> to vector<64x64xf32>
    %cst_30 = arith.constant dense<0.000000e+00> : vector<8x64xf32>
    %31 = tpu.matmul %25, %30, %cst_30 {dimension_numbers = #tpu.dot_dimension_numbers<[1], [0], [0], [1], [0, 0, 1, 1], [], []>} : vector<8x64xf32>, vector<64x64xf32>, vector<8x64xf32> -> vector<8x64xf32>
    %c0_31 = arith.constant 0 : index
    %c0_32 = arith.constant 0 : index
    %c0_33 = arith.constant 0 : index
    %32 = vector.load %arg4[%c0_31, %c0_32, %c0_33] : memref<3x1x64xf32, #tpu.memory_space<vmem>>, vector<1x1x64xf32>
    %33 = vector.shape_cast %32 : vector<1x1x64xf32> to vector<1x64xf32>
    %34 = vector.broadcast %33 : vector<1x64xf32> to vector<8x64xf32>
    %35 = arith.addf %31, %34 : vector<8x64xf32>
    %36 = arith.addf %28, %35 : vector<8x64xf32>
    %37 = arith.negf %36 : vector<8x64xf32>
    %38 = math.exp %37 : vector<8x64xf32>
    %cst_34 = arith.constant 1.000000e+00 : f32
    %39 = vector.broadcast %cst_34 : f32 to vector<8x64xf32>
    %40 = arith.addf %39, %38 : vector<8x64xf32>
    %41 = arith.divf %39, %40 : vector<8x64xf32>
    %42 = arith.index_cast %26 : i32 to index
    %c0_35 = arith.constant 0 : index
    %43 = vector.load %arg13[%42, %c0_35] : memref<64x64xf32, #tpu.memory_space<vmem>>, vector<8x64xf32>
    %c1_36 = arith.constant 1 : index
    %c0_37 = arith.constant 0 : index
    %c0_38 = arith.constant 0 : index
    %44 = vector.load %arg2[%c1_36, %c0_37, %c0_38] : memref<3x64x64xf32, #tpu.memory_space<vmem>>, vector<1x64x64xf32>
    %45 = vector.shape_cast %44 : vector<1x64x64xf32> to vector<64x64xf32>
    %cst_39 = arith.constant dense<0.000000e+00> : vector<8x64xf32>
    %46 = tpu.matmul %25, %45, %cst_39 {dimension_numbers = #tpu.dot_dimension_numbers<[1], [0], [0], [1], [0, 0, 1, 1], [], []>} : vector<8x64xf32>, vector<64x64xf32>, vector<8x64xf32> -> vector<8x64xf32>
    %c1_40 = arith.constant 1 : index
    %c0_41 = arith.constant 0 : index
    %c0_42 = arith.constant 0 : index
    %47 = vector.load %arg4[%c1_40, %c0_41, %c0_42] : memref<3x1x64xf32, #tpu.memory_space<vmem>>, vector<1x1x64xf32>
    %48 = vector.shape_cast %47 : vector<1x1x64xf32> to vector<1x64xf32>
    %49 = vector.broadcast %48 : vector<1x64xf32> to vector<8x64xf32>
    %50 = arith.addf %46, %49 : vector<8x64xf32>
    %51 = arith.addf %43, %50 : vector<8x64xf32>
    %52 = arith.negf %51 : vector<8x64xf32>
    %53 = math.exp %52 : vector<8x64xf32>
    %cst_43 = arith.constant 1.000000e+00 : f32
    %54 = vector.broadcast %cst_43 : f32 to vector<8x64xf32>
    %55 = arith.addf %54, %53 : vector<8x64xf32>
    %56 = arith.divf %54, %55 : vector<8x64xf32>
    %57 = arith.index_cast %26 : i32 to index
    %c0_44 = arith.constant 0 : index
    %58 = vector.load %arg14[%57, %c0_44] : memref<64x64xf32, #tpu.memory_space<vmem>>, vector<8x64xf32>
    %c2_45 = arith.constant 2 : index
    %c0_46 = arith.constant 0 : index
    %c0_47 = arith.constant 0 : index
    %59 = vector.load %arg2[%c2_45, %c0_46, %c0_47] : memref<3x64x64xf32, #tpu.memory_space<vmem>>, vector<1x64x64xf32>
    %60 = vector.shape_cast %59 : vector<1x64x64xf32> to vector<64x64xf32>
    %cst_48 = arith.constant dense<0.000000e+00> : vector<8x64xf32>
    %61 = tpu.matmul %25, %60, %cst_48 {dimension_numbers = #tpu.dot_dimension_numbers<[1], [0], [0], [1], [0, 0, 1, 1], [], []>} : vector<8x64xf32>, vector<64x64xf32>, vector<8x64xf32> -> vector<8x64xf32>
    %c2_49 = arith.constant 2 : index
    %c0_50 = arith.constant 0 : index
    %c0_51 = arith.constant 0 : index
    %62 = vector.load %arg4[%c2_49, %c0_50, %c0_51] : memref<3x1x64xf32, #tpu.memory_space<vmem>>, vector<1x1x64xf32>
    %63 = vector.shape_cast %62 : vector<1x1x64xf32> to vector<1x64xf32>
    %64 = vector.broadcast %63 : vector<1x64xf32> to vector<8x64xf32>
    %65 = arith.addf %61, %64 : vector<8x64xf32>
    %66 = arith.mulf %41, %65 : vector<8x64xf32>
    %67 = arith.addf %58, %66 : vector<8x64xf32>
    %68 = math.tanh %67 : vector<8x64xf32>
    %cst_52 = arith.constant 1.000000e+00 : f32
    %69 = vector.broadcast %cst_52 : f32 to vector<8x64xf32>
    %70 = arith.subf %69, %56 : vector<8x64xf32>
    %71 = arith.mulf %70, %68 : vector<8x64xf32>
    %72 = arith.mulf %56, %25 : vector<8x64xf32>
    %73 = arith.addf %71, %72 : vector<8x64xf32>
    %c0_53 = arith.constant 0 : index
    %c0_54 = arith.constant 0 : index
    %c0_55 = arith.constant 0 : index
    %74 = vector.load %arg5[%c0_53, %c0_54, %c0_55] : memref<3x64x64xf32, #tpu.memory_space<vmem>>, vector<1x64x64xf32>
    %75 = vector.shape_cast %74 : vector<1x64x64xf32> to vector<64x64xf32>
    %cst_56 = arith.constant dense<0.000000e+00> : vector<8x64xf32>
    %76 = tpu.matmul %73, %75, %cst_56 {dimension_numbers = #tpu.dot_dimension_numbers<[1], [0], [0], [1], [0, 0, 1, 1], [], []>} : vector<8x64xf32>, vector<64x64xf32>, vector<8x64xf32> -> vector<8x64xf32>
    %c0_57 = arith.constant 0 : index
    %c0_58 = arith.constant 0 : index
    %c0_59 = arith.constant 0 : index
    %77 = vector.load %arg7[%c0_57, %c0_58, %c0_59] : memref<3x1x64xf32, #tpu.memory_space<vmem>>, vector<1x1x64xf32>
    %78 = vector.shape_cast %77 : vector<1x1x64xf32> to vector<1x64xf32>
    %79 = vector.broadcast %78 : vector<1x64xf32> to vector<8x64xf32>
    %80 = arith.addf %76, %79 : vector<8x64xf32>
    %c0_60 = arith.constant 0 : index
    %c0_61 = arith.constant 0 : index
    %c0_62 = arith.constant 0 : index
    %81 = vector.load %arg6[%c0_60, %c0_61, %c0_62] : memref<3x64x64xf32, #tpu.memory_space<vmem>>, vector<1x64x64xf32>
    %82 = vector.shape_cast %81 : vector<1x64x64xf32> to vector<64x64xf32>
    %cst_63 = arith.constant dense<0.000000e+00> : vector<8x64xf32>
    %83 = tpu.matmul %25, %82, %cst_63 {dimension_numbers = #tpu.dot_dimension_numbers<[1], [0], [0], [1], [0, 0, 1, 1], [], []>} : vector<8x64xf32>, vector<64x64xf32>, vector<8x64xf32> -> vector<8x64xf32>
    %c0_64 = arith.constant 0 : index
    %c0_65 = arith.constant 0 : index
    %c0_66 = arith.constant 0 : index
    %84 = vector.load %arg8[%c0_64, %c0_65, %c0_66] : memref<3x1x64xf32, #tpu.memory_space<vmem>>, vector<1x1x64xf32>
    %85 = vector.shape_cast %84 : vector<1x1x64xf32> to vector<1x64xf32>
    %86 = vector.broadcast %85 : vector<1x64xf32> to vector<8x64xf32>
    %87 = arith.addf %83, %86 : vector<8x64xf32>
    %88 = arith.addf %80, %87 : vector<8x64xf32>
    %89 = arith.negf %88 : vector<8x64xf32>
    %90 = math.exp %89 : vector<8x64xf32>
    %cst_67 = arith.constant 1.000000e+00 : f32
    %91 = vector.broadcast %cst_67 : f32 to vector<8x64xf32>
    %92 = arith.addf %91, %90 : vector<8x64xf32>
    %93 = arith.divf %91, %92 : vector<8x64xf32>
    %c1_68 = arith.constant 1 : index
    %c0_69 = arith.constant 0 : index
    %c0_70 = arith.constant 0 : index
    %94 = vector.load %arg5[%c1_68, %c0_69, %c0_70] : memref<3x64x64xf32, #tpu.memory_space<vmem>>, vector<1x64x64xf32>
    %95 = vector.shape_cast %94 : vector<1x64x64xf32> to vector<64x64xf32>
    %cst_71 = arith.constant dense<0.000000e+00> : vector<8x64xf32>
    %96 = tpu.matmul %73, %95, %cst_71 {dimension_numbers = #tpu.dot_dimension_numbers<[1], [0], [0], [1], [0, 0, 1, 1], [], []>} : vector<8x64xf32>, vector<64x64xf32>, vector<8x64xf32> -> vector<8x64xf32>
    %c1_72 = arith.constant 1 : index
    %c0_73 = arith.constant 0 : index
    %c0_74 = arith.constant 0 : index
    %97 = vector.load %arg7[%c1_72, %c0_73, %c0_74] : memref<3x1x64xf32, #tpu.memory_space<vmem>>, vector<1x1x64xf32>
    %98 = vector.shape_cast %97 : vector<1x1x64xf32> to vector<1x64xf32>
    %99 = vector.broadcast %98 : vector<1x64xf32> to vector<8x64xf32>
    %100 = arith.addf %96, %99 : vector<8x64xf32>
    %c1_75 = arith.constant 1 : index
    %c0_76 = arith.constant 0 : index
    %c0_77 = arith.constant 0 : index
    %101 = vector.load %arg6[%c1_75, %c0_76, %c0_77] : memref<3x64x64xf32, #tpu.memory_space<vmem>>, vector<1x64x64xf32>
    %102 = vector.shape_cast %101 : vector<1x64x64xf32> to vector<64x64xf32>
    %cst_78 = arith.constant dense<0.000000e+00> : vector<8x64xf32>
    %103 = tpu.matmul %25, %102, %cst_78 {dimension_numbers = #tpu.dot_dimension_numbers<[1], [0], [0], [1], [0, 0, 1, 1], [], []>} : vector<8x64xf32>, vector<64x64xf32>, vector<8x64xf32> -> vector<8x64xf32>
    %c1_79 = arith.constant 1 : index
    %c0_80 = arith.constant 0 : index
    %c0_81 = arith.constant 0 : index
    %104 = vector.load %arg8[%c1_79, %c0_80, %c0_81] : memref<3x1x64xf32, #tpu.memory_space<vmem>>, vector<1x1x64xf32>
    %105 = vector.shape_cast %104 : vector<1x1x64xf32> to vector<1x64xf32>
    %106 = vector.broadcast %105 : vector<1x64xf32> to vector<8x64xf32>
    %107 = arith.addf %103, %106 : vector<8x64xf32>
    %108 = arith.addf %100, %107 : vector<8x64xf32>
    %109 = arith.negf %108 : vector<8x64xf32>
    %110 = math.exp %109 : vector<8x64xf32>
    %cst_82 = arith.constant 1.000000e+00 : f32
    %111 = vector.broadcast %cst_82 : f32 to vector<8x64xf32>
    %112 = arith.addf %111, %110 : vector<8x64xf32>
    %113 = arith.divf %111, %112 : vector<8x64xf32>
    %c2_83 = arith.constant 2 : index
    %c0_84 = arith.constant 0 : index
    %c0_85 = arith.constant 0 : index
    %114 = vector.load %arg5[%c2_83, %c0_84, %c0_85] : memref<3x64x64xf32, #tpu.memory_space<vmem>>, vector<1x64x64xf32>
    %115 = vector.shape_cast %114 : vector<1x64x64xf32> to vector<64x64xf32>
    %cst_86 = arith.constant dense<0.000000e+00> : vector<8x64xf32>
    %116 = tpu.matmul %73, %115, %cst_86 {dimension_numbers = #tpu.dot_dimension_numbers<[1], [0], [0], [1], [0, 0, 1, 1], [], []>} : vector<8x64xf32>, vector<64x64xf32>, vector<8x64xf32> -> vector<8x64xf32>
    %c2_87 = arith.constant 2 : index
    %c0_88 = arith.constant 0 : index
    %c0_89 = arith.constant 0 : index
    %117 = vector.load %arg7[%c2_87, %c0_88, %c0_89] : memref<3x1x64xf32, #tpu.memory_space<vmem>>, vector<1x1x64xf32>
    %118 = vector.shape_cast %117 : vector<1x1x64xf32> to vector<1x64xf32>
    %119 = vector.broadcast %118 : vector<1x64xf32> to vector<8x64xf32>
    %120 = arith.addf %116, %119 : vector<8x64xf32>
    %c2_90 = arith.constant 2 : index
    %c0_91 = arith.constant 0 : index
    %c0_92 = arith.constant 0 : index
    %121 = vector.load %arg6[%c2_90, %c0_91, %c0_92] : memref<3x64x64xf32, #tpu.memory_space<vmem>>, vector<1x64x64xf32>
    %122 = vector.shape_cast %121 : vector<1x64x64xf32> to vector<64x64xf32>
    %cst_93 = arith.constant dense<0.000000e+00> : vector<8x64xf32>
    %123 = tpu.matmul %25, %122, %cst_93 {dimension_numbers = #tpu.dot_dimension_numbers<[1], [0], [0], [1], [0, 0, 1, 1], [], []>} : vector<8x64xf32>, vector<64x64xf32>, vector<8x64xf32> -> vector<8x64xf32>
    %c2_94 = arith.constant 2 : index
    %c0_95 = arith.constant 0 : index
    %c0_96 = arith.constant 0 : index
    %124 = vector.load %arg8[%c2_94, %c0_95, %c0_96] : memref<3x1x64xf32, #tpu.memory_space<vmem>>, vector<1x1x64xf32>
    %125 = vector.shape_cast %124 : vector<1x1x64xf32> to vector<1x64xf32>
    %126 = vector.broadcast %125 : vector<1x64xf32> to vector<8x64xf32>
    %127 = arith.addf %123, %126 : vector<8x64xf32>
    %128 = arith.mulf %93, %127 : vector<8x64xf32>
    %129 = arith.addf %120, %128 : vector<8x64xf32>
    %130 = math.tanh %129 : vector<8x64xf32>
    %cst_97 = arith.constant 1.000000e+00 : f32
    %131 = vector.broadcast %cst_97 : f32 to vector<8x64xf32>
    %132 = arith.subf %131, %113 : vector<8x64xf32>
    %133 = arith.mulf %132, %130 : vector<8x64xf32>
    %134 = arith.mulf %113, %25 : vector<8x64xf32>
    %135 = arith.addf %133, %134 : vector<8x64xf32>
    %c1_i32 = arith.constant 1 : i32
    %c8_i32_98 = arith.constant 8 : i32
    %136 = arith.muli %c1_i32, %c8_i32_98 : i32
    %137 = arith.index_cast %136 : i32 to index
    %c0_99 = arith.constant 0 : index
    %138 = vector.load %arg12[%137, %c0_99] : memref<64x64xf32, #tpu.memory_space<vmem>>, vector<8x64xf32>
    %c0_100 = arith.constant 0 : index
    %c0_101 = arith.constant 0 : index
    %c0_102 = arith.constant 0 : index
    %139 = vector.load %arg2[%c0_100, %c0_101, %c0_102] : memref<3x64x64xf32, #tpu.memory_space<vmem>>, vector<1x64x64xf32>
    %140 = vector.shape_cast %139 : vector<1x64x64xf32> to vector<64x64xf32>
    %cst_103 = arith.constant dense<0.000000e+00> : vector<8x64xf32>
    %141 = tpu.matmul %73, %140, %cst_103 {dimension_numbers = #tpu.dot_dimension_numbers<[1], [0], [0], [1], [0, 0, 1, 1], [], []>} : vector<8x64xf32>, vector<64x64xf32>, vector<8x64xf32> -> vector<8x64xf32>
    %c0_104 = arith.constant 0 : index
    %c0_105 = arith.constant 0 : index
    %c0_106 = arith.constant 0 : index
    %142 = vector.load %arg4[%c0_104, %c0_105, %c0_106] : memref<3x1x64xf32, #tpu.memory_space<vmem>>, vector<1x1x64xf32>
    %143 = vector.shape_cast %142 : vector<1x1x64xf32> to vector<1x64xf32>
    %144 = vector.broadcast %143 : vector<1x64xf32> to vector<8x64xf32>
    %145 = arith.addf %141, %144 : vector<8x64xf32>
    %146 = arith.addf %138, %145 : vector<8x64xf32>
    %147 = arith.negf %146 : vector<8x64xf32>
    %148 = math.exp %147 : vector<8x64xf32>
    %cst_107 = arith.constant 1.000000e+00 : f32
    %149 = vector.broadcast %cst_107 : f32 to vector<8x64xf32>
    %150 = arith.addf %149, %148 : vector<8x64xf32>
    %151 = arith.divf %149, %150 : vector<8x64xf32>
    %152 = arith.index_cast %136 : i32 to index
    %c0_108 = arith.constant 0 : index
    %153 = vector.load %arg13[%152, %c0_108] : memref<64x64xf32, #tpu.memory_space<vmem>>, vector<8x64xf32>
    %c1_109 = arith.constant 1 : index
    %c0_110 = arith.constant 0 : index
    %c0_111 = arith.constant 0 : index
    %154 = vector.load %arg2[%c1_109, %c0_110, %c0_111] : memref<3x64x64xf32, #tpu.memory_space<vmem>>, vector<1x64x64xf32>
    %155 = vector.shape_cast %154 : vector<1x64x64xf32> to vector<64x64xf32>
    %cst_112 = arith.constant dense<0.000000e+00> : vector<8x64xf32>
    %156 = tpu.matmul %73, %155, %cst_112 {dimension_numbers = #tpu.dot_dimension_numbers<[1], [0], [0], [1], [0, 0, 1, 1], [], []>} : vector<8x64xf32>, vector<64x64xf32>, vector<8x64xf32> -> vector<8x64xf32>
    %c1_113 = arith.constant 1 : index
    %c0_114 = arith.constant 0 : index
    %c0_115 = arith.constant 0 : index
    %157 = vector.load %arg4[%c1_113, %c0_114, %c0_115] : memref<3x1x64xf32, #tpu.memory_space<vmem>>, vector<1x1x64xf32>
    %158 = vector.shape_cast %157 : vector<1x1x64xf32> to vector<1x64xf32>
    %159 = vector.broadcast %158 : vector<1x64xf32> to vector<8x64xf32>
    %160 = arith.addf %156, %159 : vector<8x64xf32>
    %161 = arith.addf %153, %160 : vector<8x64xf32>
    %162 = arith.negf %161 : vector<8x64xf32>
    %163 = math.exp %162 : vector<8x64xf32>
    %cst_116 = arith.constant 1.000000e+00 : f32
    %164 = vector.broadcast %cst_116 : f32 to vector<8x64xf32>
    %165 = arith.addf %164, %163 : vector<8x64xf32>
    %166 = arith.divf %164, %165 : vector<8x64xf32>
    %167 = arith.index_cast %136 : i32 to index
    %c0_117 = arith.constant 0 : index
    %168 = vector.load %arg14[%167, %c0_117] : memref<64x64xf32, #tpu.memory_space<vmem>>, vector<8x64xf32>
    %c2_118 = arith.constant 2 : index
    %c0_119 = arith.constant 0 : index
    %c0_120 = arith.constant 0 : index
    %169 = vector.load %arg2[%c2_118, %c0_119, %c0_120] : memref<3x64x64xf32, #tpu.memory_space<vmem>>, vector<1x64x64xf32>
    %170 = vector.shape_cast %169 : vector<1x64x64xf32> to vector<64x64xf32>
    %cst_121 = arith.constant dense<0.000000e+00> : vector<8x64xf32>
    %171 = tpu.matmul %73, %170, %cst_121 {dimension_numbers = #tpu.dot_dimension_numbers<[1], [0], [0], [1], [0, 0, 1, 1], [], []>} : vector<8x64xf32>, vector<64x64xf32>, vector<8x64xf32> -> vector<8x64xf32>
    %c2_122 = arith.constant 2 : index
    %c0_123 = arith.constant 0 : index
    %c0_124 = arith.constant 0 : index
    %172 = vector.load %arg4[%c2_122, %c0_123, %c0_124] : memref<3x1x64xf32, #tpu.memory_space<vmem>>, vector<1x1x64xf32>
    %173 = vector.shape_cast %172 : vector<1x1x64xf32> to vector<1x64xf32>
    %174 = vector.broadcast %173 : vector<1x64xf32> to vector<8x64xf32>
    %175 = arith.addf %171, %174 : vector<8x64xf32>
    %176 = arith.mulf %151, %175 : vector<8x64xf32>
    %177 = arith.addf %168, %176 : vector<8x64xf32>
    %178 = math.tanh %177 : vector<8x64xf32>
    %cst_125 = arith.constant 1.000000e+00 : f32
    %179 = vector.broadcast %cst_125 : f32 to vector<8x64xf32>
    %180 = arith.subf %179, %166 : vector<8x64xf32>
    %181 = arith.mulf %180, %178 : vector<8x64xf32>
    %182 = arith.mulf %166, %73 : vector<8x64xf32>
    %183 = arith.addf %181, %182 : vector<8x64xf32>
    %c0_126 = arith.constant 0 : index
    %c0_127 = arith.constant 0 : index
    %c0_128 = arith.constant 0 : index
    %184 = vector.load %arg5[%c0_126, %c0_127, %c0_128] : memref<3x64x64xf32, #tpu.memory_space<vmem>>, vector<1x64x64xf32>
    %185 = vector.shape_cast %184 : vector<1x64x64xf32> to vector<64x64xf32>
    %cst_129 = arith.constant dense<0.000000e+00> : vector<8x64xf32>
    %186 = tpu.matmul %183, %185, %cst_129 {dimension_numbers = #tpu.dot_dimension_numbers<[1], [0], [0], [1], [0, 0, 1, 1], [], []>} : vector<8x64xf32>, vector<64x64xf32>, vector<8x64xf32> -> vector<8x64xf32>
    %c0_130 = arith.constant 0 : index
    %c0_131 = arith.constant 0 : index
    %c0_132 = arith.constant 0 : index
    %187 = vector.load %arg7[%c0_130, %c0_131, %c0_132] : memref<3x1x64xf32, #tpu.memory_space<vmem>>, vector<1x1x64xf32>
    %188 = vector.shape_cast %187 : vector<1x1x64xf32> to vector<1x64xf32>
    %189 = vector.broadcast %188 : vector<1x64xf32> to vector<8x64xf32>
    %190 = arith.addf %186, %189 : vector<8x64xf32>
    %c0_133 = arith.constant 0 : index
    %c0_134 = arith.constant 0 : index
    %c0_135 = arith.constant 0 : index
    %191 = vector.load %arg6[%c0_133, %c0_134, %c0_135] : memref<3x64x64xf32, #tpu.memory_space<vmem>>, vector<1x64x64xf32>
    %192 = vector.shape_cast %191 : vector<1x64x64xf32> to vector<64x64xf32>
    %cst_136 = arith.constant dense<0.000000e+00> : vector<8x64xf32>
    %193 = tpu.matmul %135, %192, %cst_136 {dimension_numbers = #tpu.dot_dimension_numbers<[1], [0], [0], [1], [0, 0, 1, 1], [], []>} : vector<8x64xf32>, vector<64x64xf32>, vector<8x64xf32> -> vector<8x64xf32>
    %c0_137 = arith.constant 0 : index
    %c0_138 = arith.constant 0 : index
    %c0_139 = arith.constant 0 : index
    %194 = vector.load %arg8[%c0_137, %c0_138, %c0_139] : memref<3x1x64xf32, #tpu.memory_space<vmem>>, vector<1x1x64xf32>
    %195 = vector.shape_cast %194 : vector<1x1x64xf32> to vector<1x64xf32>
    %196 = vector.broadcast %195 : vector<1x64xf32> to vector<8x64xf32>
    %197 = arith.addf %193, %196 : vector<8x64xf32>
    %198 = arith.addf %190, %197 : vector<8x64xf32>
    %199 = arith.negf %198 : vector<8x64xf32>
    %200 = math.exp %199 : vector<8x64xf32>
    %cst_140 = arith.constant 1.000000e+00 : f32
    %201 = vector.broadcast %cst_140 : f32 to vector<8x64xf32>
    %202 = arith.addf %201, %200 : vector<8x64xf32>
    %203 = arith.divf %201, %202 : vector<8x64xf32>
    %c1_141 = arith.constant 1 : index
    %c0_142 = arith.constant 0 : index
    %c0_143 = arith.constant 0 : index
    %204 = vector.load %arg5[%c1_141, %c0_142, %c0_143] : memref<3x64x64xf32, #tpu.memory_space<vmem>>, vector<1x64x64xf32>
    %205 = vector.shape_cast %204 : vector<1x64x64xf32> to vector<64x64xf32>
    %cst_144 = arith.constant dense<0.000000e+00> : vector<8x64xf32>
    %206 = tpu.matmul %183, %205, %cst_144 {dimension_numbers = #tpu.dot_dimension_numbers<[1], [0], [0], [1], [0, 0, 1, 1], [], []>} : vector<8x64xf32>, vector<64x64xf32>, vector<8x64xf32> -> vector<8x64xf32>
    %c1_145 = arith.constant 1 : index
    %c0_146 = arith.constant 0 : index
    %c0_147 = arith.constant 0 : index
    %207 = vector.load %arg7[%c1_145, %c0_146, %c0_147] : memref<3x1x64xf32, #tpu.memory_space<vmem>>, vector<1x1x64xf32>
    %208 = vector.shape_cast %207 : vector<1x1x64xf32> to vector<1x64xf32>
    %209 = vector.broadcast %208 : vector<1x64xf32> to vector<8x64xf32>
    %210 = arith.addf %206, %209 : vector<8x64xf32>
    %c1_148 = arith.constant 1 : index
    %c0_149 = arith.constant 0 : index
    %c0_150 = arith.constant 0 : index
    %211 = vector.load %arg6[%c1_148, %c0_149, %c0_150] : memref<3x64x64xf32, #tpu.memory_space<vmem>>, vector<1x64x64xf32>
    %212 = vector.shape_cast %211 : vector<1x64x64xf32> to vector<64x64xf32>
    %cst_151 = arith.constant dense<0.000000e+00> : vector<8x64xf32>
    %213 = tpu.matmul %135, %212, %cst_151 {dimension_numbers = #tpu.dot_dimension_numbers<[1], [0], [0], [1], [0, 0, 1, 1], [], []>} : vector<8x64xf32>, vector<64x64xf32>, vector<8x64xf32> -> vector<8x64xf32>
    %c1_152 = arith.constant 1 : index
    %c0_153 = arith.constant 0 : index
    %c0_154 = arith.constant 0 : index
    %214 = vector.load %arg8[%c1_152, %c0_153, %c0_154] : memref<3x1x64xf32, #tpu.memory_space<vmem>>, vector<1x1x64xf32>
    %215 = vector.shape_cast %214 : vector<1x1x64xf32> to vector<1x64xf32>
    %216 = vector.broadcast %215 : vector<1x64xf32> to vector<8x64xf32>
    %217 = arith.addf %213, %216 : vector<8x64xf32>
    %218 = arith.addf %210, %217 : vector<8x64xf32>
    %219 = arith.negf %218 : vector<8x64xf32>
    %220 = math.exp %219 : vector<8x64xf32>
    %cst_155 = arith.constant 1.000000e+00 : f32
    %221 = vector.broadcast %cst_155 : f32 to vector<8x64xf32>
    %222 = arith.addf %221, %220 : vector<8x64xf32>
    %223 = arith.divf %221, %222 : vector<8x64xf32>
    %c2_156 = arith.constant 2 : index
    %c0_157 = arith.constant 0 : index
    %c0_158 = arith.constant 0 : index
    %224 = vector.load %arg5[%c2_156, %c0_157, %c0_158] : memref<3x64x64xf32, #tpu.memory_space<vmem>>, vector<1x64x64xf32>
    %225 = vector.shape_cast %224 : vector<1x64x64xf32> to vector<64x64xf32>
    %cst_159 = arith.constant dense<0.000000e+00> : vector<8x64xf32>
    %226 = tpu.matmul %183, %225, %cst_159 {dimension_numbers = #tpu.dot_dimension_numbers<[1], [0], [0], [1], [0, 0, 1, 1], [], []>} : vector<8x64xf32>, vector<64x64xf32>, vector<8x64xf32> -> vector<8x64xf32>
    %c2_160 = arith.constant 2 : index
    %c0_161 = arith.constant 0 : index
    %c0_162 = arith.constant 0 : index
    %227 = vector.load %arg7[%c2_160, %c0_161, %c0_162] : memref<3x1x64xf32, #tpu.memory_space<vmem>>, vector<1x1x64xf32>
    %228 = vector.shape_cast %227 : vector<1x1x64xf32> to vector<1x64xf32>
    %229 = vector.broadcast %228 : vector<1x64xf32> to vector<8x64xf32>
    %230 = arith.addf %226, %229 : vector<8x64xf32>
    %c2_163 = arith.constant 2 : index
    %c0_164 = arith.constant 0 : index
    %c0_165 = arith.constant 0 : index
    %231 = vector.load %arg6[%c2_163, %c0_164, %c0_165] : memref<3x64x64xf32, #tpu.memory_space<vmem>>, vector<1x64x64xf32>
    %232 = vector.shape_cast %231 : vector<1x64x64xf32> to vector<64x64xf32>
    %cst_166 = arith.constant dense<0.000000e+00> : vector<8x64xf32>
    %233 = tpu.matmul %135, %232, %cst_166 {dimension_numbers = #tpu.dot_dimension_numbers<[1], [0], [0], [1], [0, 0, 1, 1], [], []>} : vector<8x64xf32>, vector<64x64xf32>, vector<8x64xf32> -> vector<8x64xf32>
    %c2_167 = arith.constant 2 : index
    %c0_168 = arith.constant 0 : index
    %c0_169 = arith.constant 0 : index
    %234 = vector.load %arg8[%c2_167, %c0_168, %c0_169] : memref<3x1x64xf32, #tpu.memory_space<vmem>>, vector<1x1x64xf32>
    %235 = vector.shape_cast %234 : vector<1x1x64xf32> to vector<1x64xf32>
    %236 = vector.broadcast %235 : vector<1x64xf32> to vector<8x64xf32>
    %237 = arith.addf %233, %236 : vector<8x64xf32>
    %238 = arith.mulf %203, %237 : vector<8x64xf32>
    %239 = arith.addf %230, %238 : vector<8x64xf32>
    %240 = math.tanh %239 : vector<8x64xf32>
    %cst_170 = arith.constant 1.000000e+00 : f32
    %241 = vector.broadcast %cst_170 : f32 to vector<8x64xf32>
    %242 = arith.subf %241, %223 : vector<8x64xf32>
    %243 = arith.mulf %242, %240 : vector<8x64xf32>
    %244 = arith.mulf %223, %135 : vector<8x64xf32>
    %245 = arith.addf %243, %244 : vector<8x64xf32>
    %c2_i32 = arith.constant 2 : i32
    %c8_i32_171 = arith.constant 8 : i32
    %246 = arith.muli %c2_i32, %c8_i32_171 : i32
    %247 = arith.index_cast %246 : i32 to index
    %c0_172 = arith.constant 0 : index
    %248 = vector.load %arg12[%247, %c0_172] : memref<64x64xf32, #tpu.memory_space<vmem>>, vector<8x64xf32>
    %c0_173 = arith.constant 0 : index
    %c0_174 = arith.constant 0 : index
    %c0_175 = arith.constant 0 : index
    %249 = vector.load %arg2[%c0_173, %c0_174, %c0_175] : memref<3x64x64xf32, #tpu.memory_space<vmem>>, vector<1x64x64xf32>
    %250 = vector.shape_cast %249 : vector<1x64x64xf32> to vector<64x64xf32>
    %cst_176 = arith.constant dense<0.000000e+00> : vector<8x64xf32>
    %251 = tpu.matmul %183, %250, %cst_176 {dimension_numbers = #tpu.dot_dimension_numbers<[1], [0], [0], [1], [0, 0, 1, 1], [], []>} : vector<8x64xf32>, vector<64x64xf32>, vector<8x64xf32> -> vector<8x64xf32>
    %c0_177 = arith.constant 0 : index
    %c0_178 = arith.constant 0 : index
    %c0_179 = arith.constant 0 : index
    %252 = vector.load %arg4[%c0_177, %c0_178, %c0_179] : memref<3x1x64xf32, #tpu.memory_space<vmem>>, vector<1x1x64xf32>
    %253 = vector.shape_cast %252 : vector<1x1x64xf32> to vector<1x64xf32>
    %254 = vector.broadcast %253 : vector<1x64xf32> to vector<8x64xf32>
    %255 = arith.addf %251, %254 : vector<8x64xf32>
    %256 = arith.addf %248, %255 : vector<8x64xf32>
    %257 = arith.negf %256 : vector<8x64xf32>
    %258 = math.exp %257 : vector<8x64xf32>
    %cst_180 = arith.constant 1.000000e+00 : f32
    %259 = vector.broadcast %cst_180 : f32 to vector<8x64xf32>
    %260 = arith.addf %259, %258 : vector<8x64xf32>
    %261 = arith.divf %259, %260 : vector<8x64xf32>
    %262 = arith.index_cast %246 : i32 to index
    %c0_181 = arith.constant 0 : index
    %263 = vector.load %arg13[%262, %c0_181] : memref<64x64xf32, #tpu.memory_space<vmem>>, vector<8x64xf32>
    %c1_182 = arith.constant 1 : index
    %c0_183 = arith.constant 0 : index
    %c0_184 = arith.constant 0 : index
    %264 = vector.load %arg2[%c1_182, %c0_183, %c0_184] : memref<3x64x64xf32, #tpu.memory_space<vmem>>, vector<1x64x64xf32>
    %265 = vector.shape_cast %264 : vector<1x64x64xf32> to vector<64x64xf32>
    %cst_185 = arith.constant dense<0.000000e+00> : vector<8x64xf32>
    %266 = tpu.matmul %183, %265, %cst_185 {dimension_numbers = #tpu.dot_dimension_numbers<[1], [0], [0], [1], [0, 0, 1, 1], [], []>} : vector<8x64xf32>, vector<64x64xf32>, vector<8x64xf32> -> vector<8x64xf32>
    %c1_186 = arith.constant 1 : index
    %c0_187 = arith.constant 0 : index
    %c0_188 = arith.constant 0 : index
    %267 = vector.load %arg4[%c1_186, %c0_187, %c0_188] : memref<3x1x64xf32, #tpu.memory_space<vmem>>, vector<1x1x64xf32>
    %268 = vector.shape_cast %267 : vector<1x1x64xf32> to vector<1x64xf32>
    %269 = vector.broadcast %268 : vector<1x64xf32> to vector<8x64xf32>
    %270 = arith.addf %266, %269 : vector<8x64xf32>
    %271 = arith.addf %263, %270 : vector<8x64xf32>
    %272 = arith.negf %271 : vector<8x64xf32>
    %273 = math.exp %272 : vector<8x64xf32>
    %cst_189 = arith.constant 1.000000e+00 : f32
    %274 = vector.broadcast %cst_189 : f32 to vector<8x64xf32>
    %275 = arith.addf %274, %273 : vector<8x64xf32>
    %276 = arith.divf %274, %275 : vector<8x64xf32>
    %277 = arith.index_cast %246 : i32 to index
    %c0_190 = arith.constant 0 : index
    %278 = vector.load %arg14[%277, %c0_190] : memref<64x64xf32, #tpu.memory_space<vmem>>, vector<8x64xf32>
    %c2_191 = arith.constant 2 : index
    %c0_192 = arith.constant 0 : index
    %c0_193 = arith.constant 0 : index
    %279 = vector.load %arg2[%c2_191, %c0_192, %c0_193] : memref<3x64x64xf32, #tpu.memory_space<vmem>>, vector<1x64x64xf32>
    %280 = vector.shape_cast %279 : vector<1x64x64xf32> to vector<64x64xf32>
    %cst_194 = arith.constant dense<0.000000e+00> : vector<8x64xf32>
    %281 = tpu.matmul %183, %280, %cst_194 {dimension_numbers = #tpu.dot_dimension_numbers<[1], [0], [0], [1], [0, 0, 1, 1], [], []>} : vector<8x64xf32>, vector<64x64xf32>, vector<8x64xf32> -> vector<8x64xf32>
    %c2_195 = arith.constant 2 : index
    %c0_196 = arith.constant 0 : index
    %c0_197 = arith.constant 0 : index
    %282 = vector.load %arg4[%c2_195, %c0_196, %c0_197] : memref<3x1x64xf32, #tpu.memory_space<vmem>>, vector<1x1x64xf32>
    %283 = vector.shape_cast %282 : vector<1x1x64xf32> to vector<1x64xf32>
    %284 = vector.broadcast %283 : vector<1x64xf32> to vector<8x64xf32>
    %285 = arith.addf %281, %284 : vector<8x64xf32>
    %286 = arith.mulf %261, %285 : vector<8x64xf32>
    %287 = arith.addf %278, %286 : vector<8x64xf32>
    %288 = math.tanh %287 : vector<8x64xf32>
    %cst_198 = arith.constant 1.000000e+00 : f32
    %289 = vector.broadcast %cst_198 : f32 to vector<8x64xf32>
    %290 = arith.subf %289, %276 : vector<8x64xf32>
    %291 = arith.mulf %290, %288 : vector<8x64xf32>
    %292 = arith.mulf %276, %183 : vector<8x64xf32>
    %293 = arith.addf %291, %292 : vector<8x64xf32>
    %c0_199 = arith.constant 0 : index
    %c0_200 = arith.constant 0 : index
    %c0_201 = arith.constant 0 : index
    %294 = vector.load %arg5[%c0_199, %c0_200, %c0_201] : memref<3x64x64xf32, #tpu.memory_space<vmem>>, vector<1x64x64xf32>
    %295 = vector.shape_cast %294 : vector<1x64x64xf32> to vector<64x64xf32>
    %cst_202 = arith.constant dense<0.000000e+00> : vector<8x64xf32>
    %296 = tpu.matmul %293, %295, %cst_202 {dimension_numbers = #tpu.dot_dimension_numbers<[1], [0], [0], [1], [0, 0, 1, 1], [], []>} : vector<8x64xf32>, vector<64x64xf32>, vector<8x64xf32> -> vector<8x64xf32>
    %c0_203 = arith.constant 0 : index
    %c0_204 = arith.constant 0 : index
    %c0_205 = arith.constant 0 : index
    %297 = vector.load %arg7[%c0_203, %c0_204, %c0_205] : memref<3x1x64xf32, #tpu.memory_space<vmem>>, vector<1x1x64xf32>
    %298 = vector.shape_cast %297 : vector<1x1x64xf32> to vector<1x64xf32>
    %299 = vector.broadcast %298 : vector<1x64xf32> to vector<8x64xf32>
    %300 = arith.addf %296, %299 : vector<8x64xf32>
    %c0_206 = arith.constant 0 : index
    %c0_207 = arith.constant 0 : index
    %c0_208 = arith.constant 0 : index
    %301 = vector.load %arg6[%c0_206, %c0_207, %c0_208] : memref<3x64x64xf32, #tpu.memory_space<vmem>>, vector<1x64x64xf32>
    %302 = vector.shape_cast %301 : vector<1x64x64xf32> to vector<64x64xf32>
    %cst_209 = arith.constant dense<0.000000e+00> : vector<8x64xf32>
    %303 = tpu.matmul %245, %302, %cst_209 {dimension_numbers = #tpu.dot_dimension_numbers<[1], [0], [0], [1], [0, 0, 1, 1], [], []>} : vector<8x64xf32>, vector<64x64xf32>, vector<8x64xf32> -> vector<8x64xf32>
    %c0_210 = arith.constant 0 : index
    %c0_211 = arith.constant 0 : index
    %c0_212 = arith.constant 0 : index
    %304 = vector.load %arg8[%c0_210, %c0_211, %c0_212] : memref<3x1x64xf32, #tpu.memory_space<vmem>>, vector<1x1x64xf32>
    %305 = vector.shape_cast %304 : vector<1x1x64xf32> to vector<1x64xf32>
    %306 = vector.broadcast %305 : vector<1x64xf32> to vector<8x64xf32>
    %307 = arith.addf %303, %306 : vector<8x64xf32>
    %308 = arith.addf %300, %307 : vector<8x64xf32>
    %309 = arith.negf %308 : vector<8x64xf32>
    %310 = math.exp %309 : vector<8x64xf32>
    %cst_213 = arith.constant 1.000000e+00 : f32
    %311 = vector.broadcast %cst_213 : f32 to vector<8x64xf32>
    %312 = arith.addf %311, %310 : vector<8x64xf32>
    %313 = arith.divf %311, %312 : vector<8x64xf32>
    %c1_214 = arith.constant 1 : index
    %c0_215 = arith.constant 0 : index
    %c0_216 = arith.constant 0 : index
    %314 = vector.load %arg5[%c1_214, %c0_215, %c0_216] : memref<3x64x64xf32, #tpu.memory_space<vmem>>, vector<1x64x64xf32>
    %315 = vector.shape_cast %314 : vector<1x64x64xf32> to vector<64x64xf32>
    %cst_217 = arith.constant dense<0.000000e+00> : vector<8x64xf32>
    %316 = tpu.matmul %293, %315, %cst_217 {dimension_numbers = #tpu.dot_dimension_numbers<[1], [0], [0], [1], [0, 0, 1, 1], [], []>} : vector<8x64xf32>, vector<64x64xf32>, vector<8x64xf32> -> vector<8x64xf32>
    %c1_218 = arith.constant 1 : index
    %c0_219 = arith.constant 0 : index
    %c0_220 = arith.constant 0 : index
    %317 = vector.load %arg7[%c1_218, %c0_219, %c0_220] : memref<3x1x64xf32, #tpu.memory_space<vmem>>, vector<1x1x64xf32>
    %318 = vector.shape_cast %317 : vector<1x1x64xf32> to vector<1x64xf32>
    %319 = vector.broadcast %318 : vector<1x64xf32> to vector<8x64xf32>
    %320 = arith.addf %316, %319 : vector<8x64xf32>
    %c1_221 = arith.constant 1 : index
    %c0_222 = arith.constant 0 : index
    %c0_223 = arith.constant 0 : index
    %321 = vector.load %arg6[%c1_221, %c0_222, %c0_223] : memref<3x64x64xf32, #tpu.memory_space<vmem>>, vector<1x64x64xf32>
    %322 = vector.shape_cast %321 : vector<1x64x64xf32> to vector<64x64xf32>
    %cst_224 = arith.constant dense<0.000000e+00> : vector<8x64xf32>
    %323 = tpu.matmul %245, %322, %cst_224 {dimension_numbers = #tpu.dot_dimension_numbers<[1], [0], [0], [1], [0, 0, 1, 1], [], []>} : vector<8x64xf32>, vector<64x64xf32>, vector<8x64xf32> -> vector<8x64xf32>
    %c1_225 = arith.constant 1 : index
    %c0_226 = arith.constant 0 : index
    %c0_227 = arith.constant 0 : index
    %324 = vector.load %arg8[%c1_225, %c0_226, %c0_227] : memref<3x1x64xf32, #tpu.memory_space<vmem>>, vector<1x1x64xf32>
    %325 = vector.shape_cast %324 : vector<1x1x64xf32> to vector<1x64xf32>
    %326 = vector.broadcast %325 : vector<1x64xf32> to vector<8x64xf32>
    %327 = arith.addf %323, %326 : vector<8x64xf32>
    %328 = arith.addf %320, %327 : vector<8x64xf32>
    %329 = arith.negf %328 : vector<8x64xf32>
    %330 = math.exp %329 : vector<8x64xf32>
    %cst_228 = arith.constant 1.000000e+00 : f32
    %331 = vector.broadcast %cst_228 : f32 to vector<8x64xf32>
    %332 = arith.addf %331, %330 : vector<8x64xf32>
    %333 = arith.divf %331, %332 : vector<8x64xf32>
    %c2_229 = arith.constant 2 : index
    %c0_230 = arith.constant 0 : index
    %c0_231 = arith.constant 0 : index
    %334 = vector.load %arg5[%c2_229, %c0_230, %c0_231] : memref<3x64x64xf32, #tpu.memory_space<vmem>>, vector<1x64x64xf32>
    %335 = vector.shape_cast %334 : vector<1x64x64xf32> to vector<64x64xf32>
    %cst_232 = arith.constant dense<0.000000e+00> : vector<8x64xf32>
    %336 = tpu.matmul %293, %335, %cst_232 {dimension_numbers = #tpu.dot_dimension_numbers<[1], [0], [0], [1], [0, 0, 1, 1], [], []>} : vector<8x64xf32>, vector<64x64xf32>, vector<8x64xf32> -> vector<8x64xf32>
    %c2_233 = arith.constant 2 : index
    %c0_234 = arith.constant 0 : index
    %c0_235 = arith.constant 0 : index
    %337 = vector.load %arg7[%c2_233, %c0_234, %c0_235] : memref<3x1x64xf32, #tpu.memory_space<vmem>>, vector<1x1x64xf32>
    %338 = vector.shape_cast %337 : vector<1x1x64xf32> to vector<1x64xf32>
    %339 = vector.broadcast %338 : vector<1x64xf32> to vector<8x64xf32>
    %340 = arith.addf %336, %339 : vector<8x64xf32>
    %c2_236 = arith.constant 2 : index
    %c0_237 = arith.constant 0 : index
    %c0_238 = arith.constant 0 : index
    %341 = vector.load %arg6[%c2_236, %c0_237, %c0_238] : memref<3x64x64xf32, #tpu.memory_space<vmem>>, vector<1x64x64xf32>
    %342 = vector.shape_cast %341 : vector<1x64x64xf32> to vector<64x64xf32>
    %cst_239 = arith.constant dense<0.000000e+00> : vector<8x64xf32>
    %343 = tpu.matmul %245, %342, %cst_239 {dimension_numbers = #tpu.dot_dimension_numbers<[1], [0], [0], [1], [0, 0, 1, 1], [], []>} : vector<8x64xf32>, vector<64x64xf32>, vector<8x64xf32> -> vector<8x64xf32>
    %c2_240 = arith.constant 2 : index
    %c0_241 = arith.constant 0 : index
    %c0_242 = arith.constant 0 : index
    %344 = vector.load %arg8[%c2_240, %c0_241, %c0_242] : memref<3x1x64xf32, #tpu.memory_space<vmem>>, vector<1x1x64xf32>
    %345 = vector.shape_cast %344 : vector<1x1x64xf32> to vector<1x64xf32>
    %346 = vector.broadcast %345 : vector<1x64xf32> to vector<8x64xf32>
    %347 = arith.addf %343, %346 : vector<8x64xf32>
    %348 = arith.mulf %313, %347 : vector<8x64xf32>
    %349 = arith.addf %340, %348 : vector<8x64xf32>
    %350 = math.tanh %349 : vector<8x64xf32>
    %cst_243 = arith.constant 1.000000e+00 : f32
    %351 = vector.broadcast %cst_243 : f32 to vector<8x64xf32>
    %352 = arith.subf %351, %333 : vector<8x64xf32>
    %353 = arith.mulf %352, %350 : vector<8x64xf32>
    %354 = arith.mulf %333, %245 : vector<8x64xf32>
    %355 = arith.addf %353, %354 : vector<8x64xf32>
    %c3_i32 = arith.constant 3 : i32
    %c8_i32_244 = arith.constant 8 : i32
    %356 = arith.muli %c3_i32, %c8_i32_244 : i32
    %357 = arith.index_cast %356 : i32 to index
    %c0_245 = arith.constant 0 : index
    %358 = vector.load %arg12[%357, %c0_245] : memref<64x64xf32, #tpu.memory_space<vmem>>, vector<8x64xf32>
    %c0_246 = arith.constant 0 : index
    %c0_247 = arith.constant 0 : index
    %c0_248 = arith.constant 0 : index
    %359 = vector.load %arg2[%c0_246, %c0_247, %c0_248] : memref<3x64x64xf32, #tpu.memory_space<vmem>>, vector<1x64x64xf32>
    %360 = vector.shape_cast %359 : vector<1x64x64xf32> to vector<64x64xf32>
    %cst_249 = arith.constant dense<0.000000e+00> : vector<8x64xf32>
    %361 = tpu.matmul %293, %360, %cst_249 {dimension_numbers = #tpu.dot_dimension_numbers<[1], [0], [0], [1], [0, 0, 1, 1], [], []>} : vector<8x64xf32>, vector<64x64xf32>, vector<8x64xf32> -> vector<8x64xf32>
    %c0_250 = arith.constant 0 : index
    %c0_251 = arith.constant 0 : index
    %c0_252 = arith.constant 0 : index
    %362 = vector.load %arg4[%c0_250, %c0_251, %c0_252] : memref<3x1x64xf32, #tpu.memory_space<vmem>>, vector<1x1x64xf32>
    %363 = vector.shape_cast %362 : vector<1x1x64xf32> to vector<1x64xf32>
    %364 = vector.broadcast %363 : vector<1x64xf32> to vector<8x64xf32>
    %365 = arith.addf %361, %364 : vector<8x64xf32>
    %366 = arith.addf %358, %365 : vector<8x64xf32>
    %367 = arith.negf %366 : vector<8x64xf32>
    %368 = math.exp %367 : vector<8x64xf32>
    %cst_253 = arith.constant 1.000000e+00 : f32
    %369 = vector.broadcast %cst_253 : f32 to vector<8x64xf32>
    %370 = arith.addf %369, %368 : vector<8x64xf32>
    %371 = arith.divf %369, %370 : vector<8x64xf32>
    %372 = arith.index_cast %356 : i32 to index
    %c0_254 = arith.constant 0 : index
    %373 = vector.load %arg13[%372, %c0_254] : memref<64x64xf32, #tpu.memory_space<vmem>>, vector<8x64xf32>
    %c1_255 = arith.constant 1 : index
    %c0_256 = arith.constant 0 : index
    %c0_257 = arith.constant 0 : index
    %374 = vector.load %arg2[%c1_255, %c0_256, %c0_257] : memref<3x64x64xf32, #tpu.memory_space<vmem>>, vector<1x64x64xf32>
    %375 = vector.shape_cast %374 : vector<1x64x64xf32> to vector<64x64xf32>
    %cst_258 = arith.constant dense<0.000000e+00> : vector<8x64xf32>
    %376 = tpu.matmul %293, %375, %cst_258 {dimension_numbers = #tpu.dot_dimension_numbers<[1], [0], [0], [1], [0, 0, 1, 1], [], []>} : vector<8x64xf32>, vector<64x64xf32>, vector<8x64xf32> -> vector<8x64xf32>
    %c1_259 = arith.constant 1 : index
    %c0_260 = arith.constant 0 : index
    %c0_261 = arith.constant 0 : index
    %377 = vector.load %arg4[%c1_259, %c0_260, %c0_261] : memref<3x1x64xf32, #tpu.memory_space<vmem>>, vector<1x1x64xf32>
    %378 = vector.shape_cast %377 : vector<1x1x64xf32> to vector<1x64xf32>
    %379 = vector.broadcast %378 : vector<1x64xf32> to vector<8x64xf32>
    %380 = arith.addf %376, %379 : vector<8x64xf32>
    %381 = arith.addf %373, %380 : vector<8x64xf32>
    %382 = arith.negf %381 : vector<8x64xf32>
    %383 = math.exp %382 : vector<8x64xf32>
    %cst_262 = arith.constant 1.000000e+00 : f32
    %384 = vector.broadcast %cst_262 : f32 to vector<8x64xf32>
    %385 = arith.addf %384, %383 : vector<8x64xf32>
    %386 = arith.divf %384, %385 : vector<8x64xf32>
    %387 = arith.index_cast %356 : i32 to index
    %c0_263 = arith.constant 0 : index
    %388 = vector.load %arg14[%387, %c0_263] : memref<64x64xf32, #tpu.memory_space<vmem>>, vector<8x64xf32>
    %c2_264 = arith.constant 2 : index
    %c0_265 = arith.constant 0 : index
    %c0_266 = arith.constant 0 : index
    %389 = vector.load %arg2[%c2_264, %c0_265, %c0_266] : memref<3x64x64xf32, #tpu.memory_space<vmem>>, vector<1x64x64xf32>
    %390 = vector.shape_cast %389 : vector<1x64x64xf32> to vector<64x64xf32>
    %cst_267 = arith.constant dense<0.000000e+00> : vector<8x64xf32>
    %391 = tpu.matmul %293, %390, %cst_267 {dimension_numbers = #tpu.dot_dimension_numbers<[1], [0], [0], [1], [0, 0, 1, 1], [], []>} : vector<8x64xf32>, vector<64x64xf32>, vector<8x64xf32> -> vector<8x64xf32>
    %c2_268 = arith.constant 2 : index
    %c0_269 = arith.constant 0 : index
    %c0_270 = arith.constant 0 : index
    %392 = vector.load %arg4[%c2_268, %c0_269, %c0_270] : memref<3x1x64xf32, #tpu.memory_space<vmem>>, vector<1x1x64xf32>
    %393 = vector.shape_cast %392 : vector<1x1x64xf32> to vector<1x64xf32>
    %394 = vector.broadcast %393 : vector<1x64xf32> to vector<8x64xf32>
    %395 = arith.addf %391, %394 : vector<8x64xf32>
    %396 = arith.mulf %371, %395 : vector<8x64xf32>
    %397 = arith.addf %388, %396 : vector<8x64xf32>
    %398 = math.tanh %397 : vector<8x64xf32>
    %cst_271 = arith.constant 1.000000e+00 : f32
    %399 = vector.broadcast %cst_271 : f32 to vector<8x64xf32>
    %400 = arith.subf %399, %386 : vector<8x64xf32>
    %401 = arith.mulf %400, %398 : vector<8x64xf32>
    %402 = arith.mulf %386, %293 : vector<8x64xf32>
    %403 = arith.addf %401, %402 : vector<8x64xf32>
    %c0_272 = arith.constant 0 : index
    %c0_273 = arith.constant 0 : index
    %c0_274 = arith.constant 0 : index
    %404 = vector.load %arg5[%c0_272, %c0_273, %c0_274] : memref<3x64x64xf32, #tpu.memory_space<vmem>>, vector<1x64x64xf32>
    %405 = vector.shape_cast %404 : vector<1x64x64xf32> to vector<64x64xf32>
    %cst_275 = arith.constant dense<0.000000e+00> : vector<8x64xf32>
    %406 = tpu.matmul %403, %405, %cst_275 {dimension_numbers = #tpu.dot_dimension_numbers<[1], [0], [0], [1], [0, 0, 1, 1], [], []>} : vector<8x64xf32>, vector<64x64xf32>, vector<8x64xf32> -> vector<8x64xf32>
    %c0_276 = arith.constant 0 : index
    %c0_277 = arith.constant 0 : index
    %c0_278 = arith.constant 0 : index
    %407 = vector.load %arg7[%c0_276, %c0_277, %c0_278] : memref<3x1x64xf32, #tpu.memory_space<vmem>>, vector<1x1x64xf32>
    %408 = vector.shape_cast %407 : vector<1x1x64xf32> to vector<1x64xf32>
    %409 = vector.broadcast %408 : vector<1x64xf32> to vector<8x64xf32>
    %410 = arith.addf %406, %409 : vector<8x64xf32>
    %c0_279 = arith.constant 0 : index
    %c0_280 = arith.constant 0 : index
    %c0_281 = arith.constant 0 : index
    %411 = vector.load %arg6[%c0_279, %c0_280, %c0_281] : memref<3x64x64xf32, #tpu.memory_space<vmem>>, vector<1x64x64xf32>
    %412 = vector.shape_cast %411 : vector<1x64x64xf32> to vector<64x64xf32>
    %cst_282 = arith.constant dense<0.000000e+00> : vector<8x64xf32>
    %413 = tpu.matmul %355, %412, %cst_282 {dimension_numbers = #tpu.dot_dimension_numbers<[1], [0], [0], [1], [0, 0, 1, 1], [], []>} : vector<8x64xf32>, vector<64x64xf32>, vector<8x64xf32> -> vector<8x64xf32>
    %c0_283 = arith.constant 0 : index
    %c0_284 = arith.constant 0 : index
    %c0_285 = arith.constant 0 : index
    %414 = vector.load %arg8[%c0_283, %c0_284, %c0_285] : memref<3x1x64xf32, #tpu.memory_space<vmem>>, vector<1x1x64xf32>
    %415 = vector.shape_cast %414 : vector<1x1x64xf32> to vector<1x64xf32>
    %416 = vector.broadcast %415 : vector<1x64xf32> to vector<8x64xf32>
    %417 = arith.addf %413, %416 : vector<8x64xf32>
    %418 = arith.addf %410, %417 : vector<8x64xf32>
    %419 = arith.negf %418 : vector<8x64xf32>
    %420 = math.exp %419 : vector<8x64xf32>
    %cst_286 = arith.constant 1.000000e+00 : f32
    %421 = vector.broadcast %cst_286 : f32 to vector<8x64xf32>
    %422 = arith.addf %421, %420 : vector<8x64xf32>
    %423 = arith.divf %421, %422 : vector<8x64xf32>
    %c1_287 = arith.constant 1 : index
    %c0_288 = arith.constant 0 : index
    %c0_289 = arith.constant 0 : index
    %424 = vector.load %arg5[%c1_287, %c0_288, %c0_289] : memref<3x64x64xf32, #tpu.memory_space<vmem>>, vector<1x64x64xf32>
    %425 = vector.shape_cast %424 : vector<1x64x64xf32> to vector<64x64xf32>
    %cst_290 = arith.constant dense<0.000000e+00> : vector<8x64xf32>
    %426 = tpu.matmul %403, %425, %cst_290 {dimension_numbers = #tpu.dot_dimension_numbers<[1], [0], [0], [1], [0, 0, 1, 1], [], []>} : vector<8x64xf32>, vector<64x64xf32>, vector<8x64xf32> -> vector<8x64xf32>
    %c1_291 = arith.constant 1 : index
    %c0_292 = arith.constant 0 : index
    %c0_293 = arith.constant 0 : index
    %427 = vector.load %arg7[%c1_291, %c0_292, %c0_293] : memref<3x1x64xf32, #tpu.memory_space<vmem>>, vector<1x1x64xf32>
    %428 = vector.shape_cast %427 : vector<1x1x64xf32> to vector<1x64xf32>
    %429 = vector.broadcast %428 : vector<1x64xf32> to vector<8x64xf32>
    %430 = arith.addf %426, %429 : vector<8x64xf32>
    %c1_294 = arith.constant 1 : index
    %c0_295 = arith.constant 0 : index
    %c0_296 = arith.constant 0 : index
    %431 = vector.load %arg6[%c1_294, %c0_295, %c0_296] : memref<3x64x64xf32, #tpu.memory_space<vmem>>, vector<1x64x64xf32>
    %432 = vector.shape_cast %431 : vector<1x64x64xf32> to vector<64x64xf32>
    %cst_297 = arith.constant dense<0.000000e+00> : vector<8x64xf32>
    %433 = tpu.matmul %355, %432, %cst_297 {dimension_numbers = #tpu.dot_dimension_numbers<[1], [0], [0], [1], [0, 0, 1, 1], [], []>} : vector<8x64xf32>, vector<64x64xf32>, vector<8x64xf32> -> vector<8x64xf32>
    %c1_298 = arith.constant 1 : index
    %c0_299 = arith.constant 0 : index
    %c0_300 = arith.constant 0 : index
    %434 = vector.load %arg8[%c1_298, %c0_299, %c0_300] : memref<3x1x64xf32, #tpu.memory_space<vmem>>, vector<1x1x64xf32>
    %435 = vector.shape_cast %434 : vector<1x1x64xf32> to vector<1x64xf32>
    %436 = vector.broadcast %435 : vector<1x64xf32> to vector<8x64xf32>
    %437 = arith.addf %433, %436 : vector<8x64xf32>
    %438 = arith.addf %430, %437 : vector<8x64xf32>
    %439 = arith.negf %438 : vector<8x64xf32>
    %440 = math.exp %439 : vector<8x64xf32>
    %cst_301 = arith.constant 1.000000e+00 : f32
    %441 = vector.broadcast %cst_301 : f32 to vector<8x64xf32>
    %442 = arith.addf %441, %440 : vector<8x64xf32>
    %443 = arith.divf %441, %442 : vector<8x64xf32>
    %c2_302 = arith.constant 2 : index
    %c0_303 = arith.constant 0 : index
    %c0_304 = arith.constant 0 : index
    %444 = vector.load %arg5[%c2_302, %c0_303, %c0_304] : memref<3x64x64xf32, #tpu.memory_space<vmem>>, vector<1x64x64xf32>
    %445 = vector.shape_cast %444 : vector<1x64x64xf32> to vector<64x64xf32>
    %cst_305 = arith.constant dense<0.000000e+00> : vector<8x64xf32>
    %446 = tpu.matmul %403, %445, %cst_305 {dimension_numbers = #tpu.dot_dimension_numbers<[1], [0], [0], [1], [0, 0, 1, 1], [], []>} : vector<8x64xf32>, vector<64x64xf32>, vector<8x64xf32> -> vector<8x64xf32>
    %c2_306 = arith.constant 2 : index
    %c0_307 = arith.constant 0 : index
    %c0_308 = arith.constant 0 : index
    %447 = vector.load %arg7[%c2_306, %c0_307, %c0_308] : memref<3x1x64xf32, #tpu.memory_space<vmem>>, vector<1x1x64xf32>
    %448 = vector.shape_cast %447 : vector<1x1x64xf32> to vector<1x64xf32>
    %449 = vector.broadcast %448 : vector<1x64xf32> to vector<8x64xf32>
    %450 = arith.addf %446, %449 : vector<8x64xf32>
    %c2_309 = arith.constant 2 : index
    %c0_310 = arith.constant 0 : index
    %c0_311 = arith.constant 0 : index
    %451 = vector.load %arg6[%c2_309, %c0_310, %c0_311] : memref<3x64x64xf32, #tpu.memory_space<vmem>>, vector<1x64x64xf32>
    %452 = vector.shape_cast %451 : vector<1x64x64xf32> to vector<64x64xf32>
    %cst_312 = arith.constant dense<0.000000e+00> : vector<8x64xf32>
    %453 = tpu.matmul %355, %452, %cst_312 {dimension_numbers = #tpu.dot_dimension_numbers<[1], [0], [0], [1], [0, 0, 1, 1], [], []>} : vector<8x64xf32>, vector<64x64xf32>, vector<8x64xf32> -> vector<8x64xf32>
    %c2_313 = arith.constant 2 : index
    %c0_314 = arith.constant 0 : index
    %c0_315 = arith.constant 0 : index
    %454 = vector.load %arg8[%c2_313, %c0_314, %c0_315] : memref<3x1x64xf32, #tpu.memory_space<vmem>>, vector<1x1x64xf32>
    %455 = vector.shape_cast %454 : vector<1x1x64xf32> to vector<1x64xf32>
    %456 = vector.broadcast %455 : vector<1x64xf32> to vector<8x64xf32>
    %457 = arith.addf %453, %456 : vector<8x64xf32>
    %458 = arith.mulf %423, %457 : vector<8x64xf32>
    %459 = arith.addf %450, %458 : vector<8x64xf32>
    %460 = math.tanh %459 : vector<8x64xf32>
    %cst_316 = arith.constant 1.000000e+00 : f32
    %461 = vector.broadcast %cst_316 : f32 to vector<8x64xf32>
    %462 = arith.subf %461, %443 : vector<8x64xf32>
    %463 = arith.mulf %462, %460 : vector<8x64xf32>
    %464 = arith.mulf %443, %355 : vector<8x64xf32>
    %465 = arith.addf %463, %464 : vector<8x64xf32>
    %c4_i32 = arith.constant 4 : i32
    %c8_i32_317 = arith.constant 8 : i32
    %466 = arith.muli %c4_i32, %c8_i32_317 : i32
    %467 = arith.index_cast %466 : i32 to index
    %c0_318 = arith.constant 0 : index
    %468 = vector.load %arg12[%467, %c0_318] : memref<64x64xf32, #tpu.memory_space<vmem>>, vector<8x64xf32>
    %c0_319 = arith.constant 0 : index
    %c0_320 = arith.constant 0 : index
    %c0_321 = arith.constant 0 : index
    %469 = vector.load %arg2[%c0_319, %c0_320, %c0_321] : memref<3x64x64xf32, #tpu.memory_space<vmem>>, vector<1x64x64xf32>
    %470 = vector.shape_cast %469 : vector<1x64x64xf32> to vector<64x64xf32>
    %cst_322 = arith.constant dense<0.000000e+00> : vector<8x64xf32>
    %471 = tpu.matmul %403, %470, %cst_322 {dimension_numbers = #tpu.dot_dimension_numbers<[1], [0], [0], [1], [0, 0, 1, 1], [], []>} : vector<8x64xf32>, vector<64x64xf32>, vector<8x64xf32> -> vector<8x64xf32>
    %c0_323 = arith.constant 0 : index
    %c0_324 = arith.constant 0 : index
    %c0_325 = arith.constant 0 : index
    %472 = vector.load %arg4[%c0_323, %c0_324, %c0_325] : memref<3x1x64xf32, #tpu.memory_space<vmem>>, vector<1x1x64xf32>
    %473 = vector.shape_cast %472 : vector<1x1x64xf32> to vector<1x64xf32>
    %474 = vector.broadcast %473 : vector<1x64xf32> to vector<8x64xf32>
    %475 = arith.addf %471, %474 : vector<8x64xf32>
    %476 = arith.addf %468, %475 : vector<8x64xf32>
    %477 = arith.negf %476 : vector<8x64xf32>
    %478 = math.exp %477 : vector<8x64xf32>
    %cst_326 = arith.constant 1.000000e+00 : f32
    %479 = vector.broadcast %cst_326 : f32 to vector<8x64xf32>
    %480 = arith.addf %479, %478 : vector<8x64xf32>
    %481 = arith.divf %479, %480 : vector<8x64xf32>
    %482 = arith.index_cast %466 : i32 to index
    %c0_327 = arith.constant 0 : index
    %483 = vector.load %arg13[%482, %c0_327] : memref<64x64xf32, #tpu.memory_space<vmem>>, vector<8x64xf32>
    %c1_328 = arith.constant 1 : index
    %c0_329 = arith.constant 0 : index
    %c0_330 = arith.constant 0 : index
    %484 = vector.load %arg2[%c1_328, %c0_329, %c0_330] : memref<3x64x64xf32, #tpu.memory_space<vmem>>, vector<1x64x64xf32>
    %485 = vector.shape_cast %484 : vector<1x64x64xf32> to vector<64x64xf32>
    %cst_331 = arith.constant dense<0.000000e+00> : vector<8x64xf32>
    %486 = tpu.matmul %403, %485, %cst_331 {dimension_numbers = #tpu.dot_dimension_numbers<[1], [0], [0], [1], [0, 0, 1, 1], [], []>} : vector<8x64xf32>, vector<64x64xf32>, vector<8x64xf32> -> vector<8x64xf32>
    %c1_332 = arith.constant 1 : index
    %c0_333 = arith.constant 0 : index
    %c0_334 = arith.constant 0 : index
    %487 = vector.load %arg4[%c1_332, %c0_333, %c0_334] : memref<3x1x64xf32, #tpu.memory_space<vmem>>, vector<1x1x64xf32>
    %488 = vector.shape_cast %487 : vector<1x1x64xf32> to vector<1x64xf32>
    %489 = vector.broadcast %488 : vector<1x64xf32> to vector<8x64xf32>
    %490 = arith.addf %486, %489 : vector<8x64xf32>
    %491 = arith.addf %483, %490 : vector<8x64xf32>
    %492 = arith.negf %491 : vector<8x64xf32>
    %493 = math.exp %492 : vector<8x64xf32>
    %cst_335 = arith.constant 1.000000e+00 : f32
    %494 = vector.broadcast %cst_335 : f32 to vector<8x64xf32>
    %495 = arith.addf %494, %493 : vector<8x64xf32>
    %496 = arith.divf %494, %495 : vector<8x64xf32>
    %497 = arith.index_cast %466 : i32 to index
    %c0_336 = arith.constant 0 : index
    %498 = vector.load %arg14[%497, %c0_336] : memref<64x64xf32, #tpu.memory_space<vmem>>, vector<8x64xf32>
    %c2_337 = arith.constant 2 : index
    %c0_338 = arith.constant 0 : index
    %c0_339 = arith.constant 0 : index
    %499 = vector.load %arg2[%c2_337, %c0_338, %c0_339] : memref<3x64x64xf32, #tpu.memory_space<vmem>>, vector<1x64x64xf32>
    %500 = vector.shape_cast %499 : vector<1x64x64xf32> to vector<64x64xf32>
    %cst_340 = arith.constant dense<0.000000e+00> : vector<8x64xf32>
    %501 = tpu.matmul %403, %500, %cst_340 {dimension_numbers = #tpu.dot_dimension_numbers<[1], [0], [0], [1], [0, 0, 1, 1], [], []>} : vector<8x64xf32>, vector<64x64xf32>, vector<8x64xf32> -> vector<8x64xf32>
    %c2_341 = arith.constant 2 : index
    %c0_342 = arith.constant 0 : index
    %c0_343 = arith.constant 0 : index
    %502 = vector.load %arg4[%c2_341, %c0_342, %c0_343] : memref<3x1x64xf32, #tpu.memory_space<vmem>>, vector<1x1x64xf32>
    %503 = vector.shape_cast %502 : vector<1x1x64xf32> to vector<1x64xf32>
    %504 = vector.broadcast %503 : vector<1x64xf32> to vector<8x64xf32>
    %505 = arith.addf %501, %504 : vector<8x64xf32>
    %506 = arith.mulf %481, %505 : vector<8x64xf32>
    %507 = arith.addf %498, %506 : vector<8x64xf32>
    %508 = math.tanh %507 : vector<8x64xf32>
    %cst_344 = arith.constant 1.000000e+00 : f32
    %509 = vector.broadcast %cst_344 : f32 to vector<8x64xf32>
    %510 = arith.subf %509, %496 : vector<8x64xf32>
    %511 = arith.mulf %510, %508 : vector<8x64xf32>
    %512 = arith.mulf %496, %403 : vector<8x64xf32>
    %513 = arith.addf %511, %512 : vector<8x64xf32>
    %c0_345 = arith.constant 0 : index
    %c0_346 = arith.constant 0 : index
    %c0_347 = arith.constant 0 : index
    %514 = vector.load %arg5[%c0_345, %c0_346, %c0_347] : memref<3x64x64xf32, #tpu.memory_space<vmem>>, vector<1x64x64xf32>
    %515 = vector.shape_cast %514 : vector<1x64x64xf32> to vector<64x64xf32>
    %cst_348 = arith.constant dense<0.000000e+00> : vector<8x64xf32>
    %516 = tpu.matmul %513, %515, %cst_348 {dimension_numbers = #tpu.dot_dimension_numbers<[1], [0], [0], [1], [0, 0, 1, 1], [], []>} : vector<8x64xf32>, vector<64x64xf32>, vector<8x64xf32> -> vector<8x64xf32>
    %c0_349 = arith.constant 0 : index
    %c0_350 = arith.constant 0 : index
    %c0_351 = arith.constant 0 : index
    %517 = vector.load %arg7[%c0_349, %c0_350, %c0_351] : memref<3x1x64xf32, #tpu.memory_space<vmem>>, vector<1x1x64xf32>
    %518 = vector.shape_cast %517 : vector<1x1x64xf32> to vector<1x64xf32>
    %519 = vector.broadcast %518 : vector<1x64xf32> to vector<8x64xf32>
    %520 = arith.addf %516, %519 : vector<8x64xf32>
    %c0_352 = arith.constant 0 : index
    %c0_353 = arith.constant 0 : index
    %c0_354 = arith.constant 0 : index
    %521 = vector.load %arg6[%c0_352, %c0_353, %c0_354] : memref<3x64x64xf32, #tpu.memory_space<vmem>>, vector<1x64x64xf32>
    %522 = vector.shape_cast %521 : vector<1x64x64xf32> to vector<64x64xf32>
    %cst_355 = arith.constant dense<0.000000e+00> : vector<8x64xf32>
    %523 = tpu.matmul %465, %522, %cst_355 {dimension_numbers = #tpu.dot_dimension_numbers<[1], [0], [0], [1], [0, 0, 1, 1], [], []>} : vector<8x64xf32>, vector<64x64xf32>, vector<8x64xf32> -> vector<8x64xf32>
    %c0_356 = arith.constant 0 : index
    %c0_357 = arith.constant 0 : index
    %c0_358 = arith.constant 0 : index
    %524 = vector.load %arg8[%c0_356, %c0_357, %c0_358] : memref<3x1x64xf32, #tpu.memory_space<vmem>>, vector<1x1x64xf32>
    %525 = vector.shape_cast %524 : vector<1x1x64xf32> to vector<1x64xf32>
    %526 = vector.broadcast %525 : vector<1x64xf32> to vector<8x64xf32>
    %527 = arith.addf %523, %526 : vector<8x64xf32>
    %528 = arith.addf %520, %527 : vector<8x64xf32>
    %529 = arith.negf %528 : vector<8x64xf32>
    %530 = math.exp %529 : vector<8x64xf32>
    %cst_359 = arith.constant 1.000000e+00 : f32
    %531 = vector.broadcast %cst_359 : f32 to vector<8x64xf32>
    %532 = arith.addf %531, %530 : vector<8x64xf32>
    %533 = arith.divf %531, %532 : vector<8x64xf32>
    %c1_360 = arith.constant 1 : index
    %c0_361 = arith.constant 0 : index
    %c0_362 = arith.constant 0 : index
    %534 = vector.load %arg5[%c1_360, %c0_361, %c0_362] : memref<3x64x64xf32, #tpu.memory_space<vmem>>, vector<1x64x64xf32>
    %535 = vector.shape_cast %534 : vector<1x64x64xf32> to vector<64x64xf32>
    %cst_363 = arith.constant dense<0.000000e+00> : vector<8x64xf32>
    %536 = tpu.matmul %513, %535, %cst_363 {dimension_numbers = #tpu.dot_dimension_numbers<[1], [0], [0], [1], [0, 0, 1, 1], [], []>} : vector<8x64xf32>, vector<64x64xf32>, vector<8x64xf32> -> vector<8x64xf32>
    %c1_364 = arith.constant 1 : index
    %c0_365 = arith.constant 0 : index
    %c0_366 = arith.constant 0 : index
    %537 = vector.load %arg7[%c1_364, %c0_365, %c0_366] : memref<3x1x64xf32, #tpu.memory_space<vmem>>, vector<1x1x64xf32>
    %538 = vector.shape_cast %537 : vector<1x1x64xf32> to vector<1x64xf32>
    %539 = vector.broadcast %538 : vector<1x64xf32> to vector<8x64xf32>
    %540 = arith.addf %536, %539 : vector<8x64xf32>
    %c1_367 = arith.constant 1 : index
    %c0_368 = arith.constant 0 : index
    %c0_369 = arith.constant 0 : index
    %541 = vector.load %arg6[%c1_367, %c0_368, %c0_369] : memref<3x64x64xf32, #tpu.memory_space<vmem>>, vector<1x64x64xf32>
    %542 = vector.shape_cast %541 : vector<1x64x64xf32> to vector<64x64xf32>
    %cst_370 = arith.constant dense<0.000000e+00> : vector<8x64xf32>
    %543 = tpu.matmul %465, %542, %cst_370 {dimension_numbers = #tpu.dot_dimension_numbers<[1], [0], [0], [1], [0, 0, 1, 1], [], []>} : vector<8x64xf32>, vector<64x64xf32>, vector<8x64xf32> -> vector<8x64xf32>
    %c1_371 = arith.constant 1 : index
    %c0_372 = arith.constant 0 : index
    %c0_373 = arith.constant 0 : index
    %544 = vector.load %arg8[%c1_371, %c0_372, %c0_373] : memref<3x1x64xf32, #tpu.memory_space<vmem>>, vector<1x1x64xf32>
    %545 = vector.shape_cast %544 : vector<1x1x64xf32> to vector<1x64xf32>
    %546 = vector.broadcast %545 : vector<1x64xf32> to vector<8x64xf32>
    %547 = arith.addf %543, %546 : vector<8x64xf32>
    %548 = arith.addf %540, %547 : vector<8x64xf32>
    %549 = arith.negf %548 : vector<8x64xf32>
    %550 = math.exp %549 : vector<8x64xf32>
    %cst_374 = arith.constant 1.000000e+00 : f32
    %551 = vector.broadcast %cst_374 : f32 to vector<8x64xf32>
    %552 = arith.addf %551, %550 : vector<8x64xf32>
    %553 = arith.divf %551, %552 : vector<8x64xf32>
    %c2_375 = arith.constant 2 : index
    %c0_376 = arith.constant 0 : index
    %c0_377 = arith.constant 0 : index
    %554 = vector.load %arg5[%c2_375, %c0_376, %c0_377] : memref<3x64x64xf32, #tpu.memory_space<vmem>>, vector<1x64x64xf32>
    %555 = vector.shape_cast %554 : vector<1x64x64xf32> to vector<64x64xf32>
    %cst_378 = arith.constant dense<0.000000e+00> : vector<8x64xf32>
    %556 = tpu.matmul %513, %555, %cst_378 {dimension_numbers = #tpu.dot_dimension_numbers<[1], [0], [0], [1], [0, 0, 1, 1], [], []>} : vector<8x64xf32>, vector<64x64xf32>, vector<8x64xf32> -> vector<8x64xf32>
    %c2_379 = arith.constant 2 : index
    %c0_380 = arith.constant 0 : index
    %c0_381 = arith.constant 0 : index
    %557 = vector.load %arg7[%c2_379, %c0_380, %c0_381] : memref<3x1x64xf32, #tpu.memory_space<vmem>>, vector<1x1x64xf32>
    %558 = vector.shape_cast %557 : vector<1x1x64xf32> to vector<1x64xf32>
    %559 = vector.broadcast %558 : vector<1x64xf32> to vector<8x64xf32>
    %560 = arith.addf %556, %559 : vector<8x64xf32>
    %c2_382 = arith.constant 2 : index
    %c0_383 = arith.constant 0 : index
    %c0_384 = arith.constant 0 : index
    %561 = vector.load %arg6[%c2_382, %c0_383, %c0_384] : memref<3x64x64xf32, #tpu.memory_space<vmem>>, vector<1x64x64xf32>
    %562 = vector.shape_cast %561 : vector<1x64x64xf32> to vector<64x64xf32>
    %cst_385 = arith.constant dense<0.000000e+00> : vector<8x64xf32>
    %563 = tpu.matmul %465, %562, %cst_385 {dimension_numbers = #tpu.dot_dimension_numbers<[1], [0], [0], [1], [0, 0, 1, 1], [], []>} : vector<8x64xf32>, vector<64x64xf32>, vector<8x64xf32> -> vector<8x64xf32>
    %c2_386 = arith.constant 2 : index
    %c0_387 = arith.constant 0 : index
    %c0_388 = arith.constant 0 : index
    %564 = vector.load %arg8[%c2_386, %c0_387, %c0_388] : memref<3x1x64xf32, #tpu.memory_space<vmem>>, vector<1x1x64xf32>
    %565 = vector.shape_cast %564 : vector<1x1x64xf32> to vector<1x64xf32>
    %566 = vector.broadcast %565 : vector<1x64xf32> to vector<8x64xf32>
    %567 = arith.addf %563, %566 : vector<8x64xf32>
    %568 = arith.mulf %533, %567 : vector<8x64xf32>
    %569 = arith.addf %560, %568 : vector<8x64xf32>
    %570 = math.tanh %569 : vector<8x64xf32>
    %cst_389 = arith.constant 1.000000e+00 : f32
    %571 = vector.broadcast %cst_389 : f32 to vector<8x64xf32>
    %572 = arith.subf %571, %553 : vector<8x64xf32>
    %573 = arith.mulf %572, %570 : vector<8x64xf32>
    %574 = arith.mulf %553, %465 : vector<8x64xf32>
    %575 = arith.addf %573, %574 : vector<8x64xf32>
    %c5_i32 = arith.constant 5 : i32
    %c8_i32_390 = arith.constant 8 : i32
    %576 = arith.muli %c5_i32, %c8_i32_390 : i32
    %577 = arith.index_cast %576 : i32 to index
    %c0_391 = arith.constant 0 : index
    %578 = vector.load %arg12[%577, %c0_391] : memref<64x64xf32, #tpu.memory_space<vmem>>, vector<8x64xf32>
    %c0_392 = arith.constant 0 : index
    %c0_393 = arith.constant 0 : index
    %c0_394 = arith.constant 0 : index
    %579 = vector.load %arg2[%c0_392, %c0_393, %c0_394] : memref<3x64x64xf32, #tpu.memory_space<vmem>>, vector<1x64x64xf32>
    %580 = vector.shape_cast %579 : vector<1x64x64xf32> to vector<64x64xf32>
    %cst_395 = arith.constant dense<0.000000e+00> : vector<8x64xf32>
    %581 = tpu.matmul %513, %580, %cst_395 {dimension_numbers = #tpu.dot_dimension_numbers<[1], [0], [0], [1], [0, 0, 1, 1], [], []>} : vector<8x64xf32>, vector<64x64xf32>, vector<8x64xf32> -> vector<8x64xf32>
    %c0_396 = arith.constant 0 : index
    %c0_397 = arith.constant 0 : index
    %c0_398 = arith.constant 0 : index
    %582 = vector.load %arg4[%c0_396, %c0_397, %c0_398] : memref<3x1x64xf32, #tpu.memory_space<vmem>>, vector<1x1x64xf32>
    %583 = vector.shape_cast %582 : vector<1x1x64xf32> to vector<1x64xf32>
    %584 = vector.broadcast %583 : vector<1x64xf32> to vector<8x64xf32>
    %585 = arith.addf %581, %584 : vector<8x64xf32>
    %586 = arith.addf %578, %585 : vector<8x64xf32>
    %587 = arith.negf %586 : vector<8x64xf32>
    %588 = math.exp %587 : vector<8x64xf32>
    %cst_399 = arith.constant 1.000000e+00 : f32
    %589 = vector.broadcast %cst_399 : f32 to vector<8x64xf32>
    %590 = arith.addf %589, %588 : vector<8x64xf32>
    %591 = arith.divf %589, %590 : vector<8x64xf32>
    %592 = arith.index_cast %576 : i32 to index
    %c0_400 = arith.constant 0 : index
    %593 = vector.load %arg13[%592, %c0_400] : memref<64x64xf32, #tpu.memory_space<vmem>>, vector<8x64xf32>
    %c1_401 = arith.constant 1 : index
    %c0_402 = arith.constant 0 : index
    %c0_403 = arith.constant 0 : index
    %594 = vector.load %arg2[%c1_401, %c0_402, %c0_403] : memref<3x64x64xf32, #tpu.memory_space<vmem>>, vector<1x64x64xf32>
    %595 = vector.shape_cast %594 : vector<1x64x64xf32> to vector<64x64xf32>
    %cst_404 = arith.constant dense<0.000000e+00> : vector<8x64xf32>
    %596 = tpu.matmul %513, %595, %cst_404 {dimension_numbers = #tpu.dot_dimension_numbers<[1], [0], [0], [1], [0, 0, 1, 1], [], []>} : vector<8x64xf32>, vector<64x64xf32>, vector<8x64xf32> -> vector<8x64xf32>
    %c1_405 = arith.constant 1 : index
    %c0_406 = arith.constant 0 : index
    %c0_407 = arith.constant 0 : index
    %597 = vector.load %arg4[%c1_405, %c0_406, %c0_407] : memref<3x1x64xf32, #tpu.memory_space<vmem>>, vector<1x1x64xf32>
    %598 = vector.shape_cast %597 : vector<1x1x64xf32> to vector<1x64xf32>
    %599 = vector.broadcast %598 : vector<1x64xf32> to vector<8x64xf32>
    %600 = arith.addf %596, %599 : vector<8x64xf32>
    %601 = arith.addf %593, %600 : vector<8x64xf32>
    %602 = arith.negf %601 : vector<8x64xf32>
    %603 = math.exp %602 : vector<8x64xf32>
    %cst_408 = arith.constant 1.000000e+00 : f32
    %604 = vector.broadcast %cst_408 : f32 to vector<8x64xf32>
    %605 = arith.addf %604, %603 : vector<8x64xf32>
    %606 = arith.divf %604, %605 : vector<8x64xf32>
    %607 = arith.index_cast %576 : i32 to index
    %c0_409 = arith.constant 0 : index
    %608 = vector.load %arg14[%607, %c0_409] : memref<64x64xf32, #tpu.memory_space<vmem>>, vector<8x64xf32>
    %c2_410 = arith.constant 2 : index
    %c0_411 = arith.constant 0 : index
    %c0_412 = arith.constant 0 : index
    %609 = vector.load %arg2[%c2_410, %c0_411, %c0_412] : memref<3x64x64xf32, #tpu.memory_space<vmem>>, vector<1x64x64xf32>
    %610 = vector.shape_cast %609 : vector<1x64x64xf32> to vector<64x64xf32>
    %cst_413 = arith.constant dense<0.000000e+00> : vector<8x64xf32>
    %611 = tpu.matmul %513, %610, %cst_413 {dimension_numbers = #tpu.dot_dimension_numbers<[1], [0], [0], [1], [0, 0, 1, 1], [], []>} : vector<8x64xf32>, vector<64x64xf32>, vector<8x64xf32> -> vector<8x64xf32>
    %c2_414 = arith.constant 2 : index
    %c0_415 = arith.constant 0 : index
    %c0_416 = arith.constant 0 : index
    %612 = vector.load %arg4[%c2_414, %c0_415, %c0_416] : memref<3x1x64xf32, #tpu.memory_space<vmem>>, vector<1x1x64xf32>
    %613 = vector.shape_cast %612 : vector<1x1x64xf32> to vector<1x64xf32>
    %614 = vector.broadcast %613 : vector<1x64xf32> to vector<8x64xf32>
    %615 = arith.addf %611, %614 : vector<8x64xf32>
    %616 = arith.mulf %591, %615 : vector<8x64xf32>
    %617 = arith.addf %608, %616 : vector<8x64xf32>
    %618 = math.tanh %617 : vector<8x64xf32>
    %cst_417 = arith.constant 1.000000e+00 : f32
    %619 = vector.broadcast %cst_417 : f32 to vector<8x64xf32>
    %620 = arith.subf %619, %606 : vector<8x64xf32>
    %621 = arith.mulf %620, %618 : vector<8x64xf32>
    %622 = arith.mulf %606, %513 : vector<8x64xf32>
    %623 = arith.addf %621, %622 : vector<8x64xf32>
    %c0_418 = arith.constant 0 : index
    %c0_419 = arith.constant 0 : index
    %c0_420 = arith.constant 0 : index
    %624 = vector.load %arg5[%c0_418, %c0_419, %c0_420] : memref<3x64x64xf32, #tpu.memory_space<vmem>>, vector<1x64x64xf32>
    %625 = vector.shape_cast %624 : vector<1x64x64xf32> to vector<64x64xf32>
    %cst_421 = arith.constant dense<0.000000e+00> : vector<8x64xf32>
    %626 = tpu.matmul %623, %625, %cst_421 {dimension_numbers = #tpu.dot_dimension_numbers<[1], [0], [0], [1], [0, 0, 1, 1], [], []>} : vector<8x64xf32>, vector<64x64xf32>, vector<8x64xf32> -> vector<8x64xf32>
    %c0_422 = arith.constant 0 : index
    %c0_423 = arith.constant 0 : index
    %c0_424 = arith.constant 0 : index
    %627 = vector.load %arg7[%c0_422, %c0_423, %c0_424] : memref<3x1x64xf32, #tpu.memory_space<vmem>>, vector<1x1x64xf32>
    %628 = vector.shape_cast %627 : vector<1x1x64xf32> to vector<1x64xf32>
    %629 = vector.broadcast %628 : vector<1x64xf32> to vector<8x64xf32>
    %630 = arith.addf %626, %629 : vector<8x64xf32>
    %c0_425 = arith.constant 0 : index
    %c0_426 = arith.constant 0 : index
    %c0_427 = arith.constant 0 : index
    %631 = vector.load %arg6[%c0_425, %c0_426, %c0_427] : memref<3x64x64xf32, #tpu.memory_space<vmem>>, vector<1x64x64xf32>
    %632 = vector.shape_cast %631 : vector<1x64x64xf32> to vector<64x64xf32>
    %cst_428 = arith.constant dense<0.000000e+00> : vector<8x64xf32>
    %633 = tpu.matmul %575, %632, %cst_428 {dimension_numbers = #tpu.dot_dimension_numbers<[1], [0], [0], [1], [0, 0, 1, 1], [], []>} : vector<8x64xf32>, vector<64x64xf32>, vector<8x64xf32> -> vector<8x64xf32>
    %c0_429 = arith.constant 0 : index
    %c0_430 = arith.constant 0 : index
    %c0_431 = arith.constant 0 : index
    %634 = vector.load %arg8[%c0_429, %c0_430, %c0_431] : memref<3x1x64xf32, #tpu.memory_space<vmem>>, vector<1x1x64xf32>
    %635 = vector.shape_cast %634 : vector<1x1x64xf32> to vector<1x64xf32>
    %636 = vector.broadcast %635 : vector<1x64xf32> to vector<8x64xf32>
    %637 = arith.addf %633, %636 : vector<8x64xf32>
    %638 = arith.addf %630, %637 : vector<8x64xf32>
    %639 = arith.negf %638 : vector<8x64xf32>
    %640 = math.exp %639 : vector<8x64xf32>
    %cst_432 = arith.constant 1.000000e+00 : f32
    %641 = vector.broadcast %cst_432 : f32 to vector<8x64xf32>
    %642 = arith.addf %641, %640 : vector<8x64xf32>
    %643 = arith.divf %641, %642 : vector<8x64xf32>
    %c1_433 = arith.constant 1 : index
    %c0_434 = arith.constant 0 : index
    %c0_435 = arith.constant 0 : index
    %644 = vector.load %arg5[%c1_433, %c0_434, %c0_435] : memref<3x64x64xf32, #tpu.memory_space<vmem>>, vector<1x64x64xf32>
    %645 = vector.shape_cast %644 : vector<1x64x64xf32> to vector<64x64xf32>
    %cst_436 = arith.constant dense<0.000000e+00> : vector<8x64xf32>
    %646 = tpu.matmul %623, %645, %cst_436 {dimension_numbers = #tpu.dot_dimension_numbers<[1], [0], [0], [1], [0, 0, 1, 1], [], []>} : vector<8x64xf32>, vector<64x64xf32>, vector<8x64xf32> -> vector<8x64xf32>
    %c1_437 = arith.constant 1 : index
    %c0_438 = arith.constant 0 : index
    %c0_439 = arith.constant 0 : index
    %647 = vector.load %arg7[%c1_437, %c0_438, %c0_439] : memref<3x1x64xf32, #tpu.memory_space<vmem>>, vector<1x1x64xf32>
    %648 = vector.shape_cast %647 : vector<1x1x64xf32> to vector<1x64xf32>
    %649 = vector.broadcast %648 : vector<1x64xf32> to vector<8x64xf32>
    %650 = arith.addf %646, %649 : vector<8x64xf32>
    %c1_440 = arith.constant 1 : index
    %c0_441 = arith.constant 0 : index
    %c0_442 = arith.constant 0 : index
    %651 = vector.load %arg6[%c1_440, %c0_441, %c0_442] : memref<3x64x64xf32, #tpu.memory_space<vmem>>, vector<1x64x64xf32>
    %652 = vector.shape_cast %651 : vector<1x64x64xf32> to vector<64x64xf32>
    %cst_443 = arith.constant dense<0.000000e+00> : vector<8x64xf32>
    %653 = tpu.matmul %575, %652, %cst_443 {dimension_numbers = #tpu.dot_dimension_numbers<[1], [0], [0], [1], [0, 0, 1, 1], [], []>} : vector<8x64xf32>, vector<64x64xf32>, vector<8x64xf32> -> vector<8x64xf32>
    %c1_444 = arith.constant 1 : index
    %c0_445 = arith.constant 0 : index
    %c0_446 = arith.constant 0 : index
    %654 = vector.load %arg8[%c1_444, %c0_445, %c0_446] : memref<3x1x64xf32, #tpu.memory_space<vmem>>, vector<1x1x64xf32>
    %655 = vector.shape_cast %654 : vector<1x1x64xf32> to vector<1x64xf32>
    %656 = vector.broadcast %655 : vector<1x64xf32> to vector<8x64xf32>
    %657 = arith.addf %653, %656 : vector<8x64xf32>
    %658 = arith.addf %650, %657 : vector<8x64xf32>
    %659 = arith.negf %658 : vector<8x64xf32>
    %660 = math.exp %659 : vector<8x64xf32>
    %cst_447 = arith.constant 1.000000e+00 : f32
    %661 = vector.broadcast %cst_447 : f32 to vector<8x64xf32>
    %662 = arith.addf %661, %660 : vector<8x64xf32>
    %663 = arith.divf %661, %662 : vector<8x64xf32>
    %c2_448 = arith.constant 2 : index
    %c0_449 = arith.constant 0 : index
    %c0_450 = arith.constant 0 : index
    %664 = vector.load %arg5[%c2_448, %c0_449, %c0_450] : memref<3x64x64xf32, #tpu.memory_space<vmem>>, vector<1x64x64xf32>
    %665 = vector.shape_cast %664 : vector<1x64x64xf32> to vector<64x64xf32>
    %cst_451 = arith.constant dense<0.000000e+00> : vector<8x64xf32>
    %666 = tpu.matmul %623, %665, %cst_451 {dimension_numbers = #tpu.dot_dimension_numbers<[1], [0], [0], [1], [0, 0, 1, 1], [], []>} : vector<8x64xf32>, vector<64x64xf32>, vector<8x64xf32> -> vector<8x64xf32>
    %c2_452 = arith.constant 2 : index
    %c0_453 = arith.constant 0 : index
    %c0_454 = arith.constant 0 : index
    %667 = vector.load %arg7[%c2_452, %c0_453, %c0_454] : memref<3x1x64xf32, #tpu.memory_space<vmem>>, vector<1x1x64xf32>
    %668 = vector.shape_cast %667 : vector<1x1x64xf32> to vector<1x64xf32>
    %669 = vector.broadcast %668 : vector<1x64xf32> to vector<8x64xf32>
    %670 = arith.addf %666, %669 : vector<8x64xf32>
    %c2_455 = arith.constant 2 : index
    %c0_456 = arith.constant 0 : index
    %c0_457 = arith.constant 0 : index
    %671 = vector.load %arg6[%c2_455, %c0_456, %c0_457] : memref<3x64x64xf32, #tpu.memory_space<vmem>>, vector<1x64x64xf32>
    %672 = vector.shape_cast %671 : vector<1x64x64xf32> to vector<64x64xf32>
    %cst_458 = arith.constant dense<0.000000e+00> : vector<8x64xf32>
    %673 = tpu.matmul %575, %672, %cst_458 {dimension_numbers = #tpu.dot_dimension_numbers<[1], [0], [0], [1], [0, 0, 1, 1], [], []>} : vector<8x64xf32>, vector<64x64xf32>, vector<8x64xf32> -> vector<8x64xf32>
    %c2_459 = arith.constant 2 : index
    %c0_460 = arith.constant 0 : index
    %c0_461 = arith.constant 0 : index
    %674 = vector.load %arg8[%c2_459, %c0_460, %c0_461] : memref<3x1x64xf32, #tpu.memory_space<vmem>>, vector<1x1x64xf32>
    %675 = vector.shape_cast %674 : vector<1x1x64xf32> to vector<1x64xf32>
    %676 = vector.broadcast %675 : vector<1x64xf32> to vector<8x64xf32>
    %677 = arith.addf %673, %676 : vector<8x64xf32>
    %678 = arith.mulf %643, %677 : vector<8x64xf32>
    %679 = arith.addf %670, %678 : vector<8x64xf32>
    %680 = math.tanh %679 : vector<8x64xf32>
    %cst_462 = arith.constant 1.000000e+00 : f32
    %681 = vector.broadcast %cst_462 : f32 to vector<8x64xf32>
    %682 = arith.subf %681, %663 : vector<8x64xf32>
    %683 = arith.mulf %682, %680 : vector<8x64xf32>
    %684 = arith.mulf %663, %575 : vector<8x64xf32>
    %685 = arith.addf %683, %684 : vector<8x64xf32>
    %c6_i32 = arith.constant 6 : i32
    %c8_i32_463 = arith.constant 8 : i32
    %686 = arith.muli %c6_i32, %c8_i32_463 : i32
    %687 = arith.index_cast %686 : i32 to index
    %c0_464 = arith.constant 0 : index
    %688 = vector.load %arg12[%687, %c0_464] : memref<64x64xf32, #tpu.memory_space<vmem>>, vector<8x64xf32>
    %c0_465 = arith.constant 0 : index
    %c0_466 = arith.constant 0 : index
    %c0_467 = arith.constant 0 : index
    %689 = vector.load %arg2[%c0_465, %c0_466, %c0_467] : memref<3x64x64xf32, #tpu.memory_space<vmem>>, vector<1x64x64xf32>
    %690 = vector.shape_cast %689 : vector<1x64x64xf32> to vector<64x64xf32>
    %cst_468 = arith.constant dense<0.000000e+00> : vector<8x64xf32>
    %691 = tpu.matmul %623, %690, %cst_468 {dimension_numbers = #tpu.dot_dimension_numbers<[1], [0], [0], [1], [0, 0, 1, 1], [], []>} : vector<8x64xf32>, vector<64x64xf32>, vector<8x64xf32> -> vector<8x64xf32>
    %c0_469 = arith.constant 0 : index
    %c0_470 = arith.constant 0 : index
    %c0_471 = arith.constant 0 : index
    %692 = vector.load %arg4[%c0_469, %c0_470, %c0_471] : memref<3x1x64xf32, #tpu.memory_space<vmem>>, vector<1x1x64xf32>
    %693 = vector.shape_cast %692 : vector<1x1x64xf32> to vector<1x64xf32>
    %694 = vector.broadcast %693 : vector<1x64xf32> to vector<8x64xf32>
    %695 = arith.addf %691, %694 : vector<8x64xf32>
    %696 = arith.addf %688, %695 : vector<8x64xf32>
    %697 = arith.negf %696 : vector<8x64xf32>
    %698 = math.exp %697 : vector<8x64xf32>
    %cst_472 = arith.constant 1.000000e+00 : f32
    %699 = vector.broadcast %cst_472 : f32 to vector<8x64xf32>
    %700 = arith.addf %699, %698 : vector<8x64xf32>
    %701 = arith.divf %699, %700 : vector<8x64xf32>
    %702 = arith.index_cast %686 : i32 to index
    %c0_473 = arith.constant 0 : index
    %703 = vector.load %arg13[%702, %c0_473] : memref<64x64xf32, #tpu.memory_space<vmem>>, vector<8x64xf32>
    %c1_474 = arith.constant 1 : index
    %c0_475 = arith.constant 0 : index
    %c0_476 = arith.constant 0 : index
    %704 = vector.load %arg2[%c1_474, %c0_475, %c0_476] : memref<3x64x64xf32, #tpu.memory_space<vmem>>, vector<1x64x64xf32>
    %705 = vector.shape_cast %704 : vector<1x64x64xf32> to vector<64x64xf32>
    %cst_477 = arith.constant dense<0.000000e+00> : vector<8x64xf32>
    %706 = tpu.matmul %623, %705, %cst_477 {dimension_numbers = #tpu.dot_dimension_numbers<[1], [0], [0], [1], [0, 0, 1, 1], [], []>} : vector<8x64xf32>, vector<64x64xf32>, vector<8x64xf32> -> vector<8x64xf32>
    %c1_478 = arith.constant 1 : index
    %c0_479 = arith.constant 0 : index
    %c0_480 = arith.constant 0 : index
    %707 = vector.load %arg4[%c1_478, %c0_479, %c0_480] : memref<3x1x64xf32, #tpu.memory_space<vmem>>, vector<1x1x64xf32>
    %708 = vector.shape_cast %707 : vector<1x1x64xf32> to vector<1x64xf32>
    %709 = vector.broadcast %708 : vector<1x64xf32> to vector<8x64xf32>
    %710 = arith.addf %706, %709 : vector<8x64xf32>
    %711 = arith.addf %703, %710 : vector<8x64xf32>
    %712 = arith.negf %711 : vector<8x64xf32>
    %713 = math.exp %712 : vector<8x64xf32>
    %cst_481 = arith.constant 1.000000e+00 : f32
    %714 = vector.broadcast %cst_481 : f32 to vector<8x64xf32>
    %715 = arith.addf %714, %713 : vector<8x64xf32>
    %716 = arith.divf %714, %715 : vector<8x64xf32>
    %717 = arith.index_cast %686 : i32 to index
    %c0_482 = arith.constant 0 : index
    %718 = vector.load %arg14[%717, %c0_482] : memref<64x64xf32, #tpu.memory_space<vmem>>, vector<8x64xf32>
    %c2_483 = arith.constant 2 : index
    %c0_484 = arith.constant 0 : index
    %c0_485 = arith.constant 0 : index
    %719 = vector.load %arg2[%c2_483, %c0_484, %c0_485] : memref<3x64x64xf32, #tpu.memory_space<vmem>>, vector<1x64x64xf32>
    %720 = vector.shape_cast %719 : vector<1x64x64xf32> to vector<64x64xf32>
    %cst_486 = arith.constant dense<0.000000e+00> : vector<8x64xf32>
    %721 = tpu.matmul %623, %720, %cst_486 {dimension_numbers = #tpu.dot_dimension_numbers<[1], [0], [0], [1], [0, 0, 1, 1], [], []>} : vector<8x64xf32>, vector<64x64xf32>, vector<8x64xf32> -> vector<8x64xf32>
    %c2_487 = arith.constant 2 : index
    %c0_488 = arith.constant 0 : index
    %c0_489 = arith.constant 0 : index
    %722 = vector.load %arg4[%c2_487, %c0_488, %c0_489] : memref<3x1x64xf32, #tpu.memory_space<vmem>>, vector<1x1x64xf32>
    %723 = vector.shape_cast %722 : vector<1x1x64xf32> to vector<1x64xf32>
    %724 = vector.broadcast %723 : vector<1x64xf32> to vector<8x64xf32>
    %725 = arith.addf %721, %724 : vector<8x64xf32>
    %726 = arith.mulf %701, %725 : vector<8x64xf32>
    %727 = arith.addf %718, %726 : vector<8x64xf32>
    %728 = math.tanh %727 : vector<8x64xf32>
    %cst_490 = arith.constant 1.000000e+00 : f32
    %729 = vector.broadcast %cst_490 : f32 to vector<8x64xf32>
    %730 = arith.subf %729, %716 : vector<8x64xf32>
    %731 = arith.mulf %730, %728 : vector<8x64xf32>
    %732 = arith.mulf %716, %623 : vector<8x64xf32>
    %733 = arith.addf %731, %732 : vector<8x64xf32>
    %c0_491 = arith.constant 0 : index
    %c0_492 = arith.constant 0 : index
    %c0_493 = arith.constant 0 : index
    %734 = vector.load %arg5[%c0_491, %c0_492, %c0_493] : memref<3x64x64xf32, #tpu.memory_space<vmem>>, vector<1x64x64xf32>
    %735 = vector.shape_cast %734 : vector<1x64x64xf32> to vector<64x64xf32>
    %cst_494 = arith.constant dense<0.000000e+00> : vector<8x64xf32>
    %736 = tpu.matmul %733, %735, %cst_494 {dimension_numbers = #tpu.dot_dimension_numbers<[1], [0], [0], [1], [0, 0, 1, 1], [], []>} : vector<8x64xf32>, vector<64x64xf32>, vector<8x64xf32> -> vector<8x64xf32>
    %c0_495 = arith.constant 0 : index
    %c0_496 = arith.constant 0 : index
    %c0_497 = arith.constant 0 : index
    %737 = vector.load %arg7[%c0_495, %c0_496, %c0_497] : memref<3x1x64xf32, #tpu.memory_space<vmem>>, vector<1x1x64xf32>
    %738 = vector.shape_cast %737 : vector<1x1x64xf32> to vector<1x64xf32>
    %739 = vector.broadcast %738 : vector<1x64xf32> to vector<8x64xf32>
    %740 = arith.addf %736, %739 : vector<8x64xf32>
    %c0_498 = arith.constant 0 : index
    %c0_499 = arith.constant 0 : index
    %c0_500 = arith.constant 0 : index
    %741 = vector.load %arg6[%c0_498, %c0_499, %c0_500] : memref<3x64x64xf32, #tpu.memory_space<vmem>>, vector<1x64x64xf32>
    %742 = vector.shape_cast %741 : vector<1x64x64xf32> to vector<64x64xf32>
    %cst_501 = arith.constant dense<0.000000e+00> : vector<8x64xf32>
    %743 = tpu.matmul %685, %742, %cst_501 {dimension_numbers = #tpu.dot_dimension_numbers<[1], [0], [0], [1], [0, 0, 1, 1], [], []>} : vector<8x64xf32>, vector<64x64xf32>, vector<8x64xf32> -> vector<8x64xf32>
    %c0_502 = arith.constant 0 : index
    %c0_503 = arith.constant 0 : index
    %c0_504 = arith.constant 0 : index
    %744 = vector.load %arg8[%c0_502, %c0_503, %c0_504] : memref<3x1x64xf32, #tpu.memory_space<vmem>>, vector<1x1x64xf32>
    %745 = vector.shape_cast %744 : vector<1x1x64xf32> to vector<1x64xf32>
    %746 = vector.broadcast %745 : vector<1x64xf32> to vector<8x64xf32>
    %747 = arith.addf %743, %746 : vector<8x64xf32>
    %748 = arith.addf %740, %747 : vector<8x64xf32>
    %749 = arith.negf %748 : vector<8x64xf32>
    %750 = math.exp %749 : vector<8x64xf32>
    %cst_505 = arith.constant 1.000000e+00 : f32
    %751 = vector.broadcast %cst_505 : f32 to vector<8x64xf32>
    %752 = arith.addf %751, %750 : vector<8x64xf32>
    %753 = arith.divf %751, %752 : vector<8x64xf32>
    %c1_506 = arith.constant 1 : index
    %c0_507 = arith.constant 0 : index
    %c0_508 = arith.constant 0 : index
    %754 = vector.load %arg5[%c1_506, %c0_507, %c0_508] : memref<3x64x64xf32, #tpu.memory_space<vmem>>, vector<1x64x64xf32>
    %755 = vector.shape_cast %754 : vector<1x64x64xf32> to vector<64x64xf32>
    %cst_509 = arith.constant dense<0.000000e+00> : vector<8x64xf32>
    %756 = tpu.matmul %733, %755, %cst_509 {dimension_numbers = #tpu.dot_dimension_numbers<[1], [0], [0], [1], [0, 0, 1, 1], [], []>} : vector<8x64xf32>, vector<64x64xf32>, vector<8x64xf32> -> vector<8x64xf32>
    %c1_510 = arith.constant 1 : index
    %c0_511 = arith.constant 0 : index
    %c0_512 = arith.constant 0 : index
    %757 = vector.load %arg7[%c1_510, %c0_511, %c0_512] : memref<3x1x64xf32, #tpu.memory_space<vmem>>, vector<1x1x64xf32>
    %758 = vector.shape_cast %757 : vector<1x1x64xf32> to vector<1x64xf32>
    %759 = vector.broadcast %758 : vector<1x64xf32> to vector<8x64xf32>
    %760 = arith.addf %756, %759 : vector<8x64xf32>
    %c1_513 = arith.constant 1 : index
    %c0_514 = arith.constant 0 : index
    %c0_515 = arith.constant 0 : index
    %761 = vector.load %arg6[%c1_513, %c0_514, %c0_515] : memref<3x64x64xf32, #tpu.memory_space<vmem>>, vector<1x64x64xf32>
    %762 = vector.shape_cast %761 : vector<1x64x64xf32> to vector<64x64xf32>
    %cst_516 = arith.constant dense<0.000000e+00> : vector<8x64xf32>
    %763 = tpu.matmul %685, %762, %cst_516 {dimension_numbers = #tpu.dot_dimension_numbers<[1], [0], [0], [1], [0, 0, 1, 1], [], []>} : vector<8x64xf32>, vector<64x64xf32>, vector<8x64xf32> -> vector<8x64xf32>
    %c1_517 = arith.constant 1 : index
    %c0_518 = arith.constant 0 : index
    %c0_519 = arith.constant 0 : index
    %764 = vector.load %arg8[%c1_517, %c0_518, %c0_519] : memref<3x1x64xf32, #tpu.memory_space<vmem>>, vector<1x1x64xf32>
    %765 = vector.shape_cast %764 : vector<1x1x64xf32> to vector<1x64xf32>
    %766 = vector.broadcast %765 : vector<1x64xf32> to vector<8x64xf32>
    %767 = arith.addf %763, %766 : vector<8x64xf32>
    %768 = arith.addf %760, %767 : vector<8x64xf32>
    %769 = arith.negf %768 : vector<8x64xf32>
    %770 = math.exp %769 : vector<8x64xf32>
    %cst_520 = arith.constant 1.000000e+00 : f32
    %771 = vector.broadcast %cst_520 : f32 to vector<8x64xf32>
    %772 = arith.addf %771, %770 : vector<8x64xf32>
    %773 = arith.divf %771, %772 : vector<8x64xf32>
    %c2_521 = arith.constant 2 : index
    %c0_522 = arith.constant 0 : index
    %c0_523 = arith.constant 0 : index
    %774 = vector.load %arg5[%c2_521, %c0_522, %c0_523] : memref<3x64x64xf32, #tpu.memory_space<vmem>>, vector<1x64x64xf32>
    %775 = vector.shape_cast %774 : vector<1x64x64xf32> to vector<64x64xf32>
    %cst_524 = arith.constant dense<0.000000e+00> : vector<8x64xf32>
    %776 = tpu.matmul %733, %775, %cst_524 {dimension_numbers = #tpu.dot_dimension_numbers<[1], [0], [0], [1], [0, 0, 1, 1], [], []>} : vector<8x64xf32>, vector<64x64xf32>, vector<8x64xf32> -> vector<8x64xf32>
    %c2_525 = arith.constant 2 : index
    %c0_526 = arith.constant 0 : index
    %c0_527 = arith.constant 0 : index
    %777 = vector.load %arg7[%c2_525, %c0_526, %c0_527] : memref<3x1x64xf32, #tpu.memory_space<vmem>>, vector<1x1x64xf32>
    %778 = vector.shape_cast %777 : vector<1x1x64xf32> to vector<1x64xf32>
    %779 = vector.broadcast %778 : vector<1x64xf32> to vector<8x64xf32>
    %780 = arith.addf %776, %779 : vector<8x64xf32>
    %c2_528 = arith.constant 2 : index
    %c0_529 = arith.constant 0 : index
    %c0_530 = arith.constant 0 : index
    %781 = vector.load %arg6[%c2_528, %c0_529, %c0_530] : memref<3x64x64xf32, #tpu.memory_space<vmem>>, vector<1x64x64xf32>
    %782 = vector.shape_cast %781 : vector<1x64x64xf32> to vector<64x64xf32>
    %cst_531 = arith.constant dense<0.000000e+00> : vector<8x64xf32>
    %783 = tpu.matmul %685, %782, %cst_531 {dimension_numbers = #tpu.dot_dimension_numbers<[1], [0], [0], [1], [0, 0, 1, 1], [], []>} : vector<8x64xf32>, vector<64x64xf32>, vector<8x64xf32> -> vector<8x64xf32>
    %c2_532 = arith.constant 2 : index
    %c0_533 = arith.constant 0 : index
    %c0_534 = arith.constant 0 : index
    %784 = vector.load %arg8[%c2_532, %c0_533, %c0_534] : memref<3x1x64xf32, #tpu.memory_space<vmem>>, vector<1x1x64xf32>
    %785 = vector.shape_cast %784 : vector<1x1x64xf32> to vector<1x64xf32>
    %786 = vector.broadcast %785 : vector<1x64xf32> to vector<8x64xf32>
    %787 = arith.addf %783, %786 : vector<8x64xf32>
    %788 = arith.mulf %753, %787 : vector<8x64xf32>
    %789 = arith.addf %780, %788 : vector<8x64xf32>
    %790 = math.tanh %789 : vector<8x64xf32>
    %cst_535 = arith.constant 1.000000e+00 : f32
    %791 = vector.broadcast %cst_535 : f32 to vector<8x64xf32>
    %792 = arith.subf %791, %773 : vector<8x64xf32>
    %793 = arith.mulf %792, %790 : vector<8x64xf32>
    %794 = arith.mulf %773, %685 : vector<8x64xf32>
    %795 = arith.addf %793, %794 : vector<8x64xf32>
    %c7_i32 = arith.constant 7 : i32
    %c8_i32_536 = arith.constant 8 : i32
    %796 = arith.muli %c7_i32, %c8_i32_536 : i32
    %797 = arith.index_cast %796 : i32 to index
    %c0_537 = arith.constant 0 : index
    %798 = vector.load %arg12[%797, %c0_537] : memref<64x64xf32, #tpu.memory_space<vmem>>, vector<8x64xf32>
    %c0_538 = arith.constant 0 : index
    %c0_539 = arith.constant 0 : index
    %c0_540 = arith.constant 0 : index
    %799 = vector.load %arg2[%c0_538, %c0_539, %c0_540] : memref<3x64x64xf32, #tpu.memory_space<vmem>>, vector<1x64x64xf32>
    %800 = vector.shape_cast %799 : vector<1x64x64xf32> to vector<64x64xf32>
    %cst_541 = arith.constant dense<0.000000e+00> : vector<8x64xf32>
    %801 = tpu.matmul %733, %800, %cst_541 {dimension_numbers = #tpu.dot_dimension_numbers<[1], [0], [0], [1], [0, 0, 1, 1], [], []>} : vector<8x64xf32>, vector<64x64xf32>, vector<8x64xf32> -> vector<8x64xf32>
    %c0_542 = arith.constant 0 : index
    %c0_543 = arith.constant 0 : index
    %c0_544 = arith.constant 0 : index
    %802 = vector.load %arg4[%c0_542, %c0_543, %c0_544] : memref<3x1x64xf32, #tpu.memory_space<vmem>>, vector<1x1x64xf32>
    %803 = vector.shape_cast %802 : vector<1x1x64xf32> to vector<1x64xf32>
    %804 = vector.broadcast %803 : vector<1x64xf32> to vector<8x64xf32>
    %805 = arith.addf %801, %804 : vector<8x64xf32>
    %806 = arith.addf %798, %805 : vector<8x64xf32>
    %807 = arith.negf %806 : vector<8x64xf32>
    %808 = math.exp %807 : vector<8x64xf32>
    %cst_545 = arith.constant 1.000000e+00 : f32
    %809 = vector.broadcast %cst_545 : f32 to vector<8x64xf32>
    %810 = arith.addf %809, %808 : vector<8x64xf32>
    %811 = arith.divf %809, %810 : vector<8x64xf32>
    %812 = arith.index_cast %796 : i32 to index
    %c0_546 = arith.constant 0 : index
    %813 = vector.load %arg13[%812, %c0_546] : memref<64x64xf32, #tpu.memory_space<vmem>>, vector<8x64xf32>
    %c1_547 = arith.constant 1 : index
    %c0_548 = arith.constant 0 : index
    %c0_549 = arith.constant 0 : index
    %814 = vector.load %arg2[%c1_547, %c0_548, %c0_549] : memref<3x64x64xf32, #tpu.memory_space<vmem>>, vector<1x64x64xf32>
    %815 = vector.shape_cast %814 : vector<1x64x64xf32> to vector<64x64xf32>
    %cst_550 = arith.constant dense<0.000000e+00> : vector<8x64xf32>
    %816 = tpu.matmul %733, %815, %cst_550 {dimension_numbers = #tpu.dot_dimension_numbers<[1], [0], [0], [1], [0, 0, 1, 1], [], []>} : vector<8x64xf32>, vector<64x64xf32>, vector<8x64xf32> -> vector<8x64xf32>
    %c1_551 = arith.constant 1 : index
    %c0_552 = arith.constant 0 : index
    %c0_553 = arith.constant 0 : index
    %817 = vector.load %arg4[%c1_551, %c0_552, %c0_553] : memref<3x1x64xf32, #tpu.memory_space<vmem>>, vector<1x1x64xf32>
    %818 = vector.shape_cast %817 : vector<1x1x64xf32> to vector<1x64xf32>
    %819 = vector.broadcast %818 : vector<1x64xf32> to vector<8x64xf32>
    %820 = arith.addf %816, %819 : vector<8x64xf32>
    %821 = arith.addf %813, %820 : vector<8x64xf32>
    %822 = arith.negf %821 : vector<8x64xf32>
    %823 = math.exp %822 : vector<8x64xf32>
    %cst_554 = arith.constant 1.000000e+00 : f32
    %824 = vector.broadcast %cst_554 : f32 to vector<8x64xf32>
    %825 = arith.addf %824, %823 : vector<8x64xf32>
    %826 = arith.divf %824, %825 : vector<8x64xf32>
    %827 = arith.index_cast %796 : i32 to index
    %c0_555 = arith.constant 0 : index
    %828 = vector.load %arg14[%827, %c0_555] : memref<64x64xf32, #tpu.memory_space<vmem>>, vector<8x64xf32>
    %c2_556 = arith.constant 2 : index
    %c0_557 = arith.constant 0 : index
    %c0_558 = arith.constant 0 : index
    %829 = vector.load %arg2[%c2_556, %c0_557, %c0_558] : memref<3x64x64xf32, #tpu.memory_space<vmem>>, vector<1x64x64xf32>
    %830 = vector.shape_cast %829 : vector<1x64x64xf32> to vector<64x64xf32>
    %cst_559 = arith.constant dense<0.000000e+00> : vector<8x64xf32>
    %831 = tpu.matmul %733, %830, %cst_559 {dimension_numbers = #tpu.dot_dimension_numbers<[1], [0], [0], [1], [0, 0, 1, 1], [], []>} : vector<8x64xf32>, vector<64x64xf32>, vector<8x64xf32> -> vector<8x64xf32>
    %c2_560 = arith.constant 2 : index
    %c0_561 = arith.constant 0 : index
    %c0_562 = arith.constant 0 : index
    %832 = vector.load %arg4[%c2_560, %c0_561, %c0_562] : memref<3x1x64xf32, #tpu.memory_space<vmem>>, vector<1x1x64xf32>
    %833 = vector.shape_cast %832 : vector<1x1x64xf32> to vector<1x64xf32>
    %834 = vector.broadcast %833 : vector<1x64xf32> to vector<8x64xf32>
    %835 = arith.addf %831, %834 : vector<8x64xf32>
    %836 = arith.mulf %811, %835 : vector<8x64xf32>
    %837 = arith.addf %828, %836 : vector<8x64xf32>
    %838 = math.tanh %837 : vector<8x64xf32>
    %cst_563 = arith.constant 1.000000e+00 : f32
    %839 = vector.broadcast %cst_563 : f32 to vector<8x64xf32>
    %840 = arith.subf %839, %826 : vector<8x64xf32>
    %841 = arith.mulf %840, %838 : vector<8x64xf32>
    %842 = arith.mulf %826, %733 : vector<8x64xf32>
    %843 = arith.addf %841, %842 : vector<8x64xf32>
    %c0_564 = arith.constant 0 : index
    %c0_565 = arith.constant 0 : index
    %c0_566 = arith.constant 0 : index
    %844 = vector.load %arg5[%c0_564, %c0_565, %c0_566] : memref<3x64x64xf32, #tpu.memory_space<vmem>>, vector<1x64x64xf32>
    %845 = vector.shape_cast %844 : vector<1x64x64xf32> to vector<64x64xf32>
    %cst_567 = arith.constant dense<0.000000e+00> : vector<8x64xf32>
    %846 = tpu.matmul %843, %845, %cst_567 {dimension_numbers = #tpu.dot_dimension_numbers<[1], [0], [0], [1], [0, 0, 1, 1], [], []>} : vector<8x64xf32>, vector<64x64xf32>, vector<8x64xf32> -> vector<8x64xf32>
    %c0_568 = arith.constant 0 : index
    %c0_569 = arith.constant 0 : index
    %c0_570 = arith.constant 0 : index
    %847 = vector.load %arg7[%c0_568, %c0_569, %c0_570] : memref<3x1x64xf32, #tpu.memory_space<vmem>>, vector<1x1x64xf32>
    %848 = vector.shape_cast %847 : vector<1x1x64xf32> to vector<1x64xf32>
    %849 = vector.broadcast %848 : vector<1x64xf32> to vector<8x64xf32>
    %850 = arith.addf %846, %849 : vector<8x64xf32>
    %c0_571 = arith.constant 0 : index
    %c0_572 = arith.constant 0 : index
    %c0_573 = arith.constant 0 : index
    %851 = vector.load %arg6[%c0_571, %c0_572, %c0_573] : memref<3x64x64xf32, #tpu.memory_space<vmem>>, vector<1x64x64xf32>
    %852 = vector.shape_cast %851 : vector<1x64x64xf32> to vector<64x64xf32>
    %cst_574 = arith.constant dense<0.000000e+00> : vector<8x64xf32>
    %853 = tpu.matmul %795, %852, %cst_574 {dimension_numbers = #tpu.dot_dimension_numbers<[1], [0], [0], [1], [0, 0, 1, 1], [], []>} : vector<8x64xf32>, vector<64x64xf32>, vector<8x64xf32> -> vector<8x64xf32>
    %c0_575 = arith.constant 0 : index
    %c0_576 = arith.constant 0 : index
    %c0_577 = arith.constant 0 : index
    %854 = vector.load %arg8[%c0_575, %c0_576, %c0_577] : memref<3x1x64xf32, #tpu.memory_space<vmem>>, vector<1x1x64xf32>
    %855 = vector.shape_cast %854 : vector<1x1x64xf32> to vector<1x64xf32>
    %856 = vector.broadcast %855 : vector<1x64xf32> to vector<8x64xf32>
    %857 = arith.addf %853, %856 : vector<8x64xf32>
    %858 = arith.addf %850, %857 : vector<8x64xf32>
    %859 = arith.negf %858 : vector<8x64xf32>
    %860 = math.exp %859 : vector<8x64xf32>
    %cst_578 = arith.constant 1.000000e+00 : f32
    %861 = vector.broadcast %cst_578 : f32 to vector<8x64xf32>
    %862 = arith.addf %861, %860 : vector<8x64xf32>
    %863 = arith.divf %861, %862 : vector<8x64xf32>
    %c1_579 = arith.constant 1 : index
    %c0_580 = arith.constant 0 : index
    %c0_581 = arith.constant 0 : index
    %864 = vector.load %arg5[%c1_579, %c0_580, %c0_581] : memref<3x64x64xf32, #tpu.memory_space<vmem>>, vector<1x64x64xf32>
    %865 = vector.shape_cast %864 : vector<1x64x64xf32> to vector<64x64xf32>
    %cst_582 = arith.constant dense<0.000000e+00> : vector<8x64xf32>
    %866 = tpu.matmul %843, %865, %cst_582 {dimension_numbers = #tpu.dot_dimension_numbers<[1], [0], [0], [1], [0, 0, 1, 1], [], []>} : vector<8x64xf32>, vector<64x64xf32>, vector<8x64xf32> -> vector<8x64xf32>
    %c1_583 = arith.constant 1 : index
    %c0_584 = arith.constant 0 : index
    %c0_585 = arith.constant 0 : index
    %867 = vector.load %arg7[%c1_583, %c0_584, %c0_585] : memref<3x1x64xf32, #tpu.memory_space<vmem>>, vector<1x1x64xf32>
    %868 = vector.shape_cast %867 : vector<1x1x64xf32> to vector<1x64xf32>
    %869 = vector.broadcast %868 : vector<1x64xf32> to vector<8x64xf32>
    %870 = arith.addf %866, %869 : vector<8x64xf32>
    %c1_586 = arith.constant 1 : index
    %c0_587 = arith.constant 0 : index
    %c0_588 = arith.constant 0 : index
    %871 = vector.load %arg6[%c1_586, %c0_587, %c0_588] : memref<3x64x64xf32, #tpu.memory_space<vmem>>, vector<1x64x64xf32>
    %872 = vector.shape_cast %871 : vector<1x64x64xf32> to vector<64x64xf32>
    %cst_589 = arith.constant dense<0.000000e+00> : vector<8x64xf32>
    %873 = tpu.matmul %795, %872, %cst_589 {dimension_numbers = #tpu.dot_dimension_numbers<[1], [0], [0], [1], [0, 0, 1, 1], [], []>} : vector<8x64xf32>, vector<64x64xf32>, vector<8x64xf32> -> vector<8x64xf32>
    %c1_590 = arith.constant 1 : index
    %c0_591 = arith.constant 0 : index
    %c0_592 = arith.constant 0 : index
    %874 = vector.load %arg8[%c1_590, %c0_591, %c0_592] : memref<3x1x64xf32, #tpu.memory_space<vmem>>, vector<1x1x64xf32>
    %875 = vector.shape_cast %874 : vector<1x1x64xf32> to vector<1x64xf32>
    %876 = vector.broadcast %875 : vector<1x64xf32> to vector<8x64xf32>
    %877 = arith.addf %873, %876 : vector<8x64xf32>
    %878 = arith.addf %870, %877 : vector<8x64xf32>
    %879 = arith.negf %878 : vector<8x64xf32>
    %880 = math.exp %879 : vector<8x64xf32>
    %cst_593 = arith.constant 1.000000e+00 : f32
    %881 = vector.broadcast %cst_593 : f32 to vector<8x64xf32>
    %882 = arith.addf %881, %880 : vector<8x64xf32>
    %883 = arith.divf %881, %882 : vector<8x64xf32>
    %c2_594 = arith.constant 2 : index
    %c0_595 = arith.constant 0 : index
    %c0_596 = arith.constant 0 : index
    %884 = vector.load %arg5[%c2_594, %c0_595, %c0_596] : memref<3x64x64xf32, #tpu.memory_space<vmem>>, vector<1x64x64xf32>
    %885 = vector.shape_cast %884 : vector<1x64x64xf32> to vector<64x64xf32>
    %cst_597 = arith.constant dense<0.000000e+00> : vector<8x64xf32>
    %886 = tpu.matmul %843, %885, %cst_597 {dimension_numbers = #tpu.dot_dimension_numbers<[1], [0], [0], [1], [0, 0, 1, 1], [], []>} : vector<8x64xf32>, vector<64x64xf32>, vector<8x64xf32> -> vector<8x64xf32>
    %c2_598 = arith.constant 2 : index
    %c0_599 = arith.constant 0 : index
    %c0_600 = arith.constant 0 : index
    %887 = vector.load %arg7[%c2_598, %c0_599, %c0_600] : memref<3x1x64xf32, #tpu.memory_space<vmem>>, vector<1x1x64xf32>
    %888 = vector.shape_cast %887 : vector<1x1x64xf32> to vector<1x64xf32>
    %889 = vector.broadcast %888 : vector<1x64xf32> to vector<8x64xf32>
    %890 = arith.addf %886, %889 : vector<8x64xf32>
    %c2_601 = arith.constant 2 : index
    %c0_602 = arith.constant 0 : index
    %c0_603 = arith.constant 0 : index
    %891 = vector.load %arg6[%c2_601, %c0_602, %c0_603] : memref<3x64x64xf32, #tpu.memory_space<vmem>>, vector<1x64x64xf32>
    %892 = vector.shape_cast %891 : vector<1x64x64xf32> to vector<64x64xf32>
    %cst_604 = arith.constant dense<0.000000e+00> : vector<8x64xf32>
    %893 = tpu.matmul %795, %892, %cst_604 {dimension_numbers = #tpu.dot_dimension_numbers<[1], [0], [0], [1], [0, 0, 1, 1], [], []>} : vector<8x64xf32>, vector<64x64xf32>, vector<8x64xf32> -> vector<8x64xf32>
    %c2_605 = arith.constant 2 : index
    %c0_606 = arith.constant 0 : index
    %c0_607 = arith.constant 0 : index
    %894 = vector.load %arg8[%c2_605, %c0_606, %c0_607] : memref<3x1x64xf32, #tpu.memory_space<vmem>>, vector<1x1x64xf32>
    %895 = vector.shape_cast %894 : vector<1x1x64xf32> to vector<1x64xf32>
    %896 = vector.broadcast %895 : vector<1x64xf32> to vector<8x64xf32>
    %897 = arith.addf %893, %896 : vector<8x64xf32>
    %898 = arith.mulf %863, %897 : vector<8x64xf32>
    %899 = arith.addf %890, %898 : vector<8x64xf32>
    %900 = math.tanh %899 : vector<8x64xf32>
    %cst_608 = arith.constant 1.000000e+00 : f32
    %901 = vector.broadcast %cst_608 : f32 to vector<8x64xf32>
    %902 = arith.subf %901, %883 : vector<8x64xf32>
    %903 = arith.mulf %902, %900 : vector<8x64xf32>
    %904 = arith.mulf %883, %795 : vector<8x64xf32>
    %905 = arith.addf %903, %904 : vector<8x64xf32>
    %c8_i32_609 = arith.constant 8 : i32
    %c0_610 = arith.constant 0 : index
    %c0_611 = arith.constant 0 : index
    %906 = vector.load %arg9[%c0_610, %c0_611] : memref<1x64xf32, #tpu.memory_space<vmem>>, vector<1x64xf32>
    %907 = vector.broadcast %906 : vector<1x64xf32> to vector<8x64xf32>
    %908 = arith.mulf %905, %907 : vector<8x64xf32>
    %cst_612 = arith.constant dense<0.000000e+00> : vector<8xf32>
    %909 = vector.multi_reduction <add>, %908, %cst_612 [1] : vector<8x64xf32> to vector<8xf32>
    %910 = vector.shape_cast %909 : vector<8xf32> to vector<8x1xf32>
    %c0_613 = arith.constant 0 : index
    %c0_614 = arith.constant 0 : index
    %911 = vector.load %arg10[%c0_613, %c0_614] : memref<1x1xf32, #tpu.memory_space<vmem>>, vector<1x1xf32>
    %912 = vector.broadcast %911 : vector<1x1xf32> to vector<8x1xf32>
    %913 = arith.addf %910, %912 : vector<8x1xf32>
    %c0_615 = arith.constant 0 : index
    %c0_616 = arith.constant 0 : index
    %914 = vector.load %arg11[%c0_615, %c0_616] : memref<8x1xf32, #tpu.memory_space<vmem>>, vector<8x1xf32>
    tpu.vector_store %arg11[%c0_615, %c0_616], %913 {strides = array<i32>} : memref<8x1xf32, #tpu.memory_space<vmem>>, vector<8x1xf32>,
    return
  }
}

</mosaic_0001>

<llo_original>
// kernel: gru_model_forward.1
$region0: #{gru_model_forward.1}
  #allocation0 [shape = 'u32[]', space=smem, size = 0x4, offset = 0x4, fixed_abs, tag = 'smem constant byte address 0x4 - core index']
  #allocation1 [shape = 'u32[144,128]{1,0:T(1,128)}', space=vmem, size = 0x12000, scoped, tag = 'internal scratch']
  #allocation2 [shape = 'f32[64,64]{1,0:T(8,128)}', space=vmem, size = 0x8000, scoped, tag = 'scratch operand']
  #allocation3 [shape = 'f32[64,64]{1,0:T(8,128)}', space=vmem, size = 0x8000, scoped, tag = 'scratch operand']
  #allocation4 [shape = 'f32[64,64]{1,0:T(8,128)}', space=vmem, size = 0x8000, scoped, tag = 'scratch operand']
  #allocation5 [shape = 'f32[1,1]{1,0:T(1,128)S(1)}', space=vmem, size = 0x200, scoped, tag = 'scoped memory for gru_model_forward.1']
  %s0 = inlined_call_operand.vmem [shape: f32[64,6], index: 0, kind: input, shape index: {}]
  %s1 = inlined_call_operand.vmem [shape: f32[3,6,64], index: 1, kind: input, shape index: {}]
  %s2 = inlined_call_operand.vmem [shape: f32[3,64,64], index: 2, kind: input, shape index: {}]
  %s3 = inlined_call_operand.hbm [shape: f32[3,1,64], index: 3, kind: input, shape index: {}]
  %s4 = inlined_call_operand.hbm [shape: f32[3,1,64], index: 4, kind: input, shape index: {}]
  %s5 = inlined_call_operand.hbm [shape: f32[3,64,64], index: 5, kind: input, shape index: {}]
  %s6 = inlined_call_operand.hbm [shape: f32[3,64,64], index: 6, kind: input, shape index: {}]
  %s7 = inlined_call_operand.hbm [shape: f32[3,1,64], index: 7, kind: input, shape index: {}]
  %s8 = inlined_call_operand.hbm [shape: f32[3,1,64], index: 8, kind: input, shape index: {}]
  %s9 = inlined_call_operand.vmem [shape: f32[1,64], index: 9, kind: input, shape index: {}]
  %s10 = inlined_call_operand.<no memory space> [shape: f32[1,1], index: 10, kind: input, shape index: {}]
  %s11 = inlined_call_operand.vmem [shape: f32[8,1], index: 11, kind: output, shape index: {}]
  %s12 = sld [smem:[#allocation0]]
  $region78: #{gru_model_forward.1} parent=0
    _
  %s14 = ssub.s32 1, %s12
  %s15 = scalar_select 0, %s14, %s12
  %v16 = vstv %s10
  %17 = vst [vmem:[#allocation5] sm:$0x1] %v16
  $region1: #{gru_model_forward.1} parent=0
    #allocation6 [shape = 'u8[1536]{0}', space=vmem, size = 0x800, scoped, tag = 'input window, operand 3, single buffered']
    #allocation7 [shape = 's32[1]{0}', space=sflag, size = 0x4, scoped, tag = 'scoped memory for gru_model_forward.1']
    #allocation8 [shape = 'u8[1536]{0}', space=vmem, size = 0x800, scoped, tag = 'input window, operand 4, single buffered']
    #allocation9 [shape = 's32[1]{0}', space=sflag, size = 0x4, scoped, tag = 'scoped memory for gru_model_forward.1']
    #allocation10 [shape = 'u8[98304]{0}', space=vmem, size = 0x18000, scoped, tag = 'input window, operand 5, single buffered']
    #allocation11 [shape = 'u8[98304]{0}', space=vmem, size = 0x18000, scoped, tag = 'input window, operand 6, single buffered']
    #allocation12 [shape = 's32[1]{0}', space=sflag, size = 0x4, scoped, tag = 'scoped memory for gru_model_forward.1']
    #allocation13 [shape = 'u8[1536]{0}', space=vmem, size = 0x800, scoped, tag = 'input window, operand 7, single buffered']
    #allocation14 [shape = 'u8[1536]{0}', space=vmem, size = 0x800, scoped, tag = 'input window, operand 8, single buffered']
    #allocation15 [shape = 's32[1]{0}', space=sflag, size = 0x4, scoped, tag = 'scoped memory for gru_model_forward.1']
    %18 = vsyncpa [#allocation7], 0
    %19 = vsyncpa [#allocation9], 0
    %20 = vsyncpa [#allocation12], 0
    %21 = vsyncpa [#allocation15], 0
    // Predicated region
    $region2: #{gru_model_forward.1} parent=1 // pred_check
      _
    $region3: #{gru_model_forward.1} parent=1 // pred_check_branch
      %23 = sbr.rel (0) target = $region5
    $region4: #{gru_model_forward.1} parent=1 // pred_region
      _
    $region5: #{gru_model_forward.1} parent=1 // pred_fallthru
      _
    // Predicated region
    $region6: #{gru_model_forward.1} parent=1 // pred_check
      _
    $region7: #{gru_model_forward.1} parent=1 // pred_check_branch
      %25 = sbr.rel (0) target = $region9
    $region8: #{gru_model_forward.1} parent=1 // pred_region
      _
    $region9: #{gru_model_forward.1} parent=1 // pred_fallthru
      _
    // Predicated region
    $region10: #{gru_model_forward.1} parent=1 // pred_check
      _
    $region11: #{gru_model_forward.1} parent=1 // pred_check_branch
      %27 = sbr.rel (0) target = $region13
    $region12: #{gru_model_forward.1} parent=1 // pred_region
      _
    $region13: #{gru_model_forward.1} parent=1 // pred_fallthru
      _
    // Predicated region
    $region14: #{gru_model_forward.1} parent=1 // pred_check
      _
    $region15: #{gru_model_forward.1} parent=1 // pred_check_branch
      %29 = sbr.rel (0) target = $region17
    $region16: #{gru_model_forward.1} parent=1 // pred_region
      %s31 = ssub.s32 48, 48
      %32 = vsyncadd [#allocation7], %s31
      %s33 = sshll.u32 [#allocation6], 4
      %s34 = int_to_ptr.vmem [resolvable:$true] %s33
      %39 = dma.hbm_to_vmem [thread:$0]  %s3, 48, %s34, [#allocation7], 16, 16, 1
    $region17: #{gru_model_forward.1} parent=1 // pred_fallthru
      _
    // Predicated region
    $region18: #{gru_model_forward.1} parent=1 // pred_check
      _
    $region19: #{gru_model_forward.1} parent=1 // pred_check_branch
      %41 = sbr.rel (0) target = $region21
    $region20: #{gru_model_forward.1} parent=1 // pred_region
      %s43 = ssub.s32 48, 48
      %44 = vsyncadd [#allocation9], %s43
      %s45 = sshll.u32 [#allocation8], 4
      %s46 = int_to_ptr.vmem [resolvable:$true] %s45
      %51 = dma.hbm_to_vmem [thread:$0]  %s4, 48, %s46, [#allocation9], 16, 16, 1
    $region21: #{gru_model_forward.1} parent=1 // pred_fallthru
      _
    // Predicated region
    $region22: #{gru_model_forward.1} parent=1 // pred_check
      _
    $region23: #{gru_model_forward.1} parent=1 // pred_check_branch
      %53 = sbr.rel (0) target = $region25
    $region24: #{gru_model_forward.1} parent=1 // pred_region
      %s55 = ssub.s32 3072, 3072
      %56 = vsyncadd [#allocation9], %s55
      %s57 = sshll.u32 [#allocation10], 4
      %s58 = int_to_ptr.vmem [resolvable:$true] %s57
      %63 = dma.hbm_to_vmem [thread:$0]  %s5, 3072, %s58, [#allocation9], 128, 128, 8
    $region25: #{gru_model_forward.1} parent=1 // pred_fallthru
      _
    // Predicated region
    $region26: #{gru_model_forward.1} parent=1 // pred_check
      _
    $region27: #{gru_model_forward.1} parent=1 // pred_check_branch
      %65 = sbr.rel (0) target = $region29
    $region28: #{gru_model_forward.1} parent=1 // pred_region
      %s67 = ssub.s32 3072, 3072
      %68 = vsyncadd [#allocation12], %s67
      %s69 = sshll.u32 [#allocation11], 4
      %s70 = int_to_ptr.vmem [resolvable:$true] %s69
      %75 = dma.hbm_to_vmem [thread:$0]  %s6, 3072, %s70, [#allocation12], 128, 128, 8
    $region29: #{gru_model_forward.1} parent=1 // pred_fallthru
      _
    // Predicated region
    $region30: #{gru_model_forward.1} parent=1 // pred_check
      _
    $region31: #{gru_model_forward.1} parent=1 // pred_check_branch
      %77 = sbr.rel (0) target = $region33
    $region32: #{gru_model_forward.1} parent=1 // pred_region
      %s79 = ssub.s32 48, 48
      %80 = vsyncadd [#allocation12], %s79
      %s81 = sshll.u32 [#allocation13], 4
      %s82 = int_to_ptr.vmem [resolvable:$true] %s81
      %87 = dma.hbm_to_vmem [thread:$0]  %s7, 48, %s82, [#allocation12], 16, 16, 1
    $region33: #{gru_model_forward.1} parent=1 // pred_fallthru
      _
    // Predicated region
    $region34: #{gru_model_forward.1} parent=1 // pred_check
      _
    $region35: #{gru_model_forward.1} parent=1 // pred_check_branch
      %89 = sbr.rel (0) target = $region37
    $region36: #{gru_model_forward.1} parent=1 // pred_region
      %s91 = ssub.s32 48, 48
      %92 = vsyncadd [#allocation15], %s91
      %s93 = sshll.u32 [#allocation14], 4
      %s94 = int_to_ptr.vmem [resolvable:$true] %s93
      %99 = dma.hbm_to_vmem [thread:$0]  %s8, 48, %s94, [#allocation15], 16, 16, 1
    $region37: #{gru_model_forward.1} parent=1 // pred_fallthru
      _
    // Predicated region
    $region38: #{gru_model_forward.1} parent=1 // pred_check
      _
    $region39: #{gru_model_forward.1} parent=1 // pred_check_branch
      %101 = sbr.rel (0) target = $region41
    $region40: #{gru_model_forward.1} parent=1 // pred_region
      _
    $region41: #{gru_model_forward.1} parent=1 // pred_fallthru
      _
    // Predicated region
    $region42: #{gru_model_forward.1} parent=1 // pred_check
      _
    $region43: #{gru_model_forward.1} parent=1 // pred_check_branch
      %103 = sbr.rel (0) target = $region45
    $region44: #{gru_model_forward.1} parent=1 // pred_region
      _
    $region45: #{gru_model_forward.1} parent=1 // pred_fallthru
      _
    // Predicated region
    $region46: #{gru_model_forward.1} parent=1 // pred_check
      _
    $region47: #{gru_model_forward.1} parent=1 // pred_check_branch
      %105 = sbr.rel (0) target = $region49
    $region48: #{gru_model_forward.1} parent=1 // pred_region
      %106 = dma.done [#allocation7], 48
    $region49: #{gru_model_forward.1} parent=1 // pred_fallthru
      _
    // Predicated region
    $region50: #{gru_model_forward.1} parent=1 // pred_check
      _
    $region51: #{gru_model_forward.1} parent=1 // pred_check_branch
      %108 = sbr.rel (0) target = $region53
    $region52: #{gru_model_forward.1} parent=1 // pred_region
      %109 = dma.done [#allocation9], 48
    $region53: #{gru_model_forward.1} parent=1 // pred_fallthru
      _
    // Predicated region
    $region54: #{gru_model_forward.1} parent=1 // pred_check
      _
    $region55: #{gru_model_forward.1} parent=1 // pred_check_branch
      %111 = sbr.rel (0) target = $region57
    $region56: #{gru_model_forward.1} parent=1 // pred_region
      %112 = dma.done [#allocation9], 3072
    $region57: #{gru_model_forward.1} parent=1 // pred_fallthru
      _
    // Predicated region
    $region58: #{gru_model_forward.1} parent=1 // pred_check
      _
    $region59: #{gru_model_forward.1} parent=1 // pred_check_branch
      %114 = sbr.rel (0) target = $region61
    $region60: #{gru_model_forward.1} parent=1 // pred_region
      %115 = dma.done [#allocation12], 3072
    $region61: #{gru_model_forward.1} parent=1 // pred_fallthru
      _
    // Predicated region
    $region62: #{gru_model_forward.1} parent=1 // pred_check
      _
    $region63: #{gru_model_forward.1} parent=1 // pred_check_branch
      %117 = sbr.rel (0) target = $region65
    $region64: #{gru_model_forward.1} parent=1 // pred_region
      %118 = dma.done [#allocation12], 48
    $region65: #{gru_model_forward.1} parent=1 // pred_fallthru
      _
    // Predicated region
    $region66: #{gru_model_forward.1} parent=1 // pred_check
      _
    $region67: #{gru_model_forward.1} parent=1 // pred_check_branch
      %120 = sbr.rel (0) target = $region69
    $region68: #{gru_model_forward.1} parent=1 // pred_region
      %121 = dma.done [#allocation15], 48
    $region69: #{gru_model_forward.1} parent=1 // pred_fallthru
      _
    %v122 = vld [vmem:[%s0] sm:$0xff]
    %v123 = vld [vmem:[%s0 + $0x8] sm:$0xff]
    %v124 = vld [vmem:[%s0 + $0x10] sm:$0xff]
    %v125 = vld [vmem:[%s0 + $0x18] sm:$0xff]
    %v126 = vld [vmem:[%s0 + $0x20] sm:$0xff]
    %v127 = vld [vmem:[%s0 + $0x28] sm:$0xff]
    %v128 = vld [vmem:[%s0 + $0x30] sm:$0xff]
    %v129 = vld [vmem:[%s0 + $0x38] sm:$0xff]
    %v130 = vld [vmem:[%s1] sm:$0x3f]
    %v131 = vld [vmem:[#allocation6] sm:$0x1]
    %v133 = vlaneseq
    %v134 = vshrl.u32 %v133, 7
    %v135 = vsub.s32 0, %v134
    %v136 = vrot.slane %v131, %v135
    %vm138 = vcmask 48128
    %v140 = vsel %vm138, %v122, 0
    %v143 = vsel %vm138, %v123, 0
    %v146 = vsel %vm138, %v124, 0
    %v149 = vsel %vm138, %v125, 0
    %v152 = vsel %vm138, %v126, 0
    %v155 = vsel %vm138, %v127, 0
    %v158 = vsel %vm138, %v128, 0
    %v161 = vsel %vm138, %v129, 0
    %vm163 = vcmask 1045504
    %v165 = vsel %vm163, %v130, 0
    %167 = vmatprep.subr.mxu0 0.0
    %168 = vmatpush1.msra.mxu0 0.0
    %169 = vmatprep.subr.mxu0 0.0
    %170 = vmatpush1.msra.mxu0 0.0
    %171 = vmatprep.subr.mxu0 0.0
    %172 = vmatpush1.msra.mxu0 0.0
    %173 = vmatprep.subr.mxu0 0.0
    %174 = vmatpush1.msra.mxu0 0.0
    %175 = vmatprep.subr.mxu0 0.0
    %176 = vmatpush1.msra.mxu0 0.0
    %177 = vmatprep.subr.mxu0 0.0
    %178 = vmatpush1.msra.mxu0 0.0
    %179 = vmatprep.subr.mxu0 0.0
    %180 = vmatpush1.msra.mxu0 0.0
    %181 = vmatprep.subr.mxu0 0.0
    %182 = vmatpush1.msra.mxu0 0.0
    %183 = vmatprep.subr.mxu0 0.0
    %184 = vmatpush1.msra.mxu0 0.0
    %185 = vmatprep.subr.mxu0 0.0
    %186 = vmatpush1.msra.mxu0 0.0
    %187 = vmatprep.subr.mxu0 0.0
    %188 = vmatpush1.msra.mxu0 0.0
    %189 = vmatprep.subr.mxu0 0.0
    %190 = vmatpush1.msra.mxu0 0.0
    %191 = vmatprep.subr.mxu0 0.0
    %192 = vmatpush1.msra.mxu0 0.0
    %193 = vmatprep.subr.mxu0 0.0
    %194 = vmatpush1.msra.mxu0 0.0
    %195 = vmatprep.subr.mxu0 0.0
    %196 = vmatpush1.msra.mxu0 0.0
    %197 = vmatprep.subr.mxu0 0.0
    %198 = vmatpush1.msra.mxu0 %v165
    %199 = vmatprep.subr.mxu0 0.0
    %200 = vmatpush2.msra.mxu0 0.0
    %201 = vmatprep.subr.mxu0 0.0
    %202 = vmatpush2.msra.mxu0 0.0
    %203 = vmatprep.subr.mxu0 0.0
    %204 = vmatpush2.msra.mxu0 0.0
    %205 = vmatprep.subr.mxu0 0.0
    %206 = vmatpush2.msra.mxu0 0.0
    %207 = vmatprep.subr.mxu0 0.0
    %208 = vmatpush2.msra.mxu0 0.0
    %209 = vmatprep.subr.mxu0 0.0
    %210 = vmatpush2.msra.mxu0 0.0
    %211 = vmatprep.subr.mxu0 0.0
    %212 = vmatpush2.msra.mxu0 0.0
    %213 = vmatprep.subr.mxu0 0.0
    %214 = vmatpush2.msra.mxu0 0.0
    %215 = vmatprep.subr.mxu0 0.0
    %216 = vmatpush2.msra.mxu0 0.0
    %217 = vmatprep.subr.mxu0 0.0
    %218 = vmatpush2.msra.mxu0 0.0
    %219 = vmatprep.subr.mxu0 0.0
    %220 = vmatpush2.msra.mxu0 0.0
    %221 = vmatprep.subr.mxu0 0.0
    %222 = vmatpush2.msra.mxu0 0.0
    %223 = vmatprep.subr.mxu0 0.0
    %224 = vmatpush2.msra.mxu0 0.0
    %225 = vmatprep.subr.mxu0 0.0
    %226 = vmatpush2.msra.mxu0 0.0
    %227 = vmatprep.subr.mxu0 0.0
    %228 = vmatpush2.msra.mxu0 0.0
    %229 = vmatprep.subr.mxu0 0.0
    %230 = vmatpush2.msra.mxu0 0.0
    %231 = vmatprep.mubr.f32.mxu0 0.0
    %232 = vmatmul.mubr.f32.gmra.mxu0 %v140
    %v233 = vpop.f32.mrf.mxu0
    %v234 = vadd.f32 %v136, %v233
    %v235 = vpop.f32.mrf.mxu0
    %236 = vmatprep.mubr.f32.mxu0 0.0
    %237 = vmatmul.mubr.f32.gmra.mxu0 %v143
    %v238 = vpop.f32.mrf.mxu0
    %v239 = vadd.f32 %v136, %v238
    %v240 = vpop.f32.mrf.mxu0
    %241 = vmatprep.mubr.f32.mxu0 0.0
    %242 = vmatmul.mubr.f32.gmra.mxu0 %v146
    %v243 = vpop.f32.mrf.mxu0
    %v244 = vadd.f32 %v136, %v243
    %v245 = vpop.f32.mrf.mxu0
    %246 = vmatprep.mubr.f32.mxu0 0.0
    %247 = vmatmul.mubr.f32.gmra.mxu0 %v149
    %v248 = vpop.f32.mrf.mxu0
    %v249 = vadd.f32 %v136, %v248
    %v250 = vpop.f32.mrf.mxu0
    %251 = vmatprep.mubr.f32.mxu0 0.0
    %252 = vmatmul.mubr.f32.gmra.mxu0 %v152
    %v253 = vpop.f32.mrf.mxu0
    %v254 = vadd.f32 %v136, %v253
    %v255 = vpop.f32.mrf.mxu0
    %256 = vmatprep.mubr.f32.mxu0 0.0
    %257 = vmatmul.mubr.f32.gmra.mxu0 %v155
    %v258 = vpop.f32.mrf.mxu0
    %v259 = vadd.f32 %v136, %v258
    %v260 = vpop.f32.mrf.mxu0
    %261 = vmatprep.mubr.f32.mxu0 0.0
    %262 = vmatmul.mubr.f32.gmra.mxu0 %v158
    %v263 = vpop.f32.mrf.mxu0
    %v264 = vadd.f32 %v136, %v263
    %v265 = vpop.f32.mrf.mxu0
    %266 = vmatprep.mubr.f32.mxu0 0.0
    %267 = vmatmul.mubr.f32.gmra.mxu0 %v161
    %v268 = vpop.f32.mrf.mxu0
    %v269 = vadd.f32 %v136, %v268
    %v270 = vpop.f32.mrf.mxu0
    %271 = vdwg.mxu0
    %vm272 = vcmask 523264
    %273 = vst.msk [vmem:[#allocation2] sm:$0xff] %vm272, %v234
    %274 = vst.msk [vmem:[#allocation2 + $0x8] sm:$0xff] %vm272, %v239
    %275 = vst.msk [vmem:[#allocation2 + $0x10] sm:$0xff] %vm272, %v244
    %276 = vst.msk [vmem:[#allocation2 + $0x18] sm:$0xff] %vm272, %v249
    %277 = vst.msk [vmem:[#allocation2 + $0x20] sm:$0xff] %vm272, %v254
    %278 = vst.msk [vmem:[#allocation2 + $0x28] sm:$0xff] %vm272, %v259
    %279 = vst.msk [vmem:[#allocation2 + $0x30] sm:$0xff] %vm272, %v264
    %280 = vst.msk [vmem:[#allocation2 + $0x38] sm:$0xff] %vm272, %v269
    %s281 = scalar_lea.vmem %s1, 8
    %v282 = vld [vmem:[%s281] sm:$0x3f]
    %s283 = scalar_lea.vmem [#allocation6], 1
    %v284 = vld [vmem:[%s283] sm:$0x1]
    %v286 = vlaneseq
    %v287 = vshrl.u32 %v286, 7
    %v288 = vsub.s32 0, %v287
    %v289 = vrot.slane %v284, %v288
    %v292 = vsel %vm163, %v282, 0
    %294 = vmatprep.subr.mxu0 0.0
    %295 = vmatpush1.msra.mxu0 0.0
    %296 = vmatprep.subr.mxu0 0.0
    %297 = vmatpush1.msra.mxu0 0.0
    %298 = vmatprep.subr.mxu0 0.0
    %299 = vmatpush1.msra.mxu0 0.0
    %300 = vmatprep.subr.mxu0 0.0
    %301 = vmatpush1.msra.mxu0 0.0
    %302 = vmatprep.subr.mxu0 0.0
    %303 = vmatpush1.msra.mxu0 0.0
    %304 = vmatprep.subr.mxu0 0.0
    %305 = vmatpush1.msra.mxu0 0.0
    %306 = vmatprep.subr.mxu0 0.0
    %307 = vmatpush1.msra.mxu0 0.0
    %308 = vmatprep.subr.mxu0 0.0
    %309 = vmatpush1.msra.mxu0 0.0
    %310 = vmatprep.subr.mxu0 0.0
    %311 = vmatpush1.msra.mxu0 0.0
    %312 = vmatprep.subr.mxu0 0.0
    %313 = vmatpush1.msra.mxu0 0.0
    %314 = vmatprep.subr.mxu0 0.0
    %315 = vmatpush1.msra.mxu0 0.0
    %316 = vmatprep.subr.mxu0 0.0
    %317 = vmatpush1.msra.mxu0 0.0
    %318 = vmatprep.subr.mxu0 0.0
    %319 = vmatpush1.msra.mxu0 0.0
    %320 = vmatprep.subr.mxu0 0.0
    %321 = vmatpush1.msra.mxu0 0.0
    %322 = vmatprep.subr.mxu0 0.0
    %323 = vmatpush1.msra.mxu0 0.0
    %324 = vmatprep.subr.mxu0 0.0
    %325 = vmatpush1.msra.mxu0 %v292
    %326 = vmatprep.subr.mxu0 0.0
    %327 = vmatpush2.msra.mxu0 0.0
    %328 = vmatprep.subr.mxu0 0.0
    %329 = vmatpush2.msra.mxu0 0.0
    %330 = vmatprep.subr.mxu0 0.0
    %331 = vmatpush2.msra.mxu0 0.0
    %332 = vmatprep.subr.mxu0 0.0
    %333 = vmatpush2.msra.mxu0 0.0
    %334 = vmatprep.subr.mxu0 0.0
    %335 = vmatpush2.msra.mxu0 0.0
    %336 = vmatprep.subr.mxu0 0.0
    %337 = vmatpush2.msra.mxu0 0.0
    %338 = vmatprep.subr.mxu0 0.0
    %339 = vmatpush2.msra.mxu0 0.0
    %340 = vmatprep.subr.mxu0 0.0
    %341 = vmatpush2.msra.mxu0 0.0
    %342 = vmatprep.subr.mxu0 0.0
    %343 = vmatpush2.msra.mxu0 0.0
    %344 = vmatprep.subr.mxu0 0.0
    %345 = vmatpush2.msra.mxu0 0.0
    %346 = vmatprep.subr.mxu0 0.0
    %347 = vmatpush2.msra.mxu0 0.0
    %348 = vmatprep.subr.mxu0 0.0
    %349 = vmatpush2.msra.mxu0 0.0
    %350 = vmatprep.subr.mxu0 0.0
    %351 = vmatpush2.msra.mxu0 0.0
    %352 = vmatprep.subr.mxu0 0.0
    %353 = vmatpush2.msra.mxu0 0.0
    %354 = vmatprep.subr.mxu0 0.0
    %355 = vmatpush2.msra.mxu0 0.0
    %356 = vmatprep.subr.mxu0 0.0
    %357 = vmatpush2.msra.mxu0 0.0
    %358 = vmatprep.mubr.f32.mxu0 0.0
    %359 = vmatmul.mubr.f32.gmra.mxu0 %v140
    %v360 = vpop.f32.mrf.mxu0
    %v361 = vadd.f32 %v289, %v360
    %v362 = vpop.f32.mrf.mxu0
    %363 = vmatprep.mubr.f32.mxu0 0.0
    %364 = vmatmul.mubr.f32.gmra.mxu0 %v143
    %v365 = vpop.f32.mrf.mxu0
    %v366 = vadd.f32 %v289, %v365
    %v367 = vpop.f32.mrf.mxu0
    %368 = vmatprep.mubr.f32.mxu0 0.0
    %369 = vmatmul.mubr.f32.gmra.mxu0 %v146
    %v370 = vpop.f32.mrf.mxu0
    %v371 = vadd.f32 %v289, %v370
    %v372 = vpop.f32.mrf.mxu0
    %373 = vmatprep.mubr.f32.mxu0 0.0
    %374 = vmatmul.mubr.f32.gmra.mxu0 %v149
    %v375 = vpop.f32.mrf.mxu0
    %v376 = vadd.f32 %v289, %v375
    %v377 = vpop.f32.mrf.mxu0
    %378 = vmatprep.mubr.f32.mxu0 0.0
    %379 = vmatmul.mubr.f32.gmra.mxu0 %v152
    %v380 = vpop.f32.mrf.mxu0
    %v381 = vadd.f32 %v289, %v380
    %v382 = vpop.f32.mrf.mxu0
    %383 = vmatprep.mubr.f32.mxu0 0.0
    %384 = vmatmul.mubr.f32.gmra.mxu0 %v155
    %v385 = vpop.f32.mrf.mxu0
    %v386 = vadd.f32 %v289, %v385
    %v387 = vpop.f32.mrf.mxu0
    %388 = vmatprep.mubr.f32.mxu0 0.0
    %389 = vmatmul.mubr.f32.gmra.mxu0 %v158
    %v390 = vpop.f32.mrf.mxu0
    %v391 = vadd.f32 %v289, %v390
    %v392 = vpop.f32.mrf.mxu0
    %393 = vmatprep.mubr.f32.mxu0 0.0
    %394 = vmatmul.mubr.f32.gmra.mxu0 %v161
    %v395 = vpop.f32.mrf.mxu0
    %v396 = vadd.f32 %v289, %v395
    %v397 = vpop.f32.mrf.mxu0
    %398 = vdwg.mxu0
    %399 = vst.msk [vmem:[#allocation3] sm:$0xff] %vm272, %v361
    %400 = vst.msk [vmem:[#allocation3 + $0x8] sm:$0xff] %vm272, %v366
    %401 = vst.msk [vmem:[#allocation3 + $0x10] sm:$0xff] %vm272, %v371
    %402 = vst.msk [vmem:[#allocation3 + $0x18] sm:$0xff] %vm272, %v376
    %403 = vst.msk [vmem:[#allocation3 + $0x20] sm:$0xff] %vm272, %v381
    %404 = vst.msk [vmem:[#allocation3 + $0x28] sm:$0xff] %vm272, %v386
    %405 = vst.msk [vmem:[#allocation3 + $0x30] sm:$0xff] %vm272, %v391
    %406 = vst.msk [vmem:[#allocation3 + $0x38] sm:$0xff] %vm272, %v396
    %s407 = scalar_lea.vmem %s1, 16
    %v408 = vld [vmem:[%s407] sm:$0x3f]
    %s409 = scalar_lea.vmem [#allocation6], 2
    %v410 = vld [vmem:[%s409] sm:$0x1]
    %v412 = vlaneseq
    %v413 = vshrl.u32 %v412, 7
    %v414 = vsub.s32 0, %v413
    %v415 = vrot.slane %v410, %v414
    %v418 = vsel %vm163, %v408, 0
    %420 = vmatprep.subr.mxu0 0.0
    %421 = vmatpush1.msra.mxu0 0.0
    %422 = vmatprep.subr.mxu0 0.0
    %423 = vmatpush1.msra.mxu0 0.0
    %424 = vmatprep.subr.mxu0 0.0
    %425 = vmatpush1.msra.mxu0 0.0
    %426 = vmatprep.subr.mxu0 0.0
    %427 = vmatpush1.msra.mxu0 0.0
    %428 = vmatprep.subr.mxu0 0.0
    %429 = vmatpush1.msra.mxu0 0.0
    %430 = vmatprep.subr.mxu0 0.0
    %431 = vmatpush1.msra.mxu0 0.0
    %432 = vmatprep.subr.mxu0 0.0
    %433 = vmatpush1.msra.mxu0 0.0
    %434 = vmatprep.subr.mxu0 0.0
    %435 = vmatpush1.msra.mxu0 0.0
    %436 = vmatprep.subr.mxu0 0.0
    %437 = vmatpush1.msra.mxu0 0.0
    %438 = vmatprep.subr.mxu0 0.0
    %439 = vmatpush1.msra.mxu0 0.0
    %440 = vmatprep.subr.mxu0 0.0
    %441 = vmatpush1.msra.mxu0 0.0
    %442 = vmatprep.subr.mxu0 0.0
    %443 = vmatpush1.msra.mxu0 0.0
    %444 = vmatprep.subr.mxu0 0.0
    %445 = vmatpush1.msra.mxu0 0.0
    %446 = vmatprep.subr.mxu0 0.0
    %447 = vmatpush1.msra.mxu0 0.0
    %448 = vmatprep.subr.mxu0 0.0
    %449 = vmatpush1.msra.mxu0 0.0
    %450 = vmatprep.subr.mxu0 0.0
    %451 = vmatpush1.msra.mxu0 %v418
    %452 = vmatprep.subr.mxu0 0.0
    %453 = vmatpush2.msra.mxu0 0.0
    %454 = vmatprep.subr.mxu0 0.0
    %455 = vmatpush2.msra.mxu0 0.0
    %456 = vmatprep.subr.mxu0 0.0
    %457 = vmatpush2.msra.mxu0 0.0
    %458 = vmatprep.subr.mxu0 0.0
    %459 = vmatpush2.msra.mxu0 0.0
    %460 = vmatprep.subr.mxu0 0.0
    %461 = vmatpush2.msra.mxu0 0.0
    %462 = vmatprep.subr.mxu0 0.0
    %463 = vmatpush2.msra.mxu0 0.0
    %464 = vmatprep.subr.mxu0 0.0
    %465 = vmatpush2.msra.mxu0 0.0
    %466 = vmatprep.subr.mxu0 0.0
    %467 = vmatpush2.msra.mxu0 0.0
    %468 = vmatprep.subr.mxu0 0.0
    %469 = vmatpush2.msra.mxu0 0.0
    %470 = vmatprep.subr.mxu0 0.0
    %471 = vmatpush2.msra.mxu0 0.0
    %472 = vmatprep.subr.mxu0 0.0
    %473 = vmatpush2.msra.mxu0 0.0
    %474 = vmatprep.subr.mxu0 0.0
    %475 = vmatpush2.msra.mxu0 0.0
    %476 = vmatprep.subr.mxu0 0.0
    %477 = vmatpush2.msra.mxu0 0.0
    %478 = vmatprep.subr.mxu0 0.0
    %479 = vmatpush2.msra.mxu0 0.0
    %480 = vmatprep.subr.mxu0 0.0
    %481 = vmatpush2.msra.mxu0 0.0
    %482 = vmatprep.subr.mxu0 0.0
    %483 = vmatpush2.msra.mxu0 0.0
    %484 = vmatprep.mubr.f32.mxu0 0.0
    %485 = vmatmul.mubr.f32.gmra.mxu0 %v140
    %v486 = vpop.f32.mrf.mxu0
    %v487 = vadd.f32 %v415, %v486
    %v488 = vpop.f32.mrf.mxu0
    %489 = vmatprep.mubr.f32.mxu0 0.0
    %490 = vmatmul.mubr.f32.gmra.mxu0 %v143
    %v491 = vpop.f32.mrf.mxu0
    %v492 = vadd.f32 %v415, %v491
    %v493 = vpop.f32.mrf.mxu0
    %494 = vmatprep.mubr.f32.mxu0 0.0
    %495 = vmatmul.mubr.f32.gmra.mxu0 %v146
    %v496 = vpop.f32.mrf.mxu0
    %v497 = vadd.f32 %v415, %v496
    %v498 = vpop.f32.mrf.mxu0
    %499 = vmatprep.mubr.f32.mxu0 0.0
    %500 = vmatmul.mubr.f32.gmra.mxu0 %v149
    %v501 = vpop.f32.mrf.mxu0
    %v502 = vadd.f32 %v415, %v501
    %v503 = vpop.f32.mrf.mxu0
    %504 = vmatprep.mubr.f32.mxu0 0.0
    %505 = vmatmul.mubr.f32.gmra.mxu0 %v152
    %v506 = vpop.f32.mrf.mxu0
    %v507 = vadd.f32 %v415, %v506
    %v508 = vpop.f32.mrf.mxu0
    %509 = vmatprep.mubr.f32.mxu0 0.0
    %510 = vmatmul.mubr.f32.gmra.mxu0 %v155
    %v511 = vpop.f32.mrf.mxu0
    %v512 = vadd.f32 %v415, %v511
    %v513 = vpop.f32.mrf.mxu0
    %514 = vmatprep.mubr.f32.mxu0 0.0
    %515 = vmatmul.mubr.f32.gmra.mxu0 %v158
    %v516 = vpop.f32.mrf.mxu0
    %v517 = vadd.f32 %v415, %v516
    %v518 = vpop.f32.mrf.mxu0
    %519 = vmatprep.mubr.f32.mxu0 0.0
    %520 = vmatmul.mubr.f32.gmra.mxu0 %v161
    %v521 = vpop.f32.mrf.mxu0
    %v522 = vadd.f32 %v415, %v521
    %v523 = vpop.f32.mrf.mxu0
    %524 = vdwg.mxu0
    %525 = vst.msk [vmem:[#allocation4] sm:$0xff] %vm272, %v487
    %526 = vst.msk [vmem:[#allocation4 + $0x8] sm:$0xff] %vm272, %v492
    %527 = vst.msk [vmem:[#allocation4 + $0x10] sm:$0xff] %vm272, %v497
    %528 = vst.msk [vmem:[#allocation4 + $0x18] sm:$0xff] %vm272, %v502
    %529 = vst.msk [vmem:[#allocation4 + $0x20] sm:$0xff] %vm272, %v507
    %530 = vst.msk [vmem:[#allocation4 + $0x28] sm:$0xff] %vm272, %v512
    %531 = vst.msk [vmem:[#allocation4 + $0x30] sm:$0xff] %vm272, %v517
    %532 = vst.msk [vmem:[#allocation4 + $0x38] sm:$0xff] %vm272, %v522
    %v533 = vld [vmem:[#allocation2] sm:$0xff]
    %v534 = vld [vmem:[%s2] sm:$0xff]
    %v535 = vld [vmem:[%s2 + $0x8] sm:$0xff]
    %v536 = vld [vmem:[%s2 + $0x10] sm:$0xff]
    %v537 = vld [vmem:[%s2 + $0x18] sm:$0xff]
    %v538 = vld [vmem:[%s2 + $0x20] sm:$0xff]
    %v539 = vld [vmem:[%s2 + $0x28] sm:$0xff]
    %v540 = vld [vmem:[%s2 + $0x30] sm:$0xff]
    %v541 = vld [vmem:[%s2 + $0x38] sm:$0xff]
    %v542 = vld [vmem:[#allocation8] sm:$0x1]
    %v544 = vlaneseq
    %v545 = vshrl.u32 %v544, 7
    %v546 = vsub.s32 0, %v545
    %v547 = vrot.slane %v542, %v546
    %v550 = vsel %vm272, 0.0, 0
    %552 = vmatprep.subr.mxu0 0.0
    %553 = vmatpush1.msra.mxu0 0.0
    %554 = vmatprep.subr.mxu0 0.0
    %555 = vmatpush1.msra.mxu0 0.0
    %556 = vmatprep.subr.mxu0 0.0
    %557 = vmatpush1.msra.mxu0 0.0
    %558 = vmatprep.subr.mxu0 0.0
    %559 = vmatpush1.msra.mxu0 0.0
    %560 = vmatprep.subr.mxu0 0.0
    %561 = vmatpush1.msra.mxu0 0.0
    %562 = vmatprep.subr.mxu0 0.0
    %563 = vmatpush1.msra.mxu0 0.0
    %564 = vmatprep.subr.mxu0 0.0
    %565 = vmatpush1.msra.mxu0 0.0
    %566 = vmatprep.subr.mxu0 0.0
    %567 = vmatpush1.msra.mxu0 0.0
    %568 = vmatprep.subr.mxu0 0.0
    %569 = vmatpush1.msra.mxu0 %v541
    %570 = vmatprep.subr.mxu0 0.0
    %571 = vmatpush1.msra.mxu0 %v540
    %572 = vmatprep.subr.mxu0 0.0
    %573 = vmatpush1.msra.mxu0 %v539
    %574 = vmatprep.subr.mxu0 0.0
    %575 = vmatpush1.msra.mxu0 %v538
    %576 = vmatprep.subr.mxu0 0.0
    %577 = vmatpush1.msra.mxu0 %v537
    %578 = vmatprep.subr.mxu0 0.0
    %579 = vmatpush1.msra.mxu0 %v536
    %580 = vmatprep.subr.mxu0 0.0
    %581 = vmatpush1.msra.mxu0 %v535
    %582 = vmatprep.subr.mxu0 0.0
    %583 = vmatpush1.msra.mxu0 %v534
    %584 = vmatprep.subr.mxu0 0.0
    %585 = vmatpush2.msra.mxu0 0.0
    %586 = vmatprep.subr.mxu0 0.0
    %587 = vmatpush2.msra.mxu0 0.0
    %588 = vmatprep.subr.mxu0 0.0
    %589 = vmatpush2.msra.mxu0 0.0
    %590 = vmatprep.subr.mxu0 0.0
    %591 = vmatpush2.msra.mxu0 0.0
    %592 = vmatprep.subr.mxu0 0.0
    %593 = vmatpush2.msra.mxu0 0.0
    %594 = vmatprep.subr.mxu0 0.0
    %595 = vmatpush2.msra.mxu0 0.0
    %596 = vmatprep.subr.mxu0 0.0
    %597 = vmatpush2.msra.mxu0 0.0
    %598 = vmatprep.subr.mxu0 0.0
    %599 = vmatpush2.msra.mxu0 0.0
    %600 = vmatprep.subr.mxu0 0.0
    %601 = vmatpush2.msra.mxu0 0.0
    %602 = vmatprep.subr.mxu0 0.0
    %603 = vmatpush2.msra.mxu0 0.0
    %604 = vmatprep.subr.mxu0 0.0
    %605 = vmatpush2.msra.mxu0 0.0
    %606 = vmatprep.subr.mxu0 0.0
    %607 = vmatpush2.msra.mxu0 0.0
    %608 = vmatprep.subr.mxu0 0.0
    %609 = vmatpush2.msra.mxu0 0.0
    %610 = vmatprep.subr.mxu0 0.0
    %611 = vmatpush2.msra.mxu0 0.0
    %612 = vmatprep.subr.mxu0 0.0
    %613 = vmatpush2.msra.mxu0 0.0
    %614 = vmatprep.subr.mxu0 0.0
    %615 = vmatpush2.msra.mxu0 0.0
    %616 = vmatprep.mubr.f32.mxu0 0.0
    %617 = vmatmul.mubr.f32.gmra.mxu0 %v550
    %v618 = vpop.f32.mrf.mxu0
    %v619 = vadd.f32 %v547, %v618
    %v620 = vpop.f32.mrf.mxu0
    %621 = vdwg.mxu0
    %v622 = vadd.f32 %v533, %v619
    %v623 = vxor.u32 %v622, 2147483648
    %v624 = vmul.f32 %v623, 1.442695
    %v625 = vpow.pop %v624
    %v626 = vadd.f32 %v625, 1.0
    %v627 = vrcp.pop %v626
    %v628 = vmul.f32 1.0, %v627
    %v629 = vld [vmem:[#allocation3] sm:$0xff]
    %s630 = scalar_lea.vmem %s2, 64
    %v631 = vld [vmem:[%s630] sm:$0xff]
    %v632 = vld [vmem:[%s630 + $0x8] sm:$0xff]
    %v633 = vld [vmem:[%s630 + $0x10] sm:$0xff]
    %v634 = vld [vmem:[%s630 + $0x18] sm:$0xff]
    %v635 = vld [vmem:[%s630 + $0x20] sm:$0xff]
    %v636 = vld [vmem:[%s630 + $0x28] sm:$0xff]
    %v637 = vld [vmem:[%s630 + $0x30] sm:$0xff]
    %v638 = vld [vmem:[%s630 + $0x38] sm:$0xff]
    %s639 = scalar_lea.vmem [#allocation8], 1
    %v640 = vld [vmem:[%s639] sm:$0x1]
    %v642 = vlaneseq
    %v643 = vshrl.u32 %v642, 7
    %v644 = vsub.s32 0, %v643
    %v645 = vrot.slane %v640, %v644
    %647 = vmatprep.subr.mxu0 0.0
    %648 = vmatpush1.msra.mxu0 0.0
    %649 = vmatprep.subr.mxu0 0.0
    %650 = vmatpush1.msra.mxu0 0.0
    %651 = vmatprep.subr.mxu0 0.0
    %652 = vmatpush1.msra.mxu0 0.0
    %653 = vmatprep.subr.mxu0 0.0
    %654 = vmatpush1.msra.mxu0 0.0
    %655 = vmatprep.subr.mxu0 0.0
    %656 = vmatpush1.msra.mxu0 0.0
    %657 = vmatprep.subr.mxu0 0.0
    %658 = vmatpush1.msra.mxu0 0.0
    %659 = vmatprep.subr.mxu0 0.0
    %660 = vmatpush1.msra.mxu0 0.0
    %661 = vmatprep.subr.mxu0 0.0
    %662 = vmatpush1.msra.mxu0 0.0
    %663 = vmatprep.subr.mxu0 0.0
    %664 = vmatpush1.msra.mxu0 %v638
    %665 = vmatprep.subr.mxu0 0.0
    %666 = vmatpush1.msra.mxu0 %v637
    %667 = vmatprep.subr.mxu0 0.0
    %668 = vmatpush1.msra.mxu0 %v636
    %669 = vmatprep.subr.mxu0 0.0
    %670 = vmatpush1.msra.mxu0 %v635
    %671 = vmatprep.subr.mxu0 0.0
    %672 = vmatpush1.msra.mxu0 %v634
    %673 = vmatprep.subr.mxu0 0.0
    %674 = vmatpush1.msra.mxu0 %v633
    %675 = vmatprep.subr.mxu0 0.0
    %676 = vmatpush1.msra.mxu0 %v632
    %677 = vmatprep.subr.mxu0 0.0
    %678 = vmatpush1.msra.mxu0 %v631
    %679 = vmatprep.subr.mxu0 0.0
    %680 = vmatpush2.msra.mxu0 0.0
    %681 = vmatprep.subr.mxu0 0.0
    %682 = vmatpush2.msra.mxu0 0.0
    %683 = vmatprep.subr.mxu0 0.0
    %684 = vmatpush2.msra.mxu0 0.0
    %685 = vmatprep.subr.mxu0 0.0
    %686 = vmatpush2.msra.mxu0 0.0
    %687 = vmatprep.subr.mxu0 0.0
    %688 = vmatpush2.msra.mxu0 0.0
    %689 = vmatprep.subr.mxu0 0.0
    %690 = vmatpush2.msra.mxu0 0.0
    %691 = vmatprep.subr.mxu0 0.0
    %692 = vmatpush2.msra.mxu0 0.0
    %693 = vmatprep.subr.mxu0 0.0
    %694 = vmatpush2.msra.mxu0 0.0
    %695 = vmatprep.subr.mxu0 0.0
    %696 = vmatpush2.msra.mxu0 0.0
    %697 = vmatprep.subr.mxu0 0.0
    %698 = vmatpush2.msra.mxu0 0.0
    %699 = vmatprep.subr.mxu0 0.0
    %700 = vmatpush2.msra.mxu0 0.0
    %701 = vmatprep.subr.mxu0 0.0
    %702 = vmatpush2.msra.mxu0 0.0
    %703 = vmatprep.subr.mxu0 0.0
    %704 = vmatpush2.msra.mxu0 0.0
    %705 = vmatprep.subr.mxu0 0.0
    %706 = vmatpush2.msra.mxu0 0.0
    %707 = vmatprep.subr.mxu0 0.0
    %708 = vmatpush2.msra.mxu0 0.0
    %709 = vmatprep.subr.mxu0 0.0
    %710 = vmatpush2.msra.mxu0 0.0
    %711 = vmatprep.mubr.f32.mxu0 0.0
    %712 = vmatmul.mubr.f32.gmra.mxu0 %v550
    %v713 = vpop.f32.mrf.mxu0
    %v714 = vadd.f32 %v645, %v713
    %v715 = vpop.f32.mrf.mxu0
    %716 = vdwg.mxu0
    %v717 = vadd.f32 %v629, %v714
    %v718 = vxor.u32 %v717, 2147483648
    %v719 = vmul.f32 %v718, 1.442695
    %v720 = vpow.pop %v719
    %v721 = vadd.f32 %v720, 1.0
    %v722 = vrcp.pop %v721
    %v723 = vmul.f32 1.0, %v722
    %v724 = vld [vmem:[#allocation4] sm:$0xff]
    %s725 = scalar_lea.vmem %s2, 128
    %v726 = vld [vmem:[%s725] sm:$0xff]
    %v727 = vld [vmem:[%s725 + $0x8] sm:$0xff]
    %v728 = vld [vmem:[%s725 + $0x10] sm:$0xff]
    %v729 = vld [vmem:[%s725 + $0x18] sm:$0xff]
    %v730 = vld [vmem:[%s725 + $0x20] sm:$0xff]
    %v731 = vld [vmem:[%s725 + $0x28] sm:$0xff]
    %v732 = vld [vmem:[%s725 + $0x30] sm:$0xff]
    %v733 = vld [vmem:[%s725 + $0x38] sm:$0xff]
    %s734 = scalar_lea.vmem [#allocation8], 2
    %v735 = vld [vmem:[%s734] sm:$0x1]
    %v737 = vlaneseq
    %v738 = vshrl.u32 %v737, 7
    %v739 = vsub.s32 0, %v738
    %v740 = vrot.slane %v735, %v739
    %742 = vmatprep.subr.mxu0 0.0
    %743 = vmatpush1.msra.mxu0 0.0
    %744 = vmatprep.subr.mxu0 0.0
    %745 = vmatpush1.msra.mxu0 0.0
    %746 = vmatprep.subr.mxu0 0.0
    %747 = vmatpush1.msra.mxu0 0.0
    %748 = vmatprep.subr.mxu0 0.0
    %749 = vmatpush1.msra.mxu0 0.0
    %750 = vmatprep.subr.mxu0 0.0
    %751 = vmatpush1.msra.mxu0 0.0
    %752 = vmatprep.subr.mxu0 0.0
    %753 = vmatpush1.msra.mxu0 0.0
    %754 = vmatprep.subr.mxu0 0.0
    %755 = vmatpush1.msra.mxu0 0.0
    %756 = vmatprep.subr.mxu0 0.0
    %757 = vmatpush1.msra.mxu0 0.0
    %758 = vmatprep.subr.mxu0 0.0
    %759 = vmatpush1.msra.mxu0 %v733
    %760 = vmatprep.subr.mxu0 0.0
    %761 = vmatpush1.msra.mxu0 %v732
    %762 = vmatprep.subr.mxu0 0.0
    %763 = vmatpush1.msra.mxu0 %v731
    %764 = vmatprep.subr.mxu0 0.0
    %765 = vmatpush1.msra.mxu0 %v730
    %766 = vmatprep.subr.mxu0 0.0
    %767 = vmatpush1.msra.mxu0 %v729
    %768 = vmatprep.subr.mxu0 0.0
    %769 = vmatpush1.msra.mxu0 %v728
    %770 = vmatprep.subr.mxu0 0.0
    %771 = vmatpush1.msra.mxu0 %v727
    %772 = vmatprep.subr.mxu0 0.0
    %773 = vmatpush1.msra.mxu0 %v726
    %774 = vmatprep.subr.mxu0 0.0
    %775 = vmatpush2.msra.mxu0 0.0
    %776 = vmatprep.subr.mxu0 0.0
    %777 = vmatpush2.msra.mxu0 0.0
    %778 = vmatprep.subr.mxu0 0.0
    %779 = vmatpush2.msra.mxu0 0.0
    %780 = vmatprep.subr.mxu0 0.0
    %781 = vmatpush2.msra.mxu0 0.0
    %782 = vmatprep.subr.mxu0 0.0
    %783 = vmatpush2.msra.mxu0 0.0
    %784 = vmatprep.subr.mxu0 0.0
    %785 = vmatpush2.msra.mxu0 0.0
    %786 = vmatprep.subr.mxu0 0.0
    %787 = vmatpush2.msra.mxu0 0.0
    %788 = vmatprep.subr.mxu0 0.0
    %789 = vmatpush2.msra.mxu0 0.0
    %790 = vmatprep.subr.mxu0 0.0
    %791 = vmatpush2.msra.mxu0 0.0
    %792 = vmatprep.subr.mxu0 0.0
    %793 = vmatpush2.msra.mxu0 0.0
    %794 = vmatprep.subr.mxu0 0.0
    %795 = vmatpush2.msra.mxu0 0.0
    %796 = vmatprep.subr.mxu0 0.0
    %797 = vmatpush2.msra.mxu0 0.0
    %798 = vmatprep.subr.mxu0 0.0
    %799 = vmatpush2.msra.mxu0 0.0
    %800 = vmatprep.subr.mxu0 0.0
    %801 = vmatpush2.msra.mxu0 0.0
    %802 = vmatprep.subr.mxu0 0.0
    %803 = vmatpush2.msra.mxu0 0.0
    %804 = vmatprep.subr.mxu0 0.0
    %805 = vmatpush2.msra.mxu0 0.0
    %806 = vmatprep.mubr.f32.mxu0 0.0
    %807 = vmatmul.mubr.f32.gmra.mxu0 %v550
    %v808 = vpop.f32.mrf.mxu0
    %v809 = vadd.f32 %v740, %v808
    %v810 = vpop.f32.mrf.mxu0
    %811 = vdwg.mxu0
    %v812 = vmul.f32 %v628, %v809
    %v813 = vadd.f32 %v724, %v812
    %v814 = vtanh.pop %v813
    %v815 = vsub.f32 1.0, %v723
    %v816 = vmul.f32 %v815, %v814
    %v817 = vmul.f32 %v723, 0.0
    %v818 = vadd.f32 %v816, %v817
    %v819 = vld [vmem:[#allocation10] sm:$0xff]
    %v820 = vld [vmem:[#allocation10 + $0x8] sm:$0xff]
    %v821 = vld [vmem:[#allocation10 + $0x10] sm:$0xff]
    %v822 = vld [vmem:[#allocation10 + $0x18] sm:$0xff]
    %v823 = vld [vmem:[#allocation10 + $0x20] sm:$0xff]
    %v824 = vld [vmem:[#allocation10 + $0x28] sm:$0xff]
    %v825 = vld [vmem:[#allocation10 + $0x30] sm:$0xff]
    %v826 = vld [vmem:[#allocation10 + $0x38] sm:$0xff]
    %v827 = vld [vmem:[#allocation13] sm:$0x1]
    %v829 = vlaneseq
    %v830 = vshrl.u32 %v829, 7
    %v831 = vsub.s32 0, %v830
    %v832 = vrot.slane %v827, %v831
    %v835 = vsel %vm272, %v818, 0
    %837 = vmatprep.subr.mxu0 0.0
    %838 = vmatpush1.msra.mxu0 0.0
    %839 = vmatprep.subr.mxu0 0.0
    %840 = vmatpush1.msra.mxu0 0.0
    %841 = vmatprep.subr.mxu0 0.0
    %842 = vmatpush1.msra.mxu0 0.0
    %843 = vmatprep.subr.mxu0 0.0
    %844 = vmatpush1.msra.mxu0 0.0
    %845 = vmatprep.subr.mxu0 0.0
    %846 = vmatpush1.msra.mxu0 0.0
    %847 = vmatprep.subr.mxu0 0.0
    %848 = vmatpush1.msra.mxu0 0.0
    %849 = vmatprep.subr.mxu0 0.0
    %850 = vmatpush1.msra.mxu0 0.0
    %851 = vmatprep.subr.mxu0 0.0
    %852 = vmatpush1.msra.mxu0 0.0
    %853 = vmatprep.subr.mxu0 0.0
    %854 = vmatpush1.msra.mxu0 %v826
    %855 = vmatprep.subr.mxu0 0.0
    %856 = vmatpush1.msra.mxu0 %v825
    %857 = vmatprep.subr.mxu0 0.0
    %858 = vmatpush1.msra.mxu0 %v824
    %859 = vmatprep.subr.mxu0 0.0
    %860 = vmatpush1.msra.mxu0 %v823
    %861 = vmatprep.subr.mxu0 0.0
    %862 = vmatpush1.msra.mxu0 %v822
    %863 = vmatprep.subr.mxu0 0.0
    %864 = vmatpush1.msra.mxu0 %v821
    %865 = vmatprep.subr.mxu0 0.0
    %866 = vmatpush1.msra.mxu0 %v820
    %867 = vmatprep.subr.mxu0 0.0
    %868 = vmatpush1.msra.mxu0 %v819
    %869 = vmatprep.subr.mxu0 0.0
    %870 = vmatpush2.msra.mxu0 0.0
    %871 = vmatprep.subr.mxu0 0.0
    %872 = vmatpush2.msra.mxu0 0.0
    %873 = vmatprep.subr.mxu0 0.0
    %874 = vmatpush2.msra.mxu0 0.0
    %875 = vmatprep.subr.mxu0 0.0
    %876 = vmatpush2.msra.mxu0 0.0
    %877 = vmatprep.subr.mxu0 0.0
    %878 = vmatpush2.msra.mxu0 0.0
    %879 = vmatprep.subr.mxu0 0.0
    %880 = vmatpush2.msra.mxu0 0.0
    %881 = vmatprep.subr.mxu0 0.0
    %882 = vmatpush2.msra.mxu0 0.0
    %883 = vmatprep.subr.mxu0 0.0
    %884 = vmatpush2.msra.mxu0 0.0
    %885 = vmatprep.subr.mxu0 0.0
    %886 = vmatpush2.msra.mxu0 0.0
    %887 = vmatprep.subr.mxu0 0.0
    %888 = vmatpush2.msra.mxu0 0.0
    %889 = vmatprep.subr.mxu0 0.0
    %890 = vmatpush2.msra.mxu0 0.0
    %891 = vmatprep.subr.mxu0 0.0
    %892 = vmatpush2.msra.mxu0 0.0
    %893 = vmatprep.subr.mxu0 0.0
    %894 = vmatpush2.msra.mxu0 0.0
    %895 = vmatprep.subr.mxu0 0.0
    %896 = vmatpush2.msra.mxu0 0.0
    %897 = vmatprep.subr.mxu0 0.0
    %898 = vmatpush2.msra.mxu0 0.0
    %899 = vmatprep.subr.mxu0 0.0
    %900 = vmatpush2.msra.mxu0 0.0
    %901 = vmatprep.mubr.f32.mxu0 0.0
    %902 = vmatmul.mubr.f32.gmra.mxu0 %v835
    %v903 = vpop.f32.mrf.mxu0
    %v904 = vadd.f32 %v832, %v903
    %v905 = vpop.f32.mrf.mxu0
    %906 = vdwg.mxu0
    %v907 = vld [vmem:[#allocation11] sm:$0xff]
    %v908 = vld [vmem:[#allocation11 + $0x8] sm:$0xff]
    %v909 = vld [vmem:[#allocation11 + $0x10] sm:$0xff]
    %v910 = vld [vmem:[#allocation11 + $0x18] sm:$0xff]
    %v911 = vld [vmem:[#allocation11 + $0x20] sm:$0xff]
    %v912 = vld [vmem:[#allocation11 + $0x28] sm:$0xff]
    %v913 = vld [vmem:[#allocation11 + $0x30] sm:$0xff]
    %v914 = vld [vmem:[#allocation11 + $0x38] sm:$0xff]
    %v915 = vld [vmem:[#allocation14] sm:$0x1]
    %v917 = vlaneseq
    %v918 = vshrl.u32 %v917, 7
    %v919 = vsub.s32 0, %v918
    %v920 = vrot.slane %v915, %v919
    %922 = vmatprep.subr.mxu0 0.0
    %923 = vmatpush1.msra.mxu0 0.0
    %924 = vmatprep.subr.mxu0 0.0
    %925 = vmatpush1.msra.mxu0 0.0
    %926 = vmatprep.subr.mxu0 0.0
    %927 = vmatpush1.msra.mxu0 0.0
    %928 = vmatprep.subr.mxu0 0.0
    %929 = vmatpush1.msra.mxu0 0.0
    %930 = vmatprep.subr.mxu0 0.0
    %931 = vmatpush1.msra.mxu0 0.0
    %932 = vmatprep.subr.mxu0 0.0
    %933 = vmatpush1.msra.mxu0 0.0
    %934 = vmatprep.subr.mxu0 0.0
    %935 = vmatpush1.msra.mxu0 0.0
    %936 = vmatprep.subr.mxu0 0.0
    %937 = vmatpush1.msra.mxu0 0.0
    %938 = vmatprep.subr.mxu0 0.0
    %939 = vmatpush1.msra.mxu0 %v914
    %940 = vmatprep.subr.mxu0 0.0
    %941 = vmatpush1.msra.mxu0 %v913
    %942 = vmatprep.subr.mxu0 0.0
    %943 = vmatpush1.msra.mxu0 %v912
    %944 = vmatprep.subr.mxu0 0.0
    %945 = vmatpush1.msra.mxu0 %v911
    %946 = vmatprep.subr.mxu0 0.0
    %947 = vmatpush1.msra.mxu0 %v910
    %948 = vmatprep.subr.mxu0 0.0
    %949 = vmatpush1.msra.mxu0 %v909
    %950 = vmatprep.subr.mxu0 0.0
    %951 = vmatpush1.msra.mxu0 %v908
    %952 = vmatprep.subr.mxu0 0.0
    %953 = vmatpush1.msra.mxu0 %v907
    %954 = vmatprep.subr.mxu0 0.0
    %955 = vmatpush2.msra.mxu0 0.0
    %956 = vmatprep.subr.mxu0 0.0
    %957 = vmatpush2.msra.mxu0 0.0
    %958 = vmatprep.subr.mxu0 0.0
    %959 = vmatpush2.msra.mxu0 0.0
    %960 = vmatprep.subr.mxu0 0.0
    %961 = vmatpush2.msra.mxu0 0.0
    %962 = vmatprep.subr.mxu0 0.0
    %963 = vmatpush2.msra.mxu0 0.0
    %964 = vmatprep.subr.mxu0 0.0
    %965 = vmatpush2.msra.mxu0 0.0
    %966 = vmatprep.subr.mxu0 0.0
    %967 = vmatpush2.msra.mxu0 0.0
    %968 = vmatprep.subr.mxu0 0.0
    %969 = vmatpush2.msra.mxu0 0.0
    %970 = vmatprep.subr.mxu0 0.0
    %971 = vmatpush2.msra.mxu0 0.0
    %972 = vmatprep.subr.mxu0 0.0
    %973 = vmatpush2.msra.mxu0 0.0
    %974 = vmatprep.subr.mxu0 0.0
    %975 = vmatpush2.msra.mxu0 0.0
    %976 = vmatprep.subr.mxu0 0.0
    %977 = vmatpush2.msra.mxu0 0.0
    %978 = vmatprep.subr.mxu0 0.0
    %979 = vmatpush2.msra.mxu0 0.0
    %980 = vmatprep.subr.mxu0 0.0
    %981 = vmatpush2.msra.mxu0 0.0
    %982 = vmatprep.subr.mxu0 0.0
    %983 = vmatpush2.msra.mxu0 0.0
    %984 = vmatprep.subr.mxu0 0.0
    %985 = vmatpush2.msra.mxu0 0.0
    %986 = vmatprep.mubr.f32.mxu0 0.0
    %987 = vmatmul.mubr.f32.gmra.mxu0 %v550
    %v988 = vpop.f32.mrf.mxu0
    %v989 = vadd.f32 %v920, %v988
    %v990 = vpop.f32.mrf.mxu0
    %991 = vdwg.mxu0
    %v992 = vadd.f32 %v904, %v989
    %v993 = vxor.u32 %v992, 2147483648
    %v994 = vmul.f32 %v993, 1.442695
    %v995 = vpow.pop %v994
    %v996 = vadd.f32 %v995, 1.0
    %v997 = vrcp.pop %v996
    %v998 = vmul.f32 1.0, %v997
    %s999 = scalar_lea.vmem [#allocation10], 64
    %v1000 = vld [vmem:[%s999] sm:$0xff]
    %v1001 = vld [vmem:[%s999 + $0x8] sm:$0xff]
    %v1002 = vld [vmem:[%s999 + $0x10] sm:$0xff]
    %v1003 = vld [vmem:[%s999 + $0x18] sm:$0xff]
    %v1004 = vld [vmem:[%s999 + $0x20] sm:$0xff]
    %v1005 = vld [vmem:[%s999 + $0x28] sm:$0xff]
    %v1006 = vld [vmem:[%s999 + $0x30] sm:$0xff]
    %v1007 = vld [vmem:[%s999 + $0x38] sm:$0xff]
    %s1008 = scalar_lea.vmem [#allocation13], 1
    %v1009 = vld [vmem:[%s1008] sm:$0x1]
    %v1011 = vlaneseq
    %v1012 = vshrl.u32 %v1011, 7
    %v1013 = vsub.s32 0, %v1012
    %v1014 = vrot.slane %v1009, %v1013
    %1016 = vmatprep.subr.mxu0 0.0
    %1017 = vmatpush1.msra.mxu0 0.0
    %1018 = vmatprep.subr.mxu0 0.0
    %1019 = vmatpush1.msra.mxu0 0.0
    %1020 = vmatprep.subr.mxu0 0.0
    %1021 = vmatpush1.msra.mxu0 0.0
    %1022 = vmatprep.subr.mxu0 0.0
    %1023 = vmatpush1.msra.mxu0 0.0
    %1024 = vmatprep.subr.mxu0 0.0
    %1025 = vmatpush1.msra.mxu0 0.0
    %1026 = vmatprep.subr.mxu0 0.0
    %1027 = vmatpush1.msra.mxu0 0.0
    %1028 = vmatprep.subr.mxu0 0.0
    %1029 = vmatpush1.msra.mxu0 0.0
    %1030 = vmatprep.subr.mxu0 0.0
    %1031 = vmatpush1.msra.mxu0 0.0
    %1032 = vmatprep.subr.mxu0 0.0
    %1033 = vmatpush1.msra.mxu0 %v1007
    %1034 = vmatprep.subr.mxu0 0.0
    %1035 = vmatpush1.msra.mxu0 %v1006
    %1036 = vmatprep.subr.mxu0 0.0
    %1037 = vmatpush1.msra.mxu0 %v1005
    %1038 = vmatprep.subr.mxu0 0.0
    %1039 = vmatpush1.msra.mxu0 %v1004
    %1040 = vmatprep.subr.mxu0 0.0
    %1041 = vmatpush1.msra.mxu0 %v1003
    %1042 = vmatprep.subr.mxu0 0.0
    %1043 = vmatpush1.msra.mxu0 %v1002
    %1044 = vmatprep.subr.mxu0 0.0
    %1045 = vmatpush1.msra.mxu0 %v1001
    %1046 = vmatprep.subr.mxu0 0.0
    %1047 = vmatpush1.msra.mxu0 %v1000
    %1048 = vmatprep.subr.mxu0 0.0
    %1049 = vmatpush2.msra.mxu0 0.0
    %1050 = vmatprep.subr.mxu0 0.0
    %1051 = vmatpush2.msra.mxu0 0.0
    %1052 = vmatprep.subr.mxu0 0.0
    %1053 = vmatpush2.msra.mxu0 0.0
    %1054 = vmatprep.subr.mxu0 0.0
    %1055 = vmatpush2.msra.mxu0 0.0
    %1056 = vmatprep.subr.mxu0 0.0
    %1057 = vmatpush2.msra.mxu0 0.0
    %1058 = vmatprep.subr.mxu0 0.0
    %1059 = vmatpush2.msra.mxu0 0.0
    %1060 = vmatprep.subr.mxu0 0.0
    %1061 = vmatpush2.msra.mxu0 0.0
    %1062 = vmatprep.subr.mxu0 0.0
    %1063 = vmatpush2.msra.mxu0 0.0
    %1064 = vmatprep.subr.mxu0 0.0
    %1065 = vmatpush2.msra.mxu0 0.0
    %1066 = vmatprep.subr.mxu0 0.0
    %1067 = vmatpush2.msra.mxu0 0.0
    %1068 = vmatprep.subr.mxu0 0.0
    %1069 = vmatpush2.msra.mxu0 0.0
    %1070 = vmatprep.subr.mxu0 0.0
    %1071 = vmatpush2.msra.mxu0 0.0
    %1072 = vmatprep.subr.mxu0 0.0
    %1073 = vmatpush2.msra.mxu0 0.0
    %1074 = vmatprep.subr.mxu0 0.0
    %1075 = vmatpush2.msra.mxu0 0.0
    %1076 = vmatprep.subr.mxu0 0.0
    %1077 = vmatpush2.msra.mxu0 0.0
    %1078 = vmatprep.subr.mxu0 0.0
    %1079 = vmatpush2.msra.mxu0 0.0
    %1080 = vmatprep.mubr.f32.mxu0 0.0
    %1081 = vmatmul.mubr.f32.gmra.mxu0 %v835
    %v1082 = vpop.f32.mrf.mxu0
    %v1083 = vadd.f32 %v1014, %v1082
    %v1084 = vpop.f32.mrf.mxu0
    %1085 = vdwg.mxu0
    %s1086 = scalar_lea.vmem [#allocation11], 64
    %v1087 = vld [vmem:[%s1086] sm:$0xff]
    %v1088 = vld [vmem:[%s1086 + $0x8] sm:$0xff]
    %v1089 = vld [vmem:[%s1086 + $0x10] sm:$0xff]
    %v1090 = vld [vmem:[%s1086 + $0x18] sm:$0xff]
    %v1091 = vld [vmem:[%s1086 + $0x20] sm:$0xff]
    %v1092 = vld [vmem:[%s1086 + $0x28] sm:$0xff]
    %v1093 = vld [vmem:[%s1086 + $0x30] sm:$0xff]
    %v1094 = vld [vmem:[%s1086 + $0x38] sm:$0xff]
    %s1095 = scalar_lea.vmem [#allocation14], 1
    %v1096 = vld [vmem:[%s1095] sm:$0x1]
    %v1098 = vlaneseq
    %v1099 = vshrl.u32 %v1098, 7
    %v1100 = vsub.s32 0, %v1099
    %v1101 = vrot.slane %v1096, %v1100
    %1103 = vmatprep.subr.mxu0 0.0
    %1104 = vmatpush1.msra.mxu0 0.0
    %1105 = vmatprep.subr.mxu0 0.0
    %1106 = vmatpush1.msra.mxu0 0.0
    %1107 = vmatprep.subr.mxu0 0.0
    %1108 = vmatpush1.msra.mxu0 0.0
    %1109 = vmatprep.subr.mxu0 0.0
    %1110 = vmatpush1.msra.mxu0 0.0
    %1111 = vmatprep.subr.mxu0 0.0
    %1112 = vmatpush1.msra.mxu0 0.0
    %1113 = vmatprep.subr.mxu0 0.0
    %1114 = vmatpush1.msra.mxu0 0.0
    %1115 = vmatprep.subr.mxu0 0.0
    %1116 = vmatpush1.msra.mxu0 0.0
    %1117 = vmatprep.subr.mxu0 0.0
    %1118 = vmatpush1.msra.mxu0 0.0
    %1119 = vmatprep.subr.mxu0 0.0
    %1120 = vmatpush1.msra.mxu0 %v1094
    %1121 = vmatprep.subr.mxu0 0.0
    %1122 = vmatpush1.msra.mxu0 %v1093
    %1123 = vmatprep.subr.mxu0 0.0
    %1124 = vmatpush1.msra.mxu0 %v1092
    %1125 = vmatprep.subr.mxu0 0.0
    %1126 = vmatpush1.msra.mxu0 %v1091
    %1127 = vmatprep.subr.mxu0 0.0
    %1128 = vmatpush1.msra.mxu0 %v1090
    %1129 = vmatprep.subr.mxu0 0.0
    %1130 = vmatpush1.msra.mxu0 %v1089
    %1131 = vmatprep.subr.mxu0 0.0
    %1132 = vmatpush1.msra.mxu0 %v1088
    %1133 = vmatprep.subr.mxu0 0.0
    %1134 = vmatpush1.msra.mxu0 %v1087
    %1135 = vmatprep.subr.mxu0 0.0
    %1136 = vmatpush2.msra.mxu0 0.0
    %1137 = vmatprep.subr.mxu0 0.0
    %1138 = vmatpush2.msra.mxu0 0.0
    %1139 = vmatprep.subr.mxu0 0.0
    %1140 = vmatpush2.msra.mxu0 0.0
    %1141 = vmatprep.subr.mxu0 0.0
    %1142 = vmatpush2.msra.mxu0 0.0
    %1143 = vmatprep.subr.mxu0 0.0
    %1144 = vmatpush2.msra.mxu0 0.0
    %1145 = vmatprep.subr.mxu0 0.0
    %1146 = vmatpush2.msra.mxu0 0.0
    %1147 = vmatprep.subr.mxu0 0.0
    %1148 = vmatpush2.msra.mxu0 0.0
    %1149 = vmatprep.subr.mxu0 0.0
    %1150 = vmatpush2.msra.mxu0 0.0
    %1151 = vmatprep.subr.mxu0 0.0
    %1152 = vmatpush2.msra.mxu0 0.0
    %1153 = vmatprep.subr.mxu0 0.0
    %1154 = vmatpush2.msra.mxu0 0.0
    %1155 = vmatprep.subr.mxu0 0.0
    %1156 = vmatpush2.msra.mxu0 0.0
    %1157 = vmatprep.subr.mxu0 0.0
    %1158 = vmatpush2.msra.mxu0 0.0
    %1159 = vmatprep.subr.mxu0 0.0
    %1160 = vmatpush2.msra.mxu0 0.0
    %1161 = vmatprep.subr.mxu0 0.0
    %1162 = vmatpush2.msra.mxu0 0.0
    %1163 = vmatprep.subr.mxu0 0.0
    %1164 = vmatpush2.msra.mxu0 0.0
    %1165 = vmatprep.subr.mxu0 0.0
    %1166 = vmatpush2.msra.mxu0 0.0
    %1167 = vmatprep.mubr.f32.mxu0 0.0
    %1168 = vmatmul.mubr.f32.gmra.mxu0 %v550
    %v1169 = vpop.f32.mrf.mxu0
    %v1170 = vadd.f32 %v1101, %v1169
    %v1171 = vpop.f32.mrf.mxu0
    %1172 = vdwg.mxu0
    %v1173 = vadd.f32 %v1083, %v1170
    %v1174 = vxor.u32 %v1173, 2147483648
    %v1175 = vmul.f32 %v1174, 1.442695
    %v1176 = vpow.pop %v1175
    %v1177 = vadd.f32 %v1176, 1.0
    %v1178 = vrcp.pop %v1177
    %v1179 = vmul.f32 1.0, %v1178
    %s1180 = scalar_lea.vmem [#allocation10], 128
    %v1181 = vld [vmem:[%s1180] sm:$0xff]
    %v1182 = vld [vmem:[%s1180 + $0x8] sm:$0xff]
    %v1183 = vld [vmem:[%s1180 + $0x10] sm:$0xff]
    %v1184 = vld [vmem:[%s1180 + $0x18] sm:$0xff]
    %v1185 = vld [vmem:[%s1180 + $0x20] sm:$0xff]
    %v1186 = vld [vmem:[%s1180 + $0x28] sm:$0xff]
    %v1187 = vld [vmem:[%s1180 + $0x30] sm:$0xff]
    %v1188 = vld [vmem:[%s1180 + $0x38] sm:$0xff]
    %s1189 = scalar_lea.vmem [#allocation13], 2
    %v1190 = vld [vmem:[%s1189] sm:$0x1]
    %v1192 = vlaneseq
    %v1193 = vshrl.u32 %v1192, 7
    %v1194 = vsub.s32 0, %v1193
    %v1195 = vrot.slane %v1190, %v1194
    %1197 = vmatprep.subr.mxu0 0.0
    %1198 = vmatpush1.msra.mxu0 0.0
    %1199 = vmatprep.subr.mxu0 0.0
    %1200 = vmatpush1.msra.mxu0 0.0
    %1201 = vmatprep.subr.mxu0 0.0
    %1202 = vmatpush1.msra.mxu0 0.0
    %1203 = vmatprep.subr.mxu0 0.0
    %1204 = vmatpush1.msra.mxu0 0.0
    %1205 = vmatprep.subr.mxu0 0.0
    %1206 = vmatpush1.msra.mxu0 0.0
    %1207 = vmatprep.subr.mxu0 0.0
    %1208 = vmatpush1.msra.mxu0 0.0
    %1209 = vmatprep.subr.mxu0 0.0
    %1210 = vmatpush1.msra.mxu0 0.0
    %1211 = vmatprep.subr.mxu0 0.0
    %1212 = vmatpush1.msra.mxu0 0.0
    %1213 = vmatprep.subr.mxu0 0.0
    %1214 = vmatpush1.msra.mxu0 %v1188
    %1215 = vmatprep.subr.mxu0 0.0
    %1216 = vmatpush1.msra.mxu0 %v1187
    %1217 = vmatprep.subr.mxu0 0.0
    %1218 = vmatpush1.msra.mxu0 %v1186
    %1219 = vmatprep.subr.mxu0 0.0
    %1220 = vmatpush1.msra.mxu0 %v1185
    %1221 = vmatprep.subr.mxu0 0.0
    %1222 = vmatpush1.msra.mxu0 %v1184
    %1223 = vmatprep.subr.mxu0 0.0
    %1224 = vmatpush1.msra.mxu0 %v1183
    %1225 = vmatprep.subr.mxu0 0.0
    %1226 = vmatpush1.msra.mxu0 %v1182
    %1227 = vmatprep.subr.mxu0 0.0
    %1228 = vmatpush1.msra.mxu0 %v1181
    %1229 = vmatprep.subr.mxu0 0.0
    %1230 = vmatpush2.msra.mxu0 0.0
    %1231 = vmatprep.subr.mxu0 0.0
    %1232 = vmatpush2.msra.mxu0 0.0
    %1233 = vmatprep.subr.mxu0 0.0
    %1234 = vmatpush2.msra.mxu0 0.0
    %1235 = vmatprep.subr.mxu0 0.0
    %1236 = vmatpush2.msra.mxu0 0.0
    %1237 = vmatprep.subr.mxu0 0.0
    %1238 = vmatpush2.msra.mxu0 0.0
    %1239 = vmatprep.subr.mxu0 0.0
    %1240 = vmatpush2.msra.mxu0 0.0
    %1241 = vmatprep.subr.mxu0 0.0
    %1242 = vmatpush2.msra.mxu0 0.0
    %1243 = vmatprep.subr.mxu0 0.0
    %1244 = vmatpush2.msra.mxu0 0.0
    %1245 = vmatprep.subr.mxu0 0.0
    %1246 = vmatpush2.msra.mxu0 0.0
    %1247 = vmatprep.subr.mxu0 0.0
    %1248 = vmatpush2.msra.mxu0 0.0
    %1249 = vmatprep.subr.mxu0 0.0
    %1250 = vmatpush2.msra.mxu0 0.0
    %1251 = vmatprep.subr.mxu0 0.0
    %1252 = vmatpush2.msra.mxu0 0.0
    %1253 = vmatprep.subr.mxu0 0.0
    %1254 = vmatpush2.msra.mxu0 0.0
    %1255 = vmatprep.subr.mxu0 0.0
    %1256 = vmatpush2.msra.mxu0 0.0
    %1257 = vmatprep.subr.mxu0 0.0
    %1258 = vmatpush2.msra.mxu0 0.0
    %1259 = vmatprep.subr.mxu0 0.0
    %1260 = vmatpush2.msra.mxu0 0.0
    %1261 = vmatprep.mubr.f32.mxu0 0.0
    %1262 = vmatmul.mubr.f32.gmra.mxu0 %v835
    %v1263 = vpop.f32.mrf.mxu0
    %v1264 = vadd.f32 %v1195, %v1263
    %v1265 = vpop.f32.mrf.mxu0
    %1266 = vdwg.mxu0
    %s1267 = scalar_lea.vmem [#allocation11], 128
    %v1268 = vld [vmem:[%s1267] sm:$0xff]
    %v1269 = vld [vmem:[%s1267 + $0x8] sm:$0xff]
    %v1270 = vld [vmem:[%s1267 + $0x10] sm:$0xff]
    %v1271 = vld [vmem:[%s1267 + $0x18] sm:$0xff]
    %v1272 = vld [vmem:[%s1267 + $0x20] sm:$0xff]
    %v1273 = vld [vmem:[%s1267 + $0x28] sm:$0xff]
    %v1274 = vld [vmem:[%s1267 + $0x30] sm:$0xff]
    %v1275 = vld [vmem:[%s1267 + $0x38] sm:$0xff]
    %s1276 = scalar_lea.vmem [#allocation14], 2
    %v1277 = vld [vmem:[%s1276] sm:$0x1]
    %v1279 = vlaneseq
    %v1280 = vshrl.u32 %v1279, 7
    %v1281 = vsub.s32 0, %v1280
    %v1282 = vrot.slane %v1277, %v1281
    %1284 = vmatprep.subr.mxu0 0.0
    %1285 = vmatpush1.msra.mxu0 0.0
    %1286 = vmatprep.subr.mxu0 0.0
    %1287 = vmatpush1.msra.mxu0 0.0
    %1288 = vmatprep.subr.mxu0 0.0
    %1289 = vmatpush1.msra.mxu0 0.0
    %1290 = vmatprep.subr.mxu0 0.0
    %1291 = vmatpush1.msra.mxu0 0.0
    %1292 = vmatprep.subr.mxu0 0.0
    %1293 = vmatpush1.msra.mxu0 0.0
    %1294 = vmatprep.subr.mxu0 0.0
    %1295 = vmatpush1.msra.mxu0 0.0
    %1296 = vmatprep.subr.mxu0 0.0
    %1297 = vmatpush1.msra.mxu0 0.0
    %1298 = vmatprep.subr.mxu0 0.0
    %1299 = vmatpush1.msra.mxu0 0.0
    %1300 = vmatprep.subr.mxu0 0.0
    %1301 = vmatpush1.msra.mxu0 %v1275
    %1302 = vmatprep.subr.mxu0 0.0
    %1303 = vmatpush1.msra.mxu0 %v1274
    %1304 = vmatprep.subr.mxu0 0.0
    %1305 = vmatpush1.msra.mxu0 %v1273
    %1306 = vmatprep.subr.mxu0 0.0
    %1307 = vmatpush1.msra.mxu0 %v1272
    %1308 = vmatprep.subr.mxu0 0.0
    %1309 = vmatpush1.msra.mxu0 %v1271
    %1310 = vmatprep.subr.mxu0 0.0
    %1311 = vmatpush1.msra.mxu0 %v1270
    %1312 = vmatprep.subr.mxu0 0.0
    %1313 = vmatpush1.msra.mxu0 %v1269
    %1314 = vmatprep.subr.mxu0 0.0
    %1315 = vmatpush1.msra.mxu0 %v1268
    %1316 = vmatprep.subr.mxu0 0.0
    %1317 = vmatpush2.msra.mxu0 0.0
    %1318 = vmatprep.subr.mxu0 0.0
    %1319 = vmatpush2.msra.mxu0 0.0
    %1320 = vmatprep.subr.mxu0 0.0
    %1321 = vmatpush2.msra.mxu0 0.0
    %1322 = vmatprep.subr.mxu0 0.0
    %1323 = vmatpush2.msra.mxu0 0.0
    %1324 = vmatprep.subr.mxu0 0.0
    %1325 = vmatpush2.msra.mxu0 0.0
    %1326 = vmatprep.subr.mxu0 0.0
    %1327 = vmatpush2.msra.mxu0 0.0
    %1328 = vmatprep.subr.mxu0 0.0
    %1329 = vmatpush2.msra.mxu0 0.0
    %1330 = vmatprep.subr.mxu0 0.0
    %1331 = vmatpush2.msra.mxu0 0.0
    %1332 = vmatprep.subr.mxu0 0.0
    %1333 = vmatpush2.msra.mxu0 0.0
    %1334 = vmatprep.subr.mxu0 0.0
    %1335 = vmatpush2.msra.mxu0 0.0
    %1336 = vmatprep.subr.mxu0 0.0
    %1337 = vmatpush2.msra.mxu0 0.0
    %1338 = vmatprep.subr.mxu0 0.0
    %1339 = vmatpush2.msra.mxu0 0.0
    %1340 = vmatprep.subr.mxu0 0.0
    %1341 = vmatpush2.msra.mxu0 0.0
    %1342 = vmatprep.subr.mxu0 0.0
    %1343 = vmatpush2.msra.mxu0 0.0
    %1344 = vmatprep.subr.mxu0 0.0
    %1345 = vmatpush2.msra.mxu0 0.0
    %1346 = vmatprep.subr.mxu0 0.0
    %1347 = vmatpush2.msra.mxu0 0.0
    %1348 = vmatprep.mubr.f32.mxu0 0.0
    %1349 = vmatmul.mubr.f32.gmra.mxu0 %v550
    %v1350 = vpop.f32.mrf.mxu0
    %v1351 = vadd.f32 %v1282, %v1350
    %v1352 = vpop.f32.mrf.mxu0
    %1353 = vdwg.mxu0
    %v1354 = vmul.f32 %v998, %v1351
    %v1355 = vadd.f32 %v1264, %v1354
    %v1356 = vtanh.pop %v1355
    %v1357 = vsub.f32 1.0, %v1179
    %v1358 = vmul.f32 %v1357, %v1356
    %v1359 = vmul.f32 %v1179, 0.0
    %v1360 = vadd.f32 %v1358, %v1359
    %v1361 = vld [vmem:[#allocation2 + $0x8] sm:$0xff]
    %1362 = vmatprep.subr.mxu0 0.0
    %1363 = vmatpush1.msra.mxu0 0.0
    %1364 = vmatprep.subr.mxu0 0.0
    %1365 = vmatpush1.msra.mxu0 0.0
    %1366 = vmatprep.subr.mxu0 0.0
    %1367 = vmatpush1.msra.mxu0 0.0
    %1368 = vmatprep.subr.mxu0 0.0
    %1369 = vmatpush1.msra.mxu0 0.0
    %1370 = vmatprep.subr.mxu0 0.0
    %1371 = vmatpush1.msra.mxu0 0.0
    %1372 = vmatprep.subr.mxu0 0.0
    %1373 = vmatpush1.msra.mxu0 0.0
    %1374 = vmatprep.subr.mxu0 0.0
    %1375 = vmatpush1.msra.mxu0 0.0
    %1376 = vmatprep.subr.mxu0 0.0
    %1377 = vmatpush1.msra.mxu0 0.0
    %1378 = vmatprep.subr.mxu0 0.0
    %1379 = vmatpush1.msra.mxu0 %v541
    %1380 = vmatprep.subr.mxu0 0.0
    %1381 = vmatpush1.msra.mxu0 %v540
    %1382 = vmatprep.subr.mxu0 0.0
    %1383 = vmatpush1.msra.mxu0 %v539
    %1384 = vmatprep.subr.mxu0 0.0
    %1385 = vmatpush1.msra.mxu0 %v538
    %1386 = vmatprep.subr.mxu0 0.0
    %1387 = vmatpush1.msra.mxu0 %v537
    %1388 = vmatprep.subr.mxu0 0.0
    %1389 = vmatpush1.msra.mxu0 %v536
    %1390 = vmatprep.subr.mxu0 0.0
    %1391 = vmatpush1.msra.mxu0 %v535
    %1392 = vmatprep.subr.mxu0 0.0
    %1393 = vmatpush1.msra.mxu0 %v534
    %1394 = vmatprep.subr.mxu0 0.0
    %1395 = vmatpush2.msra.mxu0 0.0
    %1396 = vmatprep.subr.mxu0 0.0
    %1397 = vmatpush2.msra.mxu0 0.0
    %1398 = vmatprep.subr.mxu0 0.0
    %1399 = vmatpush2.msra.mxu0 0.0
    %1400 = vmatprep.subr.mxu0 0.0
    %1401 = vmatpush2.msra.mxu0 0.0
    %1402 = vmatprep.subr.mxu0 0.0
    %1403 = vmatpush2.msra.mxu0 0.0
    %1404 = vmatprep.subr.mxu0 0.0
    %1405 = vmatpush2.msra.mxu0 0.0
    %1406 = vmatprep.subr.mxu0 0.0
    %1407 = vmatpush2.msra.mxu0 0.0
    %1408 = vmatprep.subr.mxu0 0.0
    %1409 = vmatpush2.msra.mxu0 0.0
    %1410 = vmatprep.subr.mxu0 0.0
    %1411 = vmatpush2.msra.mxu0 0.0
    %1412 = vmatprep.subr.mxu0 0.0
    %1413 = vmatpush2.msra.mxu0 0.0
    %1414 = vmatprep.subr.mxu0 0.0
    %1415 = vmatpush2.msra.mxu0 0.0
    %1416 = vmatprep.subr.mxu0 0.0
    %1417 = vmatpush2.msra.mxu0 0.0
    %1418 = vmatprep.subr.mxu0 0.0
    %1419 = vmatpush2.msra.mxu0 0.0
    %1420 = vmatprep.subr.mxu0 0.0
    %1421 = vmatpush2.msra.mxu0 0.0
    %1422 = vmatprep.subr.mxu0 0.0
    %1423 = vmatpush2.msra.mxu0 0.0
    %1424 = vmatprep.subr.mxu0 0.0
    %1425 = vmatpush2.msra.mxu0 0.0
    %1426 = vmatprep.mubr.f32.mxu0 0.0
    %1427 = vmatmul.mubr.f32.gmra.mxu0 %v835
    %v1428 = vpop.f32.mrf.mxu0
    %v1429 = vadd.f32 %v547, %v1428
    %v1430 = vpop.f32.mrf.mxu0
    %1431 = vdwg.mxu0
    %v1432 = vadd.f32 %v1361, %v1429
    %v1433 = vxor.u32 %v1432, 2147483648
    %v1434 = vmul.f32 %v1433, 1.442695
    %v1435 = vpow.pop %v1434
    %v1436 = vadd.f32 %v1435, 1.0
    %v1437 = vrcp.pop %v1436
    %v1438 = vmul.f32 1.0, %v1437
    %v1439 = vld [vmem:[#allocation3 + $0x8] sm:$0xff]
    %1440 = vmatprep.subr.mxu0 0.0
    %1441 = vmatpush1.msra.mxu0 0.0
    %1442 = vmatprep.subr.mxu0 0.0
    %1443 = vmatpush1.msra.mxu0 0.0
    %1444 = vmatprep.subr.mxu0 0.0
    %1445 = vmatpush1.msra.mxu0 0.0
    %1446 = vmatprep.subr.mxu0 0.0
    %1447 = vmatpush1.msra.mxu0 0.0
    %1448 = vmatprep.subr.mxu0 0.0
    %1449 = vmatpush1.msra.mxu0 0.0
    %1450 = vmatprep.subr.mxu0 0.0
    %1451 = vmatpush1.msra.mxu0 0.0
    %1452 = vmatprep.subr.mxu0 0.0
    %1453 = vmatpush1.msra.mxu0 0.0
    %1454 = vmatprep.subr.mxu0 0.0
    %1455 = vmatpush1.msra.mxu0 0.0
    %1456 = vmatprep.subr.mxu0 0.0
    %1457 = vmatpush1.msra.mxu0 %v638
    %1458 = vmatprep.subr.mxu0 0.0
    %1459 = vmatpush1.msra.mxu0 %v637
    %1460 = vmatprep.subr.mxu0 0.0
    %1461 = vmatpush1.msra.mxu0 %v636
    %1462 = vmatprep.subr.mxu0 0.0
    %1463 = vmatpush1.msra.mxu0 %v635
    %1464 = vmatprep.subr.mxu0 0.0
    %1465 = vmatpush1.msra.mxu0 %v634
    %1466 = vmatprep.subr.mxu0 0.0
    %1467 = vmatpush1.msra.mxu0 %v633
    %1468 = vmatprep.subr.mxu0 0.0
    %1469 = vmatpush1.msra.mxu0 %v632
    %1470 = vmatprep.subr.mxu0 0.0
    %1471 = vmatpush1.msra.mxu0 %v631
    %1472 = vmatprep.subr.mxu0 0.0
    %1473 = vmatpush2.msra.mxu0 0.0
    %1474 = vmatprep.subr.mxu0 0.0
    %1475 = vmatpush2.msra.mxu0 0.0
    %1476 = vmatprep.subr.mxu0 0.0
    %1477 = vmatpush2.msra.mxu0 0.0
    %1478 = vmatprep.subr.mxu0 0.0
    %1479 = vmatpush2.msra.mxu0 0.0
    %1480 = vmatprep.subr.mxu0 0.0
    %1481 = vmatpush2.msra.mxu0 0.0
    %1482 = vmatprep.subr.mxu0 0.0
    %1483 = vmatpush2.msra.mxu0 0.0
    %1484 = vmatprep.subr.mxu0 0.0
    %1485 = vmatpush2.msra.mxu0 0.0
    %1486 = vmatprep.subr.mxu0 0.0
    %1487 = vmatpush2.msra.mxu0 0.0
    %1488 = vmatprep.subr.mxu0 0.0
    %1489 = vmatpush2.msra.mxu0 0.0
    %1490 = vmatprep.subr.mxu0 0.0
    %1491 = vmatpush2.msra.mxu0 0.0
    %1492 = vmatprep.subr.mxu0 0.0
    %1493 = vmatpush2.msra.mxu0 0.0
    %1494 = vmatprep.subr.mxu0 0.0
    %1495 = vmatpush2.msra.mxu0 0.0
    %1496 = vmatprep.subr.mxu0 0.0
    %1497 = vmatpush2.msra.mxu0 0.0
    %1498 = vmatprep.subr.mxu0 0.0
    %1499 = vmatpush2.msra.mxu0 0.0
    %1500 = vmatprep.subr.mxu0 0.0
    %1501 = vmatpush2.msra.mxu0 0.0
    %1502 = vmatprep.subr.mxu0 0.0
    %1503 = vmatpush2.msra.mxu0 0.0
    %1504 = vmatprep.mubr.f32.mxu0 0.0
    %1505 = vmatmul.mubr.f32.gmra.mxu0 %v835
    %v1506 = vpop.f32.mrf.mxu0
    %v1507 = vadd.f32 %v645, %v1506
    %v1508 = vpop.f32.mrf.mxu0
    %1509 = vdwg.mxu0
    %v1510 = vadd.f32 %v1439, %v1507
    %v1511 = vxor.u32 %v1510, 2147483648
    %v1512 = vmul.f32 %v1511, 1.442695
    %v1513 = vpow.pop %v1512
    %v1514 = vadd.f32 %v1513, 1.0
    %v1515 = vrcp.pop %v1514
    %v1516 = vmul.f32 1.0, %v1515
    %v1517 = vld [vmem:[#allocation4 + $0x8] sm:$0xff]
    %1518 = vmatprep.subr.mxu0 0.0
    %1519 = vmatpush1.msra.mxu0 0.0
    %1520 = vmatprep.subr.mxu0 0.0
    %1521 = vmatpush1.msra.mxu0 0.0
    %1522 = vmatprep.subr.mxu0 0.0
    %1523 = vmatpush1.msra.mxu0 0.0
    %1524 = vmatprep.subr.mxu0 0.0
    %1525 = vmatpush1.msra.mxu0 0.0
    %1526 = vmatprep.subr.mxu0 0.0
    %1527 = vmatpush1.msra.mxu0 0.0
    %1528 = vmatprep.subr.mxu0 0.0
    %1529 = vmatpush1.msra.mxu0 0.0
    %1530 = vmatprep.subr.mxu0 0.0
    %1531 = vmatpush1.msra.mxu0 0.0
    %1532 = vmatprep.subr.mxu0 0.0
    %1533 = vmatpush1.msra.mxu0 0.0
    %1534 = vmatprep.subr.mxu0 0.0
    %1535 = vmatpush1.msra.mxu0 %v733
    %1536 = vmatprep.subr.mxu0 0.0
    %1537 = vmatpush1.msra.mxu0 %v732
    %1538 = vmatprep.subr.mxu0 0.0
    %1539 = vmatpush1.msra.mxu0 %v731
    %1540 = vmatprep.subr.mxu0 0.0
    %1541 = vmatpush1.msra.mxu0 %v730
    %1542 = vmatprep.subr.mxu0 0.0
    %1543 = vmatpush1.msra.mxu0 %v729
    %1544 = vmatprep.subr.mxu0 0.0
    %1545 = vmatpush1.msra.mxu0 %v728
    %1546 = vmatprep.subr.mxu0 0.0
    %1547 = vmatpush1.msra.mxu0 %v727
    %1548 = vmatprep.subr.mxu0 0.0
    %1549 = vmatpush1.msra.mxu0 %v726
    %1550 = vmatprep.subr.mxu0 0.0
    %1551 = vmatpush2.msra.mxu0 0.0
    %1552 = vmatprep.subr.mxu0 0.0
    %1553 = vmatpush2.msra.mxu0 0.0
    %1554 = vmatprep.subr.mxu0 0.0
    %1555 = vmatpush2.msra.mxu0 0.0
    %1556 = vmatprep.subr.mxu0 0.0
    %1557 = vmatpush2.msra.mxu0 0.0
    %1558 = vmatprep.subr.mxu0 0.0
    %1559 = vmatpush2.msra.mxu0 0.0
    %1560 = vmatprep.subr.mxu0 0.0
    %1561 = vmatpush2.msra.mxu0 0.0
    %1562 = vmatprep.subr.mxu0 0.0
    %1563 = vmatpush2.msra.mxu0 0.0
    %1564 = vmatprep.subr.mxu0 0.0
    %1565 = vmatpush2.msra.mxu0 0.0
    %1566 = vmatprep.subr.mxu0 0.0
    %1567 = vmatpush2.msra.mxu0 0.0
    %1568 = vmatprep.subr.mxu0 0.0
    %1569 = vmatpush2.msra.mxu0 0.0
    %1570 = vmatprep.subr.mxu0 0.0
    %1571 = vmatpush2.msra.mxu0 0.0
    %1572 = vmatprep.subr.mxu0 0.0
    %1573 = vmatpush2.msra.mxu0 0.0
    %1574 = vmatprep.subr.mxu0 0.0
    %1575 = vmatpush2.msra.mxu0 0.0
    %1576 = vmatprep.subr.mxu0 0.0
    %1577 = vmatpush2.msra.mxu0 0.0
    %1578 = vmatprep.subr.mxu0 0.0
    %1579 = vmatpush2.msra.mxu0 0.0
    %1580 = vmatprep.subr.mxu0 0.0
    %1581 = vmatpush2.msra.mxu0 0.0
    %1582 = vmatprep.mubr.f32.mxu0 0.0
    %1583 = vmatmul.mubr.f32.gmra.mxu0 %v835
    %v1584 = vpop.f32.mrf.mxu0
    %v1585 = vadd.f32 %v740, %v1584
    %v1586 = vpop.f32.mrf.mxu0
    %1587 = vdwg.mxu0
    %v1588 = vmul.f32 %v1438, %v1585
    %v1589 = vadd.f32 %v1517, %v1588
    %v1590 = vtanh.pop %v1589
    %v1591 = vsub.f32 1.0, %v1516
    %v1592 = vmul.f32 %v1591, %v1590
    %v1593 = vmul.f32 %v1516, %v818
    %v1594 = vadd.f32 %v1592, %v1593
    %v1596 = vsel %vm272, %v1594, 0
    %1598 = vmatprep.subr.mxu0 0.0
    %1599 = vmatpush1.msra.mxu0 0.0
    %1600 = vmatprep.subr.mxu0 0.0
    %1601 = vmatpush1.msra.mxu0 0.0
    %1602 = vmatprep.subr.mxu0 0.0
    %1603 = vmatpush1.msra.mxu0 0.0
    %1604 = vmatprep.subr.mxu0 0.0
    %1605 = vmatpush1.msra.mxu0 0.0
    %1606 = vmatprep.subr.mxu0 0.0
    %1607 = vmatpush1.msra.mxu0 0.0
    %1608 = vmatprep.subr.mxu0 0.0
    %1609 = vmatpush1.msra.mxu0 0.0
    %1610 = vmatprep.subr.mxu0 0.0
    %1611 = vmatpush1.msra.mxu0 0.0
    %1612 = vmatprep.subr.mxu0 0.0
    %1613 = vmatpush1.msra.mxu0 0.0
    %1614 = vmatprep.subr.mxu0 0.0
    %1615 = vmatpush1.msra.mxu0 %v826
    %1616 = vmatprep.subr.mxu0 0.0
    %1617 = vmatpush1.msra.mxu0 %v825
    %1618 = vmatprep.subr.mxu0 0.0
    %1619 = vmatpush1.msra.mxu0 %v824
    %1620 = vmatprep.subr.mxu0 0.0
    %1621 = vmatpush1.msra.mxu0 %v823
    %1622 = vmatprep.subr.mxu0 0.0
    %1623 = vmatpush1.msra.mxu0 %v822
    %1624 = vmatprep.subr.mxu0 0.0
    %1625 = vmatpush1.msra.mxu0 %v821
    %1626 = vmatprep.subr.mxu0 0.0
    %1627 = vmatpush1.msra.mxu0 %v820
    %1628 = vmatprep.subr.mxu0 0.0
    %1629 = vmatpush1.msra.mxu0 %v819
    %1630 = vmatprep.subr.mxu0 0.0
    %1631 = vmatpush2.msra.mxu0 0.0
    %1632 = vmatprep.subr.mxu0 0.0
    %1633 = vmatpush2.msra.mxu0 0.0
    %1634 = vmatprep.subr.mxu0 0.0
    %1635 = vmatpush2.msra.mxu0 0.0
    %1636 = vmatprep.subr.mxu0 0.0
    %1637 = vmatpush2.msra.mxu0 0.0
    %1638 = vmatprep.subr.mxu0 0.0
    %1639 = vmatpush2.msra.mxu0 0.0
    %1640 = vmatprep.subr.mxu0 0.0
    %1641 = vmatpush2.msra.mxu0 0.0
    %1642 = vmatprep.subr.mxu0 0.0
    %1643 = vmatpush2.msra.mxu0 0.0
    %1644 = vmatprep.subr.mxu0 0.0
    %1645 = vmatpush2.msra.mxu0 0.0
    %1646 = vmatprep.subr.mxu0 0.0
    %1647 = vmatpush2.msra.mxu0 0.0
    %1648 = vmatprep.subr.mxu0 0.0
    %1649 = vmatpush2.msra.mxu0 0.0
    %1650 = vmatprep.subr.mxu0 0.0
    %1651 = vmatpush2.msra.mxu0 0.0
    %1652 = vmatprep.subr.mxu0 0.0
    %1653 = vmatpush2.msra.mxu0 0.0
    %1654 = vmatprep.subr.mxu0 0.0
    %1655 = vmatpush2.msra.mxu0 0.0
    %1656 = vmatprep.subr.mxu0 0.0
    %1657 = vmatpush2.msra.mxu0 0.0
    %1658 = vmatprep.subr.mxu0 0.0
    %1659 = vmatpush2.msra.mxu0 0.0
    %1660 = vmatprep.subr.mxu0 0.0
    %1661 = vmatpush2.msra.mxu0 0.0
    %1662 = vmatprep.mubr.f32.mxu0 0.0
    %1663 = vmatmul.mubr.f32.gmra.mxu0 %v1596
    %v1664 = vpop.f32.mrf.mxu0
    %v1665 = vadd.f32 %v832, %v1664
    %v1666 = vpop.f32.mrf.mxu0
    %1667 = vdwg.mxu0
    %v1669 = vsel %vm272, %v1360, 0
    %1671 = vmatprep.subr.mxu0 0.0
    %1672 = vmatpush1.msra.mxu0 0.0
    %1673 = vmatprep.subr.mxu0 0.0
    %1674 = vmatpush1.msra.mxu0 0.0
    %1675 = vmatprep.subr.mxu0 0.0
    %1676 = vmatpush1.msra.mxu0 0.0
    %1677 = vmatprep.subr.mxu0 0.0
    %1678 = vmatpush1.msra.mxu0 0.0
    %1679 = vmatprep.subr.mxu0 0.0
    %1680 = vmatpush1.msra.mxu0 0.0
    %1681 = vmatprep.subr.mxu0 0.0
    %1682 = vmatpush1.msra.mxu0 0.0
    %1683 = vmatprep.subr.mxu0 0.0
    %1684 = vmatpush1.msra.mxu0 0.0
    %1685 = vmatprep.subr.mxu0 0.0
    %1686 = vmatpush1.msra.mxu0 0.0
    %1687 = vmatprep.subr.mxu0 0.0
    %1688 = vmatpush1.msra.mxu0 %v914
    %1689 = vmatprep.subr.mxu0 0.0
    %1690 = vmatpush1.msra.mxu0 %v913
    %1691 = vmatprep.subr.mxu0 0.0
    %1692 = vmatpush1.msra.mxu0 %v912
    %1693 = vmatprep.subr.mxu0 0.0
    %1694 = vmatpush1.msra.mxu0 %v911
    %1695 = vmatprep.subr.mxu0 0.0
    %1696 = vmatpush1.msra.mxu0 %v910
    %1697 = vmatprep.subr.mxu0 0.0
    %1698 = vmatpush1.msra.mxu0 %v909
    %1699 = vmatprep.subr.mxu0 0.0
    %1700 = vmatpush1.msra.mxu0 %v908
    %1701 = vmatprep.subr.mxu0 0.0
    %1702 = vmatpush1.msra.mxu0 %v907
    %1703 = vmatprep.subr.mxu0 0.0
    %1704 = vmatpush2.msra.mxu0 0.0
    %1705 = vmatprep.subr.mxu0 0.0
    %1706 = vmatpush2.msra.mxu0 0.0
    %1707 = vmatprep.subr.mxu0 0.0
    %1708 = vmatpush2.msra.mxu0 0.0
    %1709 = vmatprep.subr.mxu0 0.0
    %1710 = vmatpush2.msra.mxu0 0.0
    %1711 = vmatprep.subr.mxu0 0.0
    %1712 = vmatpush2.msra.mxu0 0.0
    %1713 = vmatprep.subr.mxu0 0.0
    %1714 = vmatpush2.msra.mxu0 0.0
    %1715 = vmatprep.subr.mxu0 0.0
    %1716 = vmatpush2.msra.mxu0 0.0
    %1717 = vmatprep.subr.mxu0 0.0
    %1718 = vmatpush2.msra.mxu0 0.0
    %1719 = vmatprep.subr.mxu0 0.0
    %1720 = vmatpush2.msra.mxu0 0.0
    %1721 = vmatprep.subr.mxu0 0.0
    %1722 = vmatpush2.msra.mxu0 0.0
    %1723 = vmatprep.subr.mxu0 0.0
    %1724 = vmatpush2.msra.mxu0 0.0
    %1725 = vmatprep.subr.mxu0 0.0
    %1726 = vmatpush2.msra.mxu0 0.0
    %1727 = vmatprep.subr.mxu0 0.0
    %1728 = vmatpush2.msra.mxu0 0.0
    %1729 = vmatprep.subr.mxu0 0.0
    %1730 = vmatpush2.msra.mxu0 0.0
    %1731 = vmatprep.subr.mxu0 0.0
    %1732 = vmatpush2.msra.mxu0 0.0
    %1733 = vmatprep.subr.mxu0 0.0
    %1734 = vmatpush2.msra.mxu0 0.0
    %1735 = vmatprep.mubr.f32.mxu0 0.0
    %1736 = vmatmul.mubr.f32.gmra.mxu0 %v1669
    %v1737 = vpop.f32.mrf.mxu0
    %v1738 = vadd.f32 %v920, %v1737
    %v1739 = vpop.f32.mrf.mxu0
    %1740 = vdwg.mxu0
    %v1741 = vadd.f32 %v1665, %v1738
    %v1742 = vxor.u32 %v1741, 2147483648
    %v1743 = vmul.f32 %v1742, 1.442695
    %v1744 = vpow.pop %v1743
    %v1745 = vadd.f32 %v1744, 1.0
    %v1746 = vrcp.pop %v1745
    %v1747 = vmul.f32 1.0, %v1746
    %1748 = vmatprep.subr.mxu0 0.0
    %1749 = vmatpush1.msra.mxu0 0.0
    %1750 = vmatprep.subr.mxu0 0.0
    %1751 = vmatpush1.msra.mxu0 0.0
    %1752 = vmatprep.subr.mxu0 0.0
    %1753 = vmatpush1.msra.mxu0 0.0
    %1754 = vmatprep.subr.mxu0 0.0
    %1755 = vmatpush1.msra.mxu0 0.0
    %1756 = vmatprep.subr.mxu0 0.0
    %1757 = vmatpush1.msra.mxu0 0.0
    %1758 = vmatprep.subr.mxu0 0.0
    %1759 = vmatpush1.msra.mxu0 0.0
    %1760 = vmatprep.subr.mxu0 0.0
    %1761 = vmatpush1.msra.mxu0 0.0
    %1762 = vmatprep.subr.mxu0 0.0
    %1763 = vmatpush1.msra.mxu0 0.0
    %1764 = vmatprep.subr.mxu0 0.0
    %1765 = vmatpush1.msra.mxu0 %v1007
    %1766 = vmatprep.subr.mxu0 0.0
    %1767 = vmatpush1.msra.mxu0 %v1006
    %1768 = vmatprep.subr.mxu0 0.0
    %1769 = vmatpush1.msra.mxu0 %v1005
    %1770 = vmatprep.subr.mxu0 0.0
    %1771 = vmatpush1.msra.mxu0 %v1004
    %1772 = vmatprep.subr.mxu0 0.0
    %1773 = vmatpush1.msra.mxu0 %v1003
    %1774 = vmatprep.subr.mxu0 0.0
    %1775 = vmatpush1.msra.mxu0 %v1002
    %1776 = vmatprep.subr.mxu0 0.0
    %1777 = vmatpush1.msra.mxu0 %v1001
    %1778 = vmatprep.subr.mxu0 0.0
    %1779 = vmatpush1.msra.mxu0 %v1000
    %1780 = vmatprep.subr.mxu0 0.0
    %1781 = vmatpush2.msra.mxu0 0.0
    %1782 = vmatprep.subr.mxu0 0.0
    %1783 = vmatpush2.msra.mxu0 0.0
    %1784 = vmatprep.subr.mxu0 0.0
    %1785 = vmatpush2.msra.mxu0 0.0
    %1786 = vmatprep.subr.mxu0 0.0
    %1787 = vmatpush2.msra.mxu0 0.0
    %1788 = vmatprep.subr.mxu0 0.0
    %1789 = vmatpush2.msra.mxu0 0.0
    %1790 = vmatprep.subr.mxu0 0.0
    %1791 = vmatpush2.msra.mxu0 0.0
    %1792 = vmatprep.subr.mxu0 0.0
    %1793 = vmatpush2.msra.mxu0 0.0
    %1794 = vmatprep.subr.mxu0 0.0
    %1795 = vmatpush2.msra.mxu0 0.0
    %1796 = vmatprep.subr.mxu0 0.0
    %1797 = vmatpush2.msra.mxu0 0.0
    %1798 = vmatprep.subr.mxu0 0.0
    %1799 = vmatpush2.msra.mxu0 0.0
    %1800 = vmatprep.subr.mxu0 0.0
    %1801 = vmatpush2.msra.mxu0 0.0
    %1802 = vmatprep.subr.mxu0 0.0
    %1803 = vmatpush2.msra.mxu0 0.0
    %1804 = vmatprep.subr.mxu0 0.0
    %1805 = vmatpush2.msra.mxu0 0.0
    %1806 = vmatprep.subr.mxu0 0.0
    %1807 = vmatpush2.msra.mxu0 0.0
    %1808 = vmatprep.subr.mxu0 0.0
    %1809 = vmatpush2.msra.mxu0 0.0
    %1810 = vmatprep.subr.mxu0 0.0
    %1811 = vmatpush2.msra.mxu0 0.0
    %1812 = vmatprep.mubr.f32.mxu0 0.0
    %1813 = vmatmul.mubr.f32.gmra.mxu0 %v1596
    %v1814 = vpop.f32.mrf.mxu0
    %v1815 = vadd.f32 %v1014, %v1814
    %v1816 = vpop.f32.mrf.mxu0
    %1817 = vdwg.mxu0
    %1818 = vmatprep.subr.mxu0 0.0
    %1819 = vmatpush1.msra.mxu0 0.0
    %1820 = vmatprep.subr.mxu0 0.0
    %1821 = vmatpush1.msra.mxu0 0.0
    %1822 = vmatprep.subr.mxu0 0.0
    %1823 = vmatpush1.msra.mxu0 0.0
    %1824 = vmatprep.subr.mxu0 0.0
    %1825 = vmatpush1.msra.mxu0 0.0
    %1826 = vmatprep.subr.mxu0 0.0
    %1827 = vmatpush1.msra.mxu0 0.0
    %1828 = vmatprep.subr.mxu0 0.0
    %1829 = vmatpush1.msra.mxu0 0.0
    %1830 = vmatprep.subr.mxu0 0.0
    %1831 = vmatpush1.msra.mxu0 0.0
    %1832 = vmatprep.subr.mxu0 0.0
    %1833 = vmatpush1.msra.mxu0 0.0
    %1834 = vmatprep.subr.mxu0 0.0
    %1835 = vmatpush1.msra.mxu0 %v1094
    %1836 = vmatprep.subr.mxu0 0.0
    %1837 = vmatpush1.msra.mxu0 %v1093
    %1838 = vmatprep.subr.mxu0 0.0
    %1839 = vmatpush1.msra.mxu0 %v1092
    %1840 = vmatprep.subr.mxu0 0.0
    %1841 = vmatpush1.msra.mxu0 %v1091
    %1842 = vmatprep.subr.mxu0 0.0
    %1843 = vmatpush1.msra.mxu0 %v1090
    %1844 = vmatprep.subr.mxu0 0.0
    %1845 = vmatpush1.msra.mxu0 %v1089
    %1846 = vmatprep.subr.mxu0 0.0
    %1847 = vmatpush1.msra.mxu0 %v1088
    %1848 = vmatprep.subr.mxu0 0.0
    %1849 = vmatpush1.msra.mxu0 %v1087
    %1850 = vmatprep.subr.mxu0 0.0
    %1851 = vmatpush2.msra.mxu0 0.0
    %1852 = vmatprep.subr.mxu0 0.0
    %1853 = vmatpush2.msra.mxu0 0.0
    %1854 = vmatprep.subr.mxu0 0.0
    %1855 = vmatpush2.msra.mxu0 0.0
    %1856 = vmatprep.subr.mxu0 0.0
    %1857 = vmatpush2.msra.mxu0 0.0
    %1858 = vmatprep.subr.mxu0 0.0
    %1859 = vmatpush2.msra.mxu0 0.0
    %1860 = vmatprep.subr.mxu0 0.0
    %1861 = vmatpush2.msra.mxu0 0.0
    %1862 = vmatprep.subr.mxu0 0.0
    %1863 = vmatpush2.msra.mxu0 0.0
    %1864 = vmatprep.subr.mxu0 0.0
    %1865 = vmatpush2.msra.mxu0 0.0
    %1866 = vmatprep.subr.mxu0 0.0
    %1867 = vmatpush2.msra.mxu0 0.0
    %1868 = vmatprep.subr.mxu0 0.0
    %1869 = vmatpush2.msra.mxu0 0.0
    %1870 = vmatprep.subr.mxu0 0.0
    %1871 = vmatpush2.msra.mxu0 0.0
    %1872 = vmatprep.subr.mxu0 0.0
    %1873 = vmatpush2.msra.mxu0 0.0
    %1874 = vmatprep.subr.mxu0 0.0
    %1875 = vmatpush2.msra.mxu0 0.0
    %1876 = vmatprep.subr.mxu0 0.0
    %1877 = vmatpush2.msra.mxu0 0.0
    %1878 = vmatprep.subr.mxu0 0.0
    %1879 = vmatpush2.msra.mxu0 0.0
    %1880 = vmatprep.subr.mxu0 0.0
    %1881 = vmatpush2.msra.mxu0 0.0
    %1882 = vmatprep.mubr.f32.mxu0 0.0
    %1883 = vmatmul.mubr.f32.gmra.mxu0 %v1669
    %v1884 = vpop.f32.mrf.mxu0
    %v1885 = vadd.f32 %v1101, %v1884
    %v1886 = vpop.f32.mrf.mxu0
    %1887 = vdwg.mxu0
    %v1888 = vadd.f32 %v1815, %v1885
    %v1889 = vxor.u32 %v1888, 2147483648
    %v1890 = vmul.f32 %v1889, 1.442695
    %v1891 = vpow.pop %v1890
    %v1892 = vadd.f32 %v1891, 1.0
    %v1893 = vrcp.pop %v1892
    %v1894 = vmul.f32 1.0, %v1893
    %1895 = vmatprep.subr.mxu0 0.0
    %1896 = vmatpush1.msra.mxu0 0.0
    %1897 = vmatprep.subr.mxu0 0.0
    %1898 = vmatpush1.msra.mxu0 0.0
    %1899 = vmatprep.subr.mxu0 0.0
    %1900 = vmatpush1.msra.mxu0 0.0
    %1901 = vmatprep.subr.mxu0 0.0
    %1902 = vmatpush1.msra.mxu0 0.0
    %1903 = vmatprep.subr.mxu0 0.0
    %1904 = vmatpush1.msra.mxu0 0.0
    %1905 = vmatprep.subr.mxu0 0.0
    %1906 = vmatpush1.msra.mxu0 0.0
    %1907 = vmatprep.subr.mxu0 0.0
    %1908 = vmatpush1.msra.mxu0 0.0
    %1909 = vmatprep.subr.mxu0 0.0
    %1910 = vmatpush1.msra.mxu0 0.0
    %1911 = vmatprep.subr.mxu0 0.0
    %1912 = vmatpush1.msra.mxu0 %v1188
    %1913 = vmatprep.subr.mxu0 0.0
    %1914 = vmatpush1.msra.mxu0 %v1187
    %1915 = vmatprep.subr.mxu0 0.0
    %1916 = vmatpush1.msra.mxu0 %v1186
    %1917 = vmatprep.subr.mxu0 0.0
    %1918 = vmatpush1.msra.mxu0 %v1185
    %1919 = vmatprep.subr.mxu0 0.0
    %1920 = vmatpush1.msra.mxu0 %v1184
    %1921 = vmatprep.subr.mxu0 0.0
    %1922 = vmatpush1.msra.mxu0 %v1183
    %1923 = vmatprep.subr.mxu0 0.0
    %1924 = vmatpush1.msra.mxu0 %v1182
    %1925 = vmatprep.subr.mxu0 0.0
    %1926 = vmatpush1.msra.mxu0 %v1181
    %1927 = vmatprep.subr.mxu0 0.0
    %1928 = vmatpush2.msra.mxu0 0.0
    %1929 = vmatprep.subr.mxu0 0.0
    %1930 = vmatpush2.msra.mxu0 0.0
    %1931 = vmatprep.subr.mxu0 0.0
    %1932 = vmatpush2.msra.mxu0 0.0
    %1933 = vmatprep.subr.mxu0 0.0
    %1934 = vmatpush2.msra.mxu0 0.0
    %1935 = vmatprep.subr.mxu0 0.0
    %1936 = vmatpush2.msra.mxu0 0.0
    %1937 = vmatprep.subr.mxu0 0.0
    %1938 = vmatpush2.msra.mxu0 0.0
    %1939 = vmatprep.subr.mxu0 0.0
    %1940 = vmatpush2.msra.mxu0 0.0
    %1941 = vmatprep.subr.mxu0 0.0
    %1942 = vmatpush2.msra.mxu0 0.0
    %1943 = vmatprep.subr.mxu0 0.0
    %1944 = vmatpush2.msra.mxu0 0.0
    %1945 = vmatprep.subr.mxu0 0.0
    %1946 = vmatpush2.msra.mxu0 0.0
    %1947 = vmatprep.subr.mxu0 0.0
    %1948 = vmatpush2.msra.mxu0 0.0
    %1949 = vmatprep.subr.mxu0 0.0
    %1950 = vmatpush2.msra.mxu0 0.0
    %1951 = vmatprep.subr.mxu0 0.0
    %1952 = vmatpush2.msra.mxu0 0.0
    %1953 = vmatprep.subr.mxu0 0.0
    %1954 = vmatpush2.msra.mxu0 0.0
    %1955 = vmatprep.subr.mxu0 0.0
    %1956 = vmatpush2.msra.mxu0 0.0
    %1957 = vmatprep.subr.mxu0 0.0
    %1958 = vmatpush2.msra.mxu0 0.0
    %1959 = vmatprep.mubr.f32.mxu0 0.0
    %1960 = vmatmul.mubr.f32.gmra.mxu0 %v1596
    %v1961 = vpop.f32.mrf.mxu0
    %v1962 = vadd.f32 %v1195, %v1961
    %v1963 = vpop.f32.mrf.mxu0
    %1964 = vdwg.mxu0
    %1965 = vmatprep.subr.mxu0 0.0
    %1966 = vmatpush1.msra.mxu0 0.0
    %1967 = vmatprep.subr.mxu0 0.0
    %1968 = vmatpush1.msra.mxu0 0.0
    %1969 = vmatprep.subr.mxu0 0.0
    %1970 = vmatpush1.msra.mxu0 0.0
    %1971 = vmatprep.subr.mxu0 0.0
    %1972 = vmatpush1.msra.mxu0 0.0
    %1973 = vmatprep.subr.mxu0 0.0
    %1974 = vmatpush1.msra.mxu0 0.0
    %1975 = vmatprep.subr.mxu0 0.0
    %1976 = vmatpush1.msra.mxu0 0.0
    %1977 = vmatprep.subr.mxu0 0.0
    %1978 = vmatpush1.msra.mxu0 0.0
    %1979 = vmatprep.subr.mxu0 0.0
    %1980 = vmatpush1.msra.mxu0 0.0
    %1981 = vmatprep.subr.mxu0 0.0
    %1982 = vmatpush1.msra.mxu0 %v1275
    %1983 = vmatprep.subr.mxu0 0.0
    %1984 = vmatpush1.msra.mxu0 %v1274
    %1985 = vmatprep.subr.mxu0 0.0
    %1986 = vmatpush1.msra.mxu0 %v1273
    %1987 = vmatprep.subr.mxu0 0.0
    %1988 = vmatpush1.msra.mxu0 %v1272
    %1989 = vmatprep.subr.mxu0 0.0
    %1990 = vmatpush1.msra.mxu0 %v1271
    %1991 = vmatprep.subr.mxu0 0.0
    %1992 = vmatpush1.msra.mxu0 %v1270
    %1993 = vmatprep.subr.mxu0 0.0
    %1994 = vmatpush1.msra.mxu0 %v1269
    %1995 = vmatprep.subr.mxu0 0.0
    %1996 = vmatpush1.msra.mxu0 %v1268
    %1997 = vmatprep.subr.mxu0 0.0
    %1998 = vmatpush2.msra.mxu0 0.0
    %1999 = vmatprep.subr.mxu0 0.0
    %2000 = vmatpush2.msra.mxu0 0.0
    %2001 = vmatprep.subr.mxu0 0.0
    %2002 = vmatpush2.msra.mxu0 0.0
    %2003 = vmatprep.subr.mxu0 0.0
    %2004 = vmatpush2.msra.mxu0 0.0
    %2005 = vmatprep.subr.mxu0 0.0
    %2006 = vmatpush2.msra.mxu0 0.0
    %2007 = vmatprep.subr.mxu0 0.0
    %2008 = vmatpush2.msra.mxu0 0.0
    %2009 = vmatprep.subr.mxu0 0.0
    %2010 = vmatpush2.msra.mxu0 0.0
    %2011 = vmatprep.subr.mxu0 0.0
    %2012 = vmatpush2.msra.mxu0 0.0
    %2013 = vmatprep.subr.mxu0 0.0
    %2014 = vmatpush2.msra.mxu0 0.0
    %2015 = vmatprep.subr.mxu0 0.0
    %2016 = vmatpush2.msra.mxu0 0.0
    %2017 = vmatprep.subr.mxu0 0.0
    %2018 = vmatpush2.msra.mxu0 0.0
    %2019 = vmatprep.subr.mxu0 0.0
    %2020 = vmatpush2.msra.mxu0 0.0
    %2021 = vmatprep.subr.mxu0 0.0
    %2022 = vmatpush2.msra.mxu0 0.0
    %2023 = vmatprep.subr.mxu0 0.0
    %2024 = vmatpush2.msra.mxu0 0.0
    %2025 = vmatprep.subr.mxu0 0.0
    %2026 = vmatpush2.msra.mxu0 0.0
    %2027 = vmatprep.subr.mxu0 0.0
    %2028 = vmatpush2.msra.mxu0 0.0
    %2029 = vmatprep.mubr.f32.mxu0 0.0
    %2030 = vmatmul.mubr.f32.gmra.mxu0 %v1669
    %v2031 = vpop.f32.mrf.mxu0
    %v2032 = vadd.f32 %v1282, %v2031
    %v2033 = vpop.f32.mrf.mxu0
    %2034 = vdwg.mxu0
    %v2035 = vmul.f32 %v1747, %v2032
    %v2036 = vadd.f32 %v1962, %v2035
    %v2037 = vtanh.pop %v2036
    %v2038 = vsub.f32 1.0, %v1894
    %v2039 = vmul.f32 %v2038, %v2037
    %v2040 = vmul.f32 %v1894, %v1360
    %v2041 = vadd.f32 %v2039, %v2040
    %v2042 = vld [vmem:[#allocation2 + $0x10] sm:$0xff]
    %2043 = vmatprep.subr.mxu0 0.0
    %2044 = vmatpush1.msra.mxu0 0.0
    %2045 = vmatprep.subr.mxu0 0.0
    %2046 = vmatpush1.msra.mxu0 0.0
    %2047 = vmatprep.subr.mxu0 0.0
    %2048 = vmatpush1.msra.mxu0 0.0
    %2049 = vmatprep.subr.mxu0 0.0
    %2050 = vmatpush1.msra.mxu0 0.0
    %2051 = vmatprep.subr.mxu0 0.0
    %2052 = vmatpush1.msra.mxu0 0.0
    %2053 = vmatprep.subr.mxu0 0.0
    %2054 = vmatpush1.msra.mxu0 0.0
    %2055 = vmatprep.subr.mxu0 0.0
    %2056 = vmatpush1.msra.mxu0 0.0
    %2057 = vmatprep.subr.mxu0 0.0
    %2058 = vmatpush1.msra.mxu0 0.0
    %2059 = vmatprep.subr.mxu0 0.0
    %2060 = vmatpush1.msra.mxu0 %v541
    %2061 = vmatprep.subr.mxu0 0.0
    %2062 = vmatpush1.msra.mxu0 %v540
    %2063 = vmatprep.subr.mxu0 0.0
    %2064 = vmatpush1.msra.mxu0 %v539
    %2065 = vmatprep.subr.mxu0 0.0
    %2066 = vmatpush1.msra.mxu0 %v538
    %2067 = vmatprep.subr.mxu0 0.0
    %2068 = vmatpush1.msra.mxu0 %v537
    %2069 = vmatprep.subr.mxu0 0.0
    %2070 = vmatpush1.msra.mxu0 %v536
    %2071 = vmatprep.subr.mxu0 0.0
    %2072 = vmatpush1.msra.mxu0 %v535
    %2073 = vmatprep.subr.mxu0 0.0
    %2074 = vmatpush1.msra.mxu0 %v534
    %2075 = vmatprep.subr.mxu0 0.0
    %2076 = vmatpush2.msra.mxu0 0.0
    %2077 = vmatprep.subr.mxu0 0.0
    %2078 = vmatpush2.msra.mxu0 0.0
    %2079 = vmatprep.subr.mxu0 0.0
    %2080 = vmatpush2.msra.mxu0 0.0
    %2081 = vmatprep.subr.mxu0 0.0
    %2082 = vmatpush2.msra.mxu0 0.0
    %2083 = vmatprep.subr.mxu0 0.0
    %2084 = vmatpush2.msra.mxu0 0.0
    %2085 = vmatprep.subr.mxu0 0.0
    %2086 = vmatpush2.msra.mxu0 0.0
    %2087 = vmatprep.subr.mxu0 0.0
    %2088 = vmatpush2.msra.mxu0 0.0
    %2089 = vmatprep.subr.mxu0 0.0
    %2090 = vmatpush2.msra.mxu0 0.0
    %2091 = vmatprep.subr.mxu0 0.0
    %2092 = vmatpush2.msra.mxu0 0.0
    %2093 = vmatprep.subr.mxu0 0.0
    %2094 = vmatpush2.msra.mxu0 0.0
    %2095 = vmatprep.subr.mxu0 0.0
    %2096 = vmatpush2.msra.mxu0 0.0
    %2097 = vmatprep.subr.mxu0 0.0
    %2098 = vmatpush2.msra.mxu0 0.0
    %2099 = vmatprep.subr.mxu0 0.0
    %2100 = vmatpush2.msra.mxu0 0.0
    %2101 = vmatprep.subr.mxu0 0.0
    %2102 = vmatpush2.msra.mxu0 0.0
    %2103 = vmatprep.subr.mxu0 0.0
    %2104 = vmatpush2.msra.mxu0 0.0
    %2105 = vmatprep.subr.mxu0 0.0
    %2106 = vmatpush2.msra.mxu0 0.0
    %2107 = vmatprep.mubr.f32.mxu0 0.0
    %2108 = vmatmul.mubr.f32.gmra.mxu0 %v1596
    %v2109 = vpop.f32.mrf.mxu0
    %v2110 = vadd.f32 %v547, %v2109
    %v2111 = vpop.f32.mrf.mxu0
    %2112 = vdwg.mxu0
    %v2113 = vadd.f32 %v2042, %v2110
    %v2114 = vxor.u32 %v2113, 2147483648
    %v2115 = vmul.f32 %v2114, 1.442695
    %v2116 = vpow.pop %v2115
    %v2117 = vadd.f32 %v2116, 1.0
    %v2118 = vrcp.pop %v2117
    %v2119 = vmul.f32 1.0, %v2118
    %v2120 = vld [vmem:[#allocation3 + $0x10] sm:$0xff]
    %2121 = vmatprep.subr.mxu0 0.0
    %2122 = vmatpush1.msra.mxu0 0.0
    %2123 = vmatprep.subr.mxu0 0.0
    %2124 = vmatpush1.msra.mxu0 0.0
    %2125 = vmatprep.subr.mxu0 0.0
    %2126 = vmatpush1.msra.mxu0 0.0
    %2127 = vmatprep.subr.mxu0 0.0
    %2128 = vmatpush1.msra.mxu0 0.0
    %2129 = vmatprep.subr.mxu0 0.0
    %2130 = vmatpush1.msra.mxu0 0.0
    %2131 = vmatprep.subr.mxu0 0.0
    %2132 = vmatpush1.msra.mxu0 0.0
    %2133 = vmatprep.subr.mxu0 0.0
    %2134 = vmatpush1.msra.mxu0 0.0
    %2135 = vmatprep.subr.mxu0 0.0
    %2136 = vmatpush1.msra.mxu0 0.0
    %2137 = vmatprep.subr.mxu0 0.0
    %2138 = vmatpush1.msra.mxu0 %v638
    %2139 = vmatprep.subr.mxu0 0.0
    %2140 = vmatpush1.msra.mxu0 %v637
    %2141 = vmatprep.subr.mxu0 0.0
    %2142 = vmatpush1.msra.mxu0 %v636
    %2143 = vmatprep.subr.mxu0 0.0
    %2144 = vmatpush1.msra.mxu0 %v635
    %2145 = vmatprep.subr.mxu0 0.0
    %2146 = vmatpush1.msra.mxu0 %v634
    %2147 = vmatprep.subr.mxu0 0.0
    %2148 = vmatpush1.msra.mxu0 %v633
    %2149 = vmatprep.subr.mxu0 0.0
    %2150 = vmatpush1.msra.mxu0 %v632
    %2151 = vmatprep.subr.mxu0 0.0
    %2152 = vmatpush1.msra.mxu0 %v631
    %2153 = vmatprep.subr.mxu0 0.0
    %2154 = vmatpush2.msra.mxu0 0.0
    %2155 = vmatprep.subr.mxu0 0.0
    %2156 = vmatpush2.msra.mxu0 0.0
    %2157 = vmatprep.subr.mxu0 0.0
    %2158 = vmatpush2.msra.mxu0 0.0
    %2159 = vmatprep.subr.mxu0 0.0
    %2160 = vmatpush2.msra.mxu0 0.0
    %2161 = vmatprep.subr.mxu0 0.0
    %2162 = vmatpush2.msra.mxu0 0.0
    %2163 = vmatprep.subr.mxu0 0.0
    %2164 = vmatpush2.msra.mxu0 0.0
    %2165 = vmatprep.subr.mxu0 0.0
    %2166 = vmatpush2.msra.mxu0 0.0
    %2167 = vmatprep.subr.mxu0 0.0
    %2168 = vmatpush2.msra.mxu0 0.0
    %2169 = vmatprep.subr.mxu0 0.0
    %2170 = vmatpush2.msra.mxu0 0.0
    %2171 = vmatprep.subr.mxu0 0.0
    %2172 = vmatpush2.msra.mxu0 0.0
    %2173 = vmatprep.subr.mxu0 0.0
    %2174 = vmatpush2.msra.mxu0 0.0
    %2175 = vmatprep.subr.mxu0 0.0
    %2176 = vmatpush2.msra.mxu0 0.0
    %2177 = vmatprep.subr.mxu0 0.0
    %2178 = vmatpush2.msra.mxu0 0.0
    %2179 = vmatprep.subr.mxu0 0.0
    %2180 = vmatpush2.msra.mxu0 0.0
    %2181 = vmatprep.subr.mxu0 0.0
    %2182 = vmatpush2.msra.mxu0 0.0
    %2183 = vmatprep.subr.mxu0 0.0
    %2184 = vmatpush2.msra.mxu0 0.0
    %2185 = vmatprep.mubr.f32.mxu0 0.0
    %2186 = vmatmul.mubr.f32.gmra.mxu0 %v1596
    %v2187 = vpop.f32.mrf.mxu0
    %v2188 = vadd.f32 %v645, %v2187
    %v2189 = vpop.f32.mrf.mxu0
    %2190 = vdwg.mxu0
    %v2191 = vadd.f32 %v2120, %v2188
    %v2192 = vxor.u32 %v2191, 2147483648
    %v2193 = vmul.f32 %v2192, 1.442695
    %v2194 = vpow.pop %v2193
    %v2195 = vadd.f32 %v2194, 1.0
    %v2196 = vrcp.pop %v2195
    %v2197 = vmul.f32 1.0, %v2196
    %v2198 = vld [vmem:[#allocation4 + $0x10] sm:$0xff]
    %2199 = vmatprep.subr.mxu0 0.0
    %2200 = vmatpush1.msra.mxu0 0.0
    %2201 = vmatprep.subr.mxu0 0.0
    %2202 = vmatpush1.msra.mxu0 0.0
    %2203 = vmatprep.subr.mxu0 0.0
    %2204 = vmatpush1.msra.mxu0 0.0
    %2205 = vmatprep.subr.mxu0 0.0
    %2206 = vmatpush1.msra.mxu0 0.0
    %2207 = vmatprep.subr.mxu0 0.0
    %2208 = vmatpush1.msra.mxu0 0.0
    %2209 = vmatprep.subr.mxu0 0.0
    %2210 = vmatpush1.msra.mxu0 0.0
    %2211 = vmatprep.subr.mxu0 0.0
    %2212 = vmatpush1.msra.mxu0 0.0
    %2213 = vmatprep.subr.mxu0 0.0
    %2214 = vmatpush1.msra.mxu0 0.0
    %2215 = vmatprep.subr.mxu0 0.0
    %2216 = vmatpush1.msra.mxu0 %v733
    %2217 = vmatprep.subr.mxu0 0.0
    %2218 = vmatpush1.msra.mxu0 %v732
    %2219 = vmatprep.subr.mxu0 0.0
    %2220 = vmatpush1.msra.mxu0 %v731
    %2221 = vmatprep.subr.mxu0 0.0
    %2222 = vmatpush1.msra.mxu0 %v730
    %2223 = vmatprep.subr.mxu0 0.0
    %2224 = vmatpush1.msra.mxu0 %v729
    %2225 = vmatprep.subr.mxu0 0.0
    %2226 = vmatpush1.msra.mxu0 %v728
    %2227 = vmatprep.subr.mxu0 0.0
    %2228 = vmatpush1.msra.mxu0 %v727
    %2229 = vmatprep.subr.mxu0 0.0
    %2230 = vmatpush1.msra.mxu0 %v726
    %2231 = vmatprep.subr.mxu0 0.0
    %2232 = vmatpush2.msra.mxu0 0.0
    %2233 = vmatprep.subr.mxu0 0.0
    %2234 = vmatpush2.msra.mxu0 0.0
    %2235 = vmatprep.subr.mxu0 0.0
    %2236 = vmatpush2.msra.mxu0 0.0
    %2237 = vmatprep.subr.mxu0 0.0
    %2238 = vmatpush2.msra.mxu0 0.0
    %2239 = vmatprep.subr.mxu0 0.0
    %2240 = vmatpush2.msra.mxu0 0.0
    %2241 = vmatprep.subr.mxu0 0.0
    %2242 = vmatpush2.msra.mxu0 0.0
    %2243 = vmatprep.subr.mxu0 0.0
    %2244 = vmatpush2.msra.mxu0 0.0
    %2245 = vmatprep.subr.mxu0 0.0
    %2246 = vmatpush2.msra.mxu0 0.0
    %2247 = vmatprep.subr.mxu0 0.0
    %2248 = vmatpush2.msra.mxu0 0.0
    %2249 = vmatprep.subr.mxu0 0.0
    %2250 = vmatpush2.msra.mxu0 0.0
    %2251 = vmatprep.subr.mxu0 0.0
    %2252 = vmatpush2.msra.mxu0 0.0
    %2253 = vmatprep.subr.mxu0 0.0
    %2254 = vmatpush2.msra.mxu0 0.0
    %2255 = vmatprep.subr.mxu0 0.0
    %2256 = vmatpush2.msra.mxu0 0.0
    %2257 = vmatprep.subr.mxu0 0.0
    %2258 = vmatpush2.msra.mxu0 0.0
    %2259 = vmatprep.subr.mxu0 0.0
    %2260 = vmatpush2.msra.mxu0 0.0
    %2261 = vmatprep.subr.mxu0 0.0
    %2262 = vmatpush2.msra.mxu0 0.0
    %2263 = vmatprep.mubr.f32.mxu0 0.0
    %2264 = vmatmul.mubr.f32.gmra.mxu0 %v1596
    %v2265 = vpop.f32.mrf.mxu0
    %v2266 = vadd.f32 %v740, %v2265
    %v2267 = vpop.f32.mrf.mxu0
    %2268 = vdwg.mxu0
    %v2269 = vmul.f32 %v2119, %v2266
    %v2270 = vadd.f32 %v2198, %v2269
    %v2271 = vtanh.pop %v2270
    %v2272 = vsub.f32 1.0, %v2197
    %v2273 = vmul.f32 %v2272, %v2271
    %v2274 = vmul.f32 %v2197, %v1594
    %v2275 = vadd.f32 %v2273, %v2274
    %v2277 = vsel %vm272, %v2275, 0
    %2279 = vmatprep.subr.mxu0 0.0
    %2280 = vmatpush1.msra.mxu0 0.0
    %2281 = vmatprep.subr.mxu0 0.0
    %2282 = vmatpush1.msra.mxu0 0.0
    %2283 = vmatprep.subr.mxu0 0.0
    %2284 = vmatpush1.msra.mxu0 0.0
    %2285 = vmatprep.subr.mxu0 0.0
    %2286 = vmatpush1.msra.mxu0 0.0
    %2287 = vmatprep.subr.mxu0 0.0
    %2288 = vmatpush1.msra.mxu0 0.0
    %2289 = vmatprep.subr.mxu0 0.0
    %2290 = vmatpush1.msra.mxu0 0.0
    %2291 = vmatprep.subr.mxu0 0.0
    %2292 = vmatpush1.msra.mxu0 0.0
    %2293 = vmatprep.subr.mxu0 0.0
    %2294 = vmatpush1.msra.mxu0 0.0
    %2295 = vmatprep.subr.mxu0 0.0
    %2296 = vmatpush1.msra.mxu0 %v826
    %2297 = vmatprep.subr.mxu0 0.0
    %2298 = vmatpush1.msra.mxu0 %v825
    %2299 = vmatprep.subr.mxu0 0.0
    %2300 = vmatpush1.msra.mxu0 %v824
    %2301 = vmatprep.subr.mxu0 0.0
    %2302 = vmatpush1.msra.mxu0 %v823
    %2303 = vmatprep.subr.mxu0 0.0
    %2304 = vmatpush1.msra.mxu0 %v822
    %2305 = vmatprep.subr.mxu0 0.0
    %2306 = vmatpush1.msra.mxu0 %v821
    %2307 = vmatprep.subr.mxu0 0.0
    %2308 = vmatpush1.msra.mxu0 %v820
    %2309 = vmatprep.subr.mxu0 0.0
    %2310 = vmatpush1.msra.mxu0 %v819
    %2311 = vmatprep.subr.mxu0 0.0
    %2312 = vmatpush2.msra.mxu0 0.0
    %2313 = vmatprep.subr.mxu0 0.0
    %2314 = vmatpush2.msra.mxu0 0.0
    %2315 = vmatprep.subr.mxu0 0.0
    %2316 = vmatpush2.msra.mxu0 0.0
    %2317 = vmatprep.subr.mxu0 0.0
    %2318 = vmatpush2.msra.mxu0 0.0
    %2319 = vmatprep.subr.mxu0 0.0
    %2320 = vmatpush2.msra.mxu0 0.0
    %2321 = vmatprep.subr.mxu0 0.0
    %2322 = vmatpush2.msra.mxu0 0.0
    %2323 = vmatprep.subr.mxu0 0.0
    %2324 = vmatpush2.msra.mxu0 0.0
    %2325 = vmatprep.subr.mxu0 0.0
    %2326 = vmatpush2.msra.mxu0 0.0
    %2327 = vmatprep.subr.mxu0 0.0
    %2328 = vmatpush2.msra.mxu0 0.0
    %2329 = vmatprep.subr.mxu0 0.0
    %2330 = vmatpush2.msra.mxu0 0.0
    %2331 = vmatprep.subr.mxu0 0.0
    %2332 = vmatpush2.msra.mxu0 0.0
    %2333 = vmatprep.subr.mxu0 0.0
    %2334 = vmatpush2.msra.mxu0 0.0
    %2335 = vmatprep.subr.mxu0 0.0
    %2336 = vmatpush2.msra.mxu0 0.0
    %2337 = vmatprep.subr.mxu0 0.0
    %2338 = vmatpush2.msra.mxu0 0.0
    %2339 = vmatprep.subr.mxu0 0.0
    %2340 = vmatpush2.msra.mxu0 0.0
    %2341 = vmatprep.subr.mxu0 0.0
    %2342 = vmatpush2.msra.mxu0 0.0
    %2343 = vmatprep.mubr.f32.mxu0 0.0
    %2344 = vmatmul.mubr.f32.gmra.mxu0 %v2277
    %v2345 = vpop.f32.mrf.mxu0
    %v2346 = vadd.f32 %v832, %v2345
    %v2347 = vpop.f32.mrf.mxu0
    %2348 = vdwg.mxu0
    %v2350 = vsel %vm272, %v2041, 0
    %2352 = vmatprep.subr.mxu0 0.0
    %2353 = vmatpush1.msra.mxu0 0.0
    %2354 = vmatprep.subr.mxu0 0.0
    %2355 = vmatpush1.msra.mxu0 0.0
    %2356 = vmatprep.subr.mxu0 0.0
    %2357 = vmatpush1.msra.mxu0 0.0
    %2358 = vmatprep.subr.mxu0 0.0
    %2359 = vmatpush1.msra.mxu0 0.0
    %2360 = vmatprep.subr.mxu0 0.0
    %2361 = vmatpush1.msra.mxu0 0.0
    %2362 = vmatprep.subr.mxu0 0.0
    %2363 = vmatpush1.msra.mxu0 0.0
    %2364 = vmatprep.subr.mxu0 0.0
    %2365 = vmatpush1.msra.mxu0 0.0
    %2366 = vmatprep.subr.mxu0 0.0
    %2367 = vmatpush1.msra.mxu0 0.0
    %2368 = vmatprep.subr.mxu0 0.0
    %2369 = vmatpush1.msra.mxu0 %v914
    %2370 = vmatprep.subr.mxu0 0.0
    %2371 = vmatpush1.msra.mxu0 %v913
    %2372 = vmatprep.subr.mxu0 0.0
    %2373 = vmatpush1.msra.mxu0 %v912
    %2374 = vmatprep.subr.mxu0 0.0
    %2375 = vmatpush1.msra.mxu0 %v911
    %2376 = vmatprep.subr.mxu0 0.0
    %2377 = vmatpush1.msra.mxu0 %v910
    %2378 = vmatprep.subr.mxu0 0.0
    %2379 = vmatpush1.msra.mxu0 %v909
    %2380 = vmatprep.subr.mxu0 0.0
    %2381 = vmatpush1.msra.mxu0 %v908
    %2382 = vmatprep.subr.mxu0 0.0
    %2383 = vmatpush1.msra.mxu0 %v907
    %2384 = vmatprep.subr.mxu0 0.0
    %2385 = vmatpush2.msra.mxu0 0.0
    %2386 = vmatprep.subr.mxu0 0.0
    %2387 = vmatpush2.msra.mxu0 0.0
    %2388 = vmatprep.subr.mxu0 0.0
    %2389 = vmatpush2.msra.mxu0 0.0
    %2390 = vmatprep.subr.mxu0 0.0
    %2391 = vmatpush2.msra.mxu0 0.0
    %2392 = vmatprep.subr.mxu0 0.0
    %2393 = vmatpush2.msra.mxu0 0.0
    %2394 = vmatprep.subr.mxu0 0.0
    %2395 = vmatpush2.msra.mxu0 0.0
    %2396 = vmatprep.subr.mxu0 0.0
    %2397 = vmatpush2.msra.mxu0 0.0
    %2398 = vmatprep.subr.mxu0 0.0
    %2399 = vmatpush2.msra.mxu0 0.0
    %2400 = vmatprep.subr.mxu0 0.0
    %2401 = vmatpush2.msra.mxu0 0.0
    %2402 = vmatprep.subr.mxu0 0.0
    %2403 = vmatpush2.msra.mxu0 0.0
    %2404 = vmatprep.subr.mxu0 0.0
    %2405 = vmatpush2.msra.mxu0 0.0
    %2406 = vmatprep.subr.mxu0 0.0
    %2407 = vmatpush2.msra.mxu0 0.0
    %2408 = vmatprep.subr.mxu0 0.0
    %2409 = vmatpush2.msra.mxu0 0.0
    %2410 = vmatprep.subr.mxu0 0.0
    %2411 = vmatpush2.msra.mxu0 0.0
    %2412 = vmatprep.subr.mxu0 0.0
    %2413 = vmatpush2.msra.mxu0 0.0
    %2414 = vmatprep.subr.mxu0 0.0
    %2415 = vmatpush2.msra.mxu0 0.0
    %2416 = vmatprep.mubr.f32.mxu0 0.0
    %2417 = vmatmul.mubr.f32.gmra.mxu0 %v2350
    %v2418 = vpop.f32.mrf.mxu0
    %v2419 = vadd.f32 %v920, %v2418
    %v2420 = vpop.f32.mrf.mxu0
    %2421 = vdwg.mxu0
    %v2422 = vadd.f32 %v2346, %v2419
    %v2423 = vxor.u32 %v2422, 2147483648
    %v2424 = vmul.f32 %v2423, 1.442695
    %v2425 = vpow.pop %v2424
    %v2426 = vadd.f32 %v2425, 1.0
    %v2427 = vrcp.pop %v2426
    %v2428 = vmul.f32 1.0, %v2427
    %2429 = vmatprep.subr.mxu0 0.0
    %2430 = vmatpush1.msra.mxu0 0.0
    %2431 = vmatprep.subr.mxu0 0.0
    %2432 = vmatpush1.msra.mxu0 0.0
    %2433 = vmatprep.subr.mxu0 0.0
    %2434 = vmatpush1.msra.mxu0 0.0
    %2435 = vmatprep.subr.mxu0 0.0
    %2436 = vmatpush1.msra.mxu0 0.0
    %2437 = vmatprep.subr.mxu0 0.0
    %2438 = vmatpush1.msra.mxu0 0.0
    %2439 = vmatprep.subr.mxu0 0.0
    %2440 = vmatpush1.msra.mxu0 0.0
    %2441 = vmatprep.subr.mxu0 0.0
    %2442 = vmatpush1.msra.mxu0 0.0
    %2443 = vmatprep.subr.mxu0 0.0
    %2444 = vmatpush1.msra.mxu0 0.0
    %2445 = vmatprep.subr.mxu0 0.0
    %2446 = vmatpush1.msra.mxu0 %v1007
    %2447 = vmatprep.subr.mxu0 0.0
    %2448 = vmatpush1.msra.mxu0 %v1006
    %2449 = vmatprep.subr.mxu0 0.0
    %2450 = vmatpush1.msra.mxu0 %v1005
    %2451 = vmatprep.subr.mxu0 0.0
    %2452 = vmatpush1.msra.mxu0 %v1004
    %2453 = vmatprep.subr.mxu0 0.0
    %2454 = vmatpush1.msra.mxu0 %v1003
    %2455 = vmatprep.subr.mxu0 0.0
    %2456 = vmatpush1.msra.mxu0 %v1002
    %2457 = vmatprep.subr.mxu0 0.0
    %2458 = vmatpush1.msra.mxu0 %v1001
    %2459 = vmatprep.subr.mxu0 0.0
    %2460 = vmatpush1.msra.mxu0 %v1000
    %2461 = vmatprep.subr.mxu0 0.0
    %2462 = vmatpush2.msra.mxu0 0.0
    %2463 = vmatprep.subr.mxu0 0.0
    %2464 = vmatpush2.msra.mxu0 0.0
    %2465 = vmatprep.subr.mxu0 0.0
    %2466 = vmatpush2.msra.mxu0 0.0
    %2467 = vmatprep.subr.mxu0 0.0
    %2468 = vmatpush2.msra.mxu0 0.0
    %2469 = vmatprep.subr.mxu0 0.0
    %2470 = vmatpush2.msra.mxu0 0.0
    %2471 = vmatprep.subr.mxu0 0.0
    %2472 = vmatpush2.msra.mxu0 0.0
    %2473 = vmatprep.subr.mxu0 0.0
    %2474 = vmatpush2.msra.mxu0 0.0
    %2475 = vmatprep.subr.mxu0 0.0
    %2476 = vmatpush2.msra.mxu0 0.0
    %2477 = vmatprep.subr.mxu0 0.0
    %2478 = vmatpush2.msra.mxu0 0.0
    %2479 = vmatprep.subr.mxu0 0.0
    %2480 = vmatpush2.msra.mxu0 0.0
    %2481 = vmatprep.subr.mxu0 0.0
    %2482 = vmatpush2.msra.mxu0 0.0
    %2483 = vmatprep.subr.mxu0 0.0
    %2484 = vmatpush2.msra.mxu0 0.0
    %2485 = vmatprep.subr.mxu0 0.0
    %2486 = vmatpush2.msra.mxu0 0.0
    %2487 = vmatprep.subr.mxu0 0.0
    %2488 = vmatpush2.msra.mxu0 0.0
    %2489 = vmatprep.subr.mxu0 0.0
    %2490 = vmatpush2.msra.mxu0 0.0
    %2491 = vmatprep.subr.mxu0 0.0
    %2492 = vmatpush2.msra.mxu0 0.0
    %2493 = vmatprep.mubr.f32.mxu0 0.0
    %2494 = vmatmul.mubr.f32.gmra.mxu0 %v2277
    %v2495 = vpop.f32.mrf.mxu0
    %v2496 = vadd.f32 %v1014, %v2495
    %v2497 = vpop.f32.mrf.mxu0
    %2498 = vdwg.mxu0
    %2499 = vmatprep.subr.mxu0 0.0
    %2500 = vmatpush1.msra.mxu0 0.0
    %2501 = vmatprep.subr.mxu0 0.0
    %2502 = vmatpush1.msra.mxu0 0.0
    %2503 = vmatprep.subr.mxu0 0.0
    %2504 = vmatpush1.msra.mxu0 0.0
    %2505 = vmatprep.subr.mxu0 0.0
    %2506 = vmatpush1.msra.mxu0 0.0
    %2507 = vmatprep.subr.mxu0 0.0
    %2508 = vmatpush1.msra.mxu0 0.0
    %2509 = vmatprep.subr.mxu0 0.0
    %2510 = vmatpush1.msra.mxu0 0.0
    %2511 = vmatprep.subr.mxu0 0.0
    %2512 = vmatpush1.msra.mxu0 0.0
    %2513 = vmatprep.subr.mxu0 0.0
    %2514 = vmatpush1.msra.mxu0 0.0
    %2515 = vmatprep.subr.mxu0 0.0
    %2516 = vmatpush1.msra.mxu0 %v1094
    %2517 = vmatprep.subr.mxu0 0.0
    %2518 = vmatpush1.msra.mxu0 %v1093
    %2519 = vmatprep.subr.mxu0 0.0
    %2520 = vmatpush1.msra.mxu0 %v1092
    %2521 = vmatprep.subr.mxu0 0.0
    %2522 = vmatpush1.msra.mxu0 %v1091
    %2523 = vmatprep.subr.mxu0 0.0
    %2524 = vmatpush1.msra.mxu0 %v1090
    %2525 = vmatprep.subr.mxu0 0.0
    %2526 = vmatpush1.msra.mxu0 %v1089
    %2527 = vmatprep.subr.mxu0 0.0
    %2528 = vmatpush1.msra.mxu0 %v1088
    %2529 = vmatprep.subr.mxu0 0.0
    %2530 = vmatpush1.msra.mxu0 %v1087
    %2531 = vmatprep.subr.mxu0 0.0
    %2532 = vmatpush2.msra.mxu0 0.0
    %2533 = vmatprep.subr.mxu0 0.0
    %2534 = vmatpush2.msra.mxu0 0.0
    %2535 = vmatprep.subr.mxu0 0.0
    %2536 = vmatpush2.msra.mxu0 0.0
    %2537 = vmatprep.subr.mxu0 0.0
    %2538 = vmatpush2.msra.mxu0 0.0
    %2539 = vmatprep.subr.mxu0 0.0
    %2540 = vmatpush2.msra.mxu0 0.0
    %2541 = vmatprep.subr.mxu0 0.0
    %2542 = vmatpush2.msra.mxu0 0.0
    %2543 = vmatprep.subr.mxu0 0.0
    %2544 = vmatpush2.msra.mxu0 0.0
    %2545 = vmatprep.subr.mxu0 0.0
    %2546 = vmatpush2.msra.mxu0 0.0
    %2547 = vmatprep.subr.mxu0 0.0
    %2548 = vmatpush2.msra.mxu0 0.0
    %2549 = vmatprep.subr.mxu0 0.0
    %2550 = vmatpush2.msra.mxu0 0.0
    %2551 = vmatprep.subr.mxu0 0.0
    %2552 = vmatpush2.msra.mxu0 0.0
    %2553 = vmatprep.subr.mxu0 0.0
    %2554 = vmatpush2.msra.mxu0 0.0
    %2555 = vmatprep.subr.mxu0 0.0
    %2556 = vmatpush2.msra.mxu0 0.0
    %2557 = vmatprep.subr.mxu0 0.0
    %2558 = vmatpush2.msra.mxu0 0.0
    %2559 = vmatprep.subr.mxu0 0.0
    %2560 = vmatpush2.msra.mxu0 0.0
    %2561 = vmatprep.subr.mxu0 0.0
    %2562 = vmatpush2.msra.mxu0 0.0
    %2563 = vmatprep.mubr.f32.mxu0 0.0
    %2564 = vmatmul.mubr.f32.gmra.mxu0 %v2350
    %v2565 = vpop.f32.mrf.mxu0
    %v2566 = vadd.f32 %v1101, %v2565
    %v2567 = vpop.f32.mrf.mxu0
    %2568 = vdwg.mxu0
    %v2569 = vadd.f32 %v2496, %v2566
    %v2570 = vxor.u32 %v2569, 2147483648
    %v2571 = vmul.f32 %v2570, 1.442695
    %v2572 = vpow.pop %v2571
    %v2573 = vadd.f32 %v2572, 1.0
    %v2574 = vrcp.pop %v2573
    %v2575 = vmul.f32 1.0, %v2574
    %2576 = vmatprep.subr.mxu0 0.0
    %2577 = vmatpush1.msra.mxu0 0.0
    %2578 = vmatprep.subr.mxu0 0.0
    %2579 = vmatpush1.msra.mxu0 0.0
    %2580 = vmatprep.subr.mxu0 0.0
    %2581 = vmatpush1.msra.mxu0 0.0
    %2582 = vmatprep.subr.mxu0 0.0
    %2583 = vmatpush1.msra.mxu0 0.0
    %2584 = vmatprep.subr.mxu0 0.0
    %2585 = vmatpush1.msra.mxu0 0.0
    %2586 = vmatprep.subr.mxu0 0.0
    %2587 = vmatpush1.msra.mxu0 0.0
    %2588 = vmatprep.subr.mxu0 0.0
    %2589 = vmatpush1.msra.mxu0 0.0
    %2590 = vmatprep.subr.mxu0 0.0
    %2591 = vmatpush1.msra.mxu0 0.0
    %2592 = vmatprep.subr.mxu0 0.0
    %2593 = vmatpush1.msra.mxu0 %v1188
    %2594 = vmatprep.subr.mxu0 0.0
    %2595 = vmatpush1.msra.mxu0 %v1187
    %2596 = vmatprep.subr.mxu0 0.0
    %2597 = vmatpush1.msra.mxu0 %v1186
    %2598 = vmatprep.subr.mxu0 0.0
    %2599 = vmatpush1.msra.mxu0 %v1185
    %2600 = vmatprep.subr.mxu0 0.0
    %2601 = vmatpush1.msra.mxu0 %v1184
    %2602 = vmatprep.subr.mxu0 0.0
    %2603 = vmatpush1.msra.mxu0 %v1183
    %2604 = vmatprep.subr.mxu0 0.0
    %2605 = vmatpush1.msra.mxu0 %v1182
    %2606 = vmatprep.subr.mxu0 0.0
    %2607 = vmatpush1.msra.mxu0 %v1181
    %2608 = vmatprep.subr.mxu0 0.0
    %2609 = vmatpush2.msra.mxu0 0.0
    %2610 = vmatprep.subr.mxu0 0.0
    %2611 = vmatpush2.msra.mxu0 0.0
    %2612 = vmatprep.subr.mxu0 0.0
    %2613 = vmatpush2.msra.mxu0 0.0
    %2614 = vmatprep.subr.mxu0 0.0
    %2615 = vmatpush2.msra.mxu0 0.0
    %2616 = vmatprep.subr.mxu0 0.0
    %2617 = vmatpush2.msra.mxu0 0.0
    %2618 = vmatprep.subr.mxu0 0.0
    %2619 = vmatpush2.msra.mxu0 0.0
    %2620 = vmatprep.subr.mxu0 0.0
    %2621 = vmatpush2.msra.mxu0 0.0
    %2622 = vmatprep.subr.mxu0 0.0
    %2623 = vmatpush2.msra.mxu0 0.0
    %2624 = vmatprep.subr.mxu0 0.0
    %2625 = vmatpush2.msra.mxu0 0.0
    %2626 = vmatprep.subr.mxu0 0.0
    %2627 = vmatpush2.msra.mxu0 0.0
    %2628 = vmatprep.subr.mxu0 0.0
    %2629 = vmatpush2.msra.mxu0 0.0
    %2630 = vmatprep.subr.mxu0 0.0
    %2631 = vmatpush2.msra.mxu0 0.0
    %2632 = vmatprep.subr.mxu0 0.0
    %2633 = vmatpush2.msra.mxu0 0.0
    %2634 = vmatprep.subr.mxu0 0.0
    %2635 = vmatpush2.msra.mxu0 0.0
    %2636 = vmatprep.subr.mxu0 0.0
    %2637 = vmatpush2.msra.mxu0 0.0
    %2638 = vmatprep.subr.mxu0 0.0
    %2639 = vmatpush2.msra.mxu0 0.0
    %2640 = vmatprep.mubr.f32.mxu0 0.0
    %2641 = vmatmul.mubr.f32.gmra.mxu0 %v2277
    %v2642 = vpop.f32.mrf.mxu0
    %v2643 = vadd.f32 %v1195, %v2642
    %v2644 = vpop.f32.mrf.mxu0
    %2645 = vdwg.mxu0
    %2646 = vmatprep.subr.mxu0 0.0
    %2647 = vmatpush1.msra.mxu0 0.0
    %2648 = vmatprep.subr.mxu0 0.0
    %2649 = vmatpush1.msra.mxu0 0.0
    %2650 = vmatprep.subr.mxu0 0.0
    %2651 = vmatpush1.msra.mxu0 0.0
    %2652 = vmatprep.subr.mxu0 0.0
    %2653 = vmatpush1.msra.mxu0 0.0
    %2654 = vmatprep.subr.mxu0 0.0
    %2655 = vmatpush1.msra.mxu0 0.0
    %2656 = vmatprep.subr.mxu0 0.0
    %2657 = vmatpush1.msra.mxu0 0.0
    %2658 = vmatprep.subr.mxu0 0.0
    %2659 = vmatpush1.msra.mxu0 0.0
    %2660 = vmatprep.subr.mxu0 0.0
    %2661 = vmatpush1.msra.mxu0 0.0
    %2662 = vmatprep.subr.mxu0 0.0
    %2663 = vmatpush1.msra.mxu0 %v1275
    %2664 = vmatprep.subr.mxu0 0.0
    %2665 = vmatpush1.msra.mxu0 %v1274
    %2666 = vmatprep.subr.mxu0 0.0
    %2667 = vmatpush1.msra.mxu0 %v1273
    %2668 = vmatprep.subr.mxu0 0.0
    %2669 = vmatpush1.msra.mxu0 %v1272
    %2670 = vmatprep.subr.mxu0 0.0
    %2671 = vmatpush1.msra.mxu0 %v1271
    %2672 = vmatprep.subr.mxu0 0.0
    %2673 = vmatpush1.msra.mxu0 %v1270
    %2674 = vmatprep.subr.mxu0 0.0
    %2675 = vmatpush1.msra.mxu0 %v1269
    %2676 = vmatprep.subr.mxu0 0.0
    %2677 = vmatpush1.msra.mxu0 %v1268
    %2678 = vmatprep.subr.mxu0 0.0
    %2679 = vmatpush2.msra.mxu0 0.0
    %2680 = vmatprep.subr.mxu0 0.0
    %2681 = vmatpush2.msra.mxu0 0.0
    %2682 = vmatprep.subr.mxu0 0.0
    %2683 = vmatpush2.msra.mxu0 0.0
    %2684 = vmatprep.subr.mxu0 0.0
    %2685 = vmatpush2.msra.mxu0 0.0
    %2686 = vmatprep.subr.mxu0 0.0
    %2687 = vmatpush2.msra.mxu0 0.0
    %2688 = vmatprep.subr.mxu0 0.0
    %2689 = vmatpush2.msra.mxu0 0.0
    %2690 = vmatprep.subr.mxu0 0.0
    %2691 = vmatpush2.msra.mxu0 0.0
    %2692 = vmatprep.subr.mxu0 0.0
    %2693 = vmatpush2.msra.mxu0 0.0
    %2694 = vmatprep.subr.mxu0 0.0
    %2695 = vmatpush2.msra.mxu0 0.0
    %2696 = vmatprep.subr.mxu0 0.0
    %2697 = vmatpush2.msra.mxu0 0.0
    %2698 = vmatprep.subr.mxu0 0.0
    %2699 = vmatpush2.msra.mxu0 0.0
    %2700 = vmatprep.subr.mxu0 0.0
    %2701 = vmatpush2.msra.mxu0 0.0
    %2702 = vmatprep.subr.mxu0 0.0
    %2703 = vmatpush2.msra.mxu0 0.0
    %2704 = vmatprep.subr.mxu0 0.0
    %2705 = vmatpush2.msra.mxu0 0.0
    %2706 = vmatprep.subr.mxu0 0.0
    %2707 = vmatpush2.msra.mxu0 0.0
    %2708 = vmatprep.subr.mxu0 0.0
    %2709 = vmatpush2.msra.mxu0 0.0
    %2710 = vmatprep.mubr.f32.mxu0 0.0
    %2711 = vmatmul.mubr.f32.gmra.mxu0 %v2350
    %v2712 = vpop.f32.mrf.mxu0
    %v2713 = vadd.f32 %v1282, %v2712
    %v2714 = vpop.f32.mrf.mxu0
    %2715 = vdwg.mxu0
    %v2716 = vmul.f32 %v2428, %v2713
    %v2717 = vadd.f32 %v2643, %v2716
    %v2718 = vtanh.pop %v2717
    %v2719 = vsub.f32 1.0, %v2575
    %v2720 = vmul.f32 %v2719, %v2718
    %v2721 = vmul.f32 %v2575, %v2041
    %v2722 = vadd.f32 %v2720, %v2721
    %v2723 = vld [vmem:[#allocation2 + $0x18] sm:$0xff]
    %2724 = vmatprep.subr.mxu0 0.0
    %2725 = vmatpush1.msra.mxu0 0.0
    %2726 = vmatprep.subr.mxu0 0.0
    %2727 = vmatpush1.msra.mxu0 0.0
    %2728 = vmatprep.subr.mxu0 0.0
    %2729 = vmatpush1.msra.mxu0 0.0
    %2730 = vmatprep.subr.mxu0 0.0
    %2731 = vmatpush1.msra.mxu0 0.0
    %2732 = vmatprep.subr.mxu0 0.0
    %2733 = vmatpush1.msra.mxu0 0.0
    %2734 = vmatprep.subr.mxu0 0.0
    %2735 = vmatpush1.msra.mxu0 0.0
    %2736 = vmatprep.subr.mxu0 0.0
    %2737 = vmatpush1.msra.mxu0 0.0
    %2738 = vmatprep.subr.mxu0 0.0
    %2739 = vmatpush1.msra.mxu0 0.0
    %2740 = vmatprep.subr.mxu0 0.0
    %2741 = vmatpush1.msra.mxu0 %v541
    %2742 = vmatprep.subr.mxu0 0.0
    %2743 = vmatpush1.msra.mxu0 %v540
    %2744 = vmatprep.subr.mxu0 0.0
    %2745 = vmatpush1.msra.mxu0 %v539
    %2746 = vmatprep.subr.mxu0 0.0
    %2747 = vmatpush1.msra.mxu0 %v538
    %2748 = vmatprep.subr.mxu0 0.0
    %2749 = vmatpush1.msra.mxu0 %v537
    %2750 = vmatprep.subr.mxu0 0.0
    %2751 = vmatpush1.msra.mxu0 %v536
    %2752 = vmatprep.subr.mxu0 0.0
    %2753 = vmatpush1.msra.mxu0 %v535
    %2754 = vmatprep.subr.mxu0 0.0
    %2755 = vmatpush1.msra.mxu0 %v534
    %2756 = vmatprep.subr.mxu0 0.0
    %2757 = vmatpush2.msra.mxu0 0.0
    %2758 = vmatprep.subr.mxu0 0.0
    %2759 = vmatpush2.msra.mxu0 0.0
    %2760 = vmatprep.subr.mxu0 0.0
    %2761 = vmatpush2.msra.mxu0 0.0
    %2762 = vmatprep.subr.mxu0 0.0
    %2763 = vmatpush2.msra.mxu0 0.0
    %2764 = vmatprep.subr.mxu0 0.0
    %2765 = vmatpush2.msra.mxu0 0.0
    %2766 = vmatprep.subr.mxu0 0.0
    %2767 = vmatpush2.msra.mxu0 0.0
    %2768 = vmatprep.subr.mxu0 0.0
    %2769 = vmatpush2.msra.mxu0 0.0
    %2770 = vmatprep.subr.mxu0 0.0
    %2771 = vmatpush2.msra.mxu0 0.0
    %2772 = vmatprep.subr.mxu0 0.0
    %2773 = vmatpush2.msra.mxu0 0.0
    %2774 = vmatprep.subr.mxu0 0.0
    %2775 = vmatpush2.msra.mxu0 0.0
    %2776 = vmatprep.subr.mxu0 0.0
    %2777 = vmatpush2.msra.mxu0 0.0
    %2778 = vmatprep.subr.mxu0 0.0
    %2779 = vmatpush2.msra.mxu0 0.0
    %2780 = vmatprep.subr.mxu0 0.0
    %2781 = vmatpush2.msra.mxu0 0.0
    %2782 = vmatprep.subr.mxu0 0.0
    %2783 = vmatpush2.msra.mxu0 0.0
    %2784 = vmatprep.subr.mxu0 0.0
    %2785 = vmatpush2.msra.mxu0 0.0
    %2786 = vmatprep.subr.mxu0 0.0
    %2787 = vmatpush2.msra.mxu0 0.0
    %2788 = vmatprep.mubr.f32.mxu0 0.0
    %2789 = vmatmul.mubr.f32.gmra.mxu0 %v2277
    %v2790 = vpop.f32.mrf.mxu0
    %v2791 = vadd.f32 %v547, %v2790
    %v2792 = vpop.f32.mrf.mxu0
    %2793 = vdwg.mxu0
    %v2794 = vadd.f32 %v2723, %v2791
    %v2795 = vxor.u32 %v2794, 2147483648
    %v2796 = vmul.f32 %v2795, 1.442695
    %v2797 = vpow.pop %v2796
    %v2798 = vadd.f32 %v2797, 1.0
    %v2799 = vrcp.pop %v2798
    %v2800 = vmul.f32 1.0, %v2799
    %v2801 = vld [vmem:[#allocation3 + $0x18] sm:$0xff]
    %2802 = vmatprep.subr.mxu0 0.0
    %2803 = vmatpush1.msra.mxu0 0.0
    %2804 = vmatprep.subr.mxu0 0.0
    %2805 = vmatpush1.msra.mxu0 0.0
    %2806 = vmatprep.subr.mxu0 0.0
    %2807 = vmatpush1.msra.mxu0 0.0
    %2808 = vmatprep.subr.mxu0 0.0
    %2809 = vmatpush1.msra.mxu0 0.0
    %2810 = vmatprep.subr.mxu0 0.0
    %2811 = vmatpush1.msra.mxu0 0.0
    %2812 = vmatprep.subr.mxu0 0.0
    %2813 = vmatpush1.msra.mxu0 0.0
    %2814 = vmatprep.subr.mxu0 0.0
    %2815 = vmatpush1.msra.mxu0 0.0
    %2816 = vmatprep.subr.mxu0 0.0
    %2817 = vmatpush1.msra.mxu0 0.0
    %2818 = vmatprep.subr.mxu0 0.0
    %2819 = vmatpush1.msra.mxu0 %v638
    %2820 = vmatprep.subr.mxu0 0.0
    %2821 = vmatpush1.msra.mxu0 %v637
    %2822 = vmatprep.subr.mxu0 0.0
    %2823 = vmatpush1.msra.mxu0 %v636
    %2824 = vmatprep.subr.mxu0 0.0
    %2825 = vmatpush1.msra.mxu0 %v635
    %2826 = vmatprep.subr.mxu0 0.0
    %2827 = vmatpush1.msra.mxu0 %v634
    %2828 = vmatprep.subr.mxu0 0.0
    %2829 = vmatpush1.msra.mxu0 %v633
    %2830 = vmatprep.subr.mxu0 0.0
    %2831 = vmatpush1.msra.mxu0 %v632
    %2832 = vmatprep.subr.mxu0 0.0
    %2833 = vmatpush1.msra.mxu0 %v631
    %2834 = vmatprep.subr.mxu0 0.0
    %2835 = vmatpush2.msra.mxu0 0.0
    %2836 = vmatprep.subr.mxu0 0.0
    %2837 = vmatpush2.msra.mxu0 0.0
    %2838 = vmatprep.subr.mxu0 0.0
    %2839 = vmatpush2.msra.mxu0 0.0
    %2840 = vmatprep.subr.mxu0 0.0
    %2841 = vmatpush2.msra.mxu0 0.0
    %2842 = vmatprep.subr.mxu0 0.0
    %2843 = vmatpush2.msra.mxu0 0.0
    %2844 = vmatprep.subr.mxu0 0.0
    %2845 = vmatpush2.msra.mxu0 0.0
    %2846 = vmatprep.subr.mxu0 0.0
    %2847 = vmatpush2.msra.mxu0 0.0
    %2848 = vmatprep.subr.mxu0 0.0
    %2849 = vmatpush2.msra.mxu0 0.0
    %2850 = vmatprep.subr.mxu0 0.0
    %2851 = vmatpush2.msra.mxu0 0.0
    %2852 = vmatprep.subr.mxu0 0.0
    %2853 = vmatpush2.msra.mxu0 0.0
    %2854 = vmatprep.subr.mxu0 0.0
    %2855 = vmatpush2.msra.mxu0 0.0
    %2856 = vmatprep.subr.mxu0 0.0
    %2857 = vmatpush2.msra.mxu0 0.0
    %2858 = vmatprep.subr.mxu0 0.0
    %2859 = vmatpush2.msra.mxu0 0.0
    %2860 = vmatprep.subr.mxu0 0.0
    %2861 = vmatpush2.msra.mxu0 0.0
    %2862 = vmatprep.subr.mxu0 0.0
    %2863 = vmatpush2.msra.mxu0 0.0
    %2864 = vmatprep.subr.mxu0 0.0
    %2865 = vmatpush2.msra.mxu0 0.0
    %2866 = vmatprep.mubr.f32.mxu0 0.0
    %2867 = vmatmul.mubr.f32.gmra.mxu0 %v2277
    %v2868 = vpop.f32.mrf.mxu0
    %v2869 = vadd.f32 %v645, %v2868
    %v2870 = vpop.f32.mrf.mxu0
    %2871 = vdwg.mxu0
    %v2872 = vadd.f32 %v2801, %v2869
    %v2873 = vxor.u32 %v2872, 2147483648
    %v2874 = vmul.f32 %v2873, 1.442695
    %v2875 = vpow.pop %v2874
    %v2876 = vadd.f32 %v2875, 1.0
    %v2877 = vrcp.pop %v2876
    %v2878 = vmul.f32 1.0, %v2877
    %v2879 = vld [vmem:[#allocation4 + $0x18] sm:$0xff]
    %2880 = vmatprep.subr.mxu0 0.0
    %2881 = vmatpush1.msra.mxu0 0.0
    %2882 = vmatprep.subr.mxu0 0.0
    %2883 = vmatpush1.msra.mxu0 0.0
    %2884 = vmatprep.subr.mxu0 0.0
    %2885 = vmatpush1.msra.mxu0 0.0
    %2886 = vmatprep.subr.mxu0 0.0
    %2887 = vmatpush1.msra.mxu0 0.0
    %2888 = vmatprep.subr.mxu0 0.0
    %2889 = vmatpush1.msra.mxu0 0.0
    %2890 = vmatprep.subr.mxu0 0.0
    %2891 = vmatpush1.msra.mxu0 0.0
    %2892 = vmatprep.subr.mxu0 0.0
    %2893 = vmatpush1.msra.mxu0 0.0
    %2894 = vmatprep.subr.mxu0 0.0
    %2895 = vmatpush1.msra.mxu0 0.0
    %2896 = vmatprep.subr.mxu0 0.0
    %2897 = vmatpush1.msra.mxu0 %v733
    %2898 = vmatprep.subr.mxu0 0.0
    %2899 = vmatpush1.msra.mxu0 %v732
    %2900 = vmatprep.subr.mxu0 0.0
    %2901 = vmatpush1.msra.mxu0 %v731
    %2902 = vmatprep.subr.mxu0 0.0
    %2903 = vmatpush1.msra.mxu0 %v730
    %2904 = vmatprep.subr.mxu0 0.0
    %2905 = vmatpush1.msra.mxu0 %v729
    %2906 = vmatprep.subr.mxu0 0.0
    %2907 = vmatpush1.msra.mxu0 %v728
    %2908 = vmatprep.subr.mxu0 0.0
    %2909 = vmatpush1.msra.mxu0 %v727
    %2910 = vmatprep.subr.mxu0 0.0
    %2911 = vmatpush1.msra.mxu0 %v726
    %2912 = vmatprep.subr.mxu0 0.0
    %2913 = vmatpush2.msra.mxu0 0.0
    %2914 = vmatprep.subr.mxu0 0.0
    %2915 = vmatpush2.msra.mxu0 0.0
    %2916 = vmatprep.subr.mxu0 0.0
    %2917 = vmatpush2.msra.mxu0 0.0
    %2918 = vmatprep.subr.mxu0 0.0
    %2919 = vmatpush2.msra.mxu0 0.0
    %2920 = vmatprep.subr.mxu0 0.0
    %2921 = vmatpush2.msra.mxu0 0.0
    %2922 = vmatprep.subr.mxu0 0.0
    %2923 = vmatpush2.msra.mxu0 0.0
    %2924 = vmatprep.subr.mxu0 0.0
    %2925 = vmatpush2.msra.mxu0 0.0
    %2926 = vmatprep.subr.mxu0 0.0
    %2927 = vmatpush2.msra.mxu0 0.0
    %2928 = vmatprep.subr.mxu0 0.0
    %2929 = vmatpush2.msra.mxu0 0.0
    %2930 = vmatprep.subr.mxu0 0.0
    %2931 = vmatpush2.msra.mxu0 0.0
    %2932 = vmatprep.subr.mxu0 0.0
    %2933 = vmatpush2.msra.mxu0 0.0
    %2934 = vmatprep.subr.mxu0 0.0
    %2935 = vmatpush2.msra.mxu0 0.0
    %2936 = vmatprep.subr.mxu0 0.0
    %2937 = vmatpush2.msra.mxu0 0.0
    %2938 = vmatprep.subr.mxu0 0.0
    %2939 = vmatpush2.msra.mxu0 0.0
    %2940 = vmatprep.subr.mxu0 0.0
    %2941 = vmatpush2.msra.mxu0 0.0
    %2942 = vmatprep.subr.mxu0 0.0
    %2943 = vmatpush2.msra.mxu0 0.0
    %2944 = vmatprep.mubr.f32.mxu0 0.0
    %2945 = vmatmul.mubr.f32.gmra.mxu0 %v2277
    %v2946 = vpop.f32.mrf.mxu0
    %v2947 = vadd.f32 %v740, %v2946
    %v2948 = vpop.f32.mrf.mxu0
    %2949 = vdwg.mxu0
    %v2950 = vmul.f32 %v2800, %v2947
    %v2951 = vadd.f32 %v2879, %v2950
    %v2952 = vtanh.pop %v2951
    %v2953 = vsub.f32 1.0, %v2878
    %v2954 = vmul.f32 %v2953, %v2952
    %v2955 = vmul.f32 %v2878, %v2275
    %v2956 = vadd.f32 %v2954, %v2955
    %v2958 = vsel %vm272, %v2956, 0
    %2960 = vmatprep.subr.mxu0 0.0
    %2961 = vmatpush1.msra.mxu0 0.0
    %2962 = vmatprep.subr.mxu0 0.0
    %2963 = vmatpush1.msra.mxu0 0.0
    %2964 = vmatprep.subr.mxu0 0.0
    %2965 = vmatpush1.msra.mxu0 0.0
    %2966 = vmatprep.subr.mxu0 0.0
    %2967 = vmatpush1.msra.mxu0 0.0
    %2968 = vmatprep.subr.mxu0 0.0
    %2969 = vmatpush1.msra.mxu0 0.0
    %2970 = vmatprep.subr.mxu0 0.0
    %2971 = vmatpush1.msra.mxu0 0.0
    %2972 = vmatprep.subr.mxu0 0.0
    %2973 = vmatpush1.msra.mxu0 0.0
    %2974 = vmatprep.subr.mxu0 0.0
    %2975 = vmatpush1.msra.mxu0 0.0
    %2976 = vmatprep.subr.mxu0 0.0
    %2977 = vmatpush1.msra.mxu0 %v826
    %2978 = vmatprep.subr.mxu0 0.0
    %2979 = vmatpush1.msra.mxu0 %v825
    %2980 = vmatprep.subr.mxu0 0.0
    %2981 = vmatpush1.msra.mxu0 %v824
    %2982 = vmatprep.subr.mxu0 0.0
    %2983 = vmatpush1.msra.mxu0 %v823
    %2984 = vmatprep.subr.mxu0 0.0
    %2985 = vmatpush1.msra.mxu0 %v822
    %2986 = vmatprep.subr.mxu0 0.0
    %2987 = vmatpush1.msra.mxu0 %v821
    %2988 = vmatprep.subr.mxu0 0.0
    %2989 = vmatpush1.msra.mxu0 %v820
    %2990 = vmatprep.subr.mxu0 0.0
    %2991 = vmatpush1.msra.mxu0 %v819
    %2992 = vmatprep.subr.mxu0 0.0
    %2993 = vmatpush2.msra.mxu0 0.0
    %2994 = vmatprep.subr.mxu0 0.0
    %2995 = vmatpush2.msra.mxu0 0.0
    %2996 = vmatprep.subr.mxu0 0.0
    %2997 = vmatpush2.msra.mxu0 0.0
    %2998 = vmatprep.subr.mxu0 0.0
    %2999 = vmatpush2.msra.mxu0 0.0
    %3000 = vmatprep.subr.mxu0 0.0
    %3001 = vmatpush2.msra.mxu0 0.0
    %3002 = vmatprep.subr.mxu0 0.0
    %3003 = vmatpush2.msra.mxu0 0.0
    %3004 = vmatprep.subr.mxu0 0.0
    %3005 = vmatpush2.msra.mxu0 0.0
    %3006 = vmatprep.subr.mxu0 0.0
    %3007 = vmatpush2.msra.mxu0 0.0
    %3008 = vmatprep.subr.mxu0 0.0
    %3009 = vmatpush2.msra.mxu0 0.0
    %3010 = vmatprep.subr.mxu0 0.0
    %3011 = vmatpush2.msra.mxu0 0.0
    %3012 = vmatprep.subr.mxu0 0.0
    %3013 = vmatpush2.msra.mxu0 0.0
    %3014 = vmatprep.subr.mxu0 0.0
    %3015 = vmatpush2.msra.mxu0 0.0
    %3016 = vmatprep.subr.mxu0 0.0
    %3017 = vmatpush2.msra.mxu0 0.0
    %3018 = vmatprep.subr.mxu0 0.0
    %3019 = vmatpush2.msra.mxu0 0.0
    %3020 = vmatprep.subr.mxu0 0.0
    %3021 = vmatpush2.msra.mxu0 0.0
    %3022 = vmatprep.subr.mxu0 0.0
    %3023 = vmatpush2.msra.mxu0 0.0
    %3024 = vmatprep.mubr.f32.mxu0 0.0
    %3025 = vmatmul.mubr.f32.gmra.mxu0 %v2958
    %v3026 = vpop.f32.mrf.mxu0
    %v3027 = vadd.f32 %v832, %v3026
    %v3028 = vpop.f32.mrf.mxu0
    %3029 = vdwg.mxu0
    %v3031 = vsel %vm272, %v2722, 0
    %3033 = vmatprep.subr.mxu0 0.0
    %3034 = vmatpush1.msra.mxu0 0.0
    %3035 = vmatprep.subr.mxu0 0.0
    %3036 = vmatpush1.msra.mxu0 0.0
    %3037 = vmatprep.subr.mxu0 0.0
    %3038 = vmatpush1.msra.mxu0 0.0
    %3039 = vmatprep.subr.mxu0 0.0
    %3040 = vmatpush1.msra.mxu0 0.0
    %3041 = vmatprep.subr.mxu0 0.0
    %3042 = vmatpush1.msra.mxu0 0.0
    %3043 = vmatprep.subr.mxu0 0.0
    %3044 = vmatpush1.msra.mxu0 0.0
    %3045 = vmatprep.subr.mxu0 0.0
    %3046 = vmatpush1.msra.mxu0 0.0
    %3047 = vmatprep.subr.mxu0 0.0
    %3048 = vmatpush1.msra.mxu0 0.0
    %3049 = vmatprep.subr.mxu0 0.0
    %3050 = vmatpush1.msra.mxu0 %v914
    %3051 = vmatprep.subr.mxu0 0.0
    %3052 = vmatpush1.msra.mxu0 %v913
    %3053 = vmatprep.subr.mxu0 0.0
    %3054 = vmatpush1.msra.mxu0 %v912
    %3055 = vmatprep.subr.mxu0 0.0
    %3056 = vmatpush1.msra.mxu0 %v911
    %3057 = vmatprep.subr.mxu0 0.0
    %3058 = vmatpush1.msra.mxu0 %v910
    %3059 = vmatprep.subr.mxu0 0.0
    %3060 = vmatpush1.msra.mxu0 %v909
    %3061 = vmatprep.subr.mxu0 0.0
    %3062 = vmatpush1.msra.mxu0 %v908
    %3063 = vmatprep.subr.mxu0 0.0
    %3064 = vmatpush1.msra.mxu0 %v907
    %3065 = vmatprep.subr.mxu0 0.0
    %3066 = vmatpush2.msra.mxu0 0.0
    %3067 = vmatprep.subr.mxu0 0.0
    %3068 = vmatpush2.msra.mxu0 0.0
    %3069 = vmatprep.subr.mxu0 0.0
    %3070 = vmatpush2.msra.mxu0 0.0
    %3071 = vmatprep.subr.mxu0 0.0
    %3072 = vmatpush2.msra.mxu0 0.0
    %3073 = vmatprep.subr.mxu0 0.0
    %3074 = vmatpush2.msra.mxu0 0.0
    %3075 = vmatprep.subr.mxu0 0.0
    %3076 = vmatpush2.msra.mxu0 0.0
    %3077 = vmatprep.subr.mxu0 0.0
    %3078 = vmatpush2.msra.mxu0 0.0
    %3079 = vmatprep.subr.mxu0 0.0
    %3080 = vmatpush2.msra.mxu0 0.0
    %3081 = vmatprep.subr.mxu0 0.0
    %3082 = vmatpush2.msra.mxu0 0.0
    %3083 = vmatprep.subr.mxu0 0.0
    %3084 = vmatpush2.msra.mxu0 0.0
    %3085 = vmatprep.subr.mxu0 0.0
    %3086 = vmatpush2.msra.mxu0 0.0
    %3087 = vmatprep.subr.mxu0 0.0
    %3088 = vmatpush2.msra.mxu0 0.0
    %3089 = vmatprep.subr.mxu0 0.0
    %3090 = vmatpush2.msra.mxu0 0.0
    %3091 = vmatprep.subr.mxu0 0.0
    %3092 = vmatpush2.msra.mxu0 0.0
    %3093 = vmatprep.subr.mxu0 0.0
    %3094 = vmatpush2.msra.mxu0 0.0
    %3095 = vmatprep.subr.mxu0 0.0
    %3096 = vmatpush2.msra.mxu0 0.0
    %3097 = vmatprep.mubr.f32.mxu0 0.0
    %3098 = vmatmul.mubr.f32.gmra.mxu0 %v3031
    %v3099 = vpop.f32.mrf.mxu0
    %v3100 = vadd.f32 %v920, %v3099
    %v3101 = vpop.f32.mrf.mxu0
    %3102 = vdwg.mxu0
    %v3103 = vadd.f32 %v3027, %v3100
    %v3104 = vxor.u32 %v3103, 2147483648
    %v3105 = vmul.f32 %v3104, 1.442695
    %v3106 = vpow.pop %v3105
    %v3107 = vadd.f32 %v3106, 1.0
    %v3108 = vrcp.pop %v3107
    %v3109 = vmul.f32 1.0, %v3108
    %3110 = vmatprep.subr.mxu0 0.0
    %3111 = vmatpush1.msra.mxu0 0.0
    %3112 = vmatprep.subr.mxu0 0.0
    %3113 = vmatpush1.msra.mxu0 0.0
    %3114 = vmatprep.subr.mxu0 0.0
    %3115 = vmatpush1.msra.mxu0 0.0
    %3116 = vmatprep.subr.mxu0 0.0
    %3117 = vmatpush1.msra.mxu0 0.0
    %3118 = vmatprep.subr.mxu0 0.0
    %3119 = vmatpush1.msra.mxu0 0.0
    %3120 = vmatprep.subr.mxu0 0.0
    %3121 = vmatpush1.msra.mxu0 0.0
    %3122 = vmatprep.subr.mxu0 0.0
    %3123 = vmatpush1.msra.mxu0 0.0
    %3124 = vmatprep.subr.mxu0 0.0
    %3125 = vmatpush1.msra.mxu0 0.0
    %3126 = vmatprep.subr.mxu0 0.0
    %3127 = vmatpush1.msra.mxu0 %v1007
    %3128 = vmatprep.subr.mxu0 0.0
    %3129 = vmatpush1.msra.mxu0 %v1006
    %3130 = vmatprep.subr.mxu0 0.0
    %3131 = vmatpush1.msra.mxu0 %v1005
    %3132 = vmatprep.subr.mxu0 0.0
    %3133 = vmatpush1.msra.mxu0 %v1004
    %3134 = vmatprep.subr.mxu0 0.0
    %3135 = vmatpush1.msra.mxu0 %v1003
    %3136 = vmatprep.subr.mxu0 0.0
    %3137 = vmatpush1.msra.mxu0 %v1002
    %3138 = vmatprep.subr.mxu0 0.0
    %3139 = vmatpush1.msra.mxu0 %v1001
    %3140 = vmatprep.subr.mxu0 0.0
    %3141 = vmatpush1.msra.mxu0 %v1000
    %3142 = vmatprep.subr.mxu0 0.0
    %3143 = vmatpush2.msra.mxu0 0.0
    %3144 = vmatprep.subr.mxu0 0.0
    %3145 = vmatpush2.msra.mxu0 0.0
    %3146 = vmatprep.subr.mxu0 0.0
    %3147 = vmatpush2.msra.mxu0 0.0
    %3148 = vmatprep.subr.mxu0 0.0
    %3149 = vmatpush2.msra.mxu0 0.0
    %3150 = vmatprep.subr.mxu0 0.0
    %3151 = vmatpush2.msra.mxu0 0.0
    %3152 = vmatprep.subr.mxu0 0.0
    %3153 = vmatpush2.msra.mxu0 0.0
    %3154 = vmatprep.subr.mxu0 0.0
    %3155 = vmatpush2.msra.mxu0 0.0
    %3156 = vmatprep.subr.mxu0 0.0
    %3157 = vmatpush2.msra.mxu0 0.0
    %3158 = vmatprep.subr.mxu0 0.0
    %3159 = vmatpush2.msra.mxu0 0.0
    %3160 = vmatprep.subr.mxu0 0.0
    %3161 = vmatpush2.msra.mxu0 0.0
    %3162 = vmatprep.subr.mxu0 0.0
    %3163 = vmatpush2.msra.mxu0 0.0
    %3164 = vmatprep.subr.mxu0 0.0
    %3165 = vmatpush2.msra.mxu0 0.0
    %3166 = vmatprep.subr.mxu0 0.0
    %3167 = vmatpush2.msra.mxu0 0.0
    %3168 = vmatprep.subr.mxu0 0.0
    %3169 = vmatpush2.msra.mxu0 0.0
    %3170 = vmatprep.subr.mxu0 0.0
    %3171 = vmatpush2.msra.mxu0 0.0
    %3172 = vmatprep.subr.mxu0 0.0
    %3173 = vmatpush2.msra.mxu0 0.0
    %3174 = vmatprep.mubr.f32.mxu0 0.0
    %3175 = vmatmul.mubr.f32.gmra.mxu0 %v2958
    %v3176 = vpop.f32.mrf.mxu0
    %v3177 = vadd.f32 %v1014, %v3176
    %v3178 = vpop.f32.mrf.mxu0
    %3179 = vdwg.mxu0
    %3180 = vmatprep.subr.mxu0 0.0
    %3181 = vmatpush1.msra.mxu0 0.0
    %3182 = vmatprep.subr.mxu0 0.0
    %3183 = vmatpush1.msra.mxu0 0.0
    %3184 = vmatprep.subr.mxu0 0.0
    %3185 = vmatpush1.msra.mxu0 0.0
    %3186 = vmatprep.subr.mxu0 0.0
    %3187 = vmatpush1.msra.mxu0 0.0
    %3188 = vmatprep.subr.mxu0 0.0
    %3189 = vmatpush1.msra.mxu0 0.0
    %3190 = vmatprep.subr.mxu0 0.0
    %3191 = vmatpush1.msra.mxu0 0.0
    %3192 = vmatprep.subr.mxu0 0.0
    %3193 = vmatpush1.msra.mxu0 0.0
    %3194 = vmatprep.subr.mxu0 0.0
    %3195 = vmatpush1.msra.mxu0 0.0
    %3196 = vmatprep.subr.mxu0 0.0
    %3197 = vmatpush1.msra.mxu0 %v1094
    %3198 = vmatprep.subr.mxu0 0.0
    %3199 = vmatpush1.msra.mxu0 %v1093
    %3200 = vmatprep.subr.mxu0 0.0
    %3201 = vmatpush1.msra.mxu0 %v1092
    %3202 = vmatprep.subr.mxu0 0.0
    %3203 = vmatpush1.msra.mxu0 %v1091
    %3204 = vmatprep.subr.mxu0 0.0
    %3205 = vmatpush1.msra.mxu0 %v1090
    %3206 = vmatprep.subr.mxu0 0.0
    %3207 = vmatpush1.msra.mxu0 %v1089
    %3208 = vmatprep.subr.mxu0 0.0
    %3209 = vmatpush1.msra.mxu0 %v1088
    %3210 = vmatprep.subr.mxu0 0.0
    %3211 = vmatpush1.msra.mxu0 %v1087
    %3212 = vmatprep.subr.mxu0 0.0
    %3213 = vmatpush2.msra.mxu0 0.0
    %3214 = vmatprep.subr.mxu0 0.0
    %3215 = vmatpush2.msra.mxu0 0.0
    %3216 = vmatprep.subr.mxu0 0.0
    %3217 = vmatpush2.msra.mxu0 0.0
    %3218 = vmatprep.subr.mxu0 0.0
    %3219 = vmatpush2.msra.mxu0 0.0
    %3220 = vmatprep.subr.mxu0 0.0
    %3221 = vmatpush2.msra.mxu0 0.0
    %3222 = vmatprep.subr.mxu0 0.0
    %3223 = vmatpush2.msra.mxu0 0.0
    %3224 = vmatprep.subr.mxu0 0.0
    %3225 = vmatpush2.msra.mxu0 0.0
    %3226 = vmatprep.subr.mxu0 0.0
    %3227 = vmatpush2.msra.mxu0 0.0
    %3228 = vmatprep.subr.mxu0 0.0
    %3229 = vmatpush2.msra.mxu0 0.0
    %3230 = vmatprep.subr.mxu0 0.0
    %3231 = vmatpush2.msra.mxu0 0.0
    %3232 = vmatprep.subr.mxu0 0.0
    %3233 = vmatpush2.msra.mxu0 0.0
    %3234 = vmatprep.subr.mxu0 0.0
    %3235 = vmatpush2.msra.mxu0 0.0
    %3236 = vmatprep.subr.mxu0 0.0
    %3237 = vmatpush2.msra.mxu0 0.0
    %3238 = vmatprep.subr.mxu0 0.0
    %3239 = vmatpush2.msra.mxu0 0.0
    %3240 = vmatprep.subr.mxu0 0.0
    %3241 = vmatpush2.msra.mxu0 0.0
    %3242 = vmatprep.subr.mxu0 0.0
    %3243 = vmatpush2.msra.mxu0 0.0
    %3244 = vmatprep.mubr.f32.mxu0 0.0
    %3245 = vmatmul.mubr.f32.gmra.mxu0 %v3031
    %v3246 = vpop.f32.mrf.mxu0
    %v3247 = vadd.f32 %v1101, %v3246
    %v3248 = vpop.f32.mrf.mxu0
    %3249 = vdwg.mxu0
    %v3250 = vadd.f32 %v3177, %v3247
    %v3251 = vxor.u32 %v3250, 2147483648
    %v3252 = vmul.f32 %v3251, 1.442695
    %v3253 = vpow.pop %v3252
    %v3254 = vadd.f32 %v3253, 1.0
    %v3255 = vrcp.pop %v3254
    %v3256 = vmul.f32 1.0, %v3255
    %3257 = vmatprep.subr.mxu0 0.0
    %3258 = vmatpush1.msra.mxu0 0.0
    %3259 = vmatprep.subr.mxu0 0.0
    %3260 = vmatpush1.msra.mxu0 0.0
    %3261 = vmatprep.subr.mxu0 0.0
    %3262 = vmatpush1.msra.mxu0 0.0
    %3263 = vmatprep.subr.mxu0 0.0
    %3264 = vmatpush1.msra.mxu0 0.0
    %3265 = vmatprep.subr.mxu0 0.0
    %3266 = vmatpush1.msra.mxu0 0.0
    %3267 = vmatprep.subr.mxu0 0.0
    %3268 = vmatpush1.msra.mxu0 0.0
    %3269 = vmatprep.subr.mxu0 0.0
    %3270 = vmatpush1.msra.mxu0 0.0
    %3271 = vmatprep.subr.mxu0 0.0
    %3272 = vmatpush1.msra.mxu0 0.0
    %3273 = vmatprep.subr.mxu0 0.0
    %3274 = vmatpush1.msra.mxu0 %v1188
    %3275 = vmatprep.subr.mxu0 0.0
    %3276 = vmatpush1.msra.mxu0 %v1187
    %3277 = vmatprep.subr.mxu0 0.0
    %3278 = vmatpush1.msra.mxu0 %v1186
    %3279 = vmatprep.subr.mxu0 0.0
    %3280 = vmatpush1.msra.mxu0 %v1185
    %3281 = vmatprep.subr.mxu0 0.0
    %3282 = vmatpush1.msra.mxu0 %v1184
    %3283 = vmatprep.subr.mxu0 0.0
    %3284 = vmatpush1.msra.mxu0 %v1183
    %3285 = vmatprep.subr.mxu0 0.0
    %3286 = vmatpush1.msra.mxu0 %v1182
    %3287 = vmatprep.subr.mxu0 0.0
    %3288 = vmatpush1.msra.mxu0 %v1181
    %3289 = vmatprep.subr.mxu0 0.0
    %3290 = vmatpush2.msra.mxu0 0.0
    %3291 = vmatprep.subr.mxu0 0.0
    %3292 = vmatpush2.msra.mxu0 0.0
    %3293 = vmatprep.subr.mxu0 0.0
    %3294 = vmatpush2.msra.mxu0 0.0
    %3295 = vmatprep.subr.mxu0 0.0
    %3296 = vmatpush2.msra.mxu0 0.0
    %3297 = vmatprep.subr.mxu0 0.0
    %3298 = vmatpush2.msra.mxu0 0.0
    %3299 = vmatprep.subr.mxu0 0.0
    %3300 = vmatpush2.msra.mxu0 0.0
    %3301 = vmatprep.subr.mxu0 0.0
    %3302 = vmatpush2.msra.mxu0 0.0
    %3303 = vmatprep.subr.mxu0 0.0
    %3304 = vmatpush2.msra.mxu0 0.0
    %3305 = vmatprep.subr.mxu0 0.0
    %3306 = vmatpush2.msra.mxu0 0.0
    %3307 = vmatprep.subr.mxu0 0.0
    %3308 = vmatpush2.msra.mxu0 0.0
    %3309 = vmatprep.subr.mxu0 0.0
    %3310 = vmatpush2.msra.mxu0 0.0
    %3311 = vmatprep.subr.mxu0 0.0
    %3312 = vmatpush2.msra.mxu0 0.0
    %3313 = vmatprep.subr.mxu0 0.0
    %3314 = vmatpush2.msra.mxu0 0.0
    %3315 = vmatprep.subr.mxu0 0.0
    %3316 = vmatpush2.msra.mxu0 0.0
    %3317 = vmatprep.subr.mxu0 0.0
    %3318 = vmatpush2.msra.mxu0 0.0
    %3319 = vmatprep.subr.mxu0 0.0
    %3320 = vmatpush2.msra.mxu0 0.0
    %3321 = vmatprep.mubr.f32.mxu0 0.0
    %3322 = vmatmul.mubr.f32.gmra.mxu0 %v2958
    %v3323 = vpop.f32.mrf.mxu0
    %v3324 = vadd.f32 %v1195, %v3323
    %v3325 = vpop.f32.mrf.mxu0
    %3326 = vdwg.mxu0
    %3327 = vmatprep.subr.mxu0 0.0
    %3328 = vmatpush1.msra.mxu0 0.0
    %3329 = vmatprep.subr.mxu0 0.0
    %3330 = vmatpush1.msra.mxu0 0.0
    %3331 = vmatprep.subr.mxu0 0.0
    %3332 = vmatpush1.msra.mxu0 0.0
    %3333 = vmatprep.subr.mxu0 0.0
    %3334 = vmatpush1.msra.mxu0 0.0
    %3335 = vmatprep.subr.mxu0 0.0
    %3336 = vmatpush1.msra.mxu0 0.0
    %3337 = vmatprep.subr.mxu0 0.0
    %3338 = vmatpush1.msra.mxu0 0.0
    %3339 = vmatprep.subr.mxu0 0.0
    %3340 = vmatpush1.msra.mxu0 0.0
    %3341 = vmatprep.subr.mxu0 0.0
    %3342 = vmatpush1.msra.mxu0 0.0
    %3343 = vmatprep.subr.mxu0 0.0
    %3344 = vmatpush1.msra.mxu0 %v1275
    %3345 = vmatprep.subr.mxu0 0.0
    %3346 = vmatpush1.msra.mxu0 %v1274
    %3347 = vmatprep.subr.mxu0 0.0
    %3348 = vmatpush1.msra.mxu0 %v1273
    %3349 = vmatprep.subr.mxu0 0.0
    %3350 = vmatpush1.msra.mxu0 %v1272
    %3351 = vmatprep.subr.mxu0 0.0
    %3352 = vmatpush1.msra.mxu0 %v1271
    %3353 = vmatprep.subr.mxu0 0.0
    %3354 = vmatpush1.msra.mxu0 %v1270
    %3355 = vmatprep.subr.mxu0 0.0
    %3356 = vmatpush1.msra.mxu0 %v1269
    %3357 = vmatprep.subr.mxu0 0.0
    %3358 = vmatpush1.msra.mxu0 %v1268
    %3359 = vmatprep.subr.mxu0 0.0
    %3360 = vmatpush2.msra.mxu0 0.0
    %3361 = vmatprep.subr.mxu0 0.0
    %3362 = vmatpush2.msra.mxu0 0.0
    %3363 = vmatprep.subr.mxu0 0.0
    %3364 = vmatpush2.msra.mxu0 0.0
    %3365 = vmatprep.subr.mxu0 0.0
    %3366 = vmatpush2.msra.mxu0 0.0
    %3367 = vmatprep.subr.mxu0 0.0
    %3368 = vmatpush2.msra.mxu0 0.0
    %3369 = vmatprep.subr.mxu0 0.0
    %3370 = vmatpush2.msra.mxu0 0.0
    %3371 = vmatprep.subr.mxu0 0.0
    %3372 = vmatpush2.msra.mxu0 0.0
    %3373 = vmatprep.subr.mxu0 0.0
    %3374 = vmatpush2.msra.mxu0 0.0
    %3375 = vmatprep.subr.mxu0 0.0
    %3376 = vmatpush2.msra.mxu0 0.0
    %3377 = vmatprep.subr.mxu0 0.0
    %3378 = vmatpush2.msra.mxu0 0.0
    %3379 = vmatprep.subr.mxu0 0.0
    %3380 = vmatpush2.msra.mxu0 0.0
    %3381 = vmatprep.subr.mxu0 0.0
    %3382 = vmatpush2.msra.mxu0 0.0
    %3383 = vmatprep.subr.mxu0 0.0
    %3384 = vmatpush2.msra.mxu0 0.0
    %3385 = vmatprep.subr.mxu0 0.0
    %3386 = vmatpush2.msra.mxu0 0.0
    %3387 = vmatprep.subr.mxu0 0.0
    %3388 = vmatpush2.msra.mxu0 0.0
    %3389 = vmatprep.subr.mxu0 0.0
    %3390 = vmatpush2.msra.mxu0 0.0
    %3391 = vmatprep.mubr.f32.mxu0 0.0
    %3392 = vmatmul.mubr.f32.gmra.mxu0 %v3031
    %v3393 = vpop.f32.mrf.mxu0
    %v3394 = vadd.f32 %v1282, %v3393
    %v3395 = vpop.f32.mrf.mxu0
    %3396 = vdwg.mxu0
    %v3397 = vmul.f32 %v3109, %v3394
    %v3398 = vadd.f32 %v3324, %v3397
    %v3399 = vtanh.pop %v3398
    %v3400 = vsub.f32 1.0, %v3256
    %v3401 = vmul.f32 %v3400, %v3399
    %v3402 = vmul.f32 %v3256, %v2722
    %v3403 = vadd.f32 %v3401, %v3402
    %v3404 = vld [vmem:[#allocation2 + $0x20] sm:$0xff]
    %3405 = vmatprep.subr.mxu0 0.0
    %3406 = vmatpush1.msra.mxu0 0.0
    %3407 = vmatprep.subr.mxu0 0.0
    %3408 = vmatpush1.msra.mxu0 0.0
    %3409 = vmatprep.subr.mxu0 0.0
    %3410 = vmatpush1.msra.mxu0 0.0
    %3411 = vmatprep.subr.mxu0 0.0
    %3412 = vmatpush1.msra.mxu0 0.0
    %3413 = vmatprep.subr.mxu0 0.0
    %3414 = vmatpush1.msra.mxu0 0.0
    %3415 = vmatprep.subr.mxu0 0.0
    %3416 = vmatpush1.msra.mxu0 0.0
    %3417 = vmatprep.subr.mxu0 0.0
    %3418 = vmatpush1.msra.mxu0 0.0
    %3419 = vmatprep.subr.mxu0 0.0
    %3420 = vmatpush1.msra.mxu0 0.0
    %3421 = vmatprep.subr.mxu0 0.0
    %3422 = vmatpush1.msra.mxu0 %v541
    %3423 = vmatprep.subr.mxu0 0.0
    %3424 = vmatpush1.msra.mxu0 %v540
    %3425 = vmatprep.subr.mxu0 0.0
    %3426 = vmatpush1.msra.mxu0 %v539
    %3427 = vmatprep.subr.mxu0 0.0
    %3428 = vmatpush1.msra.mxu0 %v538
    %3429 = vmatprep.subr.mxu0 0.0
    %3430 = vmatpush1.msra.mxu0 %v537
    %3431 = vmatprep.subr.mxu0 0.0
    %3432 = vmatpush1.msra.mxu0 %v536
    %3433 = vmatprep.subr.mxu0 0.0
    %3434 = vmatpush1.msra.mxu0 %v535
    %3435 = vmatprep.subr.mxu0 0.0
    %3436 = vmatpush1.msra.mxu0 %v534
    %3437 = vmatprep.subr.mxu0 0.0
    %3438 = vmatpush2.msra.mxu0 0.0
    %3439 = vmatprep.subr.mxu0 0.0
    %3440 = vmatpush2.msra.mxu0 0.0
    %3441 = vmatprep.subr.mxu0 0.0
    %3442 = vmatpush2.msra.mxu0 0.0
    %3443 = vmatprep.subr.mxu0 0.0
    %3444 = vmatpush2.msra.mxu0 0.0
    %3445 = vmatprep.subr.mxu0 0.0
    %3446 = vmatpush2.msra.mxu0 0.0
    %3447 = vmatprep.subr.mxu0 0.0
    %3448 = vmatpush2.msra.mxu0 0.0
    %3449 = vmatprep.subr.mxu0 0.0
    %3450 = vmatpush2.msra.mxu0 0.0
    %3451 = vmatprep.subr.mxu0 0.0
    %3452 = vmatpush2.msra.mxu0 0.0
    %3453 = vmatprep.subr.mxu0 0.0
    %3454 = vmatpush2.msra.mxu0 0.0
    %3455 = vmatprep.subr.mxu0 0.0
    %3456 = vmatpush2.msra.mxu0 0.0
    %3457 = vmatprep.subr.mxu0 0.0
    %3458 = vmatpush2.msra.mxu0 0.0
    %3459 = vmatprep.subr.mxu0 0.0
    %3460 = vmatpush2.msra.mxu0 0.0
    %3461 = vmatprep.subr.mxu0 0.0
    %3462 = vmatpush2.msra.mxu0 0.0
    %3463 = vmatprep.subr.mxu0 0.0
    %3464 = vmatpush2.msra.mxu0 0.0
    %3465 = vmatprep.subr.mxu0 0.0
    %3466 = vmatpush2.msra.mxu0 0.0
    %3467 = vmatprep.subr.mxu0 0.0
    %3468 = vmatpush2.msra.mxu0 0.0
    %3469 = vmatprep.mubr.f32.mxu0 0.0
    %3470 = vmatmul.mubr.f32.gmra.mxu0 %v2958
    %v3471 = vpop.f32.mrf.mxu0
    %v3472 = vadd.f32 %v547, %v3471
    %v3473 = vpop.f32.mrf.mxu0
    %3474 = vdwg.mxu0
    %v3475 = vadd.f32 %v3404, %v3472
    %v3476 = vxor.u32 %v3475, 2147483648
    %v3477 = vmul.f32 %v3476, 1.442695
    %v3478 = vpow.pop %v3477
    %v3479 = vadd.f32 %v3478, 1.0
    %v3480 = vrcp.pop %v3479
    %v3481 = vmul.f32 1.0, %v3480
    %v3482 = vld [vmem:[#allocation3 + $0x20] sm:$0xff]
    %3483 = vmatprep.subr.mxu0 0.0
    %3484 = vmatpush1.msra.mxu0 0.0
    %3485 = vmatprep.subr.mxu0 0.0
    %3486 = vmatpush1.msra.mxu0 0.0
    %3487 = vmatprep.subr.mxu0 0.0
    %3488 = vmatpush1.msra.mxu0 0.0
    %3489 = vmatprep.subr.mxu0 0.0
    %3490 = vmatpush1.msra.mxu0 0.0
    %3491 = vmatprep.subr.mxu0 0.0
    %3492 = vmatpush1.msra.mxu0 0.0
    %3493 = vmatprep.subr.mxu0 0.0
    %3494 = vmatpush1.msra.mxu0 0.0
    %3495 = vmatprep.subr.mxu0 0.0
    %3496 = vmatpush1.msra.mxu0 0.0
    %3497 = vmatprep.subr.mxu0 0.0
    %3498 = vmatpush1.msra.mxu0 0.0
    %3499 = vmatprep.subr.mxu0 0.0
    %3500 = vmatpush1.msra.mxu0 %v638
    %3501 = vmatprep.subr.mxu0 0.0
    %3502 = vmatpush1.msra.mxu0 %v637
    %3503 = vmatprep.subr.mxu0 0.0
    %3504 = vmatpush1.msra.mxu0 %v636
    %3505 = vmatprep.subr.mxu0 0.0
    %3506 = vmatpush1.msra.mxu0 %v635
    %3507 = vmatprep.subr.mxu0 0.0
    %3508 = vmatpush1.msra.mxu0 %v634
    %3509 = vmatprep.subr.mxu0 0.0
    %3510 = vmatpush1.msra.mxu0 %v633
    %3511 = vmatprep.subr.mxu0 0.0
    %3512 = vmatpush1.msra.mxu0 %v632
    %3513 = vmatprep.subr.mxu0 0.0
    %3514 = vmatpush1.msra.mxu0 %v631
    %3515 = vmatprep.subr.mxu0 0.0
    %3516 = vmatpush2.msra.mxu0 0.0
    %3517 = vmatprep.subr.mxu0 0.0
    %3518 = vmatpush2.msra.mxu0 0.0
    %3519 = vmatprep.subr.mxu0 0.0
    %3520 = vmatpush2.msra.mxu0 0.0
    %3521 = vmatprep.subr.mxu0 0.0
    %3522 = vmatpush2.msra.mxu0 0.0
    %3523 = vmatprep.subr.mxu0 0.0
    %3524 = vmatpush2.msra.mxu0 0.0
    %3525 = vmatprep.subr.mxu0 0.0
    %3526 = vmatpush2.msra.mxu0 0.0
    %3527 = vmatprep.subr.mxu0 0.0
    %3528 = vmatpush2.msra.mxu0 0.0
    %3529 = vmatprep.subr.mxu0 0.0
    %3530 = vmatpush2.msra.mxu0 0.0
    %3531 = vmatprep.subr.mxu0 0.0
    %3532 = vmatpush2.msra.mxu0 0.0
    %3533 = vmatprep.subr.mxu0 0.0
    %3534 = vmatpush2.msra.mxu0 0.0
    %3535 = vmatprep.subr.mxu0 0.0
    %3536 = vmatpush2.msra.mxu0 0.0
    %3537 = vmatprep.subr.mxu0 0.0
    %3538 = vmatpush2.msra.mxu0 0.0
    %3539 = vmatprep.subr.mxu0 0.0
    %3540 = vmatpush2.msra.mxu0 0.0
    %3541 = vmatprep.subr.mxu0 0.0
    %3542 = vmatpush2.msra.mxu0 0.0
    %3543 = vmatprep.subr.mxu0 0.0
    %3544 = vmatpush2.msra.mxu0 0.0
    %3545 = vmatprep.subr.mxu0 0.0
    %3546 = vmatpush2.msra.mxu0 0.0
    %3547 = vmatprep.mubr.f32.mxu0 0.0
    %3548 = vmatmul.mubr.f32.gmra.mxu0 %v2958
    %v3549 = vpop.f32.mrf.mxu0
    %v3550 = vadd.f32 %v645, %v3549
    %v3551 = vpop.f32.mrf.mxu0
    %3552 = vdwg.mxu0
    %v3553 = vadd.f32 %v3482, %v3550
    %v3554 = vxor.u32 %v3553, 2147483648
    %v3555 = vmul.f32 %v3554, 1.442695
    %v3556 = vpow.pop %v3555
    %v3557 = vadd.f32 %v3556, 1.0
    %v3558 = vrcp.pop %v3557
    %v3559 = vmul.f32 1.0, %v3558
    %v3560 = vld [vmem:[#allocation4 + $0x20] sm:$0xff]
    %3561 = vmatprep.subr.mxu0 0.0
    %3562 = vmatpush1.msra.mxu0 0.0
    %3563 = vmatprep.subr.mxu0 0.0
    %3564 = vmatpush1.msra.mxu0 0.0
    %3565 = vmatprep.subr.mxu0 0.0
    %3566 = vmatpush1.msra.mxu0 0.0
    %3567 = vmatprep.subr.mxu0 0.0
    %3568 = vmatpush1.msra.mxu0 0.0
    %3569 = vmatprep.subr.mxu0 0.0
    %3570 = vmatpush1.msra.mxu0 0.0
    %3571 = vmatprep.subr.mxu0 0.0
    %3572 = vmatpush1.msra.mxu0 0.0
    %3573 = vmatprep.subr.mxu0 0.0
    %3574 = vmatpush1.msra.mxu0 0.0
    %3575 = vmatprep.subr.mxu0 0.0
    %3576 = vmatpush1.msra.mxu0 0.0
    %3577 = vmatprep.subr.mxu0 0.0
    %3578 = vmatpush1.msra.mxu0 %v733
    %3579 = vmatprep.subr.mxu0 0.0
    %3580 = vmatpush1.msra.mxu0 %v732
    %3581 = vmatprep.subr.mxu0 0.0
    %3582 = vmatpush1.msra.mxu0 %v731
    %3583 = vmatprep.subr.mxu0 0.0
    %3584 = vmatpush1.msra.mxu0 %v730
    %3585 = vmatprep.subr.mxu0 0.0
    %3586 = vmatpush1.msra.mxu0 %v729
    %3587 = vmatprep.subr.mxu0 0.0
    %3588 = vmatpush1.msra.mxu0 %v728
    %3589 = vmatprep.subr.mxu0 0.0
    %3590 = vmatpush1.msra.mxu0 %v727
    %3591 = vmatprep.subr.mxu0 0.0
    %3592 = vmatpush1.msra.mxu0 %v726
    %3593 = vmatprep.subr.mxu0 0.0
    %3594 = vmatpush2.msra.mxu0 0.0
    %3595 = vmatprep.subr.mxu0 0.0
    %3596 = vmatpush2.msra.mxu0 0.0
    %3597 = vmatprep.subr.mxu0 0.0
    %3598 = vmatpush2.msra.mxu0 0.0
    %3599 = vmatprep.subr.mxu0 0.0
    %3600 = vmatpush2.msra.mxu0 0.0
    %3601 = vmatprep.subr.mxu0 0.0
    %3602 = vmatpush2.msra.mxu0 0.0
    %3603 = vmatprep.subr.mxu0 0.0
    %3604 = vmatpush2.msra.mxu0 0.0
    %3605 = vmatprep.subr.mxu0 0.0
    %3606 = vmatpush2.msra.mxu0 0.0
    %3607 = vmatprep.subr.mxu0 0.0
    %3608 = vmatpush2.msra.mxu0 0.0
    %3609 = vmatprep.subr.mxu0 0.0
    %3610 = vmatpush2.msra.mxu0 0.0
    %3611 = vmatprep.subr.mxu0 0.0
    %3612 = vmatpush2.msra.mxu0 0.0
    %3613 = vmatprep.subr.mxu0 0.0
    %3614 = vmatpush2.msra.mxu0 0.0
    %3615 = vmatprep.subr.mxu0 0.0
    %3616 = vmatpush2.msra.mxu0 0.0
    %3617 = vmatprep.subr.mxu0 0.0
    %3618 = vmatpush2.msra.mxu0 0.0
    %3619 = vmatprep.subr.mxu0 0.0
    %3620 = vmatpush2.msra.mxu0 0.0
    %3621 = vmatprep.subr.mxu0 0.0
    %3622 = vmatpush2.msra.mxu0 0.0
    %3623 = vmatprep.subr.mxu0 0.0
    %3624 = vmatpush2.msra.mxu0 0.0
    %3625 = vmatprep.mubr.f32.mxu0 0.0
    %3626 = vmatmul.mubr.f32.gmra.mxu0 %v2958
    %v3627 = vpop.f32.mrf.mxu0
    %v3628 = vadd.f32 %v740, %v3627
    %v3629 = vpop.f32.mrf.mxu0
    %3630 = vdwg.mxu0
    %v3631 = vmul.f32 %v3481, %v3628
    %v3632 = vadd.f32 %v3560, %v3631
    %v3633 = vtanh.pop %v3632
    %v3634 = vsub.f32 1.0, %v3559
    %v3635 = vmul.f32 %v3634, %v3633
    %v3636 = vmul.f32 %v3559, %v2956
    %v3637 = vadd.f32 %v3635, %v3636
    %v3639 = vsel %vm272, %v3637, 0
    %3641 = vmatprep.subr.mxu0 0.0
    %3642 = vmatpush1.msra.mxu0 0.0
    %3643 = vmatprep.subr.mxu0 0.0
    %3644 = vmatpush1.msra.mxu0 0.0
    %3645 = vmatprep.subr.mxu0 0.0
    %3646 = vmatpush1.msra.mxu0 0.0
    %3647 = vmatprep.subr.mxu0 0.0
    %3648 = vmatpush1.msra.mxu0 0.0
    %3649 = vmatprep.subr.mxu0 0.0
    %3650 = vmatpush1.msra.mxu0 0.0
    %3651 = vmatprep.subr.mxu0 0.0
    %3652 = vmatpush1.msra.mxu0 0.0
    %3653 = vmatprep.subr.mxu0 0.0
    %3654 = vmatpush1.msra.mxu0 0.0
    %3655 = vmatprep.subr.mxu0 0.0
    %3656 = vmatpush1.msra.mxu0 0.0
    %3657 = vmatprep.subr.mxu0 0.0
    %3658 = vmatpush1.msra.mxu0 %v826
    %3659 = vmatprep.subr.mxu0 0.0
    %3660 = vmatpush1.msra.mxu0 %v825
    %3661 = vmatprep.subr.mxu0 0.0
    %3662 = vmatpush1.msra.mxu0 %v824
    %3663 = vmatprep.subr.mxu0 0.0
    %3664 = vmatpush1.msra.mxu0 %v823
    %3665 = vmatprep.subr.mxu0 0.0
    %3666 = vmatpush1.msra.mxu0 %v822
    %3667 = vmatprep.subr.mxu0 0.0
    %3668 = vmatpush1.msra.mxu0 %v821
    %3669 = vmatprep.subr.mxu0 0.0
    %3670 = vmatpush1.msra.mxu0 %v820
    %3671 = vmatprep.subr.mxu0 0.0
    %3672 = vmatpush1.msra.mxu0 %v819
    %3673 = vmatprep.subr.mxu0 0.0
    %3674 = vmatpush2.msra.mxu0 0.0
    %3675 = vmatprep.subr.mxu0 0.0
    %3676 = vmatpush2.msra.mxu0 0.0
    %3677 = vmatprep.subr.mxu0 0.0
    %3678 = vmatpush2.msra.mxu0 0.0
    %3679 = vmatprep.subr.mxu0 0.0
    %3680 = vmatpush2.msra.mxu0 0.0
    %3681 = vmatprep.subr.mxu0 0.0
    %3682 = vmatpush2.msra.mxu0 0.0
    %3683 = vmatprep.subr.mxu0 0.0
    %3684 = vmatpush2.msra.mxu0 0.0
    %3685 = vmatprep.subr.mxu0 0.0
    %3686 = vmatpush2.msra.mxu0 0.0
    %3687 = vmatprep.subr.mxu0 0.0
    %3688 = vmatpush2.msra.mxu0 0.0
    %3689 = vmatprep.subr.mxu0 0.0
    %3690 = vmatpush2.msra.mxu0 0.0
    %3691 = vmatprep.subr.mxu0 0.0
    %3692 = vmatpush2.msra.mxu0 0.0
    %3693 = vmatprep.subr.mxu0 0.0
    %3694 = vmatpush2.msra.mxu0 0.0
    %3695 = vmatprep.subr.mxu0 0.0
    %3696 = vmatpush2.msra.mxu0 0.0
    %3697 = vmatprep.subr.mxu0 0.0
    %3698 = vmatpush2.msra.mxu0 0.0
    %3699 = vmatprep.subr.mxu0 0.0
    %3700 = vmatpush2.msra.mxu0 0.0
    %3701 = vmatprep.subr.mxu0 0.0
    %3702 = vmatpush2.msra.mxu0 0.0
    %3703 = vmatprep.subr.mxu0 0.0
    %3704 = vmatpush2.msra.mxu0 0.0
    %3705 = vmatprep.mubr.f32.mxu0 0.0
    %3706 = vmatmul.mubr.f32.gmra.mxu0 %v3639
    %v3707 = vpop.f32.mrf.mxu0
    %v3708 = vadd.f32 %v832, %v3707
    %v3709 = vpop.f32.mrf.mxu0
    %3710 = vdwg.mxu0
    %v3712 = vsel %vm272, %v3403, 0
    %3714 = vmatprep.subr.mxu0 0.0
    %3715 = vmatpush1.msra.mxu0 0.0
    %3716 = vmatprep.subr.mxu0 0.0
    %3717 = vmatpush1.msra.mxu0 0.0
    %3718 = vmatprep.subr.mxu0 0.0
    %3719 = vmatpush1.msra.mxu0 0.0
    %3720 = vmatprep.subr.mxu0 0.0
    %3721 = vmatpush1.msra.mxu0 0.0
    %3722 = vmatprep.subr.mxu0 0.0
    %3723 = vmatpush1.msra.mxu0 0.0
    %3724 = vmatprep.subr.mxu0 0.0
    %3725 = vmatpush1.msra.mxu0 0.0
    %3726 = vmatprep.subr.mxu0 0.0
    %3727 = vmatpush1.msra.mxu0 0.0
    %3728 = vmatprep.subr.mxu0 0.0
    %3729 = vmatpush1.msra.mxu0 0.0
    %3730 = vmatprep.subr.mxu0 0.0
    %3731 = vmatpush1.msra.mxu0 %v914
    %3732 = vmatprep.subr.mxu0 0.0
    %3733 = vmatpush1.msra.mxu0 %v913
    %3734 = vmatprep.subr.mxu0 0.0
    %3735 = vmatpush1.msra.mxu0 %v912
    %3736 = vmatprep.subr.mxu0 0.0
    %3737 = vmatpush1.msra.mxu0 %v911
    %3738 = vmatprep.subr.mxu0 0.0
    %3739 = vmatpush1.msra.mxu0 %v910
    %3740 = vmatprep.subr.mxu0 0.0
    %3741 = vmatpush1.msra.mxu0 %v909
    %3742 = vmatprep.subr.mxu0 0.0
    %3743 = vmatpush1.msra.mxu0 %v908
    %3744 = vmatprep.subr.mxu0 0.0
    %3745 = vmatpush1.msra.mxu0 %v907
    %3746 = vmatprep.subr.mxu0 0.0
    %3747 = vmatpush2.msra.mxu0 0.0
    %3748 = vmatprep.subr.mxu0 0.0
    %3749 = vmatpush2.msra.mxu0 0.0
    %3750 = vmatprep.subr.mxu0 0.0
    %3751 = vmatpush2.msra.mxu0 0.0
    %3752 = vmatprep.subr.mxu0 0.0
    %3753 = vmatpush2.msra.mxu0 0.0
    %3754 = vmatprep.subr.mxu0 0.0
    %3755 = vmatpush2.msra.mxu0 0.0
    %3756 = vmatprep.subr.mxu0 0.0
    %3757 = vmatpush2.msra.mxu0 0.0
    %3758 = vmatprep.subr.mxu0 0.0
    %3759 = vmatpush2.msra.mxu0 0.0
    %3760 = vmatprep.subr.mxu0 0.0
    %3761 = vmatpush2.msra.mxu0 0.0
    %3762 = vmatprep.subr.mxu0 0.0
    %3763 = vmatpush2.msra.mxu0 0.0
    %3764 = vmatprep.subr.mxu0 0.0
    %3765 = vmatpush2.msra.mxu0 0.0
    %3766 = vmatprep.subr.mxu0 0.0
    %3767 = vmatpush2.msra.mxu0 0.0
    %3768 = vmatprep.subr.mxu0 0.0
    %3769 = vmatpush2.msra.mxu0 0.0
    %3770 = vmatprep.subr.mxu0 0.0
    %3771 = vmatpush2.msra.mxu0 0.0
    %3772 = vmatprep.subr.mxu0 0.0
    %3773 = vmatpush2.msra.mxu0 0.0
    %3774 = vmatprep.subr.mxu0 0.0
    %3775 = vmatpush2.msra.mxu0 0.0
    %3776 = vmatprep.subr.mxu0 0.0
    %3777 = vmatpush2.msra.mxu0 0.0
    %3778 = vmatprep.mubr.f32.mxu0 0.0
    %3779 = vmatmul.mubr.f32.gmra.mxu0 %v3712
    %v3780 = vpop.f32.mrf.mxu0
    %v3781 = vadd.f32 %v920, %v3780
    %v3782 = vpop.f32.mrf.mxu0
    %3783 = vdwg.mxu0
    %v3784 = vadd.f32 %v3708, %v3781
    %v3785 = vxor.u32 %v3784, 2147483648
    %v3786 = vmul.f32 %v3785, 1.442695
    %v3787 = vpow.pop %v3786
    %v3788 = vadd.f32 %v3787, 1.0
    %v3789 = vrcp.pop %v3788
    %v3790 = vmul.f32 1.0, %v3789
    %3791 = vmatprep.subr.mxu0 0.0
    %3792 = vmatpush1.msra.mxu0 0.0
    %3793 = vmatprep.subr.mxu0 0.0
    %3794 = vmatpush1.msra.mxu0 0.0
    %3795 = vmatprep.subr.mxu0 0.0
    %3796 = vmatpush1.msra.mxu0 0.0
    %3797 = vmatprep.subr.mxu0 0.0
    %3798 = vmatpush1.msra.mxu0 0.0
    %3799 = vmatprep.subr.mxu0 0.0
    %3800 = vmatpush1.msra.mxu0 0.0
    %3801 = vmatprep.subr.mxu0 0.0
    %3802 = vmatpush1.msra.mxu0 0.0
    %3803 = vmatprep.subr.mxu0 0.0
    %3804 = vmatpush1.msra.mxu0 0.0
    %3805 = vmatprep.subr.mxu0 0.0
    %3806 = vmatpush1.msra.mxu0 0.0
    %3807 = vmatprep.subr.mxu0 0.0
    %3808 = vmatpush1.msra.mxu0 %v1007
    %3809 = vmatprep.subr.mxu0 0.0
    %3810 = vmatpush1.msra.mxu0 %v1006
    %3811 = vmatprep.subr.mxu0 0.0
    %3812 = vmatpush1.msra.mxu0 %v1005
    %3813 = vmatprep.subr.mxu0 0.0
    %3814 = vmatpush1.msra.mxu0 %v1004
    %3815 = vmatprep.subr.mxu0 0.0
    %3816 = vmatpush1.msra.mxu0 %v1003
    %3817 = vmatprep.subr.mxu0 0.0
    %3818 = vmatpush1.msra.mxu0 %v1002
    %3819 = vmatprep.subr.mxu0 0.0
    %3820 = vmatpush1.msra.mxu0 %v1001
    %3821 = vmatprep.subr.mxu0 0.0
    %3822 = vmatpush1.msra.mxu0 %v1000
    %3823 = vmatprep.subr.mxu0 0.0
    %3824 = vmatpush2.msra.mxu0 0.0
    %3825 = vmatprep.subr.mxu0 0.0
    %3826 = vmatpush2.msra.mxu0 0.0
    %3827 = vmatprep.subr.mxu0 0.0
    %3828 = vmatpush2.msra.mxu0 0.0
    %3829 = vmatprep.subr.mxu0 0.0
    %3830 = vmatpush2.msra.mxu0 0.0
    %3831 = vmatprep.subr.mxu0 0.0
    %3832 = vmatpush2.msra.mxu0 0.0
    %3833 = vmatprep.subr.mxu0 0.0
    %3834 = vmatpush2.msra.mxu0 0.0
    %3835 = vmatprep.subr.mxu0 0.0
    %3836 = vmatpush2.msra.mxu0 0.0
    %3837 = vmatprep.subr.mxu0 0.0
    %3838 = vmatpush2.msra.mxu0 0.0
    %3839 = vmatprep.subr.mxu0 0.0
    %3840 = vmatpush2.msra.mxu0 0.0
    %3841 = vmatprep.subr.mxu0 0.0
    %3842 = vmatpush2.msra.mxu0 0.0
    %3843 = vmatprep.subr.mxu0 0.0
    %3844 = vmatpush2.msra.mxu0 0.0
    %3845 = vmatprep.subr.mxu0 0.0
    %3846 = vmatpush2.msra.mxu0 0.0
    %3847 = vmatprep.subr.mxu0 0.0
    %3848 = vmatpush2.msra.mxu0 0.0
    %3849 = vmatprep.subr.mxu0 0.0
    %3850 = vmatpush2.msra.mxu0 0.0
    %3851 = vmatprep.subr.mxu0 0.0
    %3852 = vmatpush2.msra.mxu0 0.0
    %3853 = vmatprep.subr.mxu0 0.0
    %3854 = vmatpush2.msra.mxu0 0.0
    %3855 = vmatprep.mubr.f32.mxu0 0.0
    %3856 = vmatmul.mubr.f32.gmra.mxu0 %v3639
    %v3857 = vpop.f32.mrf.mxu0
    %v3858 = vadd.f32 %v1014, %v3857
    %v3859 = vpop.f32.mrf.mxu0
    %3860 = vdwg.mxu0
    %3861 = vmatprep.subr.mxu0 0.0
    %3862 = vmatpush1.msra.mxu0 0.0
    %3863 = vmatprep.subr.mxu0 0.0
    %3864 = vmatpush1.msra.mxu0 0.0
    %3865 = vmatprep.subr.mxu0 0.0
    %3866 = vmatpush1.msra.mxu0 0.0
    %3867 = vmatprep.subr.mxu0 0.0
    %3868 = vmatpush1.msra.mxu0 0.0
    %3869 = vmatprep.subr.mxu0 0.0
    %3870 = vmatpush1.msra.mxu0 0.0
    %3871 = vmatprep.subr.mxu0 0.0
    %3872 = vmatpush1.msra.mxu0 0.0
    %3873 = vmatprep.subr.mxu0 0.0
    %3874 = vmatpush1.msra.mxu0 0.0
    %3875 = vmatprep.subr.mxu0 0.0
    %3876 = vmatpush1.msra.mxu0 0.0
    %3877 = vmatprep.subr.mxu0 0.0
    %3878 = vmatpush1.msra.mxu0 %v1094
    %3879 = vmatprep.subr.mxu0 0.0
    %3880 = vmatpush1.msra.mxu0 %v1093
    %3881 = vmatprep.subr.mxu0 0.0
    %3882 = vmatpush1.msra.mxu0 %v1092
    %3883 = vmatprep.subr.mxu0 0.0
    %3884 = vmatpush1.msra.mxu0 %v1091
    %3885 = vmatprep.subr.mxu0 0.0
    %3886 = vmatpush1.msra.mxu0 %v1090
    %3887 = vmatprep.subr.mxu0 0.0
    %3888 = vmatpush1.msra.mxu0 %v1089
    %3889 = vmatprep.subr.mxu0 0.0
    %3890 = vmatpush1.msra.mxu0 %v1088
    %3891 = vmatprep.subr.mxu0 0.0
    %3892 = vmatpush1.msra.mxu0 %v1087
    %3893 = vmatprep.subr.mxu0 0.0
    %3894 = vmatpush2.msra.mxu0 0.0
    %3895 = vmatprep.subr.mxu0 0.0
    %3896 = vmatpush2.msra.mxu0 0.0
    %3897 = vmatprep.subr.mxu0 0.0
    %3898 = vmatpush2.msra.mxu0 0.0
    %3899 = vmatprep.subr.mxu0 0.0
    %3900 = vmatpush2.msra.mxu0 0.0
    %3901 = vmatprep.subr.mxu0 0.0
    %3902 = vmatpush2.msra.mxu0 0.0
    %3903 = vmatprep.subr.mxu0 0.0
    %3904 = vmatpush2.msra.mxu0 0.0
    %3905 = vmatprep.subr.mxu0 0.0
    %3906 = vmatpush2.msra.mxu0 0.0
    %3907 = vmatprep.subr.mxu0 0.0
    %3908 = vmatpush2.msra.mxu0 0.0
    %3909 = vmatprep.subr.mxu0 0.0
    %3910 = vmatpush2.msra.mxu0 0.0
    %3911 = vmatprep.subr.mxu0 0.0
    %3912 = vmatpush2.msra.mxu0 0.0
    %3913 = vmatprep.subr.mxu0 0.0
    %3914 = vmatpush2.msra.mxu0 0.0
    %3915 = vmatprep.subr.mxu0 0.0
    %3916 = vmatpush2.msra.mxu0 0.0
    %3917 = vmatprep.subr.mxu0 0.0
    %3918 = vmatpush2.msra.mxu0 0.0
    %3919 = vmatprep.subr.mxu0 0.0
    %3920 = vmatpush2.msra.mxu0 0.0
    %3921 = vmatprep.subr.mxu0 0.0
    %3922 = vmatpush2.msra.mxu0 0.0
    %3923 = vmatprep.subr.mxu0 0.0
    %3924 = vmatpush2.msra.mxu0 0.0
    %3925 = vmatprep.mubr.f32.mxu0 0.0
    %3926 = vmatmul.mubr.f32.gmra.mxu0 %v3712
    %v3927 = vpop.f32.mrf.mxu0
    %v3928 = vadd.f32 %v1101, %v3927
    %v3929 = vpop.f32.mrf.mxu0
    %3930 = vdwg.mxu0
    %v3931 = vadd.f32 %v3858, %v3928
    %v3932 = vxor.u32 %v3931, 2147483648
    %v3933 = vmul.f32 %v3932, 1.442695
    %v3934 = vpow.pop %v3933
    %v3935 = vadd.f32 %v3934, 1.0
    %v3936 = vrcp.pop %v3935
    %v3937 = vmul.f32 1.0, %v3936
    %3938 = vmatprep.subr.mxu0 0.0
    %3939 = vmatpush1.msra.mxu0 0.0
    %3940 = vmatprep.subr.mxu0 0.0
    %3941 = vmatpush1.msra.mxu0 0.0
    %3942 = vmatprep.subr.mxu0 0.0
    %3943 = vmatpush1.msra.mxu0 0.0
    %3944 = vmatprep.subr.mxu0 0.0
    %3945 = vmatpush1.msra.mxu0 0.0
    %3946 = vmatprep.subr.mxu0 0.0
    %3947 = vmatpush1.msra.mxu0 0.0
    %3948 = vmatprep.subr.mxu0 0.0
    %3949 = vmatpush1.msra.mxu0 0.0
    %3950 = vmatprep.subr.mxu0 0.0
    %3951 = vmatpush1.msra.mxu0 0.0
    %3952 = vmatprep.subr.mxu0 0.0
    %3953 = vmatpush1.msra.mxu0 0.0
    %3954 = vmatprep.subr.mxu0 0.0
    %3955 = vmatpush1.msra.mxu0 %v1188
    %3956 = vmatprep.subr.mxu0 0.0
    %3957 = vmatpush1.msra.mxu0 %v1187
    %3958 = vmatprep.subr.mxu0 0.0
    %3959 = vmatpush1.msra.mxu0 %v1186
    %3960 = vmatprep.subr.mxu0 0.0
    %3961 = vmatpush1.msra.mxu0 %v1185
    %3962 = vmatprep.subr.mxu0 0.0
    %3963 = vmatpush1.msra.mxu0 %v1184
    %3964 = vmatprep.subr.mxu0 0.0
    %3965 = vmatpush1.msra.mxu0 %v1183
    %3966 = vmatprep.subr.mxu0 0.0
    %3967 = vmatpush1.msra.mxu0 %v1182
    %3968 = vmatprep.subr.mxu0 0.0
    %3969 = vmatpush1.msra.mxu0 %v1181
    %3970 = vmatprep.subr.mxu0 0.0
    %3971 = vmatpush2.msra.mxu0 0.0
    %3972 = vmatprep.subr.mxu0 0.0
    %3973 = vmatpush2.msra.mxu0 0.0
    %3974 = vmatprep.subr.mxu0 0.0
    %3975 = vmatpush2.msra.mxu0 0.0
    %3976 = vmatprep.subr.mxu0 0.0
    %3977 = vmatpush2.msra.mxu0 0.0
    %3978 = vmatprep.subr.mxu0 0.0
    %3979 = vmatpush2.msra.mxu0 0.0
    %3980 = vmatprep.subr.mxu0 0.0
    %3981 = vmatpush2.msra.mxu0 0.0
    %3982 = vmatprep.subr.mxu0 0.0
    %3983 = vmatpush2.msra.mxu0 0.0
    %3984 = vmatprep.subr.mxu0 0.0
    %3985 = vmatpush2.msra.mxu0 0.0
    %3986 = vmatprep.subr.mxu0 0.0
    %3987 = vmatpush2.msra.mxu0 0.0
    %3988 = vmatprep.subr.mxu0 0.0
    %3989 = vmatpush2.msra.mxu0 0.0
    %3990 = vmatprep.subr.mxu0 0.0
    %3991 = vmatpush2.msra.mxu0 0.0
    %3992 = vmatprep.subr.mxu0 0.0
    %3993 = vmatpush2.msra.mxu0 0.0
    %3994 = vmatprep.subr.mxu0 0.0
    %3995 = vmatpush2.msra.mxu0 0.0
    %3996 = vmatprep.subr.mxu0 0.0
    %3997 = vmatpush2.msra.mxu0 0.0
    %3998 = vmatprep.subr.mxu0 0.0
    %3999 = vmatpush2.msra.mxu0 0.0
    %4000 = vmatprep.subr.mxu0 0.0
    %4001 = vmatpush2.msra.mxu0 0.0
    %4002 = vmatprep.mubr.f32.mxu0 0.0
    %4003 = vmatmul.mubr.f32.gmra.mxu0 %v3639
    %v4004 = vpop.f32.mrf.mxu0
    %v4005 = vadd.f32 %v1195, %v4004
    %v4006 = vpop.f32.mrf.mxu0
    %4007 = vdwg.mxu0
    %4008 = vmatprep.subr.mxu0 0.0
    %4009 = vmatpush1.msra.mxu0 0.0
    %4010 = vmatprep.subr.mxu0 0.0
    %4011 = vmatpush1.msra.mxu0 0.0
    %4012 = vmatprep.subr.mxu0 0.0
    %4013 = vmatpush1.msra.mxu0 0.0
    %4014 = vmatprep.subr.mxu0 0.0
    %4015 = vmatpush1.msra.mxu0 0.0
    %4016 = vmatprep.subr.mxu0 0.0
    %4017 = vmatpush1.msra.mxu0 0.0
    %4018 = vmatprep.subr.mxu0 0.0
    %4019 = vmatpush1.msra.mxu0 0.0
    %4020 = vmatprep.subr.mxu0 0.0
    %4021 = vmatpush1.msra.mxu0 0.0
    %4022 = vmatprep.subr.mxu0 0.0
    %4023 = vmatpush1.msra.mxu0 0.0
    %4024 = vmatprep.subr.mxu0 0.0
    %4025 = vmatpush1.msra.mxu0 %v1275
    %4026 = vmatprep.subr.mxu0 0.0
    %4027 = vmatpush1.msra.mxu0 %v1274
    %4028 = vmatprep.subr.mxu0 0.0
    %4029 = vmatpush1.msra.mxu0 %v1273
    %4030 = vmatprep.subr.mxu0 0.0
    %4031 = vmatpush1.msra.mxu0 %v1272
    %4032 = vmatprep.subr.mxu0 0.0
    %4033 = vmatpush1.msra.mxu0 %v1271
    %4034 = vmatprep.subr.mxu0 0.0
    %4035 = vmatpush1.msra.mxu0 %v1270
    %4036 = vmatprep.subr.mxu0 0.0
    %4037 = vmatpush1.msra.mxu0 %v1269
    %4038 = vmatprep.subr.mxu0 0.0
    %4039 = vmatpush1.msra.mxu0 %v1268
    %4040 = vmatprep.subr.mxu0 0.0
    %4041 = vmatpush2.msra.mxu0 0.0
    %4042 = vmatprep.subr.mxu0 0.0
    %4043 = vmatpush2.msra.mxu0 0.0
    %4044 = vmatprep.subr.mxu0 0.0
    %4045 = vmatpush2.msra.mxu0 0.0
    %4046 = vmatprep.subr.mxu0 0.0
    %4047 = vmatpush2.msra.mxu0 0.0
    %4048 = vmatprep.subr.mxu0 0.0
    %4049 = vmatpush2.msra.mxu0 0.0
    %4050 = vmatprep.subr.mxu0 0.0
    %4051 = vmatpush2.msra.mxu0 0.0
    %4052 = vmatprep.subr.mxu0 0.0
    %4053 = vmatpush2.msra.mxu0 0.0
    %4054 = vmatprep.subr.mxu0 0.0
    %4055 = vmatpush2.msra.mxu0 0.0
    %4056 = vmatprep.subr.mxu0 0.0
    %4057 = vmatpush2.msra.mxu0 0.0
    %4058 = vmatprep.subr.mxu0 0.0
    %4059 = vmatpush2.msra.mxu0 0.0
    %4060 = vmatprep.subr.mxu0 0.0
    %4061 = vmatpush2.msra.mxu0 0.0
    %4062 = vmatprep.subr.mxu0 0.0
    %4063 = vmatpush2.msra.mxu0 0.0
    %4064 = vmatprep.subr.mxu0 0.0
    %4065 = vmatpush2.msra.mxu0 0.0
    %4066 = vmatprep.subr.mxu0 0.0
    %4067 = vmatpush2.msra.mxu0 0.0
    %4068 = vmatprep.subr.mxu0 0.0
    %4069 = vmatpush2.msra.mxu0 0.0
    %4070 = vmatprep.subr.mxu0 0.0
    %4071 = vmatpush2.msra.mxu0 0.0
    %4072 = vmatprep.mubr.f32.mxu0 0.0
    %4073 = vmatmul.mubr.f32.gmra.mxu0 %v3712
    %v4074 = vpop.f32.mrf.mxu0
    %v4075 = vadd.f32 %v1282, %v4074
    %v4076 = vpop.f32.mrf.mxu0
    %4077 = vdwg.mxu0
    %v4078 = vmul.f32 %v3790, %v4075
    %v4079 = vadd.f32 %v4005, %v4078
    %v4080 = vtanh.pop %v4079
    %v4081 = vsub.f32 1.0, %v3937
    %v4082 = vmul.f32 %v4081, %v4080
    %v4083 = vmul.f32 %v3937, %v3403
    %v4084 = vadd.f32 %v4082, %v4083
    %v4085 = vld [vmem:[#allocation2 + $0x28] sm:$0xff]
    %4086 = vmatprep.subr.mxu0 0.0
    %4087 = vmatpush1.msra.mxu0 0.0
    %4088 = vmatprep.subr.mxu0 0.0
    %4089 = vmatpush1.msra.mxu0 0.0
    %4090 = vmatprep.subr.mxu0 0.0
    %4091 = vmatpush1.msra.mxu0 0.0
    %4092 = vmatprep.subr.mxu0 0.0
    %4093 = vmatpush1.msra.mxu0 0.0
    %4094 = vmatprep.subr.mxu0 0.0
    %4095 = vmatpush1.msra.mxu0 0.0
    %4096 = vmatprep.subr.mxu0 0.0
    %4097 = vmatpush1.msra.mxu0 0.0
    %4098 = vmatprep.subr.mxu0 0.0
    %4099 = vmatpush1.msra.mxu0 0.0
    %4100 = vmatprep.subr.mxu0 0.0
    %4101 = vmatpush1.msra.mxu0 0.0
    %4102 = vmatprep.subr.mxu0 0.0
    %4103 = vmatpush1.msra.mxu0 %v541
    %4104 = vmatprep.subr.mxu0 0.0
    %4105 = vmatpush1.msra.mxu0 %v540
    %4106 = vmatprep.subr.mxu0 0.0
    %4107 = vmatpush1.msra.mxu0 %v539
    %4108 = vmatprep.subr.mxu0 0.0
    %4109 = vmatpush1.msra.mxu0 %v538
    %4110 = vmatprep.subr.mxu0 0.0
    %4111 = vmatpush1.msra.mxu0 %v537
    %4112 = vmatprep.subr.mxu0 0.0
    %4113 = vmatpush1.msra.mxu0 %v536
    %4114 = vmatprep.subr.mxu0 0.0
    %4115 = vmatpush1.msra.mxu0 %v535
    %4116 = vmatprep.subr.mxu0 0.0
    %4117 = vmatpush1.msra.mxu0 %v534
    %4118 = vmatprep.subr.mxu0 0.0
    %4119 = vmatpush2.msra.mxu0 0.0
    %4120 = vmatprep.subr.mxu0 0.0
    %4121 = vmatpush2.msra.mxu0 0.0
    %4122 = vmatprep.subr.mxu0 0.0
    %4123 = vmatpush2.msra.mxu0 0.0
    %4124 = vmatprep.subr.mxu0 0.0
    %4125 = vmatpush2.msra.mxu0 0.0
    %4126 = vmatprep.subr.mxu0 0.0
    %4127 = vmatpush2.msra.mxu0 0.0
    %4128 = vmatprep.subr.mxu0 0.0
    %4129 = vmatpush2.msra.mxu0 0.0
    %4130 = vmatprep.subr.mxu0 0.0
    %4131 = vmatpush2.msra.mxu0 0.0
    %4132 = vmatprep.subr.mxu0 0.0
    %4133 = vmatpush2.msra.mxu0 0.0
    %4134 = vmatprep.subr.mxu0 0.0
    %4135 = vmatpush2.msra.mxu0 0.0
    %4136 = vmatprep.subr.mxu0 0.0
    %4137 = vmatpush2.msra.mxu0 0.0
    %4138 = vmatprep.subr.mxu0 0.0
    %4139 = vmatpush2.msra.mxu0 0.0
    %4140 = vmatprep.subr.mxu0 0.0
    %4141 = vmatpush2.msra.mxu0 0.0
    %4142 = vmatprep.subr.mxu0 0.0
    %4143 = vmatpush2.msra.mxu0 0.0
    %4144 = vmatprep.subr.mxu0 0.0
    %4145 = vmatpush2.msra.mxu0 0.0
    %4146 = vmatprep.subr.mxu0 0.0
    %4147 = vmatpush2.msra.mxu0 0.0
    %4148 = vmatprep.subr.mxu0 0.0
    %4149 = vmatpush2.msra.mxu0 0.0
    %4150 = vmatprep.mubr.f32.mxu0 0.0
    %4151 = vmatmul.mubr.f32.gmra.mxu0 %v3639
    %v4152 = vpop.f32.mrf.mxu0
    %v4153 = vadd.f32 %v547, %v4152
    %v4154 = vpop.f32.mrf.mxu0
    %4155 = vdwg.mxu0
    %v4156 = vadd.f32 %v4085, %v4153
    %v4157 = vxor.u32 %v4156, 2147483648
    %v4158 = vmul.f32 %v4157, 1.442695
    %v4159 = vpow.pop %v4158
    %v4160 = vadd.f32 %v4159, 1.0
    %v4161 = vrcp.pop %v4160
    %v4162 = vmul.f32 1.0, %v4161
    %v4163 = vld [vmem:[#allocation3 + $0x28] sm:$0xff]
    %4164 = vmatprep.subr.mxu0 0.0
    %4165 = vmatpush1.msra.mxu0 0.0
    %4166 = vmatprep.subr.mxu0 0.0
    %4167 = vmatpush1.msra.mxu0 0.0
    %4168 = vmatprep.subr.mxu0 0.0
    %4169 = vmatpush1.msra.mxu0 0.0
    %4170 = vmatprep.subr.mxu0 0.0
    %4171 = vmatpush1.msra.mxu0 0.0
    %4172 = vmatprep.subr.mxu0 0.0
    %4173 = vmatpush1.msra.mxu0 0.0
    %4174 = vmatprep.subr.mxu0 0.0
    %4175 = vmatpush1.msra.mxu0 0.0
    %4176 = vmatprep.subr.mxu0 0.0
    %4177 = vmatpush1.msra.mxu0 0.0
    %4178 = vmatprep.subr.mxu0 0.0
    %4179 = vmatpush1.msra.mxu0 0.0
    %4180 = vmatprep.subr.mxu0 0.0
    %4181 = vmatpush1.msra.mxu0 %v638
    %4182 = vmatprep.subr.mxu0 0.0
    %4183 = vmatpush1.msra.mxu0 %v637
    %4184 = vmatprep.subr.mxu0 0.0
    %4185 = vmatpush1.msra.mxu0 %v636
    %4186 = vmatprep.subr.mxu0 0.0
    %4187 = vmatpush1.msra.mxu0 %v635
    %4188 = vmatprep.subr.mxu0 0.0
    %4189 = vmatpush1.msra.mxu0 %v634
    %4190 = vmatprep.subr.mxu0 0.0
    %4191 = vmatpush1.msra.mxu0 %v633
    %4192 = vmatprep.subr.mxu0 0.0
    %4193 = vmatpush1.msra.mxu0 %v632
    %4194 = vmatprep.subr.mxu0 0.0
    %4195 = vmatpush1.msra.mxu0 %v631
    %4196 = vmatprep.subr.mxu0 0.0
    %4197 = vmatpush2.msra.mxu0 0.0
    %4198 = vmatprep.subr.mxu0 0.0
    %4199 = vmatpush2.msra.mxu0 0.0
    %4200 = vmatprep.subr.mxu0 0.0
    %4201 = vmatpush2.msra.mxu0 0.0
    %4202 = vmatprep.subr.mxu0 0.0
    %4203 = vmatpush2.msra.mxu0 0.0
    %4204 = vmatprep.subr.mxu0 0.0
    %4205 = vmatpush2.msra.mxu0 0.0
    %4206 = vmatprep.subr.mxu0 0.0
    %4207 = vmatpush2.msra.mxu0 0.0
    %4208 = vmatprep.subr.mxu0 0.0
    %4209 = vmatpush2.msra.mxu0 0.0
    %4210 = vmatprep.subr.mxu0 0.0
    %4211 = vmatpush2.msra.mxu0 0.0
    %4212 = vmatprep.subr.mxu0 0.0
    %4213 = vmatpush2.msra.mxu0 0.0
    %4214 = vmatprep.subr.mxu0 0.0
    %4215 = vmatpush2.msra.mxu0 0.0
    %4216 = vmatprep.subr.mxu0 0.0
    %4217 = vmatpush2.msra.mxu0 0.0
    %4218 = vmatprep.subr.mxu0 0.0
    %4219 = vmatpush2.msra.mxu0 0.0
    %4220 = vmatprep.subr.mxu0 0.0
    %4221 = vmatpush2.msra.mxu0 0.0
    %4222 = vmatprep.subr.mxu0 0.0
    %4223 = vmatpush2.msra.mxu0 0.0
    %4224 = vmatprep.subr.mxu0 0.0
    %4225 = vmatpush2.msra.mxu0 0.0
    %4226 = vmatprep.subr.mxu0 0.0
    %4227 = vmatpush2.msra.mxu0 0.0
    %4228 = vmatprep.mubr.f32.mxu0 0.0
    %4229 = vmatmul.mubr.f32.gmra.mxu0 %v3639
    %v4230 = vpop.f32.mrf.mxu0
    %v4231 = vadd.f32 %v645, %v4230
    %v4232 = vpop.f32.mrf.mxu0
    %4233 = vdwg.mxu0
    %v4234 = vadd.f32 %v4163, %v4231
    %v4235 = vxor.u32 %v4234, 2147483648
    %v4236 = vmul.f32 %v4235, 1.442695
    %v4237 = vpow.pop %v4236
    %v4238 = vadd.f32 %v4237, 1.0
    %v4239 = vrcp.pop %v4238
    %v4240 = vmul.f32 1.0, %v4239
    %v4241 = vld [vmem:[#allocation4 + $0x28] sm:$0xff]
    %4242 = vmatprep.subr.mxu0 0.0
    %4243 = vmatpush1.msra.mxu0 0.0
    %4244 = vmatprep.subr.mxu0 0.0
    %4245 = vmatpush1.msra.mxu0 0.0
    %4246 = vmatprep.subr.mxu0 0.0
    %4247 = vmatpush1.msra.mxu0 0.0
    %4248 = vmatprep.subr.mxu0 0.0
    %4249 = vmatpush1.msra.mxu0 0.0
    %4250 = vmatprep.subr.mxu0 0.0
    %4251 = vmatpush1.msra.mxu0 0.0
    %4252 = vmatprep.subr.mxu0 0.0
    %4253 = vmatpush1.msra.mxu0 0.0
    %4254 = vmatprep.subr.mxu0 0.0
    %4255 = vmatpush1.msra.mxu0 0.0
    %4256 = vmatprep.subr.mxu0 0.0
    %4257 = vmatpush1.msra.mxu0 0.0
    %4258 = vmatprep.subr.mxu0 0.0
    %4259 = vmatpush1.msra.mxu0 %v733
    %4260 = vmatprep.subr.mxu0 0.0
    %4261 = vmatpush1.msra.mxu0 %v732
    %4262 = vmatprep.subr.mxu0 0.0
    %4263 = vmatpush1.msra.mxu0 %v731
    %4264 = vmatprep.subr.mxu0 0.0
    %4265 = vmatpush1.msra.mxu0 %v730
    %4266 = vmatprep.subr.mxu0 0.0
    %4267 = vmatpush1.msra.mxu0 %v729
    %4268 = vmatprep.subr.mxu0 0.0
    %4269 = vmatpush1.msra.mxu0 %v728
    %4270 = vmatprep.subr.mxu0 0.0
    %4271 = vmatpush1.msra.mxu0 %v727
    %4272 = vmatprep.subr.mxu0 0.0
    %4273 = vmatpush1.msra.mxu0 %v726
    %4274 = vmatprep.subr.mxu0 0.0
    %4275 = vmatpush2.msra.mxu0 0.0
    %4276 = vmatprep.subr.mxu0 0.0
    %4277 = vmatpush2.msra.mxu0 0.0
    %4278 = vmatprep.subr.mxu0 0.0
    %4279 = vmatpush2.msra.mxu0 0.0
    %4280 = vmatprep.subr.mxu0 0.0
    %4281 = vmatpush2.msra.mxu0 0.0
    %4282 = vmatprep.subr.mxu0 0.0
    %4283 = vmatpush2.msra.mxu0 0.0
    %4284 = vmatprep.subr.mxu0 0.0
    %4285 = vmatpush2.msra.mxu0 0.0
    %4286 = vmatprep.subr.mxu0 0.0
    %4287 = vmatpush2.msra.mxu0 0.0
    %4288 = vmatprep.subr.mxu0 0.0
    %4289 = vmatpush2.msra.mxu0 0.0
    %4290 = vmatprep.subr.mxu0 0.0
    %4291 = vmatpush2.msra.mxu0 0.0
    %4292 = vmatprep.subr.mxu0 0.0
    %4293 = vmatpush2.msra.mxu0 0.0
    %4294 = vmatprep.subr.mxu0 0.0
    %4295 = vmatpush2.msra.mxu0 0.0
    %4296 = vmatprep.subr.mxu0 0.0
    %4297 = vmatpush2.msra.mxu0 0.0
    %4298 = vmatprep.subr.mxu0 0.0
    %4299 = vmatpush2.msra.mxu0 0.0
    %4300 = vmatprep.subr.mxu0 0.0
    %4301 = vmatpush2.msra.mxu0 0.0
    %4302 = vmatprep.subr.mxu0 0.0
    %4303 = vmatpush2.msra.mxu0 0.0
    %4304 = vmatprep.subr.mxu0 0.0
    %4305 = vmatpush2.msra.mxu0 0.0
    %4306 = vmatprep.mubr.f32.mxu0 0.0
    %4307 = vmatmul.mubr.f32.gmra.mxu0 %v3639
    %v4308 = vpop.f32.mrf.mxu0
    %v4309 = vadd.f32 %v740, %v4308
    %v4310 = vpop.f32.mrf.mxu0
    %4311 = vdwg.mxu0
    %v4312 = vmul.f32 %v4162, %v4309
    %v4313 = vadd.f32 %v4241, %v4312
    %v4314 = vtanh.pop %v4313
    %v4315 = vsub.f32 1.0, %v4240
    %v4316 = vmul.f32 %v4315, %v4314
    %v4317 = vmul.f32 %v4240, %v3637
    %v4318 = vadd.f32 %v4316, %v4317
    %v4320 = vsel %vm272, %v4318, 0
    %4322 = vmatprep.subr.mxu0 0.0
    %4323 = vmatpush1.msra.mxu0 0.0
    %4324 = vmatprep.subr.mxu0 0.0
    %4325 = vmatpush1.msra.mxu0 0.0
    %4326 = vmatprep.subr.mxu0 0.0
    %4327 = vmatpush1.msra.mxu0 0.0
    %4328 = vmatprep.subr.mxu0 0.0
    %4329 = vmatpush1.msra.mxu0 0.0
    %4330 = vmatprep.subr.mxu0 0.0
    %4331 = vmatpush1.msra.mxu0 0.0
    %4332 = vmatprep.subr.mxu0 0.0
    %4333 = vmatpush1.msra.mxu0 0.0
    %4334 = vmatprep.subr.mxu0 0.0
    %4335 = vmatpush1.msra.mxu0 0.0
    %4336 = vmatprep.subr.mxu0 0.0
    %4337 = vmatpush1.msra.mxu0 0.0
    %4338 = vmatprep.subr.mxu0 0.0
    %4339 = vmatpush1.msra.mxu0 %v826
    %4340 = vmatprep.subr.mxu0 0.0
    %4341 = vmatpush1.msra.mxu0 %v825
    %4342 = vmatprep.subr.mxu0 0.0
    %4343 = vmatpush1.msra.mxu0 %v824
    %4344 = vmatprep.subr.mxu0 0.0
    %4345 = vmatpush1.msra.mxu0 %v823
    %4346 = vmatprep.subr.mxu0 0.0
    %4347 = vmatpush1.msra.mxu0 %v822
    %4348 = vmatprep.subr.mxu0 0.0
    %4349 = vmatpush1.msra.mxu0 %v821
    %4350 = vmatprep.subr.mxu0 0.0
    %4351 = vmatpush1.msra.mxu0 %v820
    %4352 = vmatprep.subr.mxu0 0.0
    %4353 = vmatpush1.msra.mxu0 %v819
    %4354 = vmatprep.subr.mxu0 0.0
    %4355 = vmatpush2.msra.mxu0 0.0
    %4356 = vmatprep.subr.mxu0 0.0
    %4357 = vmatpush2.msra.mxu0 0.0
    %4358 = vmatprep.subr.mxu0 0.0
    %4359 = vmatpush2.msra.mxu0 0.0
    %4360 = vmatprep.subr.mxu0 0.0
    %4361 = vmatpush2.msra.mxu0 0.0
    %4362 = vmatprep.subr.mxu0 0.0
    %4363 = vmatpush2.msra.mxu0 0.0
    %4364 = vmatprep.subr.mxu0 0.0
    %4365 = vmatpush2.msra.mxu0 0.0
    %4366 = vmatprep.subr.mxu0 0.0
    %4367 = vmatpush2.msra.mxu0 0.0
    %4368 = vmatprep.subr.mxu0 0.0
    %4369 = vmatpush2.msra.mxu0 0.0
    %4370 = vmatprep.subr.mxu0 0.0
    %4371 = vmatpush2.msra.mxu0 0.0
    %4372 = vmatprep.subr.mxu0 0.0
    %4373 = vmatpush2.msra.mxu0 0.0
    %4374 = vmatprep.subr.mxu0 0.0
    %4375 = vmatpush2.msra.mxu0 0.0
    %4376 = vmatprep.subr.mxu0 0.0
    %4377 = vmatpush2.msra.mxu0 0.0
    %4378 = vmatprep.subr.mxu0 0.0
    %4379 = vmatpush2.msra.mxu0 0.0
    %4380 = vmatprep.subr.mxu0 0.0
    %4381 = vmatpush2.msra.mxu0 0.0
    %4382 = vmatprep.subr.mxu0 0.0
    %4383 = vmatpush2.msra.mxu0 0.0
    %4384 = vmatprep.subr.mxu0 0.0
    %4385 = vmatpush2.msra.mxu0 0.0
    %4386 = vmatprep.mubr.f32.mxu0 0.0
    %4387 = vmatmul.mubr.f32.gmra.mxu0 %v4320
    %v4388 = vpop.f32.mrf.mxu0
    %v4389 = vadd.f32 %v832, %v4388
    %v4390 = vpop.f32.mrf.mxu0
    %4391 = vdwg.mxu0
    %v4393 = vsel %vm272, %v4084, 0
    %4395 = vmatprep.subr.mxu0 0.0
    %4396 = vmatpush1.msra.mxu0 0.0
    %4397 = vmatprep.subr.mxu0 0.0
    %4398 = vmatpush1.msra.mxu0 0.0
    %4399 = vmatprep.subr.mxu0 0.0
    %4400 = vmatpush1.msra.mxu0 0.0
    %4401 = vmatprep.subr.mxu0 0.0
    %4402 = vmatpush1.msra.mxu0 0.0
    %4403 = vmatprep.subr.mxu0 0.0
    %4404 = vmatpush1.msra.mxu0 0.0
    %4405 = vmatprep.subr.mxu0 0.0
    %4406 = vmatpush1.msra.mxu0 0.0
    %4407 = vmatprep.subr.mxu0 0.0
    %4408 = vmatpush1.msra.mxu0 0.0
    %4409 = vmatprep.subr.mxu0 0.0
    %4410 = vmatpush1.msra.mxu0 0.0
    %4411 = vmatprep.subr.mxu0 0.0
    %4412 = vmatpush1.msra.mxu0 %v914
    %4413 = vmatprep.subr.mxu0 0.0
    %4414 = vmatpush1.msra.mxu0 %v913
    %4415 = vmatprep.subr.mxu0 0.0
    %4416 = vmatpush1.msra.mxu0 %v912
    %4417 = vmatprep.subr.mxu0 0.0
    %4418 = vmatpush1.msra.mxu0 %v911
    %4419 = vmatprep.subr.mxu0 0.0
    %4420 = vmatpush1.msra.mxu0 %v910
    %4421 = vmatprep.subr.mxu0 0.0
    %4422 = vmatpush1.msra.mxu0 %v909
    %4423 = vmatprep.subr.mxu0 0.0
    %4424 = vmatpush1.msra.mxu0 %v908
    %4425 = vmatprep.subr.mxu0 0.0
    %4426 = vmatpush1.msra.mxu0 %v907
    %4427 = vmatprep.subr.mxu0 0.0
    %4428 = vmatpush2.msra.mxu0 0.0
    %4429 = vmatprep.subr.mxu0 0.0
    %4430 = vmatpush2.msra.mxu0 0.0
    %4431 = vmatprep.subr.mxu0 0.0
    %4432 = vmatpush2.msra.mxu0 0.0
    %4433 = vmatprep.subr.mxu0 0.0
    %4434 = vmatpush2.msra.mxu0 0.0
    %4435 = vmatprep.subr.mxu0 0.0
    %4436 = vmatpush2.msra.mxu0 0.0
    %4437 = vmatprep.subr.mxu0 0.0
    %4438 = vmatpush2.msra.mxu0 0.0
    %4439 = vmatprep.subr.mxu0 0.0
    %4440 = vmatpush2.msra.mxu0 0.0
    %4441 = vmatprep.subr.mxu0 0.0
    %4442 = vmatpush2.msra.mxu0 0.0
    %4443 = vmatprep.subr.mxu0 0.0
    %4444 = vmatpush2.msra.mxu0 0.0
    %4445 = vmatprep.subr.mxu0 0.0
    %4446 = vmatpush2.msra.mxu0 0.0
    %4447 = vmatprep.subr.mxu0 0.0
    %4448 = vmatpush2.msra.mxu0 0.0
    %4449 = vmatprep.subr.mxu0 0.0
    %4450 = vmatpush2.msra.mxu0 0.0
    %4451 = vmatprep.subr.mxu0 0.0
    %4452 = vmatpush2.msra.mxu0 0.0
    %4453 = vmatprep.subr.mxu0 0.0
    %4454 = vmatpush2.msra.mxu0 0.0
    %4455 = vmatprep.subr.mxu0 0.0
    %4456 = vmatpush2.msra.mxu0 0.0
    %4457 = vmatprep.subr.mxu0 0.0
    %4458 = vmatpush2.msra.mxu0 0.0
    %4459 = vmatprep.mubr.f32.mxu0 0.0
    %4460 = vmatmul.mubr.f32.gmra.mxu0 %v4393
    %v4461 = vpop.f32.mrf.mxu0
    %v4462 = vadd.f32 %v920, %v4461
    %v4463 = vpop.f32.mrf.mxu0
    %4464 = vdwg.mxu0
    %v4465 = vadd.f32 %v4389, %v4462
    %v4466 = vxor.u32 %v4465, 2147483648
    %v4467 = vmul.f32 %v4466, 1.442695
    %v4468 = vpow.pop %v4467
    %v4469 = vadd.f32 %v4468, 1.0
    %v4470 = vrcp.pop %v4469
    %v4471 = vmul.f32 1.0, %v4470
    %4472 = vmatprep.subr.mxu0 0.0
    %4473 = vmatpush1.msra.mxu0 0.0
    %4474 = vmatprep.subr.mxu0 0.0
    %4475 = vmatpush1.msra.mxu0 0.0
    %4476 = vmatprep.subr.mxu0 0.0
    %4477 = vmatpush1.msra.mxu0 0.0
    %4478 = vmatprep.subr.mxu0 0.0
    %4479 = vmatpush1.msra.mxu0 0.0
    %4480 = vmatprep.subr.mxu0 0.0
    %4481 = vmatpush1.msra.mxu0 0.0
    %4482 = vmatprep.subr.mxu0 0.0
    %4483 = vmatpush1.msra.mxu0 0.0
    %4484 = vmatprep.subr.mxu0 0.0
    %4485 = vmatpush1.msra.mxu0 0.0
    %4486 = vmatprep.subr.mxu0 0.0
    %4487 = vmatpush1.msra.mxu0 0.0
    %4488 = vmatprep.subr.mxu0 0.0
    %4489 = vmatpush1.msra.mxu0 %v1007
    %4490 = vmatprep.subr.mxu0 0.0
    %4491 = vmatpush1.msra.mxu0 %v1006
    %4492 = vmatprep.subr.mxu0 0.0
    %4493 = vmatpush1.msra.mxu0 %v1005
    %4494 = vmatprep.subr.mxu0 0.0
    %4495 = vmatpush1.msra.mxu0 %v1004
    %4496 = vmatprep.subr.mxu0 0.0
    %4497 = vmatpush1.msra.mxu0 %v1003
    %4498 = vmatprep.subr.mxu0 0.0
    %4499 = vmatpush1.msra.mxu0 %v1002
    %4500 = vmatprep.subr.mxu0 0.0
    %4501 = vmatpush1.msra.mxu0 %v1001
    %4502 = vmatprep.subr.mxu0 0.0
    %4503 = vmatpush1.msra.mxu0 %v1000
    %4504 = vmatprep.subr.mxu0 0.0
    %4505 = vmatpush2.msra.mxu0 0.0
    %4506 = vmatprep.subr.mxu0 0.0
    %4507 = vmatpush2.msra.mxu0 0.0
    %4508 = vmatprep.subr.mxu0 0.0
    %4509 = vmatpush2.msra.mxu0 0.0
    %4510 = vmatprep.subr.mxu0 0.0
    %4511 = vmatpush2.msra.mxu0 0.0
    %4512 = vmatprep.subr.mxu0 0.0
    %4513 = vmatpush2.msra.mxu0 0.0
    %4514 = vmatprep.subr.mxu0 0.0
    %4515 = vmatpush2.msra.mxu0 0.0
    %4516 = vmatprep.subr.mxu0 0.0
    %4517 = vmatpush2.msra.mxu0 0.0
    %4518 = vmatprep.subr.mxu0 0.0
    %4519 = vmatpush2.msra.mxu0 0.0
    %4520 = vmatprep.subr.mxu0 0.0
    %4521 = vmatpush2.msra.mxu0 0.0
    %4522 = vmatprep.subr.mxu0 0.0
    %4523 = vmatpush2.msra.mxu0 0.0
    %4524 = vmatprep.subr.mxu0 0.0
    %4525 = vmatpush2.msra.mxu0 0.0
    %4526 = vmatprep.subr.mxu0 0.0
    %4527 = vmatpush2.msra.mxu0 0.0
    %4528 = vmatprep.subr.mxu0 0.0
    %4529 = vmatpush2.msra.mxu0 0.0
    %4530 = vmatprep.subr.mxu0 0.0
    %4531 = vmatpush2.msra.mxu0 0.0
    %4532 = vmatprep.subr.mxu0 0.0
    %4533 = vmatpush2.msra.mxu0 0.0
    %4534 = vmatprep.subr.mxu0 0.0
    %4535 = vmatpush2.msra.mxu0 0.0
    %4536 = vmatprep.mubr.f32.mxu0 0.0
    %4537 = vmatmul.mubr.f32.gmra.mxu0 %v4320
    %v4538 = vpop.f32.mrf.mxu0
    %v4539 = vadd.f32 %v1014, %v4538
    %v4540 = vpop.f32.mrf.mxu0
    %4541 = vdwg.mxu0
    %4542 = vmatprep.subr.mxu0 0.0
    %4543 = vmatpush1.msra.mxu0 0.0
    %4544 = vmatprep.subr.mxu0 0.0
    %4545 = vmatpush1.msra.mxu0 0.0
    %4546 = vmatprep.subr.mxu0 0.0
    %4547 = vmatpush1.msra.mxu0 0.0
    %4548 = vmatprep.subr.mxu0 0.0
    %4549 = vmatpush1.msra.mxu0 0.0
    %4550 = vmatprep.subr.mxu0 0.0
    %4551 = vmatpush1.msra.mxu0 0.0
    %4552 = vmatprep.subr.mxu0 0.0
    %4553 = vmatpush1.msra.mxu0 0.0
    %4554 = vmatprep.subr.mxu0 0.0
    %4555 = vmatpush1.msra.mxu0 0.0
    %4556 = vmatprep.subr.mxu0 0.0
    %4557 = vmatpush1.msra.mxu0 0.0
    %4558 = vmatprep.subr.mxu0 0.0
    %4559 = vmatpush1.msra.mxu0 %v1094
    %4560 = vmatprep.subr.mxu0 0.0
    %4561 = vmatpush1.msra.mxu0 %v1093
    %4562 = vmatprep.subr.mxu0 0.0
    %4563 = vmatpush1.msra.mxu0 %v1092
    %4564 = vmatprep.subr.mxu0 0.0
    %4565 = vmatpush1.msra.mxu0 %v1091
    %4566 = vmatprep.subr.mxu0 0.0
    %4567 = vmatpush1.msra.mxu0 %v1090
    %4568 = vmatprep.subr.mxu0 0.0
    %4569 = vmatpush1.msra.mxu0 %v1089
    %4570 = vmatprep.subr.mxu0 0.0
    %4571 = vmatpush1.msra.mxu0 %v1088
    %4572 = vmatprep.subr.mxu0 0.0
    %4573 = vmatpush1.msra.mxu0 %v1087
    %4574 = vmatprep.subr.mxu0 0.0
    %4575 = vmatpush2.msra.mxu0 0.0
    %4576 = vmatprep.subr.mxu0 0.0
    %4577 = vmatpush2.msra.mxu0 0.0
    %4578 = vmatprep.subr.mxu0 0.0
    %4579 = vmatpush2.msra.mxu0 0.0
    %4580 = vmatprep.subr.mxu0 0.0
    %4581 = vmatpush2.msra.mxu0 0.0
    %4582 = vmatprep.subr.mxu0 0.0
    %4583 = vmatpush2.msra.mxu0 0.0
    %4584 = vmatprep.subr.mxu0 0.0
    %4585 = vmatpush2.msra.mxu0 0.0
    %4586 = vmatprep.subr.mxu0 0.0
    %4587 = vmatpush2.msra.mxu0 0.0
    %4588 = vmatprep.subr.mxu0 0.0
    %4589 = vmatpush2.msra.mxu0 0.0
    %4590 = vmatprep.subr.mxu0 0.0
    %4591 = vmatpush2.msra.mxu0 0.0
    %4592 = vmatprep.subr.mxu0 0.0
    %4593 = vmatpush2.msra.mxu0 0.0
    %4594 = vmatprep.subr.mxu0 0.0
    %4595 = vmatpush2.msra.mxu0 0.0
    %4596 = vmatprep.subr.mxu0 0.0
    %4597 = vmatpush2.msra.mxu0 0.0
    %4598 = vmatprep.subr.mxu0 0.0
    %4599 = vmatpush2.msra.mxu0 0.0
    %4600 = vmatprep.subr.mxu0 0.0
    %4601 = vmatpush2.msra.mxu0 0.0
    %4602 = vmatprep.subr.mxu0 0.0
    %4603 = vmatpush2.msra.mxu0 0.0
    %4604 = vmatprep.subr.mxu0 0.0
    %4605 = vmatpush2.msra.mxu0 0.0
    %4606 = vmatprep.mubr.f32.mxu0 0.0
    %4607 = vmatmul.mubr.f32.gmra.mxu0 %v4393
    %v4608 = vpop.f32.mrf.mxu0
    %v4609 = vadd.f32 %v1101, %v4608
    %v4610 = vpop.f32.mrf.mxu0
    %4611 = vdwg.mxu0
    %v4612 = vadd.f32 %v4539, %v4609
    %v4613 = vxor.u32 %v4612, 2147483648
    %v4614 = vmul.f32 %v4613, 1.442695
    %v4615 = vpow.pop %v4614
    %v4616 = vadd.f32 %v4615, 1.0
    %v4617 = vrcp.pop %v4616
    %v4618 = vmul.f32 1.0, %v4617
    %4619 = vmatprep.subr.mxu0 0.0
    %4620 = vmatpush1.msra.mxu0 0.0
    %4621 = vmatprep.subr.mxu0 0.0
    %4622 = vmatpush1.msra.mxu0 0.0
    %4623 = vmatprep.subr.mxu0 0.0
    %4624 = vmatpush1.msra.mxu0 0.0
    %4625 = vmatprep.subr.mxu0 0.0
    %4626 = vmatpush1.msra.mxu0 0.0
    %4627 = vmatprep.subr.mxu0 0.0
    %4628 = vmatpush1.msra.mxu0 0.0
    %4629 = vmatprep.subr.mxu0 0.0
    %4630 = vmatpush1.msra.mxu0 0.0
    %4631 = vmatprep.subr.mxu0 0.0
    %4632 = vmatpush1.msra.mxu0 0.0
    %4633 = vmatprep.subr.mxu0 0.0
    %4634 = vmatpush1.msra.mxu0 0.0
    %4635 = vmatprep.subr.mxu0 0.0
    %4636 = vmatpush1.msra.mxu0 %v1188
    %4637 = vmatprep.subr.mxu0 0.0
    %4638 = vmatpush1.msra.mxu0 %v1187
    %4639 = vmatprep.subr.mxu0 0.0
    %4640 = vmatpush1.msra.mxu0 %v1186
    %4641 = vmatprep.subr.mxu0 0.0
    %4642 = vmatpush1.msra.mxu0 %v1185
    %4643 = vmatprep.subr.mxu0 0.0
    %4644 = vmatpush1.msra.mxu0 %v1184
    %4645 = vmatprep.subr.mxu0 0.0
    %4646 = vmatpush1.msra.mxu0 %v1183
    %4647 = vmatprep.subr.mxu0 0.0
    %4648 = vmatpush1.msra.mxu0 %v1182
    %4649 = vmatprep.subr.mxu0 0.0
    %4650 = vmatpush1.msra.mxu0 %v1181
    %4651 = vmatprep.subr.mxu0 0.0
    %4652 = vmatpush2.msra.mxu0 0.0
    %4653 = vmatprep.subr.mxu0 0.0
    %4654 = vmatpush2.msra.mxu0 0.0
    %4655 = vmatprep.subr.mxu0 0.0
    %4656 = vmatpush2.msra.mxu0 0.0
    %4657 = vmatprep.subr.mxu0 0.0
    %4658 = vmatpush2.msra.mxu0 0.0
    %4659 = vmatprep.subr.mxu0 0.0
    %4660 = vmatpush2.msra.mxu0 0.0
    %4661 = vmatprep.subr.mxu0 0.0
    %4662 = vmatpush2.msra.mxu0 0.0
    %4663 = vmatprep.subr.mxu0 0.0
    %4664 = vmatpush2.msra.mxu0 0.0
    %4665 = vmatprep.subr.mxu0 0.0
    %4666 = vmatpush2.msra.mxu0 0.0
    %4667 = vmatprep.subr.mxu0 0.0
    %4668 = vmatpush2.msra.mxu0 0.0
    %4669 = vmatprep.subr.mxu0 0.0
    %4670 = vmatpush2.msra.mxu0 0.0
    %4671 = vmatprep.subr.mxu0 0.0
    %4672 = vmatpush2.msra.mxu0 0.0
    %4673 = vmatprep.subr.mxu0 0.0
    %4674 = vmatpush2.msra.mxu0 0.0
    %4675 = vmatprep.subr.mxu0 0.0
    %4676 = vmatpush2.msra.mxu0 0.0
    %4677 = vmatprep.subr.mxu0 0.0
    %4678 = vmatpush2.msra.mxu0 0.0
    %4679 = vmatprep.subr.mxu0 0.0
    %4680 = vmatpush2.msra.mxu0 0.0
    %4681 = vmatprep.subr.mxu0 0.0
    %4682 = vmatpush2.msra.mxu0 0.0
    %4683 = vmatprep.mubr.f32.mxu0 0.0
    %4684 = vmatmul.mubr.f32.gmra.mxu0 %v4320
    %v4685 = vpop.f32.mrf.mxu0
    %v4686 = vadd.f32 %v1195, %v4685
    %v4687 = vpop.f32.mrf.mxu0
    %4688 = vdwg.mxu0
    %4689 = vmatprep.subr.mxu0 0.0
    %4690 = vmatpush1.msra.mxu0 0.0
    %4691 = vmatprep.subr.mxu0 0.0
    %4692 = vmatpush1.msra.mxu0 0.0
    %4693 = vmatprep.subr.mxu0 0.0
    %4694 = vmatpush1.msra.mxu0 0.0
    %4695 = vmatprep.subr.mxu0 0.0
    %4696 = vmatpush1.msra.mxu0 0.0
    %4697 = vmatprep.subr.mxu0 0.0
    %4698 = vmatpush1.msra.mxu0 0.0
    %4699 = vmatprep.subr.mxu0 0.0
    %4700 = vmatpush1.msra.mxu0 0.0
    %4701 = vmatprep.subr.mxu0 0.0
    %4702 = vmatpush1.msra.mxu0 0.0
    %4703 = vmatprep.subr.mxu0 0.0
    %4704 = vmatpush1.msra.mxu0 0.0
    %4705 = vmatprep.subr.mxu0 0.0
    %4706 = vmatpush1.msra.mxu0 %v1275
    %4707 = vmatprep.subr.mxu0 0.0
    %4708 = vmatpush1.msra.mxu0 %v1274
    %4709 = vmatprep.subr.mxu0 0.0
    %4710 = vmatpush1.msra.mxu0 %v1273
    %4711 = vmatprep.subr.mxu0 0.0
    %4712 = vmatpush1.msra.mxu0 %v1272
    %4713 = vmatprep.subr.mxu0 0.0
    %4714 = vmatpush1.msra.mxu0 %v1271
    %4715 = vmatprep.subr.mxu0 0.0
    %4716 = vmatpush1.msra.mxu0 %v1270
    %4717 = vmatprep.subr.mxu0 0.0
    %4718 = vmatpush1.msra.mxu0 %v1269
    %4719 = vmatprep.subr.mxu0 0.0
    %4720 = vmatpush1.msra.mxu0 %v1268
    %4721 = vmatprep.subr.mxu0 0.0
    %4722 = vmatpush2.msra.mxu0 0.0
    %4723 = vmatprep.subr.mxu0 0.0
    %4724 = vmatpush2.msra.mxu0 0.0
    %4725 = vmatprep.subr.mxu0 0.0
    %4726 = vmatpush2.msra.mxu0 0.0
    %4727 = vmatprep.subr.mxu0 0.0
    %4728 = vmatpush2.msra.mxu0 0.0
    %4729 = vmatprep.subr.mxu0 0.0
    %4730 = vmatpush2.msra.mxu0 0.0
    %4731 = vmatprep.subr.mxu0 0.0
    %4732 = vmatpush2.msra.mxu0 0.0
    %4733 = vmatprep.subr.mxu0 0.0
    %4734 = vmatpush2.msra.mxu0 0.0
    %4735 = vmatprep.subr.mxu0 0.0
    %4736 = vmatpush2.msra.mxu0 0.0
    %4737 = vmatprep.subr.mxu0 0.0
    %4738 = vmatpush2.msra.mxu0 0.0
    %4739 = vmatprep.subr.mxu0 0.0
    %4740 = vmatpush2.msra.mxu0 0.0
    %4741 = vmatprep.subr.mxu0 0.0
    %4742 = vmatpush2.msra.mxu0 0.0
    %4743 = vmatprep.subr.mxu0 0.0
    %4744 = vmatpush2.msra.mxu0 0.0
    %4745 = vmatprep.subr.mxu0 0.0
    %4746 = vmatpush2.msra.mxu0 0.0
    %4747 = vmatprep.subr.mxu0 0.0
    %4748 = vmatpush2.msra.mxu0 0.0
    %4749 = vmatprep.subr.mxu0 0.0
    %4750 = vmatpush2.msra.mxu0 0.0
    %4751 = vmatprep.subr.mxu0 0.0
    %4752 = vmatpush2.msra.mxu0 0.0
    %4753 = vmatprep.mubr.f32.mxu0 0.0
    %4754 = vmatmul.mubr.f32.gmra.mxu0 %v4393
    %v4755 = vpop.f32.mrf.mxu0
    %v4756 = vadd.f32 %v1282, %v4755
    %v4757 = vpop.f32.mrf.mxu0
    %4758 = vdwg.mxu0
    %v4759 = vmul.f32 %v4471, %v4756
    %v4760 = vadd.f32 %v4686, %v4759
    %v4761 = vtanh.pop %v4760
    %v4762 = vsub.f32 1.0, %v4618
    %v4763 = vmul.f32 %v4762, %v4761
    %v4764 = vmul.f32 %v4618, %v4084
    %v4765 = vadd.f32 %v4763, %v4764
    %v4766 = vld [vmem:[#allocation2 + $0x30] sm:$0xff]
    %4767 = vmatprep.subr.mxu0 0.0
    %4768 = vmatpush1.msra.mxu0 0.0
    %4769 = vmatprep.subr.mxu0 0.0
    %4770 = vmatpush1.msra.mxu0 0.0
    %4771 = vmatprep.subr.mxu0 0.0
    %4772 = vmatpush1.msra.mxu0 0.0
    %4773 = vmatprep.subr.mxu0 0.0
    %4774 = vmatpush1.msra.mxu0 0.0
    %4775 = vmatprep.subr.mxu0 0.0
    %4776 = vmatpush1.msra.mxu0 0.0
    %4777 = vmatprep.subr.mxu0 0.0
    %4778 = vmatpush1.msra.mxu0 0.0
    %4779 = vmatprep.subr.mxu0 0.0
    %4780 = vmatpush1.msra.mxu0 0.0
    %4781 = vmatprep.subr.mxu0 0.0
    %4782 = vmatpush1.msra.mxu0 0.0
    %4783 = vmatprep.subr.mxu0 0.0
    %4784 = vmatpush1.msra.mxu0 %v541
    %4785 = vmatprep.subr.mxu0 0.0
    %4786 = vmatpush1.msra.mxu0 %v540
    %4787 = vmatprep.subr.mxu0 0.0
    %4788 = vmatpush1.msra.mxu0 %v539
    %4789 = vmatprep.subr.mxu0 0.0
    %4790 = vmatpush1.msra.mxu0 %v538
    %4791 = vmatprep.subr.mxu0 0.0
    %4792 = vmatpush1.msra.mxu0 %v537
    %4793 = vmatprep.subr.mxu0 0.0
    %4794 = vmatpush1.msra.mxu0 %v536
    %4795 = vmatprep.subr.mxu0 0.0
    %4796 = vmatpush1.msra.mxu0 %v535
    %4797 = vmatprep.subr.mxu0 0.0
    %4798 = vmatpush1.msra.mxu0 %v534
    %4799 = vmatprep.subr.mxu0 0.0
    %4800 = vmatpush2.msra.mxu0 0.0
    %4801 = vmatprep.subr.mxu0 0.0
    %4802 = vmatpush2.msra.mxu0 0.0
    %4803 = vmatprep.subr.mxu0 0.0
    %4804 = vmatpush2.msra.mxu0 0.0
    %4805 = vmatprep.subr.mxu0 0.0
    %4806 = vmatpush2.msra.mxu0 0.0
    %4807 = vmatprep.subr.mxu0 0.0
    %4808 = vmatpush2.msra.mxu0 0.0
    %4809 = vmatprep.subr.mxu0 0.0
    %4810 = vmatpush2.msra.mxu0 0.0
    %4811 = vmatprep.subr.mxu0 0.0
    %4812 = vmatpush2.msra.mxu0 0.0
    %4813 = vmatprep.subr.mxu0 0.0
    %4814 = vmatpush2.msra.mxu0 0.0
    %4815 = vmatprep.subr.mxu0 0.0
    %4816 = vmatpush2.msra.mxu0 0.0
    %4817 = vmatprep.subr.mxu0 0.0
    %4818 = vmatpush2.msra.mxu0 0.0
    %4819 = vmatprep.subr.mxu0 0.0
    %4820 = vmatpush2.msra.mxu0 0.0
    %4821 = vmatprep.subr.mxu0 0.0
    %4822 = vmatpush2.msra.mxu0 0.0
    %4823 = vmatprep.subr.mxu0 0.0
    %4824 = vmatpush2.msra.mxu0 0.0
    %4825 = vmatprep.subr.mxu0 0.0
    %4826 = vmatpush2.msra.mxu0 0.0
    %4827 = vmatprep.subr.mxu0 0.0
    %4828 = vmatpush2.msra.mxu0 0.0
    %4829 = vmatprep.subr.mxu0 0.0
    %4830 = vmatpush2.msra.mxu0 0.0
    %4831 = vmatprep.mubr.f32.mxu0 0.0
    %4832 = vmatmul.mubr.f32.gmra.mxu0 %v4320
    %v4833 = vpop.f32.mrf.mxu0
    %v4834 = vadd.f32 %v547, %v4833
    %v4835 = vpop.f32.mrf.mxu0
    %4836 = vdwg.mxu0
    %v4837 = vadd.f32 %v4766, %v4834
    %v4838 = vxor.u32 %v4837, 2147483648
    %v4839 = vmul.f32 %v4838, 1.442695
    %v4840 = vpow.pop %v4839
    %v4841 = vadd.f32 %v4840, 1.0
    %v4842 = vrcp.pop %v4841
    %v4843 = vmul.f32 1.0, %v4842
    %v4844 = vld [vmem:[#allocation3 + $0x30] sm:$0xff]
    %4845 = vmatprep.subr.mxu0 0.0
    %4846 = vmatpush1.msra.mxu0 0.0
    %4847 = vmatprep.subr.mxu0 0.0
    %4848 = vmatpush1.msra.mxu0 0.0
    %4849 = vmatprep.subr.mxu0 0.0
    %4850 = vmatpush1.msra.mxu0 0.0
    %4851 = vmatprep.subr.mxu0 0.0
    %4852 = vmatpush1.msra.mxu0 0.0
    %4853 = vmatprep.subr.mxu0 0.0
    %4854 = vmatpush1.msra.mxu0 0.0
    %4855 = vmatprep.subr.mxu0 0.0
    %4856 = vmatpush1.msra.mxu0 0.0
    %4857 = vmatprep.subr.mxu0 0.0
    %4858 = vmatpush1.msra.mxu0 0.0
    %4859 = vmatprep.subr.mxu0 0.0
    %4860 = vmatpush1.msra.mxu0 0.0
    %4861 = vmatprep.subr.mxu0 0.0
    %4862 = vmatpush1.msra.mxu0 %v638
    %4863 = vmatprep.subr.mxu0 0.0
    %4864 = vmatpush1.msra.mxu0 %v637
    %4865 = vmatprep.subr.mxu0 0.0
    %4866 = vmatpush1.msra.mxu0 %v636
    %4867 = vmatprep.subr.mxu0 0.0
    %4868 = vmatpush1.msra.mxu0 %v635
    %4869 = vmatprep.subr.mxu0 0.0
    %4870 = vmatpush1.msra.mxu0 %v634
    %4871 = vmatprep.subr.mxu0 0.0
    %4872 = vmatpush1.msra.mxu0 %v633
    %4873 = vmatprep.subr.mxu0 0.0
    %4874 = vmatpush1.msra.mxu0 %v632
    %4875 = vmatprep.subr.mxu0 0.0
    %4876 = vmatpush1.msra.mxu0 %v631
    %4877 = vmatprep.subr.mxu0 0.0
    %4878 = vmatpush2.msra.mxu0 0.0
    %4879 = vmatprep.subr.mxu0 0.0
    %4880 = vmatpush2.msra.mxu0 0.0
    %4881 = vmatprep.subr.mxu0 0.0
    %4882 = vmatpush2.msra.mxu0 0.0
    %4883 = vmatprep.subr.mxu0 0.0
    %4884 = vmatpush2.msra.mxu0 0.0
    %4885 = vmatprep.subr.mxu0 0.0
    %4886 = vmatpush2.msra.mxu0 0.0
    %4887 = vmatprep.subr.mxu0 0.0
    %4888 = vmatpush2.msra.mxu0 0.0
    %4889 = vmatprep.subr.mxu0 0.0
    %4890 = vmatpush2.msra.mxu0 0.0
    %4891 = vmatprep.subr.mxu0 0.0
    %4892 = vmatpush2.msra.mxu0 0.0
    %4893 = vmatprep.subr.mxu0 0.0
    %4894 = vmatpush2.msra.mxu0 0.0
    %4895 = vmatprep.subr.mxu0 0.0
    %4896 = vmatpush2.msra.mxu0 0.0
    %4897 = vmatprep.subr.mxu0 0.0
    %4898 = vmatpush2.msra.mxu0 0.0
    %4899 = vmatprep.subr.mxu0 0.0
    %4900 = vmatpush2.msra.mxu0 0.0
    %4901 = vmatprep.subr.mxu0 0.0
    %4902 = vmatpush2.msra.mxu0 0.0
    %4903 = vmatprep.subr.mxu0 0.0
    %4904 = vmatpush2.msra.mxu0 0.0
    %4905 = vmatprep.subr.mxu0 0.0
    %4906 = vmatpush2.msra.mxu0 0.0
    %4907 = vmatprep.subr.mxu0 0.0
    %4908 = vmatpush2.msra.mxu0 0.0
    %4909 = vmatprep.mubr.f32.mxu0 0.0
    %4910 = vmatmul.mubr.f32.gmra.mxu0 %v4320
    %v4911 = vpop.f32.mrf.mxu0
    %v4912 = vadd.f32 %v645, %v4911
    %v4913 = vpop.f32.mrf.mxu0
    %4914 = vdwg.mxu0
    %v4915 = vadd.f32 %v4844, %v4912
    %v4916 = vxor.u32 %v4915, 2147483648
    %v4917 = vmul.f32 %v4916, 1.442695
    %v4918 = vpow.pop %v4917
    %v4919 = vadd.f32 %v4918, 1.0
    %v4920 = vrcp.pop %v4919
    %v4921 = vmul.f32 1.0, %v4920
    %v4922 = vld [vmem:[#allocation4 + $0x30] sm:$0xff]
    %4923 = vmatprep.subr.mxu0 0.0
    %4924 = vmatpush1.msra.mxu0 0.0
    %4925 = vmatprep.subr.mxu0 0.0
    %4926 = vmatpush1.msra.mxu0 0.0
    %4927 = vmatprep.subr.mxu0 0.0
    %4928 = vmatpush1.msra.mxu0 0.0
    %4929 = vmatprep.subr.mxu0 0.0
    %4930 = vmatpush1.msra.mxu0 0.0
    %4931 = vmatprep.subr.mxu0 0.0
    %4932 = vmatpush1.msra.mxu0 0.0
    %4933 = vmatprep.subr.mxu0 0.0
    %4934 = vmatpush1.msra.mxu0 0.0
    %4935 = vmatprep.subr.mxu0 0.0
    %4936 = vmatpush1.msra.mxu0 0.0
    %4937 = vmatprep.subr.mxu0 0.0
    %4938 = vmatpush1.msra.mxu0 0.0
    %4939 = vmatprep.subr.mxu0 0.0
    %4940 = vmatpush1.msra.mxu0 %v733
    %4941 = vmatprep.subr.mxu0 0.0
    %4942 = vmatpush1.msra.mxu0 %v732
    %4943 = vmatprep.subr.mxu0 0.0
    %4944 = vmatpush1.msra.mxu0 %v731
    %4945 = vmatprep.subr.mxu0 0.0
    %4946 = vmatpush1.msra.mxu0 %v730
    %4947 = vmatprep.subr.mxu0 0.0
    %4948 = vmatpush1.msra.mxu0 %v729
    %4949 = vmatprep.subr.mxu0 0.0
    %4950 = vmatpush1.msra.mxu0 %v728
    %4951 = vmatprep.subr.mxu0 0.0
    %4952 = vmatpush1.msra.mxu0 %v727
    %4953 = vmatprep.subr.mxu0 0.0
    %4954 = vmatpush1.msra.mxu0 %v726
    %4955 = vmatprep.subr.mxu0 0.0
    %4956 = vmatpush2.msra.mxu0 0.0
    %4957 = vmatprep.subr.mxu0 0.0
    %4958 = vmatpush2.msra.mxu0 0.0
    %4959 = vmatprep.subr.mxu0 0.0
    %4960 = vmatpush2.msra.mxu0 0.0
    %4961 = vmatprep.subr.mxu0 0.0
    %4962 = vmatpush2.msra.mxu0 0.0
    %4963 = vmatprep.subr.mxu0 0.0
    %4964 = vmatpush2.msra.mxu0 0.0
    %4965 = vmatprep.subr.mxu0 0.0
    %4966 = vmatpush2.msra.mxu0 0.0
    %4967 = vmatprep.subr.mxu0 0.0
    %4968 = vmatpush2.msra.mxu0 0.0
    %4969 = vmatprep.subr.mxu0 0.0
    %4970 = vmatpush2.msra.mxu0 0.0
    %4971 = vmatprep.subr.mxu0 0.0
    %4972 = vmatpush2.msra.mxu0 0.0
    %4973 = vmatprep.subr.mxu0 0.0
    %4974 = vmatpush2.msra.mxu0 0.0
    %4975 = vmatprep.subr.mxu0 0.0
    %4976 = vmatpush2.msra.mxu0 0.0
    %4977 = vmatprep.subr.mxu0 0.0
    %4978 = vmatpush2.msra.mxu0 0.0
    %4979 = vmatprep.subr.mxu0 0.0
    %4980 = vmatpush2.msra.mxu0 0.0
    %4981 = vmatprep.subr.mxu0 0.0
    %4982 = vmatpush2.msra.mxu0 0.0
    %4983 = vmatprep.subr.mxu0 0.0
    %4984 = vmatpush2.msra.mxu0 0.0
    %4985 = vmatprep.subr.mxu0 0.0
    %4986 = vmatpush2.msra.mxu0 0.0
    %4987 = vmatprep.mubr.f32.mxu0 0.0
    %4988 = vmatmul.mubr.f32.gmra.mxu0 %v4320
    %v4989 = vpop.f32.mrf.mxu0
    %v4990 = vadd.f32 %v740, %v4989
    %v4991 = vpop.f32.mrf.mxu0
    %4992 = vdwg.mxu0
    %v4993 = vmul.f32 %v4843, %v4990
    %v4994 = vadd.f32 %v4922, %v4993
    %v4995 = vtanh.pop %v4994
    %v4996 = vsub.f32 1.0, %v4921
    %v4997 = vmul.f32 %v4996, %v4995
    %v4998 = vmul.f32 %v4921, %v4318
    %v4999 = vadd.f32 %v4997, %v4998
    %v5001 = vsel %vm272, %v4999, 0
    %5003 = vmatprep.subr.mxu0 0.0
    %5004 = vmatpush1.msra.mxu0 0.0
    %5005 = vmatprep.subr.mxu0 0.0
    %5006 = vmatpush1.msra.mxu0 0.0
    %5007 = vmatprep.subr.mxu0 0.0
    %5008 = vmatpush1.msra.mxu0 0.0
    %5009 = vmatprep.subr.mxu0 0.0
    %5010 = vmatpush1.msra.mxu0 0.0
    %5011 = vmatprep.subr.mxu0 0.0
    %5012 = vmatpush1.msra.mxu0 0.0
    %5013 = vmatprep.subr.mxu0 0.0
    %5014 = vmatpush1.msra.mxu0 0.0
    %5015 = vmatprep.subr.mxu0 0.0
    %5016 = vmatpush1.msra.mxu0 0.0
    %5017 = vmatprep.subr.mxu0 0.0
    %5018 = vmatpush1.msra.mxu0 0.0
    %5019 = vmatprep.subr.mxu0 0.0
    %5020 = vmatpush1.msra.mxu0 %v826
    %5021 = vmatprep.subr.mxu0 0.0
    %5022 = vmatpush1.msra.mxu0 %v825
    %5023 = vmatprep.subr.mxu0 0.0
    %5024 = vmatpush1.msra.mxu0 %v824
    %5025 = vmatprep.subr.mxu0 0.0
    %5026 = vmatpush1.msra.mxu0 %v823
    %5027 = vmatprep.subr.mxu0 0.0
    %5028 = vmatpush1.msra.mxu0 %v822
    %5029 = vmatprep.subr.mxu0 0.0
    %5030 = vmatpush1.msra.mxu0 %v821
    %5031 = vmatprep.subr.mxu0 0.0
    %5032 = vmatpush1.msra.mxu0 %v820
    %5033 = vmatprep.subr.mxu0 0.0
    %5034 = vmatpush1.msra.mxu0 %v819
    %5035 = vmatprep.subr.mxu0 0.0
    %5036 = vmatpush2.msra.mxu0 0.0
    %5037 = vmatprep.subr.mxu0 0.0
    %5038 = vmatpush2.msra.mxu0 0.0
    %5039 = vmatprep.subr.mxu0 0.0
    %5040 = vmatpush2.msra.mxu0 0.0
    %5041 = vmatprep.subr.mxu0 0.0
    %5042 = vmatpush2.msra.mxu0 0.0
    %5043 = vmatprep.subr.mxu0 0.0
    %5044 = vmatpush2.msra.mxu0 0.0
    %5045 = vmatprep.subr.mxu0 0.0
    %5046 = vmatpush2.msra.mxu0 0.0
    %5047 = vmatprep.subr.mxu0 0.0
    %5048 = vmatpush2.msra.mxu0 0.0
    %5049 = vmatprep.subr.mxu0 0.0
    %5050 = vmatpush2.msra.mxu0 0.0
    %5051 = vmatprep.subr.mxu0 0.0
    %5052 = vmatpush2.msra.mxu0 0.0
    %5053 = vmatprep.subr.mxu0 0.0
    %5054 = vmatpush2.msra.mxu0 0.0
    %5055 = vmatprep.subr.mxu0 0.0
    %5056 = vmatpush2.msra.mxu0 0.0
    %5057 = vmatprep.subr.mxu0 0.0
    %5058 = vmatpush2.msra.mxu0 0.0
    %5059 = vmatprep.subr.mxu0 0.0
    %5060 = vmatpush2.msra.mxu0 0.0
    %5061 = vmatprep.subr.mxu0 0.0
    %5062 = vmatpush2.msra.mxu0 0.0
    %5063 = vmatprep.subr.mxu0 0.0
    %5064 = vmatpush2.msra.mxu0 0.0
    %5065 = vmatprep.subr.mxu0 0.0
    %5066 = vmatpush2.msra.mxu0 0.0
    %5067 = vmatprep.mubr.f32.mxu0 0.0
    %5068 = vmatmul.mubr.f32.gmra.mxu0 %v5001
    %v5069 = vpop.f32.mrf.mxu0
    %v5070 = vadd.f32 %v832, %v5069
    %v5071 = vpop.f32.mrf.mxu0
    %5072 = vdwg.mxu0
    %v5074 = vsel %vm272, %v4765, 0
    %5076 = vmatprep.subr.mxu0 0.0
    %5077 = vmatpush1.msra.mxu0 0.0
    %5078 = vmatprep.subr.mxu0 0.0
    %5079 = vmatpush1.msra.mxu0 0.0
    %5080 = vmatprep.subr.mxu0 0.0
    %5081 = vmatpush1.msra.mxu0 0.0
    %5082 = vmatprep.subr.mxu0 0.0
    %5083 = vmatpush1.msra.mxu0 0.0
    %5084 = vmatprep.subr.mxu0 0.0
    %5085 = vmatpush1.msra.mxu0 0.0
    %5086 = vmatprep.subr.mxu0 0.0
    %5087 = vmatpush1.msra.mxu0 0.0
    %5088 = vmatprep.subr.mxu0 0.0
    %5089 = vmatpush1.msra.mxu0 0.0
    %5090 = vmatprep.subr.mxu0 0.0
    %5091 = vmatpush1.msra.mxu0 0.0
    %5092 = vmatprep.subr.mxu0 0.0
    %5093 = vmatpush1.msra.mxu0 %v914
    %5094 = vmatprep.subr.mxu0 0.0
    %5095 = vmatpush1.msra.mxu0 %v913
    %5096 = vmatprep.subr.mxu0 0.0
    %5097 = vmatpush1.msra.mxu0 %v912
    %5098 = vmatprep.subr.mxu0 0.0
    %5099 = vmatpush1.msra.mxu0 %v911
    %5100 = vmatprep.subr.mxu0 0.0
    %5101 = vmatpush1.msra.mxu0 %v910
    %5102 = vmatprep.subr.mxu0 0.0
    %5103 = vmatpush1.msra.mxu0 %v909
    %5104 = vmatprep.subr.mxu0 0.0
    %5105 = vmatpush1.msra.mxu0 %v908
    %5106 = vmatprep.subr.mxu0 0.0
    %5107 = vmatpush1.msra.mxu0 %v907
    %5108 = vmatprep.subr.mxu0 0.0
    %5109 = vmatpush2.msra.mxu0 0.0
    %5110 = vmatprep.subr.mxu0 0.0
    %5111 = vmatpush2.msra.mxu0 0.0
    %5112 = vmatprep.subr.mxu0 0.0
    %5113 = vmatpush2.msra.mxu0 0.0
    %5114 = vmatprep.subr.mxu0 0.0
    %5115 = vmatpush2.msra.mxu0 0.0
    %5116 = vmatprep.subr.mxu0 0.0
    %5117 = vmatpush2.msra.mxu0 0.0
    %5118 = vmatprep.subr.mxu0 0.0
    %5119 = vmatpush2.msra.mxu0 0.0
    %5120 = vmatprep.subr.mxu0 0.0
    %5121 = vmatpush2.msra.mxu0 0.0
    %5122 = vmatprep.subr.mxu0 0.0
    %5123 = vmatpush2.msra.mxu0 0.0
    %5124 = vmatprep.subr.mxu0 0.0
    %5125 = vmatpush2.msra.mxu0 0.0
    %5126 = vmatprep.subr.mxu0 0.0
    %5127 = vmatpush2.msra.mxu0 0.0
    %5128 = vmatprep.subr.mxu0 0.0
    %5129 = vmatpush2.msra.mxu0 0.0
    %5130 = vmatprep.subr.mxu0 0.0
    %5131 = vmatpush2.msra.mxu0 0.0
    %5132 = vmatprep.subr.mxu0 0.0
    %5133 = vmatpush2.msra.mxu0 0.0
    %5134 = vmatprep.subr.mxu0 0.0
    %5135 = vmatpush2.msra.mxu0 0.0
    %5136 = vmatprep.subr.mxu0 0.0
    %5137 = vmatpush2.msra.mxu0 0.0
    %5138 = vmatprep.subr.mxu0 0.0
    %5139 = vmatpush2.msra.mxu0 0.0
    %5140 = vmatprep.mubr.f32.mxu0 0.0
    %5141 = vmatmul.mubr.f32.gmra.mxu0 %v5074
    %v5142 = vpop.f32.mrf.mxu0
    %v5143 = vadd.f32 %v920, %v5142
    %v5144 = vpop.f32.mrf.mxu0
    %5145 = vdwg.mxu0
    %v5146 = vadd.f32 %v5070, %v5143
    %v5147 = vxor.u32 %v5146, 2147483648
    %v5148 = vmul.f32 %v5147, 1.442695
    %v5149 = vpow.pop %v5148
    %v5150 = vadd.f32 %v5149, 1.0
    %v5151 = vrcp.pop %v5150
    %v5152 = vmul.f32 1.0, %v5151
    %5153 = vmatprep.subr.mxu0 0.0
    %5154 = vmatpush1.msra.mxu0 0.0
    %5155 = vmatprep.subr.mxu0 0.0
    %5156 = vmatpush1.msra.mxu0 0.0
    %5157 = vmatprep.subr.mxu0 0.0
    %5158 = vmatpush1.msra.mxu0 0.0
    %5159 = vmatprep.subr.mxu0 0.0
    %5160 = vmatpush1.msra.mxu0 0.0
    %5161 = vmatprep.subr.mxu0 0.0
    %5162 = vmatpush1.msra.mxu0 0.0
    %5163 = vmatprep.subr.mxu0 0.0
    %5164 = vmatpush1.msra.mxu0 0.0
    %5165 = vmatprep.subr.mxu0 0.0
    %5166 = vmatpush1.msra.mxu0 0.0
    %5167 = vmatprep.subr.mxu0 0.0
    %5168 = vmatpush1.msra.mxu0 0.0
    %5169 = vmatprep.subr.mxu0 0.0
    %5170 = vmatpush1.msra.mxu0 %v1007
    %5171 = vmatprep.subr.mxu0 0.0
    %5172 = vmatpush1.msra.mxu0 %v1006
    %5173 = vmatprep.subr.mxu0 0.0
    %5174 = vmatpush1.msra.mxu0 %v1005
    %5175 = vmatprep.subr.mxu0 0.0
    %5176 = vmatpush1.msra.mxu0 %v1004
    %5177 = vmatprep.subr.mxu0 0.0
    %5178 = vmatpush1.msra.mxu0 %v1003
    %5179 = vmatprep.subr.mxu0 0.0
    %5180 = vmatpush1.msra.mxu0 %v1002
    %5181 = vmatprep.subr.mxu0 0.0
    %5182 = vmatpush1.msra.mxu0 %v1001
    %5183 = vmatprep.subr.mxu0 0.0
    %5184 = vmatpush1.msra.mxu0 %v1000
    %5185 = vmatprep.subr.mxu0 0.0
    %5186 = vmatpush2.msra.mxu0 0.0
    %5187 = vmatprep.subr.mxu0 0.0
    %5188 = vmatpush2.msra.mxu0 0.0
    %5189 = vmatprep.subr.mxu0 0.0
    %5190 = vmatpush2.msra.mxu0 0.0
    %5191 = vmatprep.subr.mxu0 0.0
    %5192 = vmatpush2.msra.mxu0 0.0
    %5193 = vmatprep.subr.mxu0 0.0
    %5194 = vmatpush2.msra.mxu0 0.0
    %5195 = vmatprep.subr.mxu0 0.0
    %5196 = vmatpush2.msra.mxu0 0.0
    %5197 = vmatprep.subr.mxu0 0.0
    %5198 = vmatpush2.msra.mxu0 0.0
    %5199 = vmatprep.subr.mxu0 0.0
    %5200 = vmatpush2.msra.mxu0 0.0
    %5201 = vmatprep.subr.mxu0 0.0
    %5202 = vmatpush2.msra.mxu0 0.0
    %5203 = vmatprep.subr.mxu0 0.0
    %5204 = vmatpush2.msra.mxu0 0.0
    %5205 = vmatprep.subr.mxu0 0.0
    %5206 = vmatpush2.msra.mxu0 0.0
    %5207 = vmatprep.subr.mxu0 0.0
    %5208 = vmatpush2.msra.mxu0 0.0
    %5209 = vmatprep.subr.mxu0 0.0
    %5210 = vmatpush2.msra.mxu0 0.0
    %5211 = vmatprep.subr.mxu0 0.0
    %5212 = vmatpush2.msra.mxu0 0.0
    %5213 = vmatprep.subr.mxu0 0.0
    %5214 = vmatpush2.msra.mxu0 0.0
    %5215 = vmatprep.subr.mxu0 0.0
    %5216 = vmatpush2.msra.mxu0 0.0
    %5217 = vmatprep.mubr.f32.mxu0 0.0
    %5218 = vmatmul.mubr.f32.gmra.mxu0 %v5001
    %v5219 = vpop.f32.mrf.mxu0
    %v5220 = vadd.f32 %v1014, %v5219
    %v5221 = vpop.f32.mrf.mxu0
    %5222 = vdwg.mxu0
    %5223 = vmatprep.subr.mxu0 0.0
    %5224 = vmatpush1.msra.mxu0 0.0
    %5225 = vmatprep.subr.mxu0 0.0
    %5226 = vmatpush1.msra.mxu0 0.0
    %5227 = vmatprep.subr.mxu0 0.0
    %5228 = vmatpush1.msra.mxu0 0.0
    %5229 = vmatprep.subr.mxu0 0.0
    %5230 = vmatpush1.msra.mxu0 0.0
    %5231 = vmatprep.subr.mxu0 0.0
    %5232 = vmatpush1.msra.mxu0 0.0
    %5233 = vmatprep.subr.mxu0 0.0
    %5234 = vmatpush1.msra.mxu0 0.0
    %5235 = vmatprep.subr.mxu0 0.0
    %5236 = vmatpush1.msra.mxu0 0.0
    %5237 = vmatprep.subr.mxu0 0.0
    %5238 = vmatpush1.msra.mxu0 0.0
    %5239 = vmatprep.subr.mxu0 0.0
    %5240 = vmatpush1.msra.mxu0 %v1094
    %5241 = vmatprep.subr.mxu0 0.0
    %5242 = vmatpush1.msra.mxu0 %v1093
    %5243 = vmatprep.subr.mxu0 0.0
    %5244 = vmatpush1.msra.mxu0 %v1092
    %5245 = vmatprep.subr.mxu0 0.0
    %5246 = vmatpush1.msra.mxu0 %v1091
    %5247 = vmatprep.subr.mxu0 0.0
    %5248 = vmatpush1.msra.mxu0 %v1090
    %5249 = vmatprep.subr.mxu0 0.0
    %5250 = vmatpush1.msra.mxu0 %v1089
    %5251 = vmatprep.subr.mxu0 0.0
    %5252 = vmatpush1.msra.mxu0 %v1088
    %5253 = vmatprep.subr.mxu0 0.0
    %5254 = vmatpush1.msra.mxu0 %v1087
    %5255 = vmatprep.subr.mxu0 0.0
    %5256 = vmatpush2.msra.mxu0 0.0
    %5257 = vmatprep.subr.mxu0 0.0
    %5258 = vmatpush2.msra.mxu0 0.0
    %5259 = vmatprep.subr.mxu0 0.0
    %5260 = vmatpush2.msra.mxu0 0.0
    %5261 = vmatprep.subr.mxu0 0.0
    %5262 = vmatpush2.msra.mxu0 0.0
    %5263 = vmatprep.subr.mxu0 0.0
    %5264 = vmatpush2.msra.mxu0 0.0
    %5265 = vmatprep.subr.mxu0 0.0
    %5266 = vmatpush2.msra.mxu0 0.0
    %5267 = vmatprep.subr.mxu0 0.0
    %5268 = vmatpush2.msra.mxu0 0.0
    %5269 = vmatprep.subr.mxu0 0.0
    %5270 = vmatpush2.msra.mxu0 0.0
    %5271 = vmatprep.subr.mxu0 0.0
    %5272 = vmatpush2.msra.mxu0 0.0
    %5273 = vmatprep.subr.mxu0 0.0
    %5274 = vmatpush2.msra.mxu0 0.0
    %5275 = vmatprep.subr.mxu0 0.0
    %5276 = vmatpush2.msra.mxu0 0.0
    %5277 = vmatprep.subr.mxu0 0.0
    %5278 = vmatpush2.msra.mxu0 0.0
    %5279 = vmatprep.subr.mxu0 0.0
    %5280 = vmatpush2.msra.mxu0 0.0
    %5281 = vmatprep.subr.mxu0 0.0
    %5282 = vmatpush2.msra.mxu0 0.0
    %5283 = vmatprep.subr.mxu0 0.0
    %5284 = vmatpush2.msra.mxu0 0.0
    %5285 = vmatprep.subr.mxu0 0.0
    %5286 = vmatpush2.msra.mxu0 0.0
    %5287 = vmatprep.mubr.f32.mxu0 0.0
    %5288 = vmatmul.mubr.f32.gmra.mxu0 %v5074
    %v5289 = vpop.f32.mrf.mxu0
    %v5290 = vadd.f32 %v1101, %v5289
    %v5291 = vpop.f32.mrf.mxu0
    %5292 = vdwg.mxu0
    %v5293 = vadd.f32 %v5220, %v5290
    %v5294 = vxor.u32 %v5293, 2147483648
    %v5295 = vmul.f32 %v5294, 1.442695
    %v5296 = vpow.pop %v5295
    %v5297 = vadd.f32 %v5296, 1.0
    %v5298 = vrcp.pop %v5297
    %v5299 = vmul.f32 1.0, %v5298
    %5300 = vmatprep.subr.mxu0 0.0
    %5301 = vmatpush1.msra.mxu0 0.0
    %5302 = vmatprep.subr.mxu0 0.0
    %5303 = vmatpush1.msra.mxu0 0.0
    %5304 = vmatprep.subr.mxu0 0.0
    %5305 = vmatpush1.msra.mxu0 0.0
    %5306 = vmatprep.subr.mxu0 0.0
    %5307 = vmatpush1.msra.mxu0 0.0
    %5308 = vmatprep.subr.mxu0 0.0
    %5309 = vmatpush1.msra.mxu0 0.0
    %5310 = vmatprep.subr.mxu0 0.0
    %5311 = vmatpush1.msra.mxu0 0.0
    %5312 = vmatprep.subr.mxu0 0.0
    %5313 = vmatpush1.msra.mxu0 0.0
    %5314 = vmatprep.subr.mxu0 0.0
    %5315 = vmatpush1.msra.mxu0 0.0
    %5316 = vmatprep.subr.mxu0 0.0
    %5317 = vmatpush1.msra.mxu0 %v1188
    %5318 = vmatprep.subr.mxu0 0.0
    %5319 = vmatpush1.msra.mxu0 %v1187
    %5320 = vmatprep.subr.mxu0 0.0
    %5321 = vmatpush1.msra.mxu0 %v1186
    %5322 = vmatprep.subr.mxu0 0.0
    %5323 = vmatpush1.msra.mxu0 %v1185
    %5324 = vmatprep.subr.mxu0 0.0
    %5325 = vmatpush1.msra.mxu0 %v1184
    %5326 = vmatprep.subr.mxu0 0.0
    %5327 = vmatpush1.msra.mxu0 %v1183
    %5328 = vmatprep.subr.mxu0 0.0
    %5329 = vmatpush1.msra.mxu0 %v1182
    %5330 = vmatprep.subr.mxu0 0.0
    %5331 = vmatpush1.msra.mxu0 %v1181
    %5332 = vmatprep.subr.mxu0 0.0
    %5333 = vmatpush2.msra.mxu0 0.0
    %5334 = vmatprep.subr.mxu0 0.0
    %5335 = vmatpush2.msra.mxu0 0.0
    %5336 = vmatprep.subr.mxu0 0.0
    %5337 = vmatpush2.msra.mxu0 0.0
    %5338 = vmatprep.subr.mxu0 0.0
    %5339 = vmatpush2.msra.mxu0 0.0
    %5340 = vmatprep.subr.mxu0 0.0
    %5341 = vmatpush2.msra.mxu0 0.0
    %5342 = vmatprep.subr.mxu0 0.0
    %5343 = vmatpush2.msra.mxu0 0.0
    %5344 = vmatprep.subr.mxu0 0.0
    %5345 = vmatpush2.msra.mxu0 0.0
    %5346 = vmatprep.subr.mxu0 0.0
    %5347 = vmatpush2.msra.mxu0 0.0
    %5348 = vmatprep.subr.mxu0 0.0
    %5349 = vmatpush2.msra.mxu0 0.0
    %5350 = vmatprep.subr.mxu0 0.0
    %5351 = vmatpush2.msra.mxu0 0.0
    %5352 = vmatprep.subr.mxu0 0.0
    %5353 = vmatpush2.msra.mxu0 0.0
    %5354 = vmatprep.subr.mxu0 0.0
    %5355 = vmatpush2.msra.mxu0 0.0
    %5356 = vmatprep.subr.mxu0 0.0
    %5357 = vmatpush2.msra.mxu0 0.0
    %5358 = vmatprep.subr.mxu0 0.0
    %5359 = vmatpush2.msra.mxu0 0.0
    %5360 = vmatprep.subr.mxu0 0.0
    %5361 = vmatpush2.msra.mxu0 0.0
    %5362 = vmatprep.subr.mxu0 0.0
    %5363 = vmatpush2.msra.mxu0 0.0
    %5364 = vmatprep.mubr.f32.mxu0 0.0
    %5365 = vmatmul.mubr.f32.gmra.mxu0 %v5001
    %v5366 = vpop.f32.mrf.mxu0
    %v5367 = vadd.f32 %v1195, %v5366
    %v5368 = vpop.f32.mrf.mxu0
    %5369 = vdwg.mxu0
    %5370 = vmatprep.subr.mxu0 0.0
    %5371 = vmatpush1.msra.mxu0 0.0
    %5372 = vmatprep.subr.mxu0 0.0
    %5373 = vmatpush1.msra.mxu0 0.0
    %5374 = vmatprep.subr.mxu0 0.0
    %5375 = vmatpush1.msra.mxu0 0.0
    %5376 = vmatprep.subr.mxu0 0.0
    %5377 = vmatpush1.msra.mxu0 0.0
    %5378 = vmatprep.subr.mxu0 0.0
    %5379 = vmatpush1.msra.mxu0 0.0
    %5380 = vmatprep.subr.mxu0 0.0
    %5381 = vmatpush1.msra.mxu0 0.0
    %5382 = vmatprep.subr.mxu0 0.0
    %5383 = vmatpush1.msra.mxu0 0.0
    %5384 = vmatprep.subr.mxu0 0.0
    %5385 = vmatpush1.msra.mxu0 0.0
    %5386 = vmatprep.subr.mxu0 0.0
    %5387 = vmatpush1.msra.mxu0 %v1275
    %5388 = vmatprep.subr.mxu0 0.0
    %5389 = vmatpush1.msra.mxu0 %v1274
    %5390 = vmatprep.subr.mxu0 0.0
    %5391 = vmatpush1.msra.mxu0 %v1273
    %5392 = vmatprep.subr.mxu0 0.0
    %5393 = vmatpush1.msra.mxu0 %v1272
    %5394 = vmatprep.subr.mxu0 0.0
    %5395 = vmatpush1.msra.mxu0 %v1271
    %5396 = vmatprep.subr.mxu0 0.0
    %5397 = vmatpush1.msra.mxu0 %v1270
    %5398 = vmatprep.subr.mxu0 0.0
    %5399 = vmatpush1.msra.mxu0 %v1269
    %5400 = vmatprep.subr.mxu0 0.0
    %5401 = vmatpush1.msra.mxu0 %v1268
    %5402 = vmatprep.subr.mxu0 0.0
    %5403 = vmatpush2.msra.mxu0 0.0
    %5404 = vmatprep.subr.mxu0 0.0
    %5405 = vmatpush2.msra.mxu0 0.0
    %5406 = vmatprep.subr.mxu0 0.0
    %5407 = vmatpush2.msra.mxu0 0.0
    %5408 = vmatprep.subr.mxu0 0.0
    %5409 = vmatpush2.msra.mxu0 0.0
    %5410 = vmatprep.subr.mxu0 0.0
    %5411 = vmatpush2.msra.mxu0 0.0
    %5412 = vmatprep.subr.mxu0 0.0
    %5413 = vmatpush2.msra.mxu0 0.0
    %5414 = vmatprep.subr.mxu0 0.0
    %5415 = vmatpush2.msra.mxu0 0.0
    %5416 = vmatprep.subr.mxu0 0.0
    %5417 = vmatpush2.msra.mxu0 0.0
    %5418 = vmatprep.subr.mxu0 0.0
    %5419 = vmatpush2.msra.mxu0 0.0
    %5420 = vmatprep.subr.mxu0 0.0
    %5421 = vmatpush2.msra.mxu0 0.0
    %5422 = vmatprep.subr.mxu0 0.0
    %5423 = vmatpush2.msra.mxu0 0.0
    %5424 = vmatprep.subr.mxu0 0.0
    %5425 = vmatpush2.msra.mxu0 0.0
    %5426 = vmatprep.subr.mxu0 0.0
    %5427 = vmatpush2.msra.mxu0 0.0
    %5428 = vmatprep.subr.mxu0 0.0
    %5429 = vmatpush2.msra.mxu0 0.0
    %5430 = vmatprep.subr.mxu0 0.0
    %5431 = vmatpush2.msra.mxu0 0.0
    %5432 = vmatprep.subr.mxu0 0.0
    %5433 = vmatpush2.msra.mxu0 0.0
    %5434 = vmatprep.mubr.f32.mxu0 0.0
    %5435 = vmatmul.mubr.f32.gmra.mxu0 %v5074
    %v5436 = vpop.f32.mrf.mxu0
    %v5437 = vadd.f32 %v1282, %v5436
    %v5438 = vpop.f32.mrf.mxu0
    %5439 = vdwg.mxu0
    %v5440 = vmul.f32 %v5152, %v5437
    %v5441 = vadd.f32 %v5367, %v5440
    %v5442 = vtanh.pop %v5441
    %v5443 = vsub.f32 1.0, %v5299
    %v5444 = vmul.f32 %v5443, %v5442
    %v5445 = vmul.f32 %v5299, %v4765
    %v5446 = vadd.f32 %v5444, %v5445
    %v5447 = vld [vmem:[#allocation2 + $0x38] sm:$0xff]
    %5448 = vmatprep.subr.mxu0 0.0
    %5449 = vmatpush1.msra.mxu0 0.0
    %5450 = vmatprep.subr.mxu0 0.0
    %5451 = vmatpush1.msra.mxu0 0.0
    %5452 = vmatprep.subr.mxu0 0.0
    %5453 = vmatpush1.msra.mxu0 0.0
    %5454 = vmatprep.subr.mxu0 0.0
    %5455 = vmatpush1.msra.mxu0 0.0
    %5456 = vmatprep.subr.mxu0 0.0
    %5457 = vmatpush1.msra.mxu0 0.0
    %5458 = vmatprep.subr.mxu0 0.0
    %5459 = vmatpush1.msra.mxu0 0.0
    %5460 = vmatprep.subr.mxu0 0.0
    %5461 = vmatpush1.msra.mxu0 0.0
    %5462 = vmatprep.subr.mxu0 0.0
    %5463 = vmatpush1.msra.mxu0 0.0
    %5464 = vmatprep.subr.mxu0 0.0
    %5465 = vmatpush1.msra.mxu0 %v541
    %5466 = vmatprep.subr.mxu0 0.0
    %5467 = vmatpush1.msra.mxu0 %v540
    %5468 = vmatprep.subr.mxu0 0.0
    %5469 = vmatpush1.msra.mxu0 %v539
    %5470 = vmatprep.subr.mxu0 0.0
    %5471 = vmatpush1.msra.mxu0 %v538
    %5472 = vmatprep.subr.mxu0 0.0
    %5473 = vmatpush1.msra.mxu0 %v537
    %5474 = vmatprep.subr.mxu0 0.0
    %5475 = vmatpush1.msra.mxu0 %v536
    %5476 = vmatprep.subr.mxu0 0.0
    %5477 = vmatpush1.msra.mxu0 %v535
    %5478 = vmatprep.subr.mxu0 0.0
    %5479 = vmatpush1.msra.mxu0 %v534
    %5480 = vmatprep.subr.mxu0 0.0
    %5481 = vmatpush2.msra.mxu0 0.0
    %5482 = vmatprep.subr.mxu0 0.0
    %5483 = vmatpush2.msra.mxu0 0.0
    %5484 = vmatprep.subr.mxu0 0.0
    %5485 = vmatpush2.msra.mxu0 0.0
    %5486 = vmatprep.subr.mxu0 0.0
    %5487 = vmatpush2.msra.mxu0 0.0
    %5488 = vmatprep.subr.mxu0 0.0
    %5489 = vmatpush2.msra.mxu0 0.0
    %5490 = vmatprep.subr.mxu0 0.0
    %5491 = vmatpush2.msra.mxu0 0.0
    %5492 = vmatprep.subr.mxu0 0.0
    %5493 = vmatpush2.msra.mxu0 0.0
    %5494 = vmatprep.subr.mxu0 0.0
    %5495 = vmatpush2.msra.mxu0 0.0
    %5496 = vmatprep.subr.mxu0 0.0
    %5497 = vmatpush2.msra.mxu0 0.0
    %5498 = vmatprep.subr.mxu0 0.0
    %5499 = vmatpush2.msra.mxu0 0.0
    %5500 = vmatprep.subr.mxu0 0.0
    %5501 = vmatpush2.msra.mxu0 0.0
    %5502 = vmatprep.subr.mxu0 0.0
    %5503 = vmatpush2.msra.mxu0 0.0
    %5504 = vmatprep.subr.mxu0 0.0
    %5505 = vmatpush2.msra.mxu0 0.0
    %5506 = vmatprep.subr.mxu0 0.0
    %5507 = vmatpush2.msra.mxu0 0.0
    %5508 = vmatprep.subr.mxu0 0.0
    %5509 = vmatpush2.msra.mxu0 0.0
    %5510 = vmatprep.subr.mxu0 0.0
    %5511 = vmatpush2.msra.mxu0 0.0
    %5512 = vmatprep.mubr.f32.mxu0 0.0
    %5513 = vmatmul.mubr.f32.gmra.mxu0 %v5001
    %v5514 = vpop.f32.mrf.mxu0
    %v5515 = vadd.f32 %v547, %v5514
    %v5516 = vpop.f32.mrf.mxu0
    %5517 = vdwg.mxu0
    %v5518 = vadd.f32 %v5447, %v5515
    %v5519 = vxor.u32 %v5518, 2147483648
    %v5520 = vmul.f32 %v5519, 1.442695
    %v5521 = vpow.pop %v5520
    %v5522 = vadd.f32 %v5521, 1.0
    %v5523 = vrcp.pop %v5522
    %v5524 = vmul.f32 1.0, %v5523
    %v5525 = vld [vmem:[#allocation3 + $0x38] sm:$0xff]
    %5526 = vmatprep.subr.mxu0 0.0
    %5527 = vmatpush1.msra.mxu0 0.0
    %5528 = vmatprep.subr.mxu0 0.0
    %5529 = vmatpush1.msra.mxu0 0.0
    %5530 = vmatprep.subr.mxu0 0.0
    %5531 = vmatpush1.msra.mxu0 0.0
    %5532 = vmatprep.subr.mxu0 0.0
    %5533 = vmatpush1.msra.mxu0 0.0
    %5534 = vmatprep.subr.mxu0 0.0
    %5535 = vmatpush1.msra.mxu0 0.0
    %5536 = vmatprep.subr.mxu0 0.0
    %5537 = vmatpush1.msra.mxu0 0.0
    %5538 = vmatprep.subr.mxu0 0.0
    %5539 = vmatpush1.msra.mxu0 0.0
    %5540 = vmatprep.subr.mxu0 0.0
    %5541 = vmatpush1.msra.mxu0 0.0
    %5542 = vmatprep.subr.mxu0 0.0
    %5543 = vmatpush1.msra.mxu0 %v638
    %5544 = vmatprep.subr.mxu0 0.0
    %5545 = vmatpush1.msra.mxu0 %v637
    %5546 = vmatprep.subr.mxu0 0.0
    %5547 = vmatpush1.msra.mxu0 %v636
    %5548 = vmatprep.subr.mxu0 0.0
    %5549 = vmatpush1.msra.mxu0 %v635
    %5550 = vmatprep.subr.mxu0 0.0
    %5551 = vmatpush1.msra.mxu0 %v634
    %5552 = vmatprep.subr.mxu0 0.0
    %5553 = vmatpush1.msra.mxu0 %v633
    %5554 = vmatprep.subr.mxu0 0.0
    %5555 = vmatpush1.msra.mxu0 %v632
    %5556 = vmatprep.subr.mxu0 0.0
    %5557 = vmatpush1.msra.mxu0 %v631
    %5558 = vmatprep.subr.mxu0 0.0
    %5559 = vmatpush2.msra.mxu0 0.0
    %5560 = vmatprep.subr.mxu0 0.0
    %5561 = vmatpush2.msra.mxu0 0.0
    %5562 = vmatprep.subr.mxu0 0.0
    %5563 = vmatpush2.msra.mxu0 0.0
    %5564 = vmatprep.subr.mxu0 0.0
    %5565 = vmatpush2.msra.mxu0 0.0
    %5566 = vmatprep.subr.mxu0 0.0
    %5567 = vmatpush2.msra.mxu0 0.0
    %5568 = vmatprep.subr.mxu0 0.0
    %5569 = vmatpush2.msra.mxu0 0.0
    %5570 = vmatprep.subr.mxu0 0.0
    %5571 = vmatpush2.msra.mxu0 0.0
    %5572 = vmatprep.subr.mxu0 0.0
    %5573 = vmatpush2.msra.mxu0 0.0
    %5574 = vmatprep.subr.mxu0 0.0
    %5575 = vmatpush2.msra.mxu0 0.0
    %5576 = vmatprep.subr.mxu0 0.0
    %5577 = vmatpush2.msra.mxu0 0.0
    %5578 = vmatprep.subr.mxu0 0.0
    %5579 = vmatpush2.msra.mxu0 0.0
    %5580 = vmatprep.subr.mxu0 0.0
    %5581 = vmatpush2.msra.mxu0 0.0
    %5582 = vmatprep.subr.mxu0 0.0
    %5583 = vmatpush2.msra.mxu0 0.0
    %5584 = vmatprep.subr.mxu0 0.0
    %5585 = vmatpush2.msra.mxu0 0.0
    %5586 = vmatprep.subr.mxu0 0.0
    %5587 = vmatpush2.msra.mxu0 0.0
    %5588 = vmatprep.subr.mxu0 0.0
    %5589 = vmatpush2.msra.mxu0 0.0
    %5590 = vmatprep.mubr.f32.mxu0 0.0
    %5591 = vmatmul.mubr.f32.gmra.mxu0 %v5001
    %v5592 = vpop.f32.mrf.mxu0
    %v5593 = vadd.f32 %v645, %v5592
    %v5594 = vpop.f32.mrf.mxu0
    %5595 = vdwg.mxu0
    %v5596 = vadd.f32 %v5525, %v5593
    %v5597 = vxor.u32 %v5596, 2147483648
    %v5598 = vmul.f32 %v5597, 1.442695
    %v5599 = vpow.pop %v5598
    %v5600 = vadd.f32 %v5599, 1.0
    %v5601 = vrcp.pop %v5600
    %v5602 = vmul.f32 1.0, %v5601
    %v5603 = vld [vmem:[#allocation4 + $0x38] sm:$0xff]
    %5604 = vmatprep.subr.mxu0 0.0
    %5605 = vmatpush1.msra.mxu0 0.0
    %5606 = vmatprep.subr.mxu0 0.0
    %5607 = vmatpush1.msra.mxu0 0.0
    %5608 = vmatprep.subr.mxu0 0.0
    %5609 = vmatpush1.msra.mxu0 0.0
    %5610 = vmatprep.subr.mxu0 0.0
    %5611 = vmatpush1.msra.mxu0 0.0
    %5612 = vmatprep.subr.mxu0 0.0
    %5613 = vmatpush1.msra.mxu0 0.0
    %5614 = vmatprep.subr.mxu0 0.0
    %5615 = vmatpush1.msra.mxu0 0.0
    %5616 = vmatprep.subr.mxu0 0.0
    %5617 = vmatpush1.msra.mxu0 0.0
    %5618 = vmatprep.subr.mxu0 0.0
    %5619 = vmatpush1.msra.mxu0 0.0
    %5620 = vmatprep.subr.mxu0 0.0
    %5621 = vmatpush1.msra.mxu0 %v733
    %5622 = vmatprep.subr.mxu0 0.0
    %5623 = vmatpush1.msra.mxu0 %v732
    %5624 = vmatprep.subr.mxu0 0.0
    %5625 = vmatpush1.msra.mxu0 %v731
    %5626 = vmatprep.subr.mxu0 0.0
    %5627 = vmatpush1.msra.mxu0 %v730
    %5628 = vmatprep.subr.mxu0 0.0
    %5629 = vmatpush1.msra.mxu0 %v729
    %5630 = vmatprep.subr.mxu0 0.0
    %5631 = vmatpush1.msra.mxu0 %v728
    %5632 = vmatprep.subr.mxu0 0.0
    %5633 = vmatpush1.msra.mxu0 %v727
    %5634 = vmatprep.subr.mxu0 0.0
    %5635 = vmatpush1.msra.mxu0 %v726
    %5636 = vmatprep.subr.mxu0 0.0
    %5637 = vmatpush2.msra.mxu0 0.0
    %5638 = vmatprep.subr.mxu0 0.0
    %5639 = vmatpush2.msra.mxu0 0.0
    %5640 = vmatprep.subr.mxu0 0.0
    %5641 = vmatpush2.msra.mxu0 0.0
    %5642 = vmatprep.subr.mxu0 0.0
    %5643 = vmatpush2.msra.mxu0 0.0
    %5644 = vmatprep.subr.mxu0 0.0
    %5645 = vmatpush2.msra.mxu0 0.0
    %5646 = vmatprep.subr.mxu0 0.0
    %5647 = vmatpush2.msra.mxu0 0.0
    %5648 = vmatprep.subr.mxu0 0.0
    %5649 = vmatpush2.msra.mxu0 0.0
    %5650 = vmatprep.subr.mxu0 0.0
    %5651 = vmatpush2.msra.mxu0 0.0
    %5652 = vmatprep.subr.mxu0 0.0
    %5653 = vmatpush2.msra.mxu0 0.0
    %5654 = vmatprep.subr.mxu0 0.0
    %5655 = vmatpush2.msra.mxu0 0.0
    %5656 = vmatprep.subr.mxu0 0.0
    %5657 = vmatpush2.msra.mxu0 0.0
    %5658 = vmatprep.subr.mxu0 0.0
    %5659 = vmatpush2.msra.mxu0 0.0
    %5660 = vmatprep.subr.mxu0 0.0
    %5661 = vmatpush2.msra.mxu0 0.0
    %5662 = vmatprep.subr.mxu0 0.0
    %5663 = vmatpush2.msra.mxu0 0.0
    %5664 = vmatprep.subr.mxu0 0.0
    %5665 = vmatpush2.msra.mxu0 0.0
    %5666 = vmatprep.subr.mxu0 0.0
    %5667 = vmatpush2.msra.mxu0 0.0
    %5668 = vmatprep.mubr.f32.mxu0 0.0
    %5669 = vmatmul.mubr.f32.gmra.mxu0 %v5001
    %v5670 = vpop.f32.mrf.mxu0
    %v5671 = vadd.f32 %v740, %v5670
    %v5672 = vpop.f32.mrf.mxu0
    %5673 = vdwg.mxu0
    %v5674 = vmul.f32 %v5524, %v5671
    %v5675 = vadd.f32 %v5603, %v5674
    %v5676 = vtanh.pop %v5675
    %v5677 = vsub.f32 1.0, %v5602
    %v5678 = vmul.f32 %v5677, %v5676
    %v5679 = vmul.f32 %v5602, %v4999
    %v5680 = vadd.f32 %v5678, %v5679
    %v5682 = vsel %vm272, %v5680, 0
    %5684 = vmatprep.subr.mxu0 0.0
    %5685 = vmatpush1.msra.mxu0 0.0
    %5686 = vmatprep.subr.mxu0 0.0
    %5687 = vmatpush1.msra.mxu0 0.0
    %5688 = vmatprep.subr.mxu0 0.0
    %5689 = vmatpush1.msra.mxu0 0.0
    %5690 = vmatprep.subr.mxu0 0.0
    %5691 = vmatpush1.msra.mxu0 0.0
    %5692 = vmatprep.subr.mxu0 0.0
    %5693 = vmatpush1.msra.mxu0 0.0
    %5694 = vmatprep.subr.mxu0 0.0
    %5695 = vmatpush1.msra.mxu0 0.0
    %5696 = vmatprep.subr.mxu0 0.0
    %5697 = vmatpush1.msra.mxu0 0.0
    %5698 = vmatprep.subr.mxu0 0.0
    %5699 = vmatpush1.msra.mxu0 0.0
    %5700 = vmatprep.subr.mxu0 0.0
    %5701 = vmatpush1.msra.mxu0 %v826
    %5702 = vmatprep.subr.mxu0 0.0
    %5703 = vmatpush1.msra.mxu0 %v825
    %5704 = vmatprep.subr.mxu0 0.0
    %5705 = vmatpush1.msra.mxu0 %v824
    %5706 = vmatprep.subr.mxu0 0.0
    %5707 = vmatpush1.msra.mxu0 %v823
    %5708 = vmatprep.subr.mxu0 0.0
    %5709 = vmatpush1.msra.mxu0 %v822
    %5710 = vmatprep.subr.mxu0 0.0
    %5711 = vmatpush1.msra.mxu0 %v821
    %5712 = vmatprep.subr.mxu0 0.0
    %5713 = vmatpush1.msra.mxu0 %v820
    %5714 = vmatprep.subr.mxu0 0.0
    %5715 = vmatpush1.msra.mxu0 %v819
    %5716 = vmatprep.subr.mxu0 0.0
    %5717 = vmatpush2.msra.mxu0 0.0
    %5718 = vmatprep.subr.mxu0 0.0
    %5719 = vmatpush2.msra.mxu0 0.0
    %5720 = vmatprep.subr.mxu0 0.0
    %5721 = vmatpush2.msra.mxu0 0.0
    %5722 = vmatprep.subr.mxu0 0.0
    %5723 = vmatpush2.msra.mxu0 0.0
    %5724 = vmatprep.subr.mxu0 0.0
    %5725 = vmatpush2.msra.mxu0 0.0
    %5726 = vmatprep.subr.mxu0 0.0
    %5727 = vmatpush2.msra.mxu0 0.0
    %5728 = vmatprep.subr.mxu0 0.0
    %5729 = vmatpush2.msra.mxu0 0.0
    %5730 = vmatprep.subr.mxu0 0.0
    %5731 = vmatpush2.msra.mxu0 0.0
    %5732 = vmatprep.subr.mxu0 0.0
    %5733 = vmatpush2.msra.mxu0 0.0
    %5734 = vmatprep.subr.mxu0 0.0
    %5735 = vmatpush2.msra.mxu0 0.0
    %5736 = vmatprep.subr.mxu0 0.0
    %5737 = vmatpush2.msra.mxu0 0.0
    %5738 = vmatprep.subr.mxu0 0.0
    %5739 = vmatpush2.msra.mxu0 0.0
    %5740 = vmatprep.subr.mxu0 0.0
    %5741 = vmatpush2.msra.mxu0 0.0
    %5742 = vmatprep.subr.mxu0 0.0
    %5743 = vmatpush2.msra.mxu0 0.0
    %5744 = vmatprep.subr.mxu0 0.0
    %5745 = vmatpush2.msra.mxu0 0.0
    %5746 = vmatprep.subr.mxu0 0.0
    %5747 = vmatpush2.msra.mxu0 0.0
    %5748 = vmatprep.mubr.f32.mxu0 0.0
    %5749 = vmatmul.mubr.f32.gmra.mxu0 %v5682
    %v5750 = vpop.f32.mrf.mxu0
    %v5751 = vadd.f32 %v832, %v5750
    %v5752 = vpop.f32.mrf.mxu0
    %5753 = vdwg.mxu0
    %v5755 = vsel %vm272, %v5446, 0
    %5757 = vmatprep.subr.mxu0 0.0
    %5758 = vmatpush1.msra.mxu0 0.0
    %5759 = vmatprep.subr.mxu0 0.0
    %5760 = vmatpush1.msra.mxu0 0.0
    %5761 = vmatprep.subr.mxu0 0.0
    %5762 = vmatpush1.msra.mxu0 0.0
    %5763 = vmatprep.subr.mxu0 0.0
    %5764 = vmatpush1.msra.mxu0 0.0
    %5765 = vmatprep.subr.mxu0 0.0
    %5766 = vmatpush1.msra.mxu0 0.0
    %5767 = vmatprep.subr.mxu0 0.0
    %5768 = vmatpush1.msra.mxu0 0.0
    %5769 = vmatprep.subr.mxu0 0.0
    %5770 = vmatpush1.msra.mxu0 0.0
    %5771 = vmatprep.subr.mxu0 0.0
    %5772 = vmatpush1.msra.mxu0 0.0
    %5773 = vmatprep.subr.mxu0 0.0
    %5774 = vmatpush1.msra.mxu0 %v914
    %5775 = vmatprep.subr.mxu0 0.0
    %5776 = vmatpush1.msra.mxu0 %v913
    %5777 = vmatprep.subr.mxu0 0.0
    %5778 = vmatpush1.msra.mxu0 %v912
    %5779 = vmatprep.subr.mxu0 0.0
    %5780 = vmatpush1.msra.mxu0 %v911
    %5781 = vmatprep.subr.mxu0 0.0
    %5782 = vmatpush1.msra.mxu0 %v910
    %5783 = vmatprep.subr.mxu0 0.0
    %5784 = vmatpush1.msra.mxu0 %v909
    %5785 = vmatprep.subr.mxu0 0.0
    %5786 = vmatpush1.msra.mxu0 %v908
    %5787 = vmatprep.subr.mxu0 0.0
    %5788 = vmatpush1.msra.mxu0 %v907
    %5789 = vmatprep.subr.mxu0 0.0
    %5790 = vmatpush2.msra.mxu0 0.0
    %5791 = vmatprep.subr.mxu0 0.0
    %5792 = vmatpush2.msra.mxu0 0.0
    %5793 = vmatprep.subr.mxu0 0.0
    %5794 = vmatpush2.msra.mxu0 0.0
    %5795 = vmatprep.subr.mxu0 0.0
    %5796 = vmatpush2.msra.mxu0 0.0
    %5797 = vmatprep.subr.mxu0 0.0
    %5798 = vmatpush2.msra.mxu0 0.0
    %5799 = vmatprep.subr.mxu0 0.0
    %5800 = vmatpush2.msra.mxu0 0.0
    %5801 = vmatprep.subr.mxu0 0.0
    %5802 = vmatpush2.msra.mxu0 0.0
    %5803 = vmatprep.subr.mxu0 0.0
    %5804 = vmatpush2.msra.mxu0 0.0
    %5805 = vmatprep.subr.mxu0 0.0
    %5806 = vmatpush2.msra.mxu0 0.0
    %5807 = vmatprep.subr.mxu0 0.0
    %5808 = vmatpush2.msra.mxu0 0.0
    %5809 = vmatprep.subr.mxu0 0.0
    %5810 = vmatpush2.msra.mxu0 0.0
    %5811 = vmatprep.subr.mxu0 0.0
    %5812 = vmatpush2.msra.mxu0 0.0
    %5813 = vmatprep.subr.mxu0 0.0
    %5814 = vmatpush2.msra.mxu0 0.0
    %5815 = vmatprep.subr.mxu0 0.0
    %5816 = vmatpush2.msra.mxu0 0.0
    %5817 = vmatprep.subr.mxu0 0.0
    %5818 = vmatpush2.msra.mxu0 0.0
    %5819 = vmatprep.subr.mxu0 0.0
    %5820 = vmatpush2.msra.mxu0 0.0
    %5821 = vmatprep.mubr.f32.mxu0 0.0
    %5822 = vmatmul.mubr.f32.gmra.mxu0 %v5755
    %v5823 = vpop.f32.mrf.mxu0
    %v5824 = vadd.f32 %v920, %v5823
    %v5825 = vpop.f32.mrf.mxu0
    %5826 = vdwg.mxu0
    %v5827 = vadd.f32 %v5751, %v5824
    %v5828 = vxor.u32 %v5827, 2147483648
    %v5829 = vmul.f32 %v5828, 1.442695
    %v5830 = vpow.pop %v5829
    %v5831 = vadd.f32 %v5830, 1.0
    %v5832 = vrcp.pop %v5831
    %v5833 = vmul.f32 1.0, %v5832
    %5834 = vmatprep.subr.mxu0 0.0
    %5835 = vmatpush1.msra.mxu0 0.0
    %5836 = vmatprep.subr.mxu0 0.0
    %5837 = vmatpush1.msra.mxu0 0.0
    %5838 = vmatprep.subr.mxu0 0.0
    %5839 = vmatpush1.msra.mxu0 0.0
    %5840 = vmatprep.subr.mxu0 0.0
    %5841 = vmatpush1.msra.mxu0 0.0
    %5842 = vmatprep.subr.mxu0 0.0
    %5843 = vmatpush1.msra.mxu0 0.0
    %5844 = vmatprep.subr.mxu0 0.0
    %5845 = vmatpush1.msra.mxu0 0.0
    %5846 = vmatprep.subr.mxu0 0.0
    %5847 = vmatpush1.msra.mxu0 0.0
    %5848 = vmatprep.subr.mxu0 0.0
    %5849 = vmatpush1.msra.mxu0 0.0
    %5850 = vmatprep.subr.mxu0 0.0
    %5851 = vmatpush1.msra.mxu0 %v1007
    %5852 = vmatprep.subr.mxu0 0.0
    %5853 = vmatpush1.msra.mxu0 %v1006
    %5854 = vmatprep.subr.mxu0 0.0
    %5855 = vmatpush1.msra.mxu0 %v1005
    %5856 = vmatprep.subr.mxu0 0.0
    %5857 = vmatpush1.msra.mxu0 %v1004
    %5858 = vmatprep.subr.mxu0 0.0
    %5859 = vmatpush1.msra.mxu0 %v1003
    %5860 = vmatprep.subr.mxu0 0.0
    %5861 = vmatpush1.msra.mxu0 %v1002
    %5862 = vmatprep.subr.mxu0 0.0
    %5863 = vmatpush1.msra.mxu0 %v1001
    %5864 = vmatprep.subr.mxu0 0.0
    %5865 = vmatpush1.msra.mxu0 %v1000
    %5866 = vmatprep.subr.mxu0 0.0
    %5867 = vmatpush2.msra.mxu0 0.0
    %5868 = vmatprep.subr.mxu0 0.0
    %5869 = vmatpush2.msra.mxu0 0.0
    %5870 = vmatprep.subr.mxu0 0.0
    %5871 = vmatpush2.msra.mxu0 0.0
    %5872 = vmatprep.subr.mxu0 0.0
    %5873 = vmatpush2.msra.mxu0 0.0
    %5874 = vmatprep.subr.mxu0 0.0
    %5875 = vmatpush2.msra.mxu0 0.0
    %5876 = vmatprep.subr.mxu0 0.0
    %5877 = vmatpush2.msra.mxu0 0.0
    %5878 = vmatprep.subr.mxu0 0.0
    %5879 = vmatpush2.msra.mxu0 0.0
    %5880 = vmatprep.subr.mxu0 0.0
    %5881 = vmatpush2.msra.mxu0 0.0
    %5882 = vmatprep.subr.mxu0 0.0
    %5883 = vmatpush2.msra.mxu0 0.0
    %5884 = vmatprep.subr.mxu0 0.0
    %5885 = vmatpush2.msra.mxu0 0.0
    %5886 = vmatprep.subr.mxu0 0.0
    %5887 = vmatpush2.msra.mxu0 0.0
    %5888 = vmatprep.subr.mxu0 0.0
    %5889 = vmatpush2.msra.mxu0 0.0
    %5890 = vmatprep.subr.mxu0 0.0
    %5891 = vmatpush2.msra.mxu0 0.0
    %5892 = vmatprep.subr.mxu0 0.0
    %5893 = vmatpush2.msra.mxu0 0.0
    %5894 = vmatprep.subr.mxu0 0.0
    %5895 = vmatpush2.msra.mxu0 0.0
    %5896 = vmatprep.subr.mxu0 0.0
    %5897 = vmatpush2.msra.mxu0 0.0
    %5898 = vmatprep.mubr.f32.mxu0 0.0
    %5899 = vmatmul.mubr.f32.gmra.mxu0 %v5682
    %v5900 = vpop.f32.mrf.mxu0
    %v5901 = vadd.f32 %v1014, %v5900
    %v5902 = vpop.f32.mrf.mxu0
    %5903 = vdwg.mxu0
    %5904 = vmatprep.subr.mxu0 0.0
    %5905 = vmatpush1.msra.mxu0 0.0
    %5906 = vmatprep.subr.mxu0 0.0
    %5907 = vmatpush1.msra.mxu0 0.0
    %5908 = vmatprep.subr.mxu0 0.0
    %5909 = vmatpush1.msra.mxu0 0.0
    %5910 = vmatprep.subr.mxu0 0.0
    %5911 = vmatpush1.msra.mxu0 0.0
    %5912 = vmatprep.subr.mxu0 0.0
    %5913 = vmatpush1.msra.mxu0 0.0
    %5914 = vmatprep.subr.mxu0 0.0
    %5915 = vmatpush1.msra.mxu0 0.0
    %5916 = vmatprep.subr.mxu0 0.0
    %5917 = vmatpush1.msra.mxu0 0.0
    %5918 = vmatprep.subr.mxu0 0.0
    %5919 = vmatpush1.msra.mxu0 0.0
    %5920 = vmatprep.subr.mxu0 0.0
    %5921 = vmatpush1.msra.mxu0 %v1094
    %5922 = vmatprep.subr.mxu0 0.0
    %5923 = vmatpush1.msra.mxu0 %v1093
    %5924 = vmatprep.subr.mxu0 0.0
    %5925 = vmatpush1.msra.mxu0 %v1092
    %5926 = vmatprep.subr.mxu0 0.0
    %5927 = vmatpush1.msra.mxu0 %v1091
    %5928 = vmatprep.subr.mxu0 0.0
    %5929 = vmatpush1.msra.mxu0 %v1090
    %5930 = vmatprep.subr.mxu0 0.0
    %5931 = vmatpush1.msra.mxu0 %v1089
    %5932 = vmatprep.subr.mxu0 0.0
    %5933 = vmatpush1.msra.mxu0 %v1088
    %5934 = vmatprep.subr.mxu0 0.0
    %5935 = vmatpush1.msra.mxu0 %v1087
    %5936 = vmatprep.subr.mxu0 0.0
    %5937 = vmatpush2.msra.mxu0 0.0
    %5938 = vmatprep.subr.mxu0 0.0
    %5939 = vmatpush2.msra.mxu0 0.0
    %5940 = vmatprep.subr.mxu0 0.0
    %5941 = vmatpush2.msra.mxu0 0.0
    %5942 = vmatprep.subr.mxu0 0.0
    %5943 = vmatpush2.msra.mxu0 0.0
    %5944 = vmatprep.subr.mxu0 0.0
    %5945 = vmatpush2.msra.mxu0 0.0
    %5946 = vmatprep.subr.mxu0 0.0
    %5947 = vmatpush2.msra.mxu0 0.0
    %5948 = vmatprep.subr.mxu0 0.0
    %5949 = vmatpush2.msra.mxu0 0.0
    %5950 = vmatprep.subr.mxu0 0.0
    %5951 = vmatpush2.msra.mxu0 0.0
    %5952 = vmatprep.subr.mxu0 0.0
    %5953 = vmatpush2.msra.mxu0 0.0
    %5954 = vmatprep.subr.mxu0 0.0
    %5955 = vmatpush2.msra.mxu0 0.0
    %5956 = vmatprep.subr.mxu0 0.0
    %5957 = vmatpush2.msra.mxu0 0.0
    %5958 = vmatprep.subr.mxu0 0.0
    %5959 = vmatpush2.msra.mxu0 0.0
    %5960 = vmatprep.subr.mxu0 0.0
    %5961 = vmatpush2.msra.mxu0 0.0
    %5962 = vmatprep.subr.mxu0 0.0
    %5963 = vmatpush2.msra.mxu0 0.0
    %5964 = vmatprep.subr.mxu0 0.0
    %5965 = vmatpush2.msra.mxu0 0.0
    %5966 = vmatprep.subr.mxu0 0.0
    %5967 = vmatpush2.msra.mxu0 0.0
    %5968 = vmatprep.mubr.f32.mxu0 0.0
    %5969 = vmatmul.mubr.f32.gmra.mxu0 %v5755
    %v5970 = vpop.f32.mrf.mxu0
    %v5971 = vadd.f32 %v1101, %v5970
    %v5972 = vpop.f32.mrf.mxu0
    %5973 = vdwg.mxu0
    %v5974 = vadd.f32 %v5901, %v5971
    %v5975 = vxor.u32 %v5974, 2147483648
    %v5976 = vmul.f32 %v5975, 1.442695
    %v5977 = vpow.pop %v5976
    %v5978 = vadd.f32 %v5977, 1.0
    %v5979 = vrcp.pop %v5978
    %v5980 = vmul.f32 1.0, %v5979
    %5981 = vmatprep.subr.mxu0 0.0
    %5982 = vmatpush1.msra.mxu0 0.0
    %5983 = vmatprep.subr.mxu0 0.0
    %5984 = vmatpush1.msra.mxu0 0.0
    %5985 = vmatprep.subr.mxu0 0.0
    %5986 = vmatpush1.msra.mxu0 0.0
    %5987 = vmatprep.subr.mxu0 0.0
    %5988 = vmatpush1.msra.mxu0 0.0
    %5989 = vmatprep.subr.mxu0 0.0
    %5990 = vmatpush1.msra.mxu0 0.0
    %5991 = vmatprep.subr.mxu0 0.0
    %5992 = vmatpush1.msra.mxu0 0.0
    %5993 = vmatprep.subr.mxu0 0.0
    %5994 = vmatpush1.msra.mxu0 0.0
    %5995 = vmatprep.subr.mxu0 0.0
    %5996 = vmatpush1.msra.mxu0 0.0
    %5997 = vmatprep.subr.mxu0 0.0
    %5998 = vmatpush1.msra.mxu0 %v1188
    %5999 = vmatprep.subr.mxu0 0.0
    %6000 = vmatpush1.msra.mxu0 %v1187
    %6001 = vmatprep.subr.mxu0 0.0
    %6002 = vmatpush1.msra.mxu0 %v1186
    %6003 = vmatprep.subr.mxu0 0.0
    %6004 = vmatpush1.msra.mxu0 %v1185
    %6005 = vmatprep.subr.mxu0 0.0
    %6006 = vmatpush1.msra.mxu0 %v1184
    %6007 = vmatprep.subr.mxu0 0.0
    %6008 = vmatpush1.msra.mxu0 %v1183
    %6009 = vmatprep.subr.mxu0 0.0
    %6010 = vmatpush1.msra.mxu0 %v1182
    %6011 = vmatprep.subr.mxu0 0.0
    %6012 = vmatpush1.msra.mxu0 %v1181
    %6013 = vmatprep.subr.mxu0 0.0
    %6014 = vmatpush2.msra.mxu0 0.0
    %6015 = vmatprep.subr.mxu0 0.0
    %6016 = vmatpush2.msra.mxu0 0.0
    %6017 = vmatprep.subr.mxu0 0.0
    %6018 = vmatpush2.msra.mxu0 0.0
    %6019 = vmatprep.subr.mxu0 0.0
    %6020 = vmatpush2.msra.mxu0 0.0
    %6021 = vmatprep.subr.mxu0 0.0
    %6022 = vmatpush2.msra.mxu0 0.0
    %6023 = vmatprep.subr.mxu0 0.0
    %6024 = vmatpush2.msra.mxu0 0.0
    %6025 = vmatprep.subr.mxu0 0.0
    %6026 = vmatpush2.msra.mxu0 0.0
    %6027 = vmatprep.subr.mxu0 0.0
    %6028 = vmatpush2.msra.mxu0 0.0
    %6029 = vmatprep.subr.mxu0 0.0
    %6030 = vmatpush2.msra.mxu0 0.0
    %6031 = vmatprep.subr.mxu0 0.0
    %6032 = vmatpush2.msra.mxu0 0.0
    %6033 = vmatprep.subr.mxu0 0.0
    %6034 = vmatpush2.msra.mxu0 0.0
    %6035 = vmatprep.subr.mxu0 0.0
    %6036 = vmatpush2.msra.mxu0 0.0
    %6037 = vmatprep.subr.mxu0 0.0
    %6038 = vmatpush2.msra.mxu0 0.0
    %6039 = vmatprep.subr.mxu0 0.0
    %6040 = vmatpush2.msra.mxu0 0.0
    %6041 = vmatprep.subr.mxu0 0.0
    %6042 = vmatpush2.msra.mxu0 0.0
    %6043 = vmatprep.subr.mxu0 0.0
    %6044 = vmatpush2.msra.mxu0 0.0
    %6045 = vmatprep.mubr.f32.mxu0 0.0
    %6046 = vmatmul.mubr.f32.gmra.mxu0 %v5682
    %v6047 = vpop.f32.mrf.mxu0
    %v6048 = vadd.f32 %v1195, %v6047
    %v6049 = vpop.f32.mrf.mxu0
    %6050 = vdwg.mxu0
    %6051 = vmatprep.subr.mxu0 0.0
    %6052 = vmatpush1.msra.mxu0 0.0
    %6053 = vmatprep.subr.mxu0 0.0
    %6054 = vmatpush1.msra.mxu0 0.0
    %6055 = vmatprep.subr.mxu0 0.0
    %6056 = vmatpush1.msra.mxu0 0.0
    %6057 = vmatprep.subr.mxu0 0.0
    %6058 = vmatpush1.msra.mxu0 0.0
    %6059 = vmatprep.subr.mxu0 0.0
    %6060 = vmatpush1.msra.mxu0 0.0
    %6061 = vmatprep.subr.mxu0 0.0
    %6062 = vmatpush1.msra.mxu0 0.0
    %6063 = vmatprep.subr.mxu0 0.0
    %6064 = vmatpush1.msra.mxu0 0.0
    %6065 = vmatprep.subr.mxu0 0.0
    %6066 = vmatpush1.msra.mxu0 0.0
    %6067 = vmatprep.subr.mxu0 0.0
    %6068 = vmatpush1.msra.mxu0 %v1275
    %6069 = vmatprep.subr.mxu0 0.0
    %6070 = vmatpush1.msra.mxu0 %v1274
    %6071 = vmatprep.subr.mxu0 0.0
    %6072 = vmatpush1.msra.mxu0 %v1273
    %6073 = vmatprep.subr.mxu0 0.0
    %6074 = vmatpush1.msra.mxu0 %v1272
    %6075 = vmatprep.subr.mxu0 0.0
    %6076 = vmatpush1.msra.mxu0 %v1271
    %6077 = vmatprep.subr.mxu0 0.0
    %6078 = vmatpush1.msra.mxu0 %v1270
    %6079 = vmatprep.subr.mxu0 0.0
    %6080 = vmatpush1.msra.mxu0 %v1269
    %6081 = vmatprep.subr.mxu0 0.0
    %6082 = vmatpush1.msra.mxu0 %v1268
    %6083 = vmatprep.subr.mxu0 0.0
    %6084 = vmatpush2.msra.mxu0 0.0
    %6085 = vmatprep.subr.mxu0 0.0
    %6086 = vmatpush2.msra.mxu0 0.0
    %6087 = vmatprep.subr.mxu0 0.0
    %6088 = vmatpush2.msra.mxu0 0.0
    %6089 = vmatprep.subr.mxu0 0.0
    %6090 = vmatpush2.msra.mxu0 0.0
    %6091 = vmatprep.subr.mxu0 0.0
    %6092 = vmatpush2.msra.mxu0 0.0
    %6093 = vmatprep.subr.mxu0 0.0
    %6094 = vmatpush2.msra.mxu0 0.0
    %6095 = vmatprep.subr.mxu0 0.0
    %6096 = vmatpush2.msra.mxu0 0.0
    %6097 = vmatprep.subr.mxu0 0.0
    %6098 = vmatpush2.msra.mxu0 0.0
    %6099 = vmatprep.subr.mxu0 0.0
    %6100 = vmatpush2.msra.mxu0 0.0
    %6101 = vmatprep.subr.mxu0 0.0
    %6102 = vmatpush2.msra.mxu0 0.0
    %6103 = vmatprep.subr.mxu0 0.0
    %6104 = vmatpush2.msra.mxu0 0.0
    %6105 = vmatprep.subr.mxu0 0.0
    %6106 = vmatpush2.msra.mxu0 0.0
    %6107 = vmatprep.subr.mxu0 0.0
    %6108 = vmatpush2.msra.mxu0 0.0
    %6109 = vmatprep.subr.mxu0 0.0
    %6110 = vmatpush2.msra.mxu0 0.0
    %6111 = vmatprep.subr.mxu0 0.0
    %6112 = vmatpush2.msra.mxu0 0.0
    %6113 = vmatprep.subr.mxu0 0.0
    %6114 = vmatpush2.msra.mxu0 0.0
    %6115 = vmatprep.mubr.f32.mxu0 0.0
    %6116 = vmatmul.mubr.f32.gmra.mxu0 %v5755
    %v6117 = vpop.f32.mrf.mxu0
    %v6118 = vadd.f32 %v1282, %v6117
    %v6119 = vpop.f32.mrf.mxu0
    %6120 = vdwg.mxu0
    %v6121 = vmul.f32 %v5833, %v6118
    %v6122 = vadd.f32 %v6048, %v6121
    %v6123 = vtanh.pop %v6122
    %v6124 = vsub.f32 1.0, %v5980
    %v6125 = vmul.f32 %v6124, %v6123
    %v6126 = vmul.f32 %v5980, %v5446
    %v6127 = vadd.f32 %v6125, %v6126
    %v6128 = vld [vmem:[%s9] sm:$0x1]
    %v6130 = vlaneseq
    %v6131 = vshrl.u32 %v6130, 7
    %v6132 = vsub.s32 0, %v6131
    %v6133 = vrot.slane %v6128, %v6132
    %v6135 = vmul.f32 %v6127, %v6133
    %v6136 = vsel %vm272, %v6135, 0.0
    %6137 = vadd.xlane.f32.xlu0 %v6136
    %v6138 = vpop.xlane.xlu0 %6137
    %v6139 = vld [vmem:[#allocation5] sm:$0x1]
    %v6141 = vlaneseq
    %v6142 = vshrl.u32 %v6141, 7
    %v6143 = vsub.s32 0, %v6142
    %v6144 = vrot.slane %v6139, %v6143
    %v6146 = vadd.f32 %v6138, %v6144
    %vm6147 = vcmask 7168
    %6148 = vst.msk [vmem:[%s11] sm:$0xff] %vm6147, %v6146
    // Predicated region
    $region70: #{gru_model_forward.1} parent=1 // pred_check
      _
    $region71: #{gru_model_forward.1} parent=1 // pred_check_branch
      %6150 = sbr.rel (0) target = $region73
    $region72: #{gru_model_forward.1} parent=1 // pred_region
      _
    $region73: #{gru_model_forward.1} parent=1 // pred_fallthru
      _
    // Predicated region
    $region74: #{gru_model_forward.1} parent=1 // pred_check
      _
    $region75: #{gru_model_forward.1} parent=1 // pred_check_branch
      %6152 = sbr.rel (0) target = $region77
    $region76: #{gru_model_forward.1} parent=1 // pred_region
      _
    $region77: #{gru_model_forward.1} parent=1 // pred_fallthru
      _
    %6153 = vsyncpa [#allocation7], 1
    %6154 = vsyncpa [#allocation9], 1
    %6155 = vsyncpa [#allocation12], 1
    %6156 = vsyncpa [#allocation15], 1

</llo_original>
